<compile_context>
chip_gen: v5e
topology: v5e:2x2
jax: 0.10.0
libtpu: 0.0.40
codegen_flags: <defaults>
</compile_context>

<pallas_src>
import jax
import jax.numpy as jnp
import numpy as np
from jax.experimental import pallas as pl
from jax.experimental.pallas import tpu as pltpu

BN_EPS = 1e-4

_K = 3        # conv kernel size (StackEncoder default)
_PAD = 1      # "same" padding for a 3x3 conv
_OFF = 8      # sublane-aligned column offset of the image inside the halo scratch
_LANE = 128   # TPU lane width; channel dim is padded to a multiple of this


def _round_up(x, m):
    return (x + m - 1) // m * m


# ----------------------------------------------------------------------------
# In-kernel helper: 3x3 conv (stride 1) from a zero-haloed VMEM scratch,
# folded-BN bias, ReLU.  One im2col strip + one MXU dot per kernel row.
# ----------------------------------------------------------------------------
def _conv3x3_bn_relu(src_ref, p_ref, w_ref, b_ref, H, W, Cp):
    # src_ref: (H + 2*_PAD, W + 2*_OFF, Cp); image at [_PAD:_PAD+H, _OFF:_OFF+W, :],
    #          zero halo everywhere the taps reach outside the image.
    # p_ref:   (H*W, 3*Cp) im2col scratch (re-filled for each kernel row).
    # w_ref:   (9*Cp, Cp), row index = (kh*3 + kw)*Cp + cin, BN scale pre-folded.
    # b_ref:   (1, Cp) folded BN bias.
    acc = jnp.zeros((H * W, Cp), jnp.float32)
    for kh in range(_K):
        # Pack the three horizontally shifted taps of this kernel row along K.
        for kw in range(_K):
            c0 = _OFF - _PAD + kw
            p_ref[:, kw * Cp:(kw + 1) * Cp] = (
                src_ref[kh:kh + H, c0:c0 + W, :].reshape(H * W, Cp))
        acc = acc + jnp.dot(
            p_ref[...],
            w_ref[kh * _K * Cp:(kh + 1) * _K * Cp, :],
            preferred_element_type=jnp.float32)
    return jnp.maximum(acc + b_ref[...], 0.0)        # (H*W, Cp)


# ----------------------------------------------------------------------------
# Fused StackEncoder kernel: conv-bn-relu -> conv-bn-relu -> 2x2/2 max-pool.
# One batch element per grid step; everything in between stays in VMEM.
# ----------------------------------------------------------------------------
def stack_encoder_kernel(x_ref, w1_ref, b1_ref, w2_ref, b2_ref,
                         y_ref, ys_ref,
                         xpad_ref, hpad_ref, p_ref):
    H, W, Cin = x_ref.shape[1], x_ref.shape[2], x_ref.shape[3]
    Cp = y_ref.shape[2]
    Hp, Wp = H // 2, W // 2

    # Zero the halo scratches every step (cheap; also provides the Cin -> Cp
    # zero channel extension for conv1 and stays correct under megacore
    # batch sharding where each core has its own scratch).
    xpad_ref[...] = jnp.zeros_like(xpad_ref)
    hpad_ref[...] = jnp.zeros_like(hpad_ref)

    # ---- conv1 + BN + ReLU --------------------------------------------------
    xpad_ref[_PAD:_PAD + H, _OFF:_OFF + W, :Cin] = x_ref[0]
    h = _conv3x3_bn_relu(xpad_ref, p_ref, w1_ref, b1_ref, H, W, Cp)

    # ---- conv2 + BN + ReLU (h never leaves VMEM) ----------------------------
    hpad_ref[_PAD:_PAD + H, _OFF:_OFF + W, :] = h.reshape(H, W, Cp)
    y = _conv3x3_bn_relu(hpad_ref, p_ref, w2_ref, b2_ref, H, W, Cp)
    y_ref[0] = y                                   # lane-dense (H*W, Cp) store

    # ---- 2x2 stride-2 max pool on the VMEM-resident y -----------------------
    # y rows are ordered (h, w): horizontally adjacent pixels are adjacent
    # rows.  Select even/odd rows with exact 0/1 matrices on the MXU, then do
    # the vertical reduction with a layout-preserving reshape + elementwise max.
    rows = H * W
    half = rows // 2
    k_idx = jax.lax.broadcasted_iota(jnp.int32, (half, rows), 0)
    r_idx = jax.lax.broadcasted_iota(jnp.int32, (half, rows), 1)
    sel_even = jnp.where(r_idx == 2 * k_idx, 1.0, 0.0).astype(jnp.float32)
    sel_odd = jnp.where(r_idx == 2 * k_idx + 1, 1.0, 0.0).astype(jnp.float32)
    even_w = jnp.dot(sel_even, y, preferred_element_type=jnp.float32)
    odd_w = jnp.dot(sel_odd, y, preferred_element_type=jnp.float32)
    hpool = jnp.maximum(even_w, odd_w)             # (H*Wp, Cp), row = h*Wp + w2
    hp4 = hpool.reshape(Hp, 2, Wp, Cp)
    ys = jnp.maximum(hp4[:, 0], hp4[:, 1])         # (Hp, Wp, Cp)
    ys_ref[0] = ys.reshape(Hp * Wp, Cp)


# ----------------------------------------------------------------------------
# Wrapper: fold BN, pad channels to a lane-dense width, call the fused kernel.
# ----------------------------------------------------------------------------
def stack_encoder_forward(x_nhwc, params):
    N, H, W, Cin = x_nhwc.shape
    KH, KW, _, Cout = params["w1"].shape
    assert (KH, KW) == (_K, _K), "kernel is specialized for 3x3 convs"
    assert H % 2 == 0 and W % 16 == 0, "layout path assumes even H and W % 16 == 0"
    Cp = _round_up(max(Cin, Cout), _LANE)
    Hp, Wp = H // 2, W // 2
    f32 = jnp.float32

    # Fold the BN scale into the conv weights, zero-pad channels to Cp and
    # flatten to the im2col layout (row = (kh*3 + kw)*Cp + cin).
    w1 = (params["w1"] * params["scale1"][None, None, None, :]).astype(f32)
    w2 = (params["w2"] * params["scale2"][None, None, None, :]).astype(f32)
    w1f = jnp.zeros((_K, _K, Cp, Cp), f32).at[:, :, :Cin, :Cout].set(w1)
    w2f = jnp.zeros((_K, _K, Cp, Cp), f32).at[:, :, :Cout, :Cout].set(w2)
    w1f = w1f.reshape(_K * _K * Cp, Cp)
    w2f = w2f.reshape(_K * _K * Cp, Cp)
    b1 = jnp.zeros((1, Cp), f32).at[0, :Cout].set(params["bias1"].astype(f32))
    b2 = jnp.zeros((1, Cp), f32).at[0, :Cout].set(params["bias2"].astype(f32))

    y_flat, ys_flat = pl.pallas_call(
        stack_encoder_kernel,
        out_shape=(jax.ShapeDtypeStruct((N, H * W, Cp), f32),
                   jax.ShapeDtypeStruct((N, Hp * Wp, Cp), f32)),
        grid=(N,),
        in_specs=[
            pl.BlockSpec((1, H, W, Cin), lambda n: (n, 0, 0, 0)),
            pl.BlockSpec((_K * _K * Cp, Cp), lambda n: (0, 0)),
            pl.BlockSpec((1, Cp), lambda n: (0, 0)),
            pl.BlockSpec((_K * _K * Cp, Cp), lambda n: (0, 0)),
            pl.BlockSpec((1, Cp), lambda n: (0, 0)),
        ],
        out_specs=(
            pl.BlockSpec((1, H * W, Cp), lambda n: (n, 0, 0)),
            pl.BlockSpec((1, Hp * Wp, Cp), lambda n: (n, 0, 0)),
        ),
        scratch_shapes=[
            pltpu.VMEM((H + 2 * _PAD, W + 2 * _OFF, Cp), f32),   # zero-haloed x
            pltpu.VMEM((H + 2 * _PAD, W + 2 * _OFF, Cp), f32),   # zero-haloed h
            pltpu.VMEM((H * W, _K * Cp), f32),                   # im2col strip
        ],
        compiler_params=pltpu.CompilerParams(
            dimension_semantics=("parallel",)),
    )(x_nhwc.astype(f32), w1f, b1, w2f, b2)

    y = y_flat.reshape(N, H, W, Cp)[..., :Cout]
    y_small = ys_flat.reshape(N, Hp, Wp, Cp)[..., :Cout]
    return y, y_small


# ----------------------------------------------------------------------------
# Deterministic synthetic parameters (shapes from StackEncoder.__init__)
# ----------------------------------------------------------------------------
def make_params(key, x_channels, y_channels, kernel_size=3):
    ks = jax.random.split(key, 10)

    def fold_bn(gamma, beta, rmean, rvar):
        scale = gamma / jnp.sqrt(rvar + BN_EPS)
        bias = beta - rmean * scale
        return scale.astype(jnp.float32), bias.astype(jnp.float32)

    w1 = 0.1 * jax.random.normal(
        ks[0], (kernel_size, kernel_size, x_channels, y_channels), jnp.float32)
    g1 = 1.0 + 0.1 * jax.random.normal(ks[1], (y_channels,), jnp.float32)
    b1 = 0.1 * jax.random.normal(ks[2], (y_channels,), jnp.float32)
    m1 = 0.05 * jax.random.normal(ks[3], (y_channels,), jnp.float32)
    v1 = 1.0 + 0.1 * jax.random.uniform(ks[4], (y_channels,), jnp.float32)
    scale1, bias1 = fold_bn(g1, b1, m1, v1)

    w2 = 0.1 * jax.random.normal(
        ks[5], (kernel_size, kernel_size, y_channels, y_channels), jnp.float32)
    g2 = 1.0 + 0.1 * jax.random.normal(ks[6], (y_channels,), jnp.float32)
    b2 = 0.1 * jax.random.normal(ks[7], (y_channels,), jnp.float32)
    m2 = 0.05 * jax.random.normal(ks[8], (y_channels,), jnp.float32)
    v2 = 1.0 + 0.1 * jax.random.uniform(ks[9], (y_channels,), jnp.float32)
    scale2, bias2 = fold_bn(g2, b2, m2, v2)

    return dict(w1=w1, scale1=scale1, bias1=bias1,
                w2=w2, scale2=scale2, bias2=bias2)


# ----------------------------------------------------------------------------
# Pure-JAX reference (for correctness check of the Pallas kernel)
# ----------------------------------------------------------------------------
def ref_forward(x_nhwc, params):
    def cbr(x, w, scale, bias):
        h = jax.lax.conv_general_dilated(
            x, w, window_strides=(1, 1), padding="SAME",
            dimension_numbers=("NHWC", "HWIO", "NHWC"))
        h = h * scale[None, None, None, :] + bias[None, None, None, :]
        return jnp.maximum(h, 0.0)

    y = cbr(cbr(x_nhwc, params["w1"], params["scale1"], params["bias1"]),
            params["w2"], params["scale2"], params["bias2"])
    N, H, W, C = y.shape
    y_small = jnp.max(y.reshape(N, H // 2, 2, W // 2, 2, C), axis=(2, 4))
    return y, y_small


if __name__ == "__main__":
    N, H, W = 2, 16, 16
    x_channels, y_channels = 4, 8

    key = jax.random.PRNGKey(0)
    kx, kp = jax.random.split(key)
    # NHWC input (equivalent to a PyTorch NCHW input of shape [2, 4, 16, 16]).
    x = jax.random.normal(kx, (N, H, W, x_channels), jnp.float32)
    params = make_params(kp, x_channels, y_channels)

    y, y_small = stack_encoder_forward(x, params)
    jax.block_until_ready((y, y_small))

    y_ref, y_small_ref = ref_forward(x, params)
    assert y.shape == (N, H, W, y_channels)
    assert y_small.shape == (N, H // 2, W // 2, y_channels)
    np.testing.assert_allclose(np.asarray(y), np.asarray(y_ref),
                               rtol=1e-4, atol=1e-4)
    np.testing.assert_allclose(np.asarray(y_small), np.asarray(y_small_ref),
                               rtol=1e-4, atol=1e-4)
    print("KERNEL_OK")
</pallas_src>

<mosaic_0001>
module attributes {stable_mosaic.version = 11 : i64} {
  func.func @stack_encoder_kernel(%arg0: i32, %arg1: memref<1x16x16x4xf32, #tpu.memory_space<vmem>>, %arg2: memref<1152x128xf32, #tpu.memory_space<vmem>>, %arg3: memref<1x128xf32, #tpu.memory_space<vmem>>, %arg4: memref<1152x128xf32, #tpu.memory_space<vmem>>, %arg5: memref<1x128xf32, #tpu.memory_space<vmem>>, %arg6: memref<1x256x128xf32, #tpu.memory_space<vmem>>, %arg7: memref<1x64x128xf32, #tpu.memory_space<vmem>>, %arg8: memref<18x32x128xf32, #tpu.memory_space<vmem>>, %arg9: memref<18x32x128xf32, #tpu.memory_space<vmem>>, %arg10: memref<256x384xf32, #tpu.memory_space<vmem>>) attributes {dimension_semantics = [#tpu.dimension_semantics<parallel>], iteration_bounds = array<i64: 2>, scalar_prefetch = 0 : i64, scratch_operands = 3 : i64, tpu.core_type = #tpu.core_type<tc>, window_params = [{transform_indices = @transform_0, window_bounds = array<i64: 1, 16, 16, 4>}, {pipeline_mode = #tpu.pipeline_mode<synchronous>, transform_indices = @transform_1, window_bounds = array<i64: 1152, 128>}, {pipeline_mode = #tpu.pipeline_mode<synchronous>, transform_indices = @transform_2, window_bounds = array<i64: 1, 128>}, {pipeline_mode = #tpu.pipeline_mode<synchronous>, transform_indices = @transform_3, window_bounds = array<i64: 1152, 128>}, {pipeline_mode = #tpu.pipeline_mode<synchronous>, transform_indices = @transform_4, window_bounds = array<i64: 1, 128>}, {transform_indices = @transform_5, window_bounds = array<i64: 1, 256, 128>}, {transform_indices = @transform_6, window_bounds = array<i64: 1, 64, 128>}]} {
    %cst = arith.constant 0.000000e+00 : f32
    %0 = vector.broadcast %cst : f32 to vector<18x32x128xf32>
    %c0 = arith.constant 0 : index
    %c0_0 = arith.constant 0 : index
    %c0_1 = arith.constant 0 : index
    %1 = vector.load %arg8[%c0, %c0_0, %c0_1] : memref<18x32x128xf32, #tpu.memory_space<vmem>>, vector<18x32x128xf32>
    tpu.vector_store %arg8[%c0, %c0_0, %c0_1], %0 {strides = array<i32>} : memref<18x32x128xf32, #tpu.memory_space<vmem>>, vector<18x32x128xf32>,
    %cst_2 = arith.constant 0.000000e+00 : f32
    %2 = vector.broadcast %cst_2 : f32 to vector<18x32x128xf32>
    %c0_3 = arith.constant 0 : index
    %c0_4 = arith.constant 0 : index
    %c0_5 = arith.constant 0 : index
    %3 = vector.load %arg9[%c0_3, %c0_4, %c0_5] : memref<18x32x128xf32, #tpu.memory_space<vmem>>, vector<18x32x128xf32>
    tpu.vector_store %arg9[%c0_3, %c0_4, %c0_5], %2 {strides = array<i32>} : memref<18x32x128xf32, #tpu.memory_space<vmem>>, vector<18x32x128xf32>,
    %c0_6 = arith.constant 0 : index
    %c0_7 = arith.constant 0 : index
    %c0_8 = arith.constant 0 : index
    %c0_9 = arith.constant 0 : index
    %4 = vector.load %arg1[%c0_6, %c0_7, %c0_8, %c0_9] : memref<1x16x16x4xf32, #tpu.memory_space<vmem>>, vector<1x16x16x4xf32>
    %5 = vector.shape_cast %4 : vector<1x16x16x4xf32> to vector<16x16x4xf32>
    %c1 = arith.constant 1 : index
    %c8 = arith.constant 8 : index
    %c0_10 = arith.constant 0 : index
    %6 = vector.load %arg8[%c1, %c8, %c0_10] : memref<18x32x128xf32, #tpu.memory_space<vmem>>, vector<16x16x4xf32>
    tpu.vector_store %arg8[%c1, %c8, %c0_10], %5 {strides = array<i32>} : memref<18x32x128xf32, #tpu.memory_space<vmem>>, vector<16x16x4xf32>,
    %cst_11 = arith.constant 0.000000e+00 : f32
    %7 = vector.broadcast %cst_11 : f32 to vector<256x128xf32>
    %c0_12 = arith.constant 0 : index
    %c7 = arith.constant 7 : index
    %c0_13 = arith.constant 0 : index
    %8 = vector.load %arg8[%c0_12, %c7, %c0_13] : memref<18x32x128xf32, #tpu.memory_space<vmem>>, vector<16x16x128xf32>
    %9 = vector.shape_cast %8 : vector<16x16x128xf32> to vector<256x128xf32>
    %c0_14 = arith.constant 0 : index
    %c0_15 = arith.constant 0 : index
    %10 = vector.load %arg10[%c0_14, %c0_15] : memref<256x384xf32, #tpu.memory_space<vmem>>, vector<256x128xf32>
    tpu.vector_store %arg10[%c0_14, %c0_15], %9 {strides = array<i32>} : memref<256x384xf32, #tpu.memory_space<vmem>>, vector<256x128xf32>,
    %c0_16 = arith.constant 0 : index
    %c8_17 = arith.constant 8 : index
    %c0_18 = arith.constant 0 : index
    %11 = vector.load %arg8[%c0_16, %c8_17, %c0_18] : memref<18x32x128xf32, #tpu.memory_space<vmem>>, vector<16x16x128xf32>
    %12 = vector.shape_cast %11 : vector<16x16x128xf32> to vector<256x128xf32>
    %c0_19 = arith.constant 0 : index
    %c128 = arith.constant 128 : index
    %13 = vector.load %arg10[%c0_19, %c128] : memref<256x384xf32, #tpu.memory_space<vmem>>, vector<256x128xf32>
    tpu.vector_store %arg10[%c0_19, %c128], %12 {strides = array<i32>} : memref<256x384xf32, #tpu.memory_space<vmem>>, vector<256x128xf32>,
    %c0_20 = arith.constant 0 : index
    %c9 = arith.constant 9 : index
    %c0_21 = arith.constant 0 : index
    %14 = vector.load %arg8[%c0_20, %c9, %c0_21] : memref<18x32x128xf32, #tpu.memory_space<vmem>>, vector<16x16x128xf32>
    %15 = vector.shape_cast %14 : vector<16x16x128xf32> to vector<256x128xf32>
    %c0_22 = arith.constant 0 : index
    %c256 = arith.constant 256 : index
    %16 = vector.load %arg10[%c0_22, %c256] : memref<256x384xf32, #tpu.memory_space<vmem>>, vector<256x128xf32>
    tpu.vector_store %arg10[%c0_22, %c256], %15 {strides = array<i32>} : memref<256x384xf32, #tpu.memory_space<vmem>>, vector<256x128xf32>,
    %c0_23 = arith.constant 0 : index
    %c0_24 = arith.constant 0 : index
    %17 = vector.load %arg10[%c0_23, %c0_24] : memref<256x384xf32, #tpu.memory_space<vmem>>, vector<256x384xf32>
    %c0_25 = arith.constant 0 : index
    %c0_26 = arith.constant 0 : index
    %18 = vector.load %arg2[%c0_25, %c0_26] : memref<1152x128xf32, #tpu.memory_space<vmem>>, vector<384x128xf32>
    %cst_27 = arith.constant dense<0.000000e+00> : vector<256x128xf32>
    %19 = tpu.matmul %17, %18, %cst_27 {dimension_numbers = #tpu.dot_dimension_numbers<[1], [0], [0], [1], [0, 0, 1, 1], [], []>} : vector<256x384xf32>, vector<384x128xf32>, vector<256x128xf32> -> vector<256x128xf32>
    %20 = arith.addf %7, %19 : vector<256x128xf32>
    %c1_28 = arith.constant 1 : index
    %c7_29 = arith.constant 7 : index
    %c0_30 = arith.constant 0 : index
    %21 = vector.load %arg8[%c1_28, %c7_29, %c0_30] : memref<18x32x128xf32, #tpu.memory_space<vmem>>, vector<16x16x128xf32>
    %22 = vector.shape_cast %21 : vector<16x16x128xf32> to vector<256x128xf32>
    %c0_31 = arith.constant 0 : index
    %c0_32 = arith.constant 0 : index
    %23 = vector.load %arg10[%c0_31, %c0_32] : memref<256x384xf32, #tpu.memory_space<vmem>>, vector<256x128xf32>
    tpu.vector_store %arg10[%c0_31, %c0_32], %22 {strides = array<i32>} : memref<256x384xf32, #tpu.memory_space<vmem>>, vector<256x128xf32>,
    %c1_33 = arith.constant 1 : index
    %c8_34 = arith.constant 8 : index
    %c0_35 = arith.constant 0 : index
    %24 = vector.load %arg8[%c1_33, %c8_34, %c0_35] : memref<18x32x128xf32, #tpu.memory_space<vmem>>, vector<16x16x128xf32>
    %25 = vector.shape_cast %24 : vector<16x16x128xf32> to vector<256x128xf32>
    %c0_36 = arith.constant 0 : index
    %c128_37 = arith.constant 128 : index
    %26 = vector.load %arg10[%c0_36, %c128_37] : memref<256x384xf32, #tpu.memory_space<vmem>>, vector<256x128xf32>
    tpu.vector_store %arg10[%c0_36, %c128_37], %25 {strides = array<i32>} : memref<256x384xf32, #tpu.memory_space<vmem>>, vector<256x128xf32>,
    %c1_38 = arith.constant 1 : index
    %c9_39 = arith.constant 9 : index
    %c0_40 = arith.constant 0 : index
    %27 = vector.load %arg8[%c1_38, %c9_39, %c0_40] : memref<18x32x128xf32, #tpu.memory_space<vmem>>, vector<16x16x128xf32>
    %28 = vector.shape_cast %27 : vector<16x16x128xf32> to vector<256x128xf32>
    %c0_41 = arith.constant 0 : index
    %c256_42 = arith.constant 256 : index
    %29 = vector.load %arg10[%c0_41, %c256_42] : memref<256x384xf32, #tpu.memory_space<vmem>>, vector<256x128xf32>
    tpu.vector_store %arg10[%c0_41, %c256_42], %28 {strides = array<i32>} : memref<256x384xf32, #tpu.memory_space<vmem>>, vector<256x128xf32>,
    %c0_43 = arith.constant 0 : index
    %c0_44 = arith.constant 0 : index
    %30 = vector.load %arg10[%c0_43, %c0_44] : memref<256x384xf32, #tpu.memory_space<vmem>>, vector<256x384xf32>
    %c384 = arith.constant 384 : index
    %c0_45 = arith.constant 0 : index
    %31 = vector.load %arg2[%c384, %c0_45] : memref<1152x128xf32, #tpu.memory_space<vmem>>, vector<384x128xf32>
    %cst_46 = arith.constant dense<0.000000e+00> : vector<256x128xf32>
    %32 = tpu.matmul %30, %31, %cst_46 {dimension_numbers = #tpu.dot_dimension_numbers<[1], [0], [0], [1], [0, 0, 1, 1], [], []>} : vector<256x384xf32>, vector<384x128xf32>, vector<256x128xf32> -> vector<256x128xf32>
    %33 = arith.addf %20, %32 : vector<256x128xf32>
    %c2 = arith.constant 2 : index
    %c7_47 = arith.constant 7 : index
    %c0_48 = arith.constant 0 : index
    %34 = vector.load %arg8[%c2, %c7_47, %c0_48] : memref<18x32x128xf32, #tpu.memory_space<vmem>>, vector<16x16x128xf32>
    %35 = vector.shape_cast %34 : vector<16x16x128xf32> to vector<256x128xf32>
    %c0_49 = arith.constant 0 : index
    %c0_50 = arith.constant 0 : index
    %36 = vector.load %arg10[%c0_49, %c0_50] : memref<256x384xf32, #tpu.memory_space<vmem>>, vector<256x128xf32>
    tpu.vector_store %arg10[%c0_49, %c0_50], %35 {strides = array<i32>} : memref<256x384xf32, #tpu.memory_space<vmem>>, vector<256x128xf32>,
    %c2_51 = arith.constant 2 : index
    %c8_52 = arith.constant 8 : index
    %c0_53 = arith.constant 0 : index
    %37 = vector.load %arg8[%c2_51, %c8_52, %c0_53] : memref<18x32x128xf32, #tpu.memory_space<vmem>>, vector<16x16x128xf32>
    %38 = vector.shape_cast %37 : vector<16x16x128xf32> to vector<256x128xf32>
    %c0_54 = arith.constant 0 : index
    %c128_55 = arith.constant 128 : index
    %39 = vector.load %arg10[%c0_54, %c128_55] : memref<256x384xf32, #tpu.memory_space<vmem>>, vector<256x128xf32>
    tpu.vector_store %arg10[%c0_54, %c128_55], %38 {strides = array<i32>} : memref<256x384xf32, #tpu.memory_space<vmem>>, vector<256x128xf32>,
    %c2_56 = arith.constant 2 : index
    %c9_57 = arith.constant 9 : index
    %c0_58 = arith.constant 0 : index
    %40 = vector.load %arg8[%c2_56, %c9_57, %c0_58] : memref<18x32x128xf32, #tpu.memory_space<vmem>>, vector<16x16x128xf32>
    %41 = vector.shape_cast %40 : vector<16x16x128xf32> to vector<256x128xf32>
    %c0_59 = arith.constant 0 : index
    %c256_60 = arith.constant 256 : index
    %42 = vector.load %arg10[%c0_59, %c256_60] : memref<256x384xf32, #tpu.memory_space<vmem>>, vector<256x128xf32>
    tpu.vector_store %arg10[%c0_59, %c256_60], %41 {strides = array<i32>} : memref<256x384xf32, #tpu.memory_space<vmem>>, vector<256x128xf32>,
    %c0_61 = arith.constant 0 : index
    %c0_62 = arith.constant 0 : index
    %43 = vector.load %arg10[%c0_61, %c0_62] : memref<256x384xf32, #tpu.memory_space<vmem>>, vector<256x384xf32>
    %c768 = arith.constant 768 : index
    %c0_63 = arith.constant 0 : index
    %44 = vector.load %arg2[%c768, %c0_63] : memref<1152x128xf32, #tpu.memory_space<vmem>>, vector<384x128xf32>
    %cst_64 = arith.constant dense<0.000000e+00> : vector<256x128xf32>
    %45 = tpu.matmul %43, %44, %cst_64 {dimension_numbers = #tpu.dot_dimension_numbers<[1], [0], [0], [1], [0, 0, 1, 1], [], []>} : vector<256x384xf32>, vector<384x128xf32>, vector<256x128xf32> -> vector<256x128xf32>
    %46 = arith.addf %33, %45 : vector<256x128xf32>
    %c0_65 = arith.constant 0 : index
    %c0_66 = arith.constant 0 : index
    %47 = vector.load %arg3[%c0_65, %c0_66] : memref<1x128xf32, #tpu.memory_space<vmem>>, vector<1x128xf32>
    %48 = vector.broadcast %47 : vector<1x128xf32> to vector<256x128xf32>
    %49 = arith.addf %46, %48 : vector<256x128xf32>
    %cst_67 = arith.constant 0.000000e+00 : f32
    %50 = vector.broadcast %cst_67 : f32 to vector<256x128xf32>
    %51 = arith.maximumf %49, %50 : vector<256x128xf32>
    %52 = vector.shape_cast %51 : vector<256x128xf32> to vector<16x16x128xf32>
    %c1_68 = arith.constant 1 : index
    %c8_69 = arith.constant 8 : index
    %c0_70 = arith.constant 0 : index
    %53 = vector.load %arg9[%c1_68, %c8_69, %c0_70] : memref<18x32x128xf32, #tpu.memory_space<vmem>>, vector<16x16x128xf32>
    tpu.vector_store %arg9[%c1_68, %c8_69, %c0_70], %52 {strides = array<i32>} : memref<18x32x128xf32, #tpu.memory_space<vmem>>, vector<16x16x128xf32>,
    %cst_71 = arith.constant 0.000000e+00 : f32
    %54 = vector.broadcast %cst_71 : f32 to vector<256x128xf32>
    %c0_72 = arith.constant 0 : index
    %c7_73 = arith.constant 7 : index
    %c0_74 = arith.constant 0 : index
    %55 = vector.load %arg9[%c0_72, %c7_73, %c0_74] : memref<18x32x128xf32, #tpu.memory_space<vmem>>, vector<16x16x128xf32>
    %56 = vector.shape_cast %55 : vector<16x16x128xf32> to vector<256x128xf32>
    %c0_75 = arith.constant 0 : index
    %c0_76 = arith.constant 0 : index
    %57 = vector.load %arg10[%c0_75, %c0_76] : memref<256x384xf32, #tpu.memory_space<vmem>>, vector<256x128xf32>
    tpu.vector_store %arg10[%c0_75, %c0_76], %56 {strides = array<i32>} : memref<256x384xf32, #tpu.memory_space<vmem>>, vector<256x128xf32>,
    %c0_77 = arith.constant 0 : index
    %c8_78 = arith.constant 8 : index
    %c0_79 = arith.constant 0 : index
    %58 = vector.load %arg9[%c0_77, %c8_78, %c0_79] : memref<18x32x128xf32, #tpu.memory_space<vmem>>, vector<16x16x128xf32>
    %59 = vector.shape_cast %58 : vector<16x16x128xf32> to vector<256x128xf32>
    %c0_80 = arith.constant 0 : index
    %c128_81 = arith.constant 128 : index
    %60 = vector.load %arg10[%c0_80, %c128_81] : memref<256x384xf32, #tpu.memory_space<vmem>>, vector<256x128xf32>
    tpu.vector_store %arg10[%c0_80, %c128_81], %59 {strides = array<i32>} : memref<256x384xf32, #tpu.memory_space<vmem>>, vector<256x128xf32>,
    %c0_82 = arith.constant 0 : index
    %c9_83 = arith.constant 9 : index
    %c0_84 = arith.constant 0 : index
    %61 = vector.load %arg9[%c0_82, %c9_83, %c0_84] : memref<18x32x128xf32, #tpu.memory_space<vmem>>, vector<16x16x128xf32>
    %62 = vector.shape_cast %61 : vector<16x16x128xf32> to vector<256x128xf32>
    %c0_85 = arith.constant 0 : index
    %c256_86 = arith.constant 256 : index
    %63 = vector.load %arg10[%c0_85, %c256_86] : memref<256x384xf32, #tpu.memory_space<vmem>>, vector<256x128xf32>
    tpu.vector_store %arg10[%c0_85, %c256_86], %62 {strides = array<i32>} : memref<256x384xf32, #tpu.memory_space<vmem>>, vector<256x128xf32>,
    %c0_87 = arith.constant 0 : index
    %c0_88 = arith.constant 0 : index
    %64 = vector.load %arg10[%c0_87, %c0_88] : memref<256x384xf32, #tpu.memory_space<vmem>>, vector<256x384xf32>
    %c0_89 = arith.constant 0 : index
    %c0_90 = arith.constant 0 : index
    %65 = vector.load %arg4[%c0_89, %c0_90] : memref<1152x128xf32, #tpu.memory_space<vmem>>, vector<384x128xf32>
    %cst_91 = arith.constant dense<0.000000e+00> : vector<256x128xf32>
    %66 = tpu.matmul %64, %65, %cst_91 {dimension_numbers = #tpu.dot_dimension_numbers<[1], [0], [0], [1], [0, 0, 1, 1], [], []>} : vector<256x384xf32>, vector<384x128xf32>, vector<256x128xf32> -> vector<256x128xf32>
    %67 = arith.addf %54, %66 : vector<256x128xf32>
    %c1_92 = arith.constant 1 : index
    %c7_93 = arith.constant 7 : index
    %c0_94 = arith.constant 0 : index
    %68 = vector.load %arg9[%c1_92, %c7_93, %c0_94] : memref<18x32x128xf32, #tpu.memory_space<vmem>>, vector<16x16x128xf32>
    %69 = vector.shape_cast %68 : vector<16x16x128xf32> to vector<256x128xf32>
    %c0_95 = arith.constant 0 : index
    %c0_96 = arith.constant 0 : index
    %70 = vector.load %arg10[%c0_95, %c0_96] : memref<256x384xf32, #tpu.memory_space<vmem>>, vector<256x128xf32>
    tpu.vector_store %arg10[%c0_95, %c0_96], %69 {strides = array<i32>} : memref<256x384xf32, #tpu.memory_space<vmem>>, vector<256x128xf32>,
    %c1_97 = arith.constant 1 : index
    %c8_98 = arith.constant 8 : index
    %c0_99 = arith.constant 0 : index
    %71 = vector.load %arg9[%c1_97, %c8_98, %c0_99] : memref<18x32x128xf32, #tpu.memory_space<vmem>>, vector<16x16x128xf32>
    %72 = vector.shape_cast %71 : vector<16x16x128xf32> to vector<256x128xf32>
    %c0_100 = arith.constant 0 : index
    %c128_101 = arith.constant 128 : index
    %73 = vector.load %arg10[%c0_100, %c128_101] : memref<256x384xf32, #tpu.memory_space<vmem>>, vector<256x128xf32>
    tpu.vector_store %arg10[%c0_100, %c128_101], %72 {strides = array<i32>} : memref<256x384xf32, #tpu.memory_space<vmem>>, vector<256x128xf32>,
    %c1_102 = arith.constant 1 : index
    %c9_103 = arith.constant 9 : index
    %c0_104 = arith.constant 0 : index
    %74 = vector.load %arg9[%c1_102, %c9_103, %c0_104] : memref<18x32x128xf32, #tpu.memory_space<vmem>>, vector<16x16x128xf32>
    %75 = vector.shape_cast %74 : vector<16x16x128xf32> to vector<256x128xf32>
    %c0_105 = arith.constant 0 : index
    %c256_106 = arith.constant 256 : index
    %76 = vector.load %arg10[%c0_105, %c256_106] : memref<256x384xf32, #tpu.memory_space<vmem>>, vector<256x128xf32>
    tpu.vector_store %arg10[%c0_105, %c256_106], %75 {strides = array<i32>} : memref<256x384xf32, #tpu.memory_space<vmem>>, vector<256x128xf32>,
    %c0_107 = arith.constant 0 : index
    %c0_108 = arith.constant 0 : index
    %77 = vector.load %arg10[%c0_107, %c0_108] : memref<256x384xf32, #tpu.memory_space<vmem>>, vector<256x384xf32>
    %c384_109 = arith.constant 384 : index
    %c0_110 = arith.constant 0 : index
    %78 = vector.load %arg4[%c384_109, %c0_110] : memref<1152x128xf32, #tpu.memory_space<vmem>>, vector<384x128xf32>
    %cst_111 = arith.constant dense<0.000000e+00> : vector<256x128xf32>
    %79 = tpu.matmul %77, %78, %cst_111 {dimension_numbers = #tpu.dot_dimension_numbers<[1], [0], [0], [1], [0, 0, 1, 1], [], []>} : vector<256x384xf32>, vector<384x128xf32>, vector<256x128xf32> -> vector<256x128xf32>
    %80 = arith.addf %67, %79 : vector<256x128xf32>
    %c2_112 = arith.constant 2 : index
    %c7_113 = arith.constant 7 : index
    %c0_114 = arith.constant 0 : index
    %81 = vector.load %arg9[%c2_112, %c7_113, %c0_114] : memref<18x32x128xf32, #tpu.memory_space<vmem>>, vector<16x16x128xf32>
    %82 = vector.shape_cast %81 : vector<16x16x128xf32> to vector<256x128xf32>
    %c0_115 = arith.constant 0 : index
    %c0_116 = arith.constant 0 : index
    %83 = vector.load %arg10[%c0_115, %c0_116] : memref<256x384xf32, #tpu.memory_space<vmem>>, vector<256x128xf32>
    tpu.vector_store %arg10[%c0_115, %c0_116], %82 {strides = array<i32>} : memref<256x384xf32, #tpu.memory_space<vmem>>, vector<256x128xf32>,
    %c2_117 = arith.constant 2 : index
    %c8_118 = arith.constant 8 : index
    %c0_119 = arith.constant 0 : index
    %84 = vector.load %arg9[%c2_117, %c8_118, %c0_119] : memref<18x32x128xf32, #tpu.memory_space<vmem>>, vector<16x16x128xf32>
    %85 = vector.shape_cast %84 : vector<16x16x128xf32> to vector<256x128xf32>
    %c0_120 = arith.constant 0 : index
    %c128_121 = arith.constant 128 : index
    %86 = vector.load %arg10[%c0_120, %c128_121] : memref<256x384xf32, #tpu.memory_space<vmem>>, vector<256x128xf32>
    tpu.vector_store %arg10[%c0_120, %c128_121], %85 {strides = array<i32>} : memref<256x384xf32, #tpu.memory_space<vmem>>, vector<256x128xf32>,
    %c2_122 = arith.constant 2 : index
    %c9_123 = arith.constant 9 : index
    %c0_124 = arith.constant 0 : index
    %87 = vector.load %arg9[%c2_122, %c9_123, %c0_124] : memref<18x32x128xf32, #tpu.memory_space<vmem>>, vector<16x16x128xf32>
    %88 = vector.shape_cast %87 : vector<16x16x128xf32> to vector<256x128xf32>
    %c0_125 = arith.constant 0 : index
    %c256_126 = arith.constant 256 : index
    %89 = vector.load %arg10[%c0_125, %c256_126] : memref<256x384xf32, #tpu.memory_space<vmem>>, vector<256x128xf32>
    tpu.vector_store %arg10[%c0_125, %c256_126], %88 {strides = array<i32>} : memref<256x384xf32, #tpu.memory_space<vmem>>, vector<256x128xf32>,
    %c0_127 = arith.constant 0 : index
    %c0_128 = arith.constant 0 : index
    %90 = vector.load %arg10[%c0_127, %c0_128] : memref<256x384xf32, #tpu.memory_space<vmem>>, vector<256x384xf32>
    %c768_129 = arith.constant 768 : index
    %c0_130 = arith.constant 0 : index
    %91 = vector.load %arg4[%c768_129, %c0_130] : memref<1152x128xf32, #tpu.memory_space<vmem>>, vector<384x128xf32>
    %cst_131 = arith.constant dense<0.000000e+00> : vector<256x128xf32>
    %92 = tpu.matmul %90, %91, %cst_131 {dimension_numbers = #tpu.dot_dimension_numbers<[1], [0], [0], [1], [0, 0, 1, 1], [], []>} : vector<256x384xf32>, vector<384x128xf32>, vector<256x128xf32> -> vector<256x128xf32>
    %93 = arith.addf %80, %92 : vector<256x128xf32>
    %c0_132 = arith.constant 0 : index
    %c0_133 = arith.constant 0 : index
    %94 = vector.load %arg5[%c0_132, %c0_133] : memref<1x128xf32, #tpu.memory_space<vmem>>, vector<1x128xf32>
    %95 = vector.broadcast %94 : vector<1x128xf32> to vector<256x128xf32>
    %96 = arith.addf %93, %95 : vector<256x128xf32>
    %cst_134 = arith.constant 0.000000e+00 : f32
    %97 = vector.broadcast %cst_134 : f32 to vector<256x128xf32>
    %98 = arith.maximumf %96, %97 : vector<256x128xf32>
    %c0_135 = arith.constant 0 : index
    %c0_136 = arith.constant 0 : index
    %c0_137 = arith.constant 0 : index
    %99 = vector.load %arg6[%c0_135, %c0_136, %c0_137] : memref<1x256x128xf32, #tpu.memory_space<vmem>>, vector<1x256x128xf32>
    %100 = vector.shape_cast %99 : vector<1x256x128xf32> to vector<256x128xf32>
    %101 = vector.shape_cast %98 : vector<256x128xf32> to vector<1x256x128xf32>
    tpu.vector_store %arg6[%c0_135, %c0_136, %c0_137], %101 {strides = array<i32>} : memref<1x256x128xf32, #tpu.memory_space<vmem>>, vector<1x256x128xf32>,
    %102 = tpu.iota {dimensions = array<i32: 0>} : vector<128x256xi32>
    %103 = tpu.iota {dimensions = array<i32: 1>} : vector<128x256xi32>
    %c2_i32 = arith.constant 2 : i32
    %104 = vector.broadcast %c2_i32 : i32 to vector<128x256xi32>
    %105 = arith.muli %104, %102 : vector<128x256xi32>
    %106 = arith.cmpi eq, %103, %105 : vector<128x256xi32>
    %cst_138 = arith.constant 1.000000e+00 : f32
    %cst_139 = arith.constant 0.000000e+00 : f32
    %107 = vector.broadcast %cst_138 : f32 to vector<128x256xf32>
    %108 = vector.broadcast %cst_139 : f32 to vector<128x256xf32>
    %109 = arith.select %106, %107, %108 : vector<128x256xi1>, vector<128x256xf32>
    %c2_i32_140 = arith.constant 2 : i32
    %110 = vector.broadcast %c2_i32_140 : i32 to vector<128x256xi32>
    %111 = arith.muli %110, %102 : vector<128x256xi32>
    %c1_i32 = arith.constant 1 : i32
    %112 = vector.broadcast %c1_i32 : i32 to vector<128x256xi32>
    %113 = arith.addi %111, %112 : vector<128x256xi32>
    %114 = arith.cmpi eq, %103, %113 : vector<128x256xi32>
    %cst_141 = arith.constant 1.000000e+00 : f32
    %cst_142 = arith.constant 0.000000e+00 : f32
    %115 = vector.broadcast %cst_141 : f32 to vector<128x256xf32>
    %116 = vector.broadcast %cst_142 : f32 to vector<128x256xf32>
    %117 = arith.select %114, %115, %116 : vector<128x256xi1>, vector<128x256xf32>
    %cst_143 = arith.constant dense<0.000000e+00> : vector<128x128xf32>
    %118 = tpu.matmul %109, %98, %cst_143 {dimension_numbers = #tpu.dot_dimension_numbers<[1], [0], [0], [1], [0, 0, 1, 1], [], []>} : vector<128x256xf32>, vector<256x128xf32>, vector<128x128xf32> -> vector<128x128xf32>
    %cst_144 = arith.constant dense<0.000000e+00> : vector<128x128xf32>
    %119 = tpu.matmul %117, %98, %cst_144 {dimension_numbers = #tpu.dot_dimension_numbers<[1], [0], [0], [1], [0, 0, 1, 1], [], []>} : vector<128x256xf32>, vector<256x128xf32>, vector<128x128xf32> -> vector<128x128xf32>
    %120 = arith.maximumf %118, %119 : vector<128x128xf32>
    %121 = vector.shape_cast %120 : vector<128x128xf32> to vector<8x2x8x128xf32>
    %122 = vector.extract_strided_slice %121 {offsets = [0, 0, 0, 0], sizes = [8, 1, 8, 128], strides = [1, 1, 1, 1]} : vector<8x2x8x128xf32> to vector<8x1x8x128xf32>
    %123 = vector.shape_cast %122 : vector<8x1x8x128xf32> to vector<8x8x128xf32>
    %124 = vector.extract_strided_slice %121 {offsets = [0, 1, 0, 0], sizes = [8, 1, 8, 128], strides = [1, 1, 1, 1]} : vector<8x2x8x128xf32> to vector<8x1x8x128xf32>
    %125 = vector.shape_cast %124 : vector<8x1x8x128xf32> to vector<8x8x128xf32>
    %126 = arith.maximumf %123, %125 : vector<8x8x128xf32>
    %127 = vector.shape_cast %126 : vector<8x8x128xf32> to vector<64x128xf32>
    %c0_145 = arith.constant 0 : index
    %c0_146 = arith.constant 0 : index
    %c0_147 = arith.constant 0 : index
    %128 = vector.load %arg7[%c0_145, %c0_146, %c0_147] : memref<1x64x128xf32, #tpu.memory_space<vmem>>, vector<1x64x128xf32>
    %129 = vector.shape_cast %128 : vector<1x64x128xf32> to vector<64x128xf32>
    %130 = vector.shape_cast %127 : vector<64x128xf32> to vector<1x64x128xf32>
    tpu.vector_store %arg7[%c0_145, %c0_146, %c0_147], %130 {strides = array<i32>} : memref<1x64x128xf32, #tpu.memory_space<vmem>>, vector<1x64x128xf32>,
    return
  }
  func.func @transform_0(%arg0: i32) -> (i32, i32, i32, i32) {
    %c0_i32 = arith.constant 0 : i32
    %c0_i32_0 = arith.constant 0 : i32
    %c0_i32_1 = arith.constant 0 : i32
    %c0_i32_2 = arith.constant 0 : i32
    return %arg0, %c0_i32, %c0_i32_0, %c0_i32_1 : i32, i32, i32, i32
  }
  func.func @transform_1(%arg0: i32) -> (i32, i32) {
    %c0_i32 = arith.constant 0 : i32
    %c0_i32_0 = arith.constant 0 : i32
    %c0_i32_1 = arith.constant 0 : i32
    return %c0_i32, %c0_i32_0 : i32, i32
  }
  func.func @transform_2(%arg0: i32) -> (i32, i32) {
    %c0_i32 = arith.constant 0 : i32
    %c0_i32_0 = arith.constant 0 : i32
    %c0_i32_1 = arith.constant 0 : i32
    return %c0_i32, %c0_i32_0 : i32, i32
  }
  func.func @transform_3(%arg0: i32) -> (i32, i32) {
    %c0_i32 = arith.constant 0 : i32
    %c0_i32_0 = arith.constant 0 : i32
    %c0_i32_1 = arith.constant 0 : i32
    return %c0_i32, %c0_i32_0 : i32, i32
  }
  func.func @transform_4(%arg0: i32) -> (i32, i32) {
    %c0_i32 = arith.constant 0 : i32
    %c0_i32_0 = arith.constant 0 : i32
    %c0_i32_1 = arith.constant 0 : i32
    return %c0_i32, %c0_i32_0 : i32, i32
  }
  func.func @transform_5(%arg0: i32) -> (i32, i32, i32) {
    %c0_i32 = arith.constant 0 : i32
    %c0_i32_0 = arith.constant 0 : i32
    %c0_i32_1 = arith.constant 0 : i32
    return %arg0, %c0_i32, %c0_i32_0 : i32, i32, i32
  }
  func.func @transform_6(%arg0: i32) -> (i32, i32, i32) {
    %c0_i32 = arith.constant 0 : i32
    %c0_i32_0 = arith.constant 0 : i32
    %c0_i32_1 = arith.constant 0 : i32
    return %arg0, %c0_i32, %c0_i32_0 : i32, i32, i32
  }
}

</mosaic_0001>

<llo_original>
// kernel: tpu_custom_call.1
$region0: #{tpu_custom_call.1}
  #allocation0 [shape = 'u32[]', space=smem, size = 0x4, offset = 0x4, fixed_abs, tag = 'smem constant byte address 0x4 - core index']
  #allocation1 [shape = 'u32[72,128]{1,0:T(1,128)}', space=vmem, size = 0x9000, scoped, tag = 'internal scratch']
  #allocation2 [shape = 'f32[18,32,128]{2,1,0:T(8,128)}', space=vmem, size = 0x48000, scoped, tag = 'scratch operand']
  #allocation3 [shape = 'f32[18,32,128]{2,1,0:T(8,128)}', space=vmem, size = 0x48000, scoped, tag = 'scratch operand']
  #allocation4 [shape = 'f32[256,384]{1,0:T(8,128)}', space=vmem, size = 0x60000, scoped, tag = 'scratch operand']
  %s0 = inlined_call_operand.vmem [shape: f32[2,16,16,4], index: 0, kind: input, shape index: {}]
  %s1 = inlined_call_operand.hbm [shape: f32[1152,128], index: 1, kind: input, shape index: {}]
  %s2 = inlined_call_operand.vmem [shape: f32[1,128], index: 2, kind: input, shape index: {}]
  %s3 = inlined_call_operand.hbm [shape: f32[1152,128], index: 3, kind: input, shape index: {}]
  %s4 = inlined_call_operand.vmem [shape: f32[1,128], index: 4, kind: input, shape index: {}]
  %s5 = inlined_call_operand.hbm [shape: f32[2,256,128], index: 5, kind: output, shape index: {0}]
  %s6 = inlined_call_operand.hbm [shape: f32[2,64,128], index: 6, kind: output, shape index: {1}]
  %7 = xla_tuple %s5, %s6
  %s8 = sld [smem:[#allocation0]]
  $region69: #{tpu_custom_call.1} parent=0
    _
  %s10 = ssub.s32 1, %s8
  %s11 = scalar_select 0, %s10, %s8
  $region1: #{tpu_custom_call.1} parent=0
    #allocation5 [shape = 'u8[589824]{0}', space=vmem, size = 0x90000, scoped, tag = 'input window, operand 1, single buffered']
    #allocation6 [shape = 's32[2]{0}', space=sflag, size = 0x8, scoped, tag = 'scoped memory for tpu_custom_call.1']
    #allocation7 [shape = 's32[2]{0}', space=sflag, size = 0x8, scoped, tag = 'scoped memory for tpu_custom_call.1']
    #allocation8 [shape = 'u8[589824]{0}', space=vmem, size = 0x90000, scoped, tag = 'input window, operand 3, single buffered']
    #allocation9 [shape = 's32[1]{0}', space=sflag, size = 0x4, scoped, tag = 'scoped memory for tpu_custom_call.1']
    #allocation10 [shape = 'u8[262144]{0}', space=vmem, size = 0x40000, scoped, tag = 'output window, operand 0']
    #allocation11 [shape = 'u8[65536]{0}', space=vmem, size = 0x10000, scoped, tag = 'output window, operand 1']
    #allocation12 [shape = 's32[2]{0}', space=sflag, size = 0x8, scoped, tag = 'scoped memory for tpu_custom_call.1']
    %12 = vsyncpa [#allocation6], 0
    %13 = vsyncpa [#allocation9], 0
    %14 = vsyncpa [#allocation7], 0
    %s15 = scalar_lea.sflag [#allocation7], 1
    %16 = vsyncpa %s15, 0
    %17 = vsyncpa [#allocation12], 0
    %s18 = scalar_lea.sflag [#allocation12], 1
    %19 = vsyncpa %s18, 0
    loop: start=0, step=1, limit=4
    $region2: #{tpu_custom_call.1} parent=1 // loop_pre_header
      _
    $region3: #{tpu_custom_call.1} parent=1 // loop_header
      %s21 = sphi 0, %s25
      %p22 = scmp.ge.s32.totalorder %s21, 4
      %s31 = sphi 0, %s33
      %s34 = sphi 0, %s31
      %s35 = sphi 0, %s34
      %s51 = sphi 0, %s35
      %s55 = sphi 0, %s55
      %s57 = sphi 0, %s55
      %s58 = sphi 0, %s57
      %s72 = sphi 0, %s58
      %s76 = sphi 0, %s76
      %s78 = sphi 0, %s76
      %s79 = sphi 0, %s78
      %s93 = sphi 0, %s79
      %s97 = sphi 0, %s97
      %s99 = sphi 0, %s97
      %s100 = sphi 0, %s99
      %s114 = sphi 0, %s100
      %s118 = sphi 0, %s118
      %s120 = sphi 0, %s118
      %s121 = sphi 0, %s120
      %s135 = sphi 0, %s121
      %s141 = sphi 0, %s143
      %s144 = sphi 0, %s141
      %s145 = sphi 0, %s144
      %s161 = sphi 0, %s145
      %s167 = sphi 0, %s169
      %s170 = sphi 0, %s167
      %s171 = sphi 0, %s170
      %s187 = sphi 0, %s171
    $region4: #{tpu_custom_call.1} parent=1 // loop_header_branch
      %24 = sbr.rel (%p22) target = $region8
    $region5: #{tpu_custom_call.1} parent=1 // loop_body
      %s26 = ssub.s32 %s21, 1
      %s27 = ssub.s32 %s21, 2
      %s28 = sadd.s32 %s21, 1
      %s29 = ssub.s32 %s21, %s28
      %p30 = scmp.eq.s32.totalorder %s29, 0
      %s32 = sadd.s32 %s31, 1
      %s33 = scalar_select %p30, %s31, %s32
      %p36 = pneg %p30
      %p37 = scmp.eq.s32.totalorder %s21, 1
      %p38 = por %p36, %p37
      %p39 = scmp.ne.s32.totalorder %s31, %s34
      %p40 = scmp.eq.s32.totalorder %s21, 0
      %p41 = por %p39, %p40
      %p42 = scmp.ne.s32.totalorder %s31, %s34
      %p43 = scmp.eq.s32.totalorder %s26, 1
      %p44 = por %p42, %p43
      %p45 = scmp.ne.s32.totalorder %s34, %s35
      %p46 = scmp.eq.s32.totalorder %s26, 0
      %p47 = por %p45, %p46
      %p48 = scmp.ne.s32.totalorder %s34, %s35
      %p49 = scmp.eq.s32.totalorder %s27, 1
      %p50 = por %p48, %p49
      %p52 = scmp.ne.s32.totalorder %s35, %s51
      %p53 = scmp.eq.s32.totalorder %s27, 0
      %p54 = por %p52, %p53
      %s56 = sadd.s32 %s55, 1
      %p59 = scmp.eq.s32.totalorder %s21, 1
      %p60 = scmp.ne.s32.totalorder %s55, %s57
      %p61 = scmp.eq.s32.totalorder %s21, 0
      %p62 = por %p60, %p61
      %p63 = scmp.ne.s32.totalorder %s55, %s57
      %p64 = scmp.eq.s32.totalorder %s26, 1
      %p65 = por %p63, %p64
      %p66 = scmp.ne.s32.totalorder %s57, %s58
      %p67 = scmp.eq.s32.totalorder %s26, 0
      %p68 = por %p66, %p67
      %p69 = scmp.ne.s32.totalorder %s57, %s58
      %p70 = scmp.eq.s32.totalorder %s27, 1
      %p71 = por %p69, %p70
      %p73 = scmp.ne.s32.totalorder %s58, %s72
      %p74 = scmp.eq.s32.totalorder %s27, 0
      %p75 = por %p73, %p74
      %s77 = sadd.s32 %s76, 1
      %p80 = scmp.eq.s32.totalorder %s21, 1
      %p81 = scmp.ne.s32.totalorder %s76, %s78
      %p82 = scmp.eq.s32.totalorder %s21, 0
      %p83 = por %p81, %p82
      %p84 = scmp.ne.s32.totalorder %s76, %s78
      %p85 = scmp.eq.s32.totalorder %s26, 1
      %p86 = por %p84, %p85
      %p87 = scmp.ne.s32.totalorder %s78, %s79
      %p88 = scmp.eq.s32.totalorder %s26, 0
      %p89 = por %p87, %p88
      %p90 = scmp.ne.s32.totalorder %s78, %s79
      %p91 = scmp.eq.s32.totalorder %s27, 1
      %p92 = por %p90, %p91
      %p94 = scmp.ne.s32.totalorder %s79, %s93
      %p95 = scmp.eq.s32.totalorder %s27, 0
      %p96 = por %p94, %p95
      %s98 = sadd.s32 %s97, 1
      %p101 = scmp.eq.s32.totalorder %s21, 1
      %p102 = scmp.ne.s32.totalorder %s97, %s99
      %p103 = scmp.eq.s32.totalorder %s21, 0
      %p104 = por %p102, %p103
      %p105 = scmp.ne.s32.totalorder %s97, %s99
      %p106 = scmp.eq.s32.totalorder %s26, 1
      %p107 = por %p105, %p106
      %p108 = scmp.ne.s32.totalorder %s99, %s100
      %p109 = scmp.eq.s32.totalorder %s26, 0
      %p110 = por %p108, %p109
      %p111 = scmp.ne.s32.totalorder %s99, %s100
      %p112 = scmp.eq.s32.totalorder %s27, 1
      %p113 = por %p111, %p112
      %p115 = scmp.ne.s32.totalorder %s100, %s114
      %p116 = scmp.eq.s32.totalorder %s27, 0
      %p117 = por %p115, %p116
      %s119 = sadd.s32 %s118, 1
      %p122 = scmp.eq.s32.totalorder %s21, 1
      %p123 = scmp.ne.s32.totalorder %s118, %s120
      %p124 = scmp.eq.s32.totalorder %s21, 0
      %p125 = por %p123, %p124
      %p126 = scmp.ne.s32.totalorder %s118, %s120
      %p127 = scmp.eq.s32.totalorder %s26, 1
      %p128 = por %p126, %p127
      %p129 = scmp.ne.s32.totalorder %s120, %s121
      %p130 = scmp.eq.s32.totalorder %s26, 0
      %p131 = por %p129, %p130
      %p132 = scmp.ne.s32.totalorder %s120, %s121
      %p133 = scmp.eq.s32.totalorder %s27, 1
      %p134 = por %p132, %p133
      %p136 = scmp.ne.s32.totalorder %s121, %s135
      %p137 = scmp.eq.s32.totalorder %s27, 0
      %p138 = por %p136, %p137
      %s139 = ssub.s32 %s21, %s28
      %p140 = scmp.eq.s32.totalorder %s139, 0
      %s142 = sadd.s32 %s141, 1
      %s143 = scalar_select %p140, %s141, %s142
      %p146 = pneg %p140
      %p147 = scmp.eq.s32.totalorder %s21, 1
      %p148 = por %p146, %p147
      %p149 = scmp.ne.s32.totalorder %s141, %s144
      %p150 = scmp.eq.s32.totalorder %s21, 0
      %p151 = por %p149, %p150
      %p152 = scmp.ne.s32.totalorder %s141, %s144
      %p153 = scmp.eq.s32.totalorder %s26, 1
      %p154 = por %p152, %p153
      %p155 = scmp.ne.s32.totalorder %s144, %s145
      %p156 = scmp.eq.s32.totalorder %s26, 0
      %p157 = por %p155, %p156
      %p158 = scmp.ne.s32.totalorder %s144, %s145
      %p159 = scmp.eq.s32.totalorder %s27, 1
      %p160 = por %p158, %p159
      %p162 = scmp.ne.s32.totalorder %s145, %s161
      %p163 = scmp.eq.s32.totalorder %s27, 0
      %p164 = por %p162, %p163
      %s165 = ssub.s32 %s21, %s28
      %p166 = scmp.eq.s32.totalorder %s165, 0
      %s168 = sadd.s32 %s167, 1
      %s169 = scalar_select %p166, %s167, %s168
      %p172 = pneg %p166
      %p173 = scmp.eq.s32.totalorder %s21, 1
      %p174 = por %p172, %p173
      %p175 = scmp.ne.s32.totalorder %s167, %s170
      %p176 = scmp.eq.s32.totalorder %s21, 0
      %p177 = por %p175, %p176
      %p178 = scmp.ne.s32.totalorder %s167, %s170
      %p179 = scmp.eq.s32.totalorder %s26, 1
      %p180 = por %p178, %p179
      %p181 = scmp.ne.s32.totalorder %s170, %s171
      %p182 = scmp.eq.s32.totalorder %s26, 0
      %p183 = por %p181, %p182
      %p184 = scmp.ne.s32.totalorder %s170, %s171
      %p185 = scmp.eq.s32.totalorder %s27, 1
      %p186 = por %p184, %p185
      %p188 = scmp.ne.s32.totalorder %s171, %s187
      %p189 = scmp.eq.s32.totalorder %s27, 0
      %p190 = por %p188, %p189
      %p191 = scmp.le.s32.totalorder 1, %s21
      %p192 = scmp.lt.s32.totalorder %s21, 3
      %p193 = pnand %p191, %p192
      %p194 = pneg %p193
      // Predicated region
      $region9: #{tpu_custom_call.1} parent=5 // pred_check
        _
      $region10: #{tpu_custom_call.1} parent=5 // pred_check_branch
        %196 = sbr.rel (%p193) target = $region12
      $region11: #{tpu_custom_call.1} parent=5 // pred_region
        %s197 = ssub.s32 %s21, 1
        // Predicated region
        $region13: #{tpu_custom_call.1} parent=11 // pred_check
          %p198 = pneg %p68
        $region14: #{tpu_custom_call.1} parent=11 // pred_check_branch
          %200 = sbr.rel (%p198) target = $region16
        $region15: #{tpu_custom_call.1} parent=11 // pred_region
          %202 = vsyncadd [#allocation6], 0
          %s203 = sshll.u32 %s1, 4
          %s204 = int_to_ptr.hbm [resolvable:$true] %s203
          %s205 = sshll.u32 [#allocation5], 4
          %s206 = int_to_ptr.vmem [resolvable:$true] %s205
          %211 = dma.hbm_to_vmem [thread:$0]  %s204, 18432, %s206, [#allocation6], 128, 128, 8
        $region16: #{tpu_custom_call.1} parent=11 // pred_fallthru
          _
        // Predicated region
        $region17: #{tpu_custom_call.1} parent=11 // pred_check
          %p212 = pneg %p89
        $region18: #{tpu_custom_call.1} parent=11 // pred_check_branch
          %214 = sbr.rel (%p212) target = $region20
        $region19: #{tpu_custom_call.1} parent=11 // pred_region
          _
        $region20: #{tpu_custom_call.1} parent=11 // pred_fallthru
          _
        // Predicated region
        $region21: #{tpu_custom_call.1} parent=11 // pred_check
          %p215 = pneg %p110
        $region22: #{tpu_custom_call.1} parent=11 // pred_check_branch
          %217 = sbr.rel (%p215) target = $region24
        $region23: #{tpu_custom_call.1} parent=11 // pred_region
          %219 = vsyncadd [#allocation9], 0
          %s220 = sshll.u32 %s3, 4
          %s221 = int_to_ptr.hbm [resolvable:$true] %s220
          %s222 = sshll.u32 [#allocation8], 4
          %s223 = int_to_ptr.vmem [resolvable:$true] %s222
          %228 = dma.hbm_to_vmem [thread:$0]  %s221, 18432, %s223, [#allocation9], 128, 128, 8
        $region24: #{tpu_custom_call.1} parent=11 // pred_fallthru
          _
        // Predicated region
        $region25: #{tpu_custom_call.1} parent=11 // pred_check
          %p229 = pneg %p131
        $region26: #{tpu_custom_call.1} parent=11 // pred_check_branch
          %231 = sbr.rel (%p229) target = $region28
        $region27: #{tpu_custom_call.1} parent=11 // pred_region
          _
        $region28: #{tpu_custom_call.1} parent=11 // pred_fallthru
          _
      $region12: #{tpu_custom_call.1} parent=5 // pred_fallthru
        _
      %p232 = scmp.lt.s32.totalorder %s21, 2
      // Predicated region
      $region29: #{tpu_custom_call.1} parent=5 // pred_check
        %p233 = pneg %p232
      $region30: #{tpu_custom_call.1} parent=5 // pred_check_branch
        %235 = sbr.rel (%p233) target = $region32
      $region31: #{tpu_custom_call.1} parent=5 // pred_region
        // Predicated region
        $region33: #{tpu_custom_call.1} parent=31 // pred_check
          %p236 = pneg %p41
        $region34: #{tpu_custom_call.1} parent=31 // pred_check_branch
          %238 = sbr.rel (%p236) target = $region36
        $region35: #{tpu_custom_call.1} parent=31 // pred_region
          %p239 = scmp.lt.s32.totalorder %s21, 1
          %s240 = scalar_select %p239, %s21, 1
          %s241 = smul.addr %s240, 32
          %s242 = smul.addr %s241, 8
          %s243 = scalar_lea.vmem %s0, %s242
        $region36: #{tpu_custom_call.1} parent=31 // pred_fallthru
          _
      $region32: #{tpu_custom_call.1} parent=5 // pred_fallthru
        _
      %p244 = scmp.le.s32.totalorder 1, %s21
      %p245 = scmp.lt.s32.totalorder %s21, 3
      %p246 = pnand %p244, %p245
      %p247 = pneg %p246
      // Predicated region
      $region37: #{tpu_custom_call.1} parent=5 // pred_check
        _
      $region38: #{tpu_custom_call.1} parent=5 // pred_check_branch
        %249 = sbr.rel (%p246) target = $region40
      $region39: #{tpu_custom_call.1} parent=5 // pred_region
        %s250 = ssub.s32 %s21, 1
        // Predicated region
        $region41: #{tpu_custom_call.1} parent=39 // pred_check
          %p251 = pneg %p68
        $region42: #{tpu_custom_call.1} parent=39 // pred_check_branch
          %253 = sbr.rel (%p251) target = $region44
        $region43: #{tpu_custom_call.1} parent=39 // pred_region
          %255 = dma.done [#allocation6], 18432
        $region44: #{tpu_custom_call.1} parent=39 // pred_fallthru
          _
        // Predicated region
        $region45: #{tpu_custom_call.1} parent=39 // pred_check
          %p256 = pneg %p110
        $region46: #{tpu_custom_call.1} parent=39 // pred_check_branch
          %258 = sbr.rel (%p256) target = $region48
        $region47: #{tpu_custom_call.1} parent=39 // pred_region
          %260 = dma.done [#allocation9], 18432
        $region48: #{tpu_custom_call.1} parent=39 // pred_fallthru
          _
        %p261 = scmp.lt.s32.totalorder %s26, 1
        %s262 = scalar_select %p261, %s26, 1
        %s263 = smul.addr %s262, 32
        %s264 = smul.addr %s263, 8
        %s265 = scalar_lea.vmem %s0, %s264
        %p266 = pneg %p47
        %p267 = pneg %p44
        %p268 = pneg %p68
        %p269 = pneg %p65
        %p270 = pneg %p89
        %p271 = pneg %p86
        %p272 = pneg %p110
        %p273 = pneg %p107
        %p274 = pneg %p131
        %p275 = pneg %p128
        %p276 = pneg %p157
        %p277 = pneg %p154
        %s278 = sand.u32 %s144, 1
        %s279 = scalar_lea.sflag [#allocation7], %s278
        %s280 = sand.u32 %s144, 1
        %s281 = smul.addr %s280, 256
        %s282 = scalar_lea.vmem [#allocation10], %s281
        %p283 = pneg %p183
        %p284 = pneg %p180
        %s285 = sand.u32 %s170, 1
        %s286 = scalar_lea.sflag [#allocation12], %s285
        %s287 = sand.u32 %s170, 1
        %s288 = smul.addr %s287, 64
        %s289 = scalar_lea.vmem [#allocation11], %s288
        %p290 = scmp.lt.s32.totalorder %s26, 1
        %s291 = scalar_select %p290, %s26, 1
        %s292 = smul.addr %s291, 32
        %s293 = smul.addr %s292, 8
        %s294 = scalar_lea.vmem %s0, %s293
        %295 = vst [vmem:[#allocation2] sm:$0xff] 0.0
        %296 = vst [vmem:[#allocation2 + $0x8] sm:$0xff] 0.0
        %297 = vst [vmem:[#allocation2 + $0x10] sm:$0xff] 0.0
        %298 = vst [vmem:[#allocation2 + $0x18] sm:$0xff] 0.0
        %299 = vst [vmem:[#allocation2 + $0x20] sm:$0xff] 0.0
        %300 = vst [vmem:[#allocation2 + $0x28] sm:$0xff] 0.0
        %301 = vst [vmem:[#allocation2 + $0x30] sm:$0xff] 0.0
        %302 = vst [vmem:[#allocation2 + $0x38] sm:$0xff] 0.0
        %303 = vst [vmem:[#allocation2 + $0x40] sm:$0xff] 0.0
        %304 = vst [vmem:[#allocation2 + $0x48] sm:$0xff] 0.0
        %305 = vst [vmem:[#allocation2 + $0x50] sm:$0xff] 0.0
        %306 = vst [vmem:[#allocation2 + $0x58] sm:$0xff] 0.0
        %307 = vst [vmem:[#allocation2 + $0x60] sm:$0xff] 0.0
        %308 = vst [vmem:[#allocation2 + $0x68] sm:$0xff] 0.0
        %309 = vst [vmem:[#allocation2 + $0x70] sm:$0xff] 0.0
        %310 = vst [vmem:[#allocation2 + $0x78] sm:$0xff] 0.0
        %311 = vst [vmem:[#allocation2 + $0x80] sm:$0xff] 0.0
        %312 = vst [vmem:[#allocation2 + $0x88] sm:$0xff] 0.0
        %313 = vst [vmem:[#allocation2 + $0x90] sm:$0xff] 0.0
        %314 = vst [vmem:[#allocation2 + $0x98] sm:$0xff] 0.0
        %315 = vst [vmem:[#allocation2 + $0xa0] sm:$0xff] 0.0
        %316 = vst [vmem:[#allocation2 + $0xa8] sm:$0xff] 0.0
        %317 = vst [vmem:[#allocation2 + $0xb0] sm:$0xff] 0.0
        %318 = vst [vmem:[#allocation2 + $0xb8] sm:$0xff] 0.0
        %319 = vst [vmem:[#allocation2 + $0xc0] sm:$0xff] 0.0
        %320 = vst [vmem:[#allocation2 + $0xc8] sm:$0xff] 0.0
        %321 = vst [vmem:[#allocation2 + $0xd0] sm:$0xff] 0.0
        %322 = vst [vmem:[#allocation2 + $0xd8] sm:$0xff] 0.0
        %323 = vst [vmem:[#allocation2 + $0xe0] sm:$0xff] 0.0
        %324 = vst [vmem:[#allocation2 + $0xe8] sm:$0xff] 0.0
        %325 = vst [vmem:[#allocation2 + $0xf0] sm:$0xff] 0.0
        %326 = vst [vmem:[#allocation2 + $0xf8] sm:$0xff] 0.0
        %327 = vst [vmem:[#allocation2 + $0x100] sm:$0xff] 0.0
        %328 = vst [vmem:[#allocation2 + $0x108] sm:$0xff] 0.0
        %329 = vst [vmem:[#allocation2 + $0x110] sm:$0xff] 0.0
        %330 = vst [vmem:[#allocation2 + $0x118] sm:$0xff] 0.0
        %331 = vst [vmem:[#allocation2 + $0x120] sm:$0xff] 0.0
        %332 = vst [vmem:[#allocation2 + $0x128] sm:$0xff] 0.0
        %333 = vst [vmem:[#allocation2 + $0x130] sm:$0xff] 0.0
        %334 = vst [vmem:[#allocation2 + $0x138] sm:$0xff] 0.0
        %335 = vst [vmem:[#allocation2 + $0x140] sm:$0xff] 0.0
        %336 = vst [vmem:[#allocation2 + $0x148] sm:$0xff] 0.0
        %337 = vst [vmem:[#allocation2 + $0x150] sm:$0xff] 0.0
        %338 = vst [vmem:[#allocation2 + $0x158] sm:$0xff] 0.0
        %339 = vst [vmem:[#allocation2 + $0x160] sm:$0xff] 0.0
        %340 = vst [vmem:[#allocation2 + $0x168] sm:$0xff] 0.0
        %341 = vst [vmem:[#allocation2 + $0x170] sm:$0xff] 0.0
        %342 = vst [vmem:[#allocation2 + $0x178] sm:$0xff] 0.0
        %343 = vst [vmem:[#allocation2 + $0x180] sm:$0xff] 0.0
        %344 = vst [vmem:[#allocation2 + $0x188] sm:$0xff] 0.0
        %345 = vst [vmem:[#allocation2 + $0x190] sm:$0xff] 0.0
        %346 = vst [vmem:[#allocation2 + $0x198] sm:$0xff] 0.0
        %347 = vst [vmem:[#allocation2 + $0x1a0] sm:$0xff] 0.0
        %348 = vst [vmem:[#allocation2 + $0x1a8] sm:$0xff] 0.0
        %349 = vst [vmem:[#allocation2 + $0x1b0] sm:$0xff] 0.0
        %350 = vst [vmem:[#allocation2 + $0x1b8] sm:$0xff] 0.0
        %351 = vst [vmem:[#allocation2 + $0x1c0] sm:$0xff] 0.0
        %352 = vst [vmem:[#allocation2 + $0x1c8] sm:$0xff] 0.0
        %353 = vst [vmem:[#allocation2 + $0x1d0] sm:$0xff] 0.0
        %354 = vst [vmem:[#allocation2 + $0x1d8] sm:$0xff] 0.0
        %355 = vst [vmem:[#allocation2 + $0x1e0] sm:$0xff] 0.0
        %356 = vst [vmem:[#allocation2 + $0x1e8] sm:$0xff] 0.0
        %357 = vst [vmem:[#allocation2 + $0x1f0] sm:$0xff] 0.0
        %358 = vst [vmem:[#allocation2 + $0x1f8] sm:$0xff] 0.0
        %359 = vst [vmem:[#allocation2 + $0x200] sm:$0xff] 0.0
        %360 = vst [vmem:[#allocation2 + $0x208] sm:$0xff] 0.0
        %361 = vst [vmem:[#allocation2 + $0x210] sm:$0xff] 0.0
        %362 = vst [vmem:[#allocation2 + $0x218] sm:$0xff] 0.0
        %363 = vst [vmem:[#allocation2 + $0x220] sm:$0xff] 0.0
        %364 = vst [vmem:[#allocation2 + $0x228] sm:$0xff] 0.0
        %365 = vst [vmem:[#allocation2 + $0x230] sm:$0xff] 0.0
        %366 = vst [vmem:[#allocation2 + $0x238] sm:$0xff] 0.0
        %367 = vst [vmem:[#allocation3] sm:$0xff] 0.0
        %368 = vst [vmem:[#allocation3 + $0x8] sm:$0xff] 0.0
        %369 = vst [vmem:[#allocation3 + $0x10] sm:$0xff] 0.0
        %370 = vst [vmem:[#allocation3 + $0x18] sm:$0xff] 0.0
        %371 = vst [vmem:[#allocation3 + $0x20] sm:$0xff] 0.0
        %372 = vst [vmem:[#allocation3 + $0x28] sm:$0xff] 0.0
        %373 = vst [vmem:[#allocation3 + $0x30] sm:$0xff] 0.0
        %374 = vst [vmem:[#allocation3 + $0x38] sm:$0xff] 0.0
        %375 = vst [vmem:[#allocation3 + $0x40] sm:$0xff] 0.0
        %376 = vst [vmem:[#allocation3 + $0x48] sm:$0xff] 0.0
        %377 = vst [vmem:[#allocation3 + $0x50] sm:$0xff] 0.0
        %378 = vst [vmem:[#allocation3 + $0x58] sm:$0xff] 0.0
        %379 = vst [vmem:[#allocation3 + $0x60] sm:$0xff] 0.0
        %380 = vst [vmem:[#allocation3 + $0x68] sm:$0xff] 0.0
        %381 = vst [vmem:[#allocation3 + $0x70] sm:$0xff] 0.0
        %382 = vst [vmem:[#allocation3 + $0x78] sm:$0xff] 0.0
        %383 = vst [vmem:[#allocation3 + $0x80] sm:$0xff] 0.0
        %384 = vst [vmem:[#allocation3 + $0x88] sm:$0xff] 0.0
        %385 = vst [vmem:[#allocation3 + $0x90] sm:$0xff] 0.0
        %386 = vst [vmem:[#allocation3 + $0x98] sm:$0xff] 0.0
        %387 = vst [vmem:[#allocation3 + $0xa0] sm:$0xff] 0.0
        %388 = vst [vmem:[#allocation3 + $0xa8] sm:$0xff] 0.0
        %389 = vst [vmem:[#allocation3 + $0xb0] sm:$0xff] 0.0
        %390 = vst [vmem:[#allocation3 + $0xb8] sm:$0xff] 0.0
        %391 = vst [vmem:[#allocation3 + $0xc0] sm:$0xff] 0.0
        %392 = vst [vmem:[#allocation3 + $0xc8] sm:$0xff] 0.0
        %393 = vst [vmem:[#allocation3 + $0xd0] sm:$0xff] 0.0
        %394 = vst [vmem:[#allocation3 + $0xd8] sm:$0xff] 0.0
        %395 = vst [vmem:[#allocation3 + $0xe0] sm:$0xff] 0.0
        %396 = vst [vmem:[#allocation3 + $0xe8] sm:$0xff] 0.0
        %397 = vst [vmem:[#allocation3 + $0xf0] sm:$0xff] 0.0
        %398 = vst [vmem:[#allocation3 + $0xf8] sm:$0xff] 0.0
        %399 = vst [vmem:[#allocation3 + $0x100] sm:$0xff] 0.0
        %400 = vst [vmem:[#allocation3 + $0x108] sm:$0xff] 0.0
        %401 = vst [vmem:[#allocation3 + $0x110] sm:$0xff] 0.0
        %402 = vst [vmem:[#allocation3 + $0x118] sm:$0xff] 0.0
        %403 = vst [vmem:[#allocation3 + $0x120] sm:$0xff] 0.0
        %404 = vst [vmem:[#allocation3 + $0x128] sm:$0xff] 0.0
        %405 = vst [vmem:[#allocation3 + $0x130] sm:$0xff] 0.0
        %406 = vst [vmem:[#allocation3 + $0x138] sm:$0xff] 0.0
        %407 = vst [vmem:[#allocation3 + $0x140] sm:$0xff] 0.0
        %408 = vst [vmem:[#allocation3 + $0x148] sm:$0xff] 0.0
        %409 = vst [vmem:[#allocation3 + $0x150] sm:$0xff] 0.0
        %410 = vst [vmem:[#allocation3 + $0x158] sm:$0xff] 0.0
        %411 = vst [vmem:[#allocation3 + $0x160] sm:$0xff] 0.0
        %412 = vst [vmem:[#allocation3 + $0x168] sm:$0xff] 0.0
        %413 = vst [vmem:[#allocation3 + $0x170] sm:$0xff] 0.0
        %414 = vst [vmem:[#allocation3 + $0x178] sm:$0xff] 0.0
        %415 = vst [vmem:[#allocation3 + $0x180] sm:$0xff] 0.0
        %416 = vst [vmem:[#allocation3 + $0x188] sm:$0xff] 0.0
        %417 = vst [vmem:[#allocation3 + $0x190] sm:$0xff] 0.0
        %418 = vst [vmem:[#allocation3 + $0x198] sm:$0xff] 0.0
        %419 = vst [vmem:[#allocation3 + $0x1a0] sm:$0xff] 0.0
        %420 = vst [vmem:[#allocation3 + $0x1a8] sm:$0xff] 0.0
        %421 = vst [vmem:[#allocation3 + $0x1b0] sm:$0xff] 0.0
        %422 = vst [vmem:[#allocation3 + $0x1b8] sm:$0xff] 0.0
        %423 = vst [vmem:[#allocation3 + $0x1c0] sm:$0xff] 0.0
        %424 = vst [vmem:[#allocation3 + $0x1c8] sm:$0xff] 0.0
        %425 = vst [vmem:[#allocation3 + $0x1d0] sm:$0xff] 0.0
        %426 = vst [vmem:[#allocation3 + $0x1d8] sm:$0xff] 0.0
        %427 = vst [vmem:[#allocation3 + $0x1e0] sm:$0xff] 0.0
        %428 = vst [vmem:[#allocation3 + $0x1e8] sm:$0xff] 0.0
        %429 = vst [vmem:[#allocation3 + $0x1f0] sm:$0xff] 0.0
        %430 = vst [vmem:[#allocation3 + $0x1f8] sm:$0xff] 0.0
        %431 = vst [vmem:[#allocation3 + $0x200] sm:$0xff] 0.0
        %432 = vst [vmem:[#allocation3 + $0x208] sm:$0xff] 0.0
        %433 = vst [vmem:[#allocation3 + $0x210] sm:$0xff] 0.0
        %434 = vst [vmem:[#allocation3 + $0x218] sm:$0xff] 0.0
        %435 = vst [vmem:[#allocation3 + $0x220] sm:$0xff] 0.0
        %436 = vst [vmem:[#allocation3 + $0x228] sm:$0xff] 0.0
        %437 = vst [vmem:[#allocation3 + $0x230] sm:$0xff] 0.0
        %438 = vst [vmem:[#allocation3 + $0x238] sm:$0xff] 0.0
        %v439 = vld [vmem:[%s294] sm:$0xff]
        %v440 = vld [vmem:[%s294 + $0x8] sm:$0xff]
        %v441 = vld [vmem:[%s294 + $0x10] sm:$0xff]
        %v442 = vld [vmem:[%s294 + $0x18] sm:$0xff]
        %v443 = vld [vmem:[%s294 + $0x20] sm:$0xff]
        %v444 = vld [vmem:[%s294 + $0x28] sm:$0xff]
        %v445 = vld [vmem:[%s294 + $0x30] sm:$0xff]
        %v446 = vld [vmem:[%s294 + $0x38] sm:$0xff]
        %v447 = vld [vmem:[%s294 + $0x40] sm:$0xff]
        %v448 = vld [vmem:[%s294 + $0x48] sm:$0xff]
        %v449 = vld [vmem:[%s294 + $0x50] sm:$0xff]
        %v450 = vld [vmem:[%s294 + $0x58] sm:$0xff]
        %v451 = vld [vmem:[%s294 + $0x60] sm:$0xff]
        %v452 = vld [vmem:[%s294 + $0x68] sm:$0xff]
        %v453 = vld [vmem:[%s294 + $0x70] sm:$0xff]
        %v454 = vld [vmem:[%s294 + $0x78] sm:$0xff]
        %v455 = vld [vmem:[%s294 + $0x80] sm:$0xff]
        %v456 = vld [vmem:[%s294 + $0x88] sm:$0xff]
        %v457 = vld [vmem:[%s294 + $0x90] sm:$0xff]
        %v458 = vld [vmem:[%s294 + $0x98] sm:$0xff]
        %v459 = vld [vmem:[%s294 + $0xa0] sm:$0xff]
        %v460 = vld [vmem:[%s294 + $0xa8] sm:$0xff]
        %v461 = vld [vmem:[%s294 + $0xb0] sm:$0xff]
        %v462 = vld [vmem:[%s294 + $0xb8] sm:$0xff]
        %v463 = vld [vmem:[%s294 + $0xc0] sm:$0xff]
        %v464 = vld [vmem:[%s294 + $0xc8] sm:$0xff]
        %v465 = vld [vmem:[%s294 + $0xd0] sm:$0xff]
        %v466 = vld [vmem:[%s294 + $0xd8] sm:$0xff]
        %v467 = vld [vmem:[%s294 + $0xe0] sm:$0xff]
        %v468 = vld [vmem:[%s294 + $0xe8] sm:$0xff]
        %v469 = vld [vmem:[%s294 + $0xf0] sm:$0xff]
        %v470 = vld [vmem:[%s294 + $0xf8] sm:$0xff]
        %s471 = scalar_lea.vmem [#allocation2], 32
        %vm472 = vcmask 31744
        %473 = vst.msk [vmem:[%s471 + $0x8] sm:$0xff] %vm472, %v439
        %474 = vst.msk [vmem:[%s471 + $0x10] sm:$0xff] %vm472, %v440
        %475 = vst.msk [vmem:[%s471 + $0x28] sm:$0xff] %vm472, %v441
        %476 = vst.msk [vmem:[%s471 + $0x30] sm:$0xff] %vm472, %v442
        %477 = vst.msk [vmem:[%s471 + $0x48] sm:$0xff] %vm472, %v443
        %478 = vst.msk [vmem:[%s471 + $0x50] sm:$0xff] %vm472, %v444
        %479 = vst.msk [vmem:[%s471 + $0x68] sm:$0xff] %vm472, %v445
        %480 = vst.msk [vmem:[%s471 + $0x70] sm:$0xff] %vm472, %v446
        %481 = vst.msk [vmem:[%s471 + $0x88] sm:$0xff] %vm472, %v447
        %482 = vst.msk [vmem:[%s471 + $0x90] sm:$0xff] %vm472, %v448
        %483 = vst.msk [vmem:[%s471 + $0xa8] sm:$0xff] %vm472, %v449
        %484 = vst.msk [vmem:[%s471 + $0xb0] sm:$0xff] %vm472, %v450
        %485 = vst.msk [vmem:[%s471 + $0xc8] sm:$0xff] %vm472, %v451
        %486 = vst.msk [vmem:[%s471 + $0xd0] sm:$0xff] %vm472, %v452
        %487 = vst.msk [vmem:[%s471 + $0xe8] sm:$0xff] %vm472, %v453
        %488 = vst.msk [vmem:[%s471 + $0xf0] sm:$0xff] %vm472, %v454
        %489 = vst.msk [vmem:[%s471 + $0x108] sm:$0xff] %vm472, %v455
        %490 = vst.msk [vmem:[%s471 + $0x110] sm:$0xff] %vm472, %v456
        %491 = vst.msk [vmem:[%s471 + $0x128] sm:$0xff] %vm472, %v457
        %492 = vst.msk [vmem:[%s471 + $0x130] sm:$0xff] %vm472, %v458
        %493 = vst.msk [vmem:[%s471 + $0x148] sm:$0xff] %vm472, %v459
        %494 = vst.msk [vmem:[%s471 + $0x150] sm:$0xff] %vm472, %v460
        %495 = vst.msk [vmem:[%s471 + $0x168] sm:$0xff] %vm472, %v461
        %496 = vst.msk [vmem:[%s471 + $0x170] sm:$0xff] %vm472, %v462
        %497 = vst.msk [vmem:[%s471 + $0x188] sm:$0xff] %vm472, %v463
        %498 = vst.msk [vmem:[%s471 + $0x190] sm:$0xff] %vm472, %v464
        %499 = vst.msk [vmem:[%s471 + $0x1a8] sm:$0xff] %vm472, %v465
        %500 = vst.msk [vmem:[%s471 + $0x1b0] sm:$0xff] %vm472, %v466
        %501 = vst.msk [vmem:[%s471 + $0x1c8] sm:$0xff] %vm472, %v467
        %502 = vst.msk [vmem:[%s471 + $0x1d0] sm:$0xff] %vm472, %v468
        %503 = vst.msk [vmem:[%s471 + $0x1e8] sm:$0xff] %vm472, %v469
        %504 = vst.msk [vmem:[%s471 + $0x1f0] sm:$0xff] %vm472, %v470
        %v505 = vld [vmem:[#allocation2 + $0x7] sm:$0xff]
        %v506 = vld [vmem:[#allocation2 + $0xf] sm:$0xff]
        %v507 = vld [vmem:[#allocation2 + $0x27] sm:$0xff]
        %v508 = vld [vmem:[#allocation2 + $0x2f] sm:$0xff]
        %v509 = vld [vmem:[#allocation2 + $0x47] sm:$0xff]
        %v510 = vld [vmem:[#allocation2 + $0x4f] sm:$0xff]
        %v511 = vld [vmem:[#allocation2 + $0x67] sm:$0xff]
        %v512 = vld [vmem:[#allocation2 + $0x6f] sm:$0xff]
        %v513 = vld [vmem:[#allocation2 + $0x87] sm:$0xff]
        %v514 = vld [vmem:[#allocation2 + $0x8f] sm:$0xff]
        %v515 = vld [vmem:[#allocation2 + $0xa7] sm:$0xff]
        %v516 = vld [vmem:[#allocation2 + $0xaf] sm:$0xff]
        %v517 = vld [vmem:[#allocation2 + $0xc7] sm:$0xff]
        %v518 = vld [vmem:[#allocation2 + $0xcf] sm:$0xff]
        %v519 = vld [vmem:[#allocation2 + $0xe7] sm:$0xff]
        %v520 = vld [vmem:[#allocation2 + $0xef] sm:$0xff]
        %v521 = vld [vmem:[#allocation2 + $0x107] sm:$0xff]
        %v522 = vld [vmem:[#allocation2 + $0x10f] sm:$0xff]
        %v523 = vld [vmem:[#allocation2 + $0x127] sm:$0xff]
        %v524 = vld [vmem:[#allocation2 + $0x12f] sm:$0xff]
        %v525 = vld [vmem:[#allocation2 + $0x147] sm:$0xff]
        %v526 = vld [vmem:[#allocation2 + $0x14f] sm:$0xff]
        %v527 = vld [vmem:[#allocation2 + $0x167] sm:$0xff]
        %v528 = vld [vmem:[#allocation2 + $0x16f] sm:$0xff]
        %v529 = vld [vmem:[#allocation2 + $0x187] sm:$0xff]
        %v530 = vld [vmem:[#allocation2 + $0x18f] sm:$0xff]
        %v531 = vld [vmem:[#allocation2 + $0x1a7] sm:$0xff]
        %v532 = vld [vmem:[#allocation2 + $0x1af] sm:$0xff]
        %v533 = vld [vmem:[#allocation2 + $0x1c7] sm:$0xff]
        %v534 = vld [vmem:[#allocation2 + $0x1cf] sm:$0xff]
        %v535 = vld [vmem:[#allocation2 + $0x1e7] sm:$0xff]
        %v536 = vld [vmem:[#allocation2 + $0x1ef] sm:$0xff]
        %537 = vst [vmem:[#allocation4] sm:$0xff] %v505
        %538 = vst [vmem:[#allocation4 + $0x18] sm:$0xff] %v506
        %539 = vst [vmem:[#allocation4 + $0x30] sm:$0xff] %v507
        %540 = vst [vmem:[#allocation4 + $0x48] sm:$0xff] %v508
        %541 = vst [vmem:[#allocation4 + $0x60] sm:$0xff] %v509
        %542 = vst [vmem:[#allocation4 + $0x78] sm:$0xff] %v510
        %543 = vst [vmem:[#allocation4 + $0x90] sm:$0xff] %v511
        %544 = vst [vmem:[#allocation4 + $0xa8] sm:$0xff] %v512
        %545 = vst [vmem:[#allocation4 + $0xc0] sm:$0xff] %v513
        %546 = vst [vmem:[#allocation4 + $0xd8] sm:$0xff] %v514
        %547 = vst [vmem:[#allocation4 + $0xf0] sm:$0xff] %v515
        %548 = vst [vmem:[#allocation4 + $0x108] sm:$0xff] %v516
        %549 = vst [vmem:[#allocation4 + $0x120] sm:$0xff] %v517
        %550 = vst [vmem:[#allocation4 + $0x138] sm:$0xff] %v518
        %551 = vst [vmem:[#allocation4 + $0x150] sm:$0xff] %v519
        %552 = vst [vmem:[#allocation4 + $0x168] sm:$0xff] %v520
        %553 = vst [vmem:[#allocation4 + $0x180] sm:$0xff] %v521
        %554 = vst [vmem:[#allocation4 + $0x198] sm:$0xff] %v522
        %555 = vst [vmem:[#allocation4 + $0x1b0] sm:$0xff] %v523
        %556 = vst [vmem:[#allocation4 + $0x1c8] sm:$0xff] %v524
        %557 = vst [vmem:[#allocation4 + $0x1e0] sm:$0xff] %v525
        %558 = vst [vmem:[#allocation4 + $0x1f8] sm:$0xff] %v526
        %559 = vst [vmem:[#allocation4 + $0x210] sm:$0xff] %v527
        %560 = vst [vmem:[#allocation4 + $0x228] sm:$0xff] %v528
        %561 = vst [vmem:[#allocation4 + $0x240] sm:$0xff] %v529
        %562 = vst [vmem:[#allocation4 + $0x258] sm:$0xff] %v530
        %563 = vst [vmem:[#allocation4 + $0x270] sm:$0xff] %v531
        %564 = vst [vmem:[#allocation4 + $0x288] sm:$0xff] %v532
        %565 = vst [vmem:[#allocation4 + $0x2a0] sm:$0xff] %v533
        %566 = vst [vmem:[#allocation4 + $0x2b8] sm:$0xff] %v534
        %567 = vst [vmem:[#allocation4 + $0x2d0] sm:$0xff] %v535
        %568 = vst [vmem:[#allocation4 + $0x2e8] sm:$0xff] %v536
        %v569 = vld [vmem:[#allocation2 + $0x8] sm:$0xff]
        %v570 = vld [vmem:[#allocation2 + $0x10] sm:$0xff]
        %v571 = vld [vmem:[#allocation2 + $0x28] sm:$0xff]
        %v572 = vld [vmem:[#allocation2 + $0x30] sm:$0xff]
        %v573 = vld [vmem:[#allocation2 + $0x48] sm:$0xff]
        %v574 = vld [vmem:[#allocation2 + $0x50] sm:$0xff]
        %v575 = vld [vmem:[#allocation2 + $0x68] sm:$0xff]
        %v576 = vld [vmem:[#allocation2 + $0x70] sm:$0xff]
        %v577 = vld [vmem:[#allocation2 + $0x88] sm:$0xff]
        %v578 = vld [vmem:[#allocation2 + $0x90] sm:$0xff]
        %v579 = vld [vmem:[#allocation2 + $0xa8] sm:$0xff]
        %v580 = vld [vmem:[#allocation2 + $0xb0] sm:$0xff]
        %v581 = vld [vmem:[#allocation2 + $0xc8] sm:$0xff]
        %v582 = vld [vmem:[#allocation2 + $0xd0] sm:$0xff]
        %v583 = vld [vmem:[#allocation2 + $0xe8] sm:$0xff]
        %v584 = vld [vmem:[#allocation2 + $0xf0] sm:$0xff]
        %v585 = vld [vmem:[#allocation2 + $0x108] sm:$0xff]
        %v586 = vld [vmem:[#allocation2 + $0x110] sm:$0xff]
        %v587 = vld [vmem:[#allocation2 + $0x128] sm:$0xff]
        %v588 = vld [vmem:[#allocation2 + $0x130] sm:$0xff]
        %v589 = vld [vmem:[#allocation2 + $0x148] sm:$0xff]
        %v590 = vld [vmem:[#allocation2 + $0x150] sm:$0xff]
        %v591 = vld [vmem:[#allocation2 + $0x168] sm:$0xff]
        %v592 = vld [vmem:[#allocation2 + $0x170] sm:$0xff]
        %v593 = vld [vmem:[#allocation2 + $0x188] sm:$0xff]
        %v594 = vld [vmem:[#allocation2 + $0x190] sm:$0xff]
        %v595 = vld [vmem:[#allocation2 + $0x1a8] sm:$0xff]
        %v596 = vld [vmem:[#allocation2 + $0x1b0] sm:$0xff]
        %v597 = vld [vmem:[#allocation2 + $0x1c8] sm:$0xff]
        %v598 = vld [vmem:[#allocation2 + $0x1d0] sm:$0xff]
        %v599 = vld [vmem:[#allocation2 + $0x1e8] sm:$0xff]
        %v600 = vld [vmem:[#allocation2 + $0x1f0] sm:$0xff]
        %601 = vst [vmem:[#allocation4 + $0x8] sm:$0xff] %v569
        %602 = vst [vmem:[#allocation4 + $0x20] sm:$0xff] %v570
        %603 = vst [vmem:[#allocation4 + $0x38] sm:$0xff] %v571
        %604 = vst [vmem:[#allocation4 + $0x50] sm:$0xff] %v572
        %605 = vst [vmem:[#allocation4 + $0x68] sm:$0xff] %v573
        %606 = vst [vmem:[#allocation4 + $0x80] sm:$0xff] %v574
        %607 = vst [vmem:[#allocation4 + $0x98] sm:$0xff] %v575
        %608 = vst [vmem:[#allocation4 + $0xb0] sm:$0xff] %v576
        %609 = vst [vmem:[#allocation4 + $0xc8] sm:$0xff] %v577
        %610 = vst [vmem:[#allocation4 + $0xe0] sm:$0xff] %v578
        %611 = vst [vmem:[#allocation4 + $0xf8] sm:$0xff] %v579
        %612 = vst [vmem:[#allocation4 + $0x110] sm:$0xff] %v580
        %613 = vst [vmem:[#allocation4 + $0x128] sm:$0xff] %v581
        %614 = vst [vmem:[#allocation4 + $0x140] sm:$0xff] %v582
        %615 = vst [vmem:[#allocation4 + $0x158] sm:$0xff] %v583
        %616 = vst [vmem:[#allocation4 + $0x170] sm:$0xff] %v584
        %617 = vst [vmem:[#allocation4 + $0x188] sm:$0xff] %v585
        %618 = vst [vmem:[#allocation4 + $0x1a0] sm:$0xff] %v586
        %619 = vst [vmem:[#allocation4 + $0x1b8] sm:$0xff] %v587
        %620 = vst [vmem:[#allocation4 + $0x1d0] sm:$0xff] %v588
        %621 = vst [vmem:[#allocation4 + $0x1e8] sm:$0xff] %v589
        %622 = vst [vmem:[#allocation4 + $0x200] sm:$0xff] %v590
        %623 = vst [vmem:[#allocation4 + $0x218] sm:$0xff] %v591
        %624 = vst [vmem:[#allocation4 + $0x230] sm:$0xff] %v592
        %625 = vst [vmem:[#allocation4 + $0x248] sm:$0xff] %v593
        %626 = vst [vmem:[#allocation4 + $0x260] sm:$0xff] %v594
        %627 = vst [vmem:[#allocation4 + $0x278] sm:$0xff] %v595
        %628 = vst [vmem:[#allocation4 + $0x290] sm:$0xff] %v596
        %629 = vst [vmem:[#allocation4 + $0x2a8] sm:$0xff] %v597
        %630 = vst [vmem:[#allocation4 + $0x2c0] sm:$0xff] %v598
        %631 = vst [vmem:[#allocation4 + $0x2d8] sm:$0xff] %v599
        %632 = vst [vmem:[#allocation4 + $0x2f0] sm:$0xff] %v600
        %v633 = vld [vmem:[#allocation2 + $0x9] sm:$0xff]
        %v634 = vld [vmem:[#allocation2 + $0x11] sm:$0xff]
        %v635 = vld [vmem:[#allocation2 + $0x29] sm:$0xff]
        %v636 = vld [vmem:[#allocation2 + $0x31] sm:$0xff]
        %v637 = vld [vmem:[#allocation2 + $0x49] sm:$0xff]
        %v638 = vld [vmem:[#allocation2 + $0x51] sm:$0xff]
        %v639 = vld [vmem:[#allocation2 + $0x69] sm:$0xff]
        %v640 = vld [vmem:[#allocation2 + $0x71] sm:$0xff]
        %v641 = vld [vmem:[#allocation2 + $0x89] sm:$0xff]
        %v642 = vld [vmem:[#allocation2 + $0x91] sm:$0xff]
        %v643 = vld [vmem:[#allocation2 + $0xa9] sm:$0xff]
        %v644 = vld [vmem:[#allocation2 + $0xb1] sm:$0xff]
        %v645 = vld [vmem:[#allocation2 + $0xc9] sm:$0xff]
        %v646 = vld [vmem:[#allocation2 + $0xd1] sm:$0xff]
        %v647 = vld [vmem:[#allocation2 + $0xe9] sm:$0xff]
        %v648 = vld [vmem:[#allocation2 + $0xf1] sm:$0xff]
        %v649 = vld [vmem:[#allocation2 + $0x109] sm:$0xff]
        %v650 = vld [vmem:[#allocation2 + $0x111] sm:$0xff]
        %v651 = vld [vmem:[#allocation2 + $0x129] sm:$0xff]
        %v652 = vld [vmem:[#allocation2 + $0x131] sm:$0xff]
        %v653 = vld [vmem:[#allocation2 + $0x149] sm:$0xff]
        %v654 = vld [vmem:[#allocation2 + $0x151] sm:$0xff]
        %v655 = vld [vmem:[#allocation2 + $0x169] sm:$0xff]
        %v656 = vld [vmem:[#allocation2 + $0x171] sm:$0xff]
        %v657 = vld [vmem:[#allocation2 + $0x189] sm:$0xff]
        %v658 = vld [vmem:[#allocation2 + $0x191] sm:$0xff]
        %v659 = vld [vmem:[#allocation2 + $0x1a9] sm:$0xff]
        %v660 = vld [vmem:[#allocation2 + $0x1b1] sm:$0xff]
        %v661 = vld [vmem:[#allocation2 + $0x1c9] sm:$0xff]
        %v662 = vld [vmem:[#allocation2 + $0x1d1] sm:$0xff]
        %v663 = vld [vmem:[#allocation2 + $0x1e9] sm:$0xff]
        %v664 = vld [vmem:[#allocation2 + $0x1f1] sm:$0xff]
        %665 = vst [vmem:[#allocation4 + $0x10] sm:$0xff] %v633
        %666 = vst [vmem:[#allocation4 + $0x28] sm:$0xff] %v634
        %667 = vst [vmem:[#allocation4 + $0x40] sm:$0xff] %v635
        %668 = vst [vmem:[#allocation4 + $0x58] sm:$0xff] %v636
        %669 = vst [vmem:[#allocation4 + $0x70] sm:$0xff] %v637
        %670 = vst [vmem:[#allocation4 + $0x88] sm:$0xff] %v638
        %671 = vst [vmem:[#allocation4 + $0xa0] sm:$0xff] %v639
        %672 = vst [vmem:[#allocation4 + $0xb8] sm:$0xff] %v640
        %673 = vst [vmem:[#allocation4 + $0xd0] sm:$0xff] %v641
        %674 = vst [vmem:[#allocation4 + $0xe8] sm:$0xff] %v642
        %675 = vst [vmem:[#allocation4 + $0x100] sm:$0xff] %v643
        %676 = vst [vmem:[#allocation4 + $0x118] sm:$0xff] %v644
        %677 = vst [vmem:[#allocation4 + $0x130] sm:$0xff] %v645
        %678 = vst [vmem:[#allocation4 + $0x148] sm:$0xff] %v646
        %679 = vst [vmem:[#allocation4 + $0x160] sm:$0xff] %v647
        %680 = vst [vmem:[#allocation4 + $0x178] sm:$0xff] %v648
        %681 = vst [vmem:[#allocation4 + $0x190] sm:$0xff] %v649
        %682 = vst [vmem:[#allocation4 + $0x1a8] sm:$0xff] %v650
        %683 = vst [vmem:[#allocation4 + $0x1c0] sm:$0xff] %v651
        %684 = vst [vmem:[#allocation4 + $0x1d8] sm:$0xff] %v652
        %685 = vst [vmem:[#allocation4 + $0x1f0] sm:$0xff] %v653
        %686 = vst [vmem:[#allocation4 + $0x208] sm:$0xff] %v654
        %687 = vst [vmem:[#allocation4 + $0x220] sm:$0xff] %v655
        %688 = vst [vmem:[#allocation4 + $0x238] sm:$0xff] %v656
        %689 = vst [vmem:[#allocation4 + $0x250] sm:$0xff] %v657
        %690 = vst [vmem:[#allocation4 + $0x268] sm:$0xff] %v658
        %691 = vst [vmem:[#allocation4 + $0x280] sm:$0xff] %v659
        %692 = vst [vmem:[#allocation4 + $0x298] sm:$0xff] %v660
        %693 = vst [vmem:[#allocation4 + $0x2b0] sm:$0xff] %v661
        %694 = vst [vmem:[#allocation4 + $0x2c8] sm:$0xff] %v662
        %695 = vst [vmem:[#allocation4 + $0x2e0] sm:$0xff] %v663
        %696 = vst [vmem:[#allocation4 + $0x2f8] sm:$0xff] %v664
        %v697 = vld [vmem:[#allocation4] sm:$0xff]
        %v698 = vld [vmem:[#allocation4 + $0x8] sm:$0xff]
        %v699 = vld [vmem:[#allocation4 + $0x10] sm:$0xff]
        %v700 = vld [vmem:[#allocation4 + $0x18] sm:$0xff]
        %v701 = vld [vmem:[#allocation4 + $0x20] sm:$0xff]
        %v702 = vld [vmem:[#allocation4 + $0x28] sm:$0xff]
        %v703 = vld [vmem:[#allocation4 + $0x30] sm:$0xff]
        %v704 = vld [vmem:[#allocation4 + $0x38] sm:$0xff]
        %v705 = vld [vmem:[#allocation4 + $0x40] sm:$0xff]
        %v706 = vld [vmem:[#allocation4 + $0x48] sm:$0xff]
        %v707 = vld [vmem:[#allocation4 + $0x50] sm:$0xff]
        %v708 = vld [vmem:[#allocation4 + $0x58] sm:$0xff]
        %v709 = vld [vmem:[#allocation4 + $0x60] sm:$0xff]
        %v710 = vld [vmem:[#allocation4 + $0x68] sm:$0xff]
        %v711 = vld [vmem:[#allocation4 + $0x70] sm:$0xff]
        %v712 = vld [vmem:[#allocation4 + $0x78] sm:$0xff]
        %v713 = vld [vmem:[#allocation4 + $0x80] sm:$0xff]
        %v714 = vld [vmem:[#allocation4 + $0x88] sm:$0xff]
        %v715 = vld [vmem:[#allocation4 + $0x90] sm:$0xff]
        %v716 = vld [vmem:[#allocation4 + $0x98] sm:$0xff]
        %v717 = vld [vmem:[#allocation4 + $0xa0] sm:$0xff]
        %v718 = vld [vmem:[#allocation4 + $0xa8] sm:$0xff]
        %v719 = vld [vmem:[#allocation4 + $0xb0] sm:$0xff]
        %v720 = vld [vmem:[#allocation4 + $0xb8] sm:$0xff]
        %v721 = vld [vmem:[#allocation4 + $0xc0] sm:$0xff]
        %v722 = vld [vmem:[#allocation4 + $0xc8] sm:$0xff]
        %v723 = vld [vmem:[#allocation4 + $0xd0] sm:$0xff]
        %v724 = vld [vmem:[#allocation4 + $0xd8] sm:$0xff]
        %v725 = vld [vmem:[#allocation4 + $0xe0] sm:$0xff]
        %v726 = vld [vmem:[#allocation4 + $0xe8] sm:$0xff]
        %v727 = vld [vmem:[#allocation4 + $0xf0] sm:$0xff]
        %v728 = vld [vmem:[#allocation4 + $0xf8] sm:$0xff]
        %v729 = vld [vmem:[#allocation4 + $0x100] sm:$0xff]
        %v730 = vld [vmem:[#allocation4 + $0x108] sm:$0xff]
        %v731 = vld [vmem:[#allocation4 + $0x110] sm:$0xff]
        %v732 = vld [vmem:[#allocation4 + $0x118] sm:$0xff]
        %v733 = vld [vmem:[#allocation4 + $0x120] sm:$0xff]
        %v734 = vld [vmem:[#allocation4 + $0x128] sm:$0xff]
        %v735 = vld [vmem:[#allocation4 + $0x130] sm:$0xff]
        %v736 = vld [vmem:[#allocation4 + $0x138] sm:$0xff]
        %v737 = vld [vmem:[#allocation4 + $0x140] sm:$0xff]
        %v738 = vld [vmem:[#allocation4 + $0x148] sm:$0xff]
        %v739 = vld [vmem:[#allocation4 + $0x150] sm:$0xff]
        %v740 = vld [vmem:[#allocation4 + $0x158] sm:$0xff]
        %v741 = vld [vmem:[#allocation4 + $0x160] sm:$0xff]
        %v742 = vld [vmem:[#allocation4 + $0x168] sm:$0xff]
        %v743 = vld [vmem:[#allocation4 + $0x170] sm:$0xff]
        %v744 = vld [vmem:[#allocation4 + $0x178] sm:$0xff]
        %v745 = vld [vmem:[#allocation4 + $0x180] sm:$0xff]
        %v746 = vld [vmem:[#allocation4 + $0x188] sm:$0xff]
        %v747 = vld [vmem:[#allocation4 + $0x190] sm:$0xff]
        %v748 = vld [vmem:[#allocation4 + $0x198] sm:$0xff]
        %v749 = vld [vmem:[#allocation4 + $0x1a0] sm:$0xff]
        %v750 = vld [vmem:[#allocation4 + $0x1a8] sm:$0xff]
        %v751 = vld [vmem:[#allocation4 + $0x1b0] sm:$0xff]
        %v752 = vld [vmem:[#allocation4 + $0x1b8] sm:$0xff]
        %v753 = vld [vmem:[#allocation4 + $0x1c0] sm:$0xff]
        %v754 = vld [vmem:[#allocation4 + $0x1c8] sm:$0xff]
        %v755 = vld [vmem:[#allocation4 + $0x1d0] sm:$0xff]
        %v756 = vld [vmem:[#allocation4 + $0x1d8] sm:$0xff]
        %v757 = vld [vmem:[#allocation4 + $0x1e0] sm:$0xff]
        %v758 = vld [vmem:[#allocation4 + $0x1e8] sm:$0xff]
        %v759 = vld [vmem:[#allocation4 + $0x1f0] sm:$0xff]
        %v760 = vld [vmem:[#allocation4 + $0x1f8] sm:$0xff]
        %v761 = vld [vmem:[#allocation4 + $0x200] sm:$0xff]
        %v762 = vld [vmem:[#allocation4 + $0x208] sm:$0xff]
        %v763 = vld [vmem:[#allocation4 + $0x210] sm:$0xff]
        %v764 = vld [vmem:[#allocation4 + $0x218] sm:$0xff]
        %v765 = vld [vmem:[#allocation4 + $0x220] sm:$0xff]
        %v766 = vld [vmem:[#allocation4 + $0x228] sm:$0xff]
        %v767 = vld [vmem:[#allocation4 + $0x230] sm:$0xff]
        %v768 = vld [vmem:[#allocation4 + $0x238] sm:$0xff]
        %v769 = vld [vmem:[#allocation4 + $0x240] sm:$0xff]
        %v770 = vld [vmem:[#allocation4 + $0x248] sm:$0xff]
        %v771 = vld [vmem:[#allocation4 + $0x250] sm:$0xff]
        %v772 = vld [vmem:[#allocation4 + $0x258] sm:$0xff]
        %v773 = vld [vmem:[#allocation4 + $0x260] sm:$0xff]
        %v774 = vld [vmem:[#allocation4 + $0x268] sm:$0xff]
        %v775 = vld [vmem:[#allocation4 + $0x270] sm:$0xff]
        %v776 = vld [vmem:[#allocation4 + $0x278] sm:$0xff]
        %v777 = vld [vmem:[#allocation4 + $0x280] sm:$0xff]
        %v778 = vld [vmem:[#allocation4 + $0x288] sm:$0xff]
        %v779 = vld [vmem:[#allocation4 + $0x290] sm:$0xff]
        %v780 = vld [vmem:[#allocation4 + $0x298] sm:$0xff]
        %v781 = vld [vmem:[#allocation4 + $0x2a0] sm:$0xff]
        %v782 = vld [vmem:[#allocation4 + $0x2a8] sm:$0xff]
        %v783 = vld [vmem:[#allocation4 + $0x2b0] sm:$0xff]
        %v784 = vld [vmem:[#allocation4 + $0x2b8] sm:$0xff]
        %v785 = vld [vmem:[#allocation4 + $0x2c0] sm:$0xff]
        %v786 = vld [vmem:[#allocation4 + $0x2c8] sm:$0xff]
        %v787 = vld [vmem:[#allocation4 + $0x2d0] sm:$0xff]
        %v788 = vld [vmem:[#allocation4 + $0x2d8] sm:$0xff]
        %v789 = vld [vmem:[#allocation4 + $0x2e0] sm:$0xff]
        %v790 = vld [vmem:[#allocation4 + $0x2e8] sm:$0xff]
        %v791 = vld [vmem:[#allocation4 + $0x2f0] sm:$0xff]
        %v792 = vld [vmem:[#allocation4 + $0x2f8] sm:$0xff]
        %v793 = vld [vmem:[#allocation5] sm:$0xff]
        %v794 = vld [vmem:[#allocation5 + $0x8] sm:$0xff]
        %v795 = vld [vmem:[#allocation5 + $0x10] sm:$0xff]
        %v796 = vld [vmem:[#allocation5 + $0x18] sm:$0xff]
        %v797 = vld [vmem:[#allocation5 + $0x20] sm:$0xff]
        %v798 = vld [vmem:[#allocation5 + $0x28] sm:$0xff]
        %v799 = vld [vmem:[#allocation5 + $0x30] sm:$0xff]
        %v800 = vld [vmem:[#allocation5 + $0x38] sm:$0xff]
        %v801 = vld [vmem:[#allocation5 + $0x40] sm:$0xff]
        %v802 = vld [vmem:[#allocation5 + $0x48] sm:$0xff]
        %v803 = vld [vmem:[#allocation5 + $0x50] sm:$0xff]
        %v804 = vld [vmem:[#allocation5 + $0x58] sm:$0xff]
        %v805 = vld [vmem:[#allocation5 + $0x60] sm:$0xff]
        %v806 = vld [vmem:[#allocation5 + $0x68] sm:$0xff]
        %v807 = vld [vmem:[#allocation5 + $0x70] sm:$0xff]
        %v808 = vld [vmem:[#allocation5 + $0x78] sm:$0xff]
        %v809 = vld [vmem:[#allocation5 + $0x80] sm:$0xff]
        %v810 = vld [vmem:[#allocation5 + $0x88] sm:$0xff]
        %v811 = vld [vmem:[#allocation5 + $0x90] sm:$0xff]
        %v812 = vld [vmem:[#allocation5 + $0x98] sm:$0xff]
        %v813 = vld [vmem:[#allocation5 + $0xa0] sm:$0xff]
        %v814 = vld [vmem:[#allocation5 + $0xa8] sm:$0xff]
        %v815 = vld [vmem:[#allocation5 + $0xb0] sm:$0xff]
        %v816 = vld [vmem:[#allocation5 + $0xb8] sm:$0xff]
        %v817 = vld [vmem:[#allocation5 + $0xc0] sm:$0xff]
        %v818 = vld [vmem:[#allocation5 + $0xc8] sm:$0xff]
        %v819 = vld [vmem:[#allocation5 + $0xd0] sm:$0xff]
        %v820 = vld [vmem:[#allocation5 + $0xd8] sm:$0xff]
        %v821 = vld [vmem:[#allocation5 + $0xe0] sm:$0xff]
        %v822 = vld [vmem:[#allocation5 + $0xe8] sm:$0xff]
        %v823 = vld [vmem:[#allocation5 + $0xf0] sm:$0xff]
        %v824 = vld [vmem:[#allocation5 + $0xf8] sm:$0xff]
        %v825 = vld [vmem:[#allocation5 + $0x100] sm:$0xff]
        %v826 = vld [vmem:[#allocation5 + $0x108] sm:$0xff]
        %v827 = vld [vmem:[#allocation5 + $0x110] sm:$0xff]
        %v828 = vld [vmem:[#allocation5 + $0x118] sm:$0xff]
        %v829 = vld [vmem:[#allocation5 + $0x120] sm:$0xff]
        %v830 = vld [vmem:[#allocation5 + $0x128] sm:$0xff]
        %v831 = vld [vmem:[#allocation5 + $0x130] sm:$0xff]
        %v832 = vld [vmem:[#allocation5 + $0x138] sm:$0xff]
        %v833 = vld [vmem:[#allocation5 + $0x140] sm:$0xff]
        %v834 = vld [vmem:[#allocation5 + $0x148] sm:$0xff]
        %v835 = vld [vmem:[#allocation5 + $0x150] sm:$0xff]
        %v836 = vld [vmem:[#allocation5 + $0x158] sm:$0xff]
        %v837 = vld [vmem:[#allocation5 + $0x160] sm:$0xff]
        %v838 = vld [vmem:[#allocation5 + $0x168] sm:$0xff]
        %v839 = vld [vmem:[#allocation5 + $0x170] sm:$0xff]
        %v840 = vld [vmem:[#allocation5 + $0x178] sm:$0xff]
        %v841 = vld [vmem:[%s471 + $0x7] sm:$0xff]
        %v842 = vld [vmem:[%s471 + $0xf] sm:$0xff]
        %v843 = vld [vmem:[%s471 + $0x27] sm:$0xff]
        %v844 = vld [vmem:[%s471 + $0x2f] sm:$0xff]
        %v845 = vld [vmem:[%s471 + $0x47] sm:$0xff]
        %v846 = vld [vmem:[%s471 + $0x4f] sm:$0xff]
        %v847 = vld [vmem:[%s471 + $0x67] sm:$0xff]
        %v848 = vld [vmem:[%s471 + $0x6f] sm:$0xff]
        %v849 = vld [vmem:[%s471 + $0x87] sm:$0xff]
        %v850 = vld [vmem:[%s471 + $0x8f] sm:$0xff]
        %v851 = vld [vmem:[%s471 + $0xa7] sm:$0xff]
        %v852 = vld [vmem:[%s471 + $0xaf] sm:$0xff]
        %v853 = vld [vmem:[%s471 + $0xc7] sm:$0xff]
        %v854 = vld [vmem:[%s471 + $0xcf] sm:$0xff]
        %v855 = vld [vmem:[%s471 + $0xe7] sm:$0xff]
        %v856 = vld [vmem:[%s471 + $0xef] sm:$0xff]
        %v857 = vld [vmem:[%s471 + $0x107] sm:$0xff]
        %v858 = vld [vmem:[%s471 + $0x10f] sm:$0xff]
        %v859 = vld [vmem:[%s471 + $0x127] sm:$0xff]
        %v860 = vld [vmem:[%s471 + $0x12f] sm:$0xff]
        %v861 = vld [vmem:[%s471 + $0x147] sm:$0xff]
        %v862 = vld [vmem:[%s471 + $0x14f] sm:$0xff]
        %v863 = vld [vmem:[%s471 + $0x167] sm:$0xff]
        %v864 = vld [vmem:[%s471 + $0x16f] sm:$0xff]
        %v865 = vld [vmem:[%s471 + $0x187] sm:$0xff]
        %v866 = vld [vmem:[%s471 + $0x18f] sm:$0xff]
        %v867 = vld [vmem:[%s471 + $0x1a7] sm:$0xff]
        %v868 = vld [vmem:[%s471 + $0x1af] sm:$0xff]
        %v869 = vld [vmem:[%s471 + $0x1c7] sm:$0xff]
        %v870 = vld [vmem:[%s471 + $0x1cf] sm:$0xff]
        %v871 = vld [vmem:[%s471 + $0x1e7] sm:$0xff]
        %v872 = vld [vmem:[%s471 + $0x1ef] sm:$0xff]
        %873 = vst [vmem:[#allocation4] sm:$0xff] %v841
        %874 = vst [vmem:[#allocation4 + $0x18] sm:$0xff] %v842
        %875 = vst [vmem:[#allocation4 + $0x30] sm:$0xff] %v843
        %876 = vst [vmem:[#allocation4 + $0x48] sm:$0xff] %v844
        %877 = vst [vmem:[#allocation4 + $0x60] sm:$0xff] %v845
        %878 = vst [vmem:[#allocation4 + $0x78] sm:$0xff] %v846
        %879 = vst [vmem:[#allocation4 + $0x90] sm:$0xff] %v847
        %880 = vst [vmem:[#allocation4 + $0xa8] sm:$0xff] %v848
        %881 = vst [vmem:[#allocation4 + $0xc0] sm:$0xff] %v849
        %882 = vst [vmem:[#allocation4 + $0xd8] sm:$0xff] %v850
        %883 = vst [vmem:[#allocation4 + $0xf0] sm:$0xff] %v851
        %884 = vst [vmem:[#allocation4 + $0x108] sm:$0xff] %v852
        %885 = vst [vmem:[#allocation4 + $0x120] sm:$0xff] %v853
        %886 = vst [vmem:[#allocation4 + $0x138] sm:$0xff] %v854
        %887 = vst [vmem:[#allocation4 + $0x150] sm:$0xff] %v855
        %888 = vst [vmem:[#allocation4 + $0x168] sm:$0xff] %v856
        %889 = vst [vmem:[#allocation4 + $0x180] sm:$0xff] %v857
        %890 = vst [vmem:[#allocation4 + $0x198] sm:$0xff] %v858
        %891 = vst [vmem:[#allocation4 + $0x1b0] sm:$0xff] %v859
        %892 = vst [vmem:[#allocation4 + $0x1c8] sm:$0xff] %v860
        %893 = vst [vmem:[#allocation4 + $0x1e0] sm:$0xff] %v861
        %894 = vst [vmem:[#allocation4 + $0x1f8] sm:$0xff] %v862
        %895 = vst [vmem:[#allocation4 + $0x210] sm:$0xff] %v863
        %896 = vst [vmem:[#allocation4 + $0x228] sm:$0xff] %v864
        %897 = vst [vmem:[#allocation4 + $0x240] sm:$0xff] %v865
        %898 = vst [vmem:[#allocation4 + $0x258] sm:$0xff] %v866
        %899 = vst [vmem:[#allocation4 + $0x270] sm:$0xff] %v867
        %900 = vst [vmem:[#allocation4 + $0x288] sm:$0xff] %v868
        %901 = vst [vmem:[#allocation4 + $0x2a0] sm:$0xff] %v869
        %902 = vst [vmem:[#allocation4 + $0x2b8] sm:$0xff] %v870
        %903 = vst [vmem:[#allocation4 + $0x2d0] sm:$0xff] %v871
        %904 = vst [vmem:[#allocation4 + $0x2e8] sm:$0xff] %v872
        %v905 = vld [vmem:[%s471 + $0x8] sm:$0xff]
        %v906 = vld [vmem:[%s471 + $0x10] sm:$0xff]
        %v907 = vld [vmem:[%s471 + $0x28] sm:$0xff]
        %v908 = vld [vmem:[%s471 + $0x30] sm:$0xff]
        %v909 = vld [vmem:[%s471 + $0x48] sm:$0xff]
        %v910 = vld [vmem:[%s471 + $0x50] sm:$0xff]
        %v911 = vld [vmem:[%s471 + $0x68] sm:$0xff]
        %v912 = vld [vmem:[%s471 + $0x70] sm:$0xff]
        %v913 = vld [vmem:[%s471 + $0x88] sm:$0xff]
        %v914 = vld [vmem:[%s471 + $0x90] sm:$0xff]
        %v915 = vld [vmem:[%s471 + $0xa8] sm:$0xff]
        %v916 = vld [vmem:[%s471 + $0xb0] sm:$0xff]
        %v917 = vld [vmem:[%s471 + $0xc8] sm:$0xff]
        %v918 = vld [vmem:[%s471 + $0xd0] sm:$0xff]
        %v919 = vld [vmem:[%s471 + $0xe8] sm:$0xff]
        %v920 = vld [vmem:[%s471 + $0xf0] sm:$0xff]
        %v921 = vld [vmem:[%s471 + $0x108] sm:$0xff]
        %v922 = vld [vmem:[%s471 + $0x110] sm:$0xff]
        %v923 = vld [vmem:[%s471 + $0x128] sm:$0xff]
        %v924 = vld [vmem:[%s471 + $0x130] sm:$0xff]
        %v925 = vld [vmem:[%s471 + $0x148] sm:$0xff]
        %v926 = vld [vmem:[%s471 + $0x150] sm:$0xff]
        %v927 = vld [vmem:[%s471 + $0x168] sm:$0xff]
        %v928 = vld [vmem:[%s471 + $0x170] sm:$0xff]
        %v929 = vld [vmem:[%s471 + $0x188] sm:$0xff]
        %v930 = vld [vmem:[%s471 + $0x190] sm:$0xff]
        %v931 = vld [vmem:[%s471 + $0x1a8] sm:$0xff]
        %v932 = vld [vmem:[%s471 + $0x1b0] sm:$0xff]
        %v933 = vld [vmem:[%s471 + $0x1c8] sm:$0xff]
        %v934 = vld [vmem:[%s471 + $0x1d0] sm:$0xff]
        %v935 = vld [vmem:[%s471 + $0x1e8] sm:$0xff]
        %v936 = vld [vmem:[%s471 + $0x1f0] sm:$0xff]
        %937 = vst [vmem:[#allocation4 + $0x8] sm:$0xff] %v905
        %938 = vst [vmem:[#allocation4 + $0x20] sm:$0xff] %v906
        %939 = vst [vmem:[#allocation4 + $0x38] sm:$0xff] %v907
        %940 = vst [vmem:[#allocation4 + $0x50] sm:$0xff] %v908
        %941 = vst [vmem:[#allocation4 + $0x68] sm:$0xff] %v909
        %942 = vst [vmem:[#allocation4 + $0x80] sm:$0xff] %v910
        %943 = vst [vmem:[#allocation4 + $0x98] sm:$0xff] %v911
        %944 = vst [vmem:[#allocation4 + $0xb0] sm:$0xff] %v912
        %945 = vst [vmem:[#allocation4 + $0xc8] sm:$0xff] %v913
        %946 = vst [vmem:[#allocation4 + $0xe0] sm:$0xff] %v914
        %947 = vst [vmem:[#allocation4 + $0xf8] sm:$0xff] %v915
        %948 = vst [vmem:[#allocation4 + $0x110] sm:$0xff] %v916
        %949 = vst [vmem:[#allocation4 + $0x128] sm:$0xff] %v917
        %950 = vst [vmem:[#allocation4 + $0x140] sm:$0xff] %v918
        %951 = vst [vmem:[#allocation4 + $0x158] sm:$0xff] %v919
        %952 = vst [vmem:[#allocation4 + $0x170] sm:$0xff] %v920
        %953 = vst [vmem:[#allocation4 + $0x188] sm:$0xff] %v921
        %954 = vst [vmem:[#allocation4 + $0x1a0] sm:$0xff] %v922
        %955 = vst [vmem:[#allocation4 + $0x1b8] sm:$0xff] %v923
        %956 = vst [vmem:[#allocation4 + $0x1d0] sm:$0xff] %v924
        %957 = vst [vmem:[#allocation4 + $0x1e8] sm:$0xff] %v925
        %958 = vst [vmem:[#allocation4 + $0x200] sm:$0xff] %v926
        %959 = vst [vmem:[#allocation4 + $0x218] sm:$0xff] %v927
        %960 = vst [vmem:[#allocation4 + $0x230] sm:$0xff] %v928
        %961 = vst [vmem:[#allocation4 + $0x248] sm:$0xff] %v929
        %962 = vst [vmem:[#allocation4 + $0x260] sm:$0xff] %v930
        %963 = vst [vmem:[#allocation4 + $0x278] sm:$0xff] %v931
        %964 = vst [vmem:[#allocation4 + $0x290] sm:$0xff] %v932
        %965 = vst [vmem:[#allocation4 + $0x2a8] sm:$0xff] %v933
        %966 = vst [vmem:[#allocation4 + $0x2c0] sm:$0xff] %v934
        %967 = vst [vmem:[#allocation4 + $0x2d8] sm:$0xff] %v935
        %968 = vst [vmem:[#allocation4 + $0x2f0] sm:$0xff] %v936
        %v969 = vld [vmem:[%s471 + $0x9] sm:$0xff]
        %v970 = vld [vmem:[%s471 + $0x11] sm:$0xff]
        %v971 = vld [vmem:[%s471 + $0x29] sm:$0xff]
        %v972 = vld [vmem:[%s471 + $0x31] sm:$0xff]
        %v973 = vld [vmem:[%s471 + $0x49] sm:$0xff]
        %v974 = vld [vmem:[%s471 + $0x51] sm:$0xff]
        %v975 = vld [vmem:[%s471 + $0x69] sm:$0xff]
        %v976 = vld [vmem:[%s471 + $0x71] sm:$0xff]
        %v977 = vld [vmem:[%s471 + $0x89] sm:$0xff]
        %v978 = vld [vmem:[%s471 + $0x91] sm:$0xff]
        %v979 = vld [vmem:[%s471 + $0xa9] sm:$0xff]
        %v980 = vld [vmem:[%s471 + $0xb1] sm:$0xff]
        %v981 = vld [vmem:[%s471 + $0xc9] sm:$0xff]
        %v982 = vld [vmem:[%s471 + $0xd1] sm:$0xff]
        %v983 = vld [vmem:[%s471 + $0xe9] sm:$0xff]
        %v984 = vld [vmem:[%s471 + $0xf1] sm:$0xff]
        %v985 = vld [vmem:[%s471 + $0x109] sm:$0xff]
        %v986 = vld [vmem:[%s471 + $0x111] sm:$0xff]
        %v987 = vld [vmem:[%s471 + $0x129] sm:$0xff]
        %v988 = vld [vmem:[%s471 + $0x131] sm:$0xff]
        %v989 = vld [vmem:[%s471 + $0x149] sm:$0xff]
        %v990 = vld [vmem:[%s471 + $0x151] sm:$0xff]
        %v991 = vld [vmem:[%s471 + $0x169] sm:$0xff]
        %v992 = vld [vmem:[%s471 + $0x171] sm:$0xff]
        %v993 = vld [vmem:[%s471 + $0x189] sm:$0xff]
        %v994 = vld [vmem:[%s471 + $0x191] sm:$0xff]
        %v995 = vld [vmem:[%s471 + $0x1a9] sm:$0xff]
        %v996 = vld [vmem:[%s471 + $0x1b1] sm:$0xff]
        %v997 = vld [vmem:[%s471 + $0x1c9] sm:$0xff]
        %v998 = vld [vmem:[%s471 + $0x1d1] sm:$0xff]
        %v999 = vld [vmem:[%s471 + $0x1e9] sm:$0xff]
        %v1000 = vld [vmem:[%s471 + $0x1f1] sm:$0xff]
        %1001 = vst [vmem:[#allocation4 + $0x10] sm:$0xff] %v969
        %1002 = vst [vmem:[#allocation4 + $0x28] sm:$0xff] %v970
        %1003 = vst [vmem:[#allocation4 + $0x40] sm:$0xff] %v971
        %1004 = vst [vmem:[#allocation4 + $0x58] sm:$0xff] %v972
        %1005 = vst [vmem:[#allocation4 + $0x70] sm:$0xff] %v973
        %1006 = vst [vmem:[#allocation4 + $0x88] sm:$0xff] %v974
        %1007 = vst [vmem:[#allocation4 + $0xa0] sm:$0xff] %v975
        %1008 = vst [vmem:[#allocation4 + $0xb8] sm:$0xff] %v976
        %1009 = vst [vmem:[#allocation4 + $0xd0] sm:$0xff] %v977
        %1010 = vst [vmem:[#allocation4 + $0xe8] sm:$0xff] %v978
        %1011 = vst [vmem:[#allocation4 + $0x100] sm:$0xff] %v979
        %1012 = vst [vmem:[#allocation4 + $0x118] sm:$0xff] %v980
        %1013 = vst [vmem:[#allocation4 + $0x130] sm:$0xff] %v981
        %1014 = vst [vmem:[#allocation4 + $0x148] sm:$0xff] %v982
        %1015 = vst [vmem:[#allocation4 + $0x160] sm:$0xff] %v983
        %1016 = vst [vmem:[#allocation4 + $0x178] sm:$0xff] %v984
        %1017 = vst [vmem:[#allocation4 + $0x190] sm:$0xff] %v985
        %1018 = vst [vmem:[#allocation4 + $0x1a8] sm:$0xff] %v986
        %1019 = vst [vmem:[#allocation4 + $0x1c0] sm:$0xff] %v987
        %1020 = vst [vmem:[#allocation4 + $0x1d8] sm:$0xff] %v988
        %1021 = vst [vmem:[#allocation4 + $0x1f0] sm:$0xff] %v989
        %1022 = vst [vmem:[#allocation4 + $0x208] sm:$0xff] %v990
        %1023 = vst [vmem:[#allocation4 + $0x220] sm:$0xff] %v991
        %1024 = vst [vmem:[#allocation4 + $0x238] sm:$0xff] %v992
        %1025 = vst [vmem:[#allocation4 + $0x250] sm:$0xff] %v993
        %1026 = vst [vmem:[#allocation4 + $0x268] sm:$0xff] %v994
        %1027 = vst [vmem:[#allocation4 + $0x280] sm:$0xff] %v995
        %1028 = vst [vmem:[#allocation4 + $0x298] sm:$0xff] %v996
        %1029 = vst [vmem:[#allocation4 + $0x2b0] sm:$0xff] %v997
        %1030 = vst [vmem:[#allocation4 + $0x2c8] sm:$0xff] %v998
        %1031 = vst [vmem:[#allocation4 + $0x2e0] sm:$0xff] %v999
        %1032 = vst [vmem:[#allocation4 + $0x2f8] sm:$0xff] %v1000
        %v1033 = vld [vmem:[#allocation4] sm:$0xff]
        %v1034 = vld [vmem:[#allocation4 + $0x8] sm:$0xff]
        %v1035 = vld [vmem:[#allocation4 + $0x10] sm:$0xff]
        %v1036 = vld [vmem:[#allocation4 + $0x18] sm:$0xff]
        %v1037 = vld [vmem:[#allocation4 + $0x20] sm:$0xff]
        %v1038 = vld [vmem:[#allocation4 + $0x28] sm:$0xff]
        %v1039 = vld [vmem:[#allocation4 + $0x30] sm:$0xff]
        %v1040 = vld [vmem:[#allocation4 + $0x38] sm:$0xff]
        %v1041 = vld [vmem:[#allocation4 + $0x40] sm:$0xff]
        %v1042 = vld [vmem:[#allocation4 + $0x48] sm:$0xff]
        %v1043 = vld [vmem:[#allocation4 + $0x50] sm:$0xff]
        %v1044 = vld [vmem:[#allocation4 + $0x58] sm:$0xff]
        %v1045 = vld [vmem:[#allocation4 + $0x60] sm:$0xff]
        %v1046 = vld [vmem:[#allocation4 + $0x68] sm:$0xff]
        %v1047 = vld [vmem:[#allocation4 + $0x70] sm:$0xff]
        %v1048 = vld [vmem:[#allocation4 + $0x78] sm:$0xff]
        %v1049 = vld [vmem:[#allocation4 + $0x80] sm:$0xff]
        %v1050 = vld [vmem:[#allocation4 + $0x88] sm:$0xff]
        %v1051 = vld [vmem:[#allocation4 + $0x90] sm:$0xff]
        %v1052 = vld [vmem:[#allocation4 + $0x98] sm:$0xff]
        %v1053 = vld [vmem:[#allocation4 + $0xa0] sm:$0xff]
        %v1054 = vld [vmem:[#allocation4 + $0xa8] sm:$0xff]
        %v1055 = vld [vmem:[#allocation4 + $0xb0] sm:$0xff]
        %v1056 = vld [vmem:[#allocation4 + $0xb8] sm:$0xff]
        %v1057 = vld [vmem:[#allocation4 + $0xc0] sm:$0xff]
        %v1058 = vld [vmem:[#allocation4 + $0xc8] sm:$0xff]
        %v1059 = vld [vmem:[#allocation4 + $0xd0] sm:$0xff]
        %v1060 = vld [vmem:[#allocation4 + $0xd8] sm:$0xff]
        %v1061 = vld [vmem:[#allocation4 + $0xe0] sm:$0xff]
        %v1062 = vld [vmem:[#allocation4 + $0xe8] sm:$0xff]
        %v1063 = vld [vmem:[#allocation4 + $0xf0] sm:$0xff]
        %v1064 = vld [vmem:[#allocation4 + $0xf8] sm:$0xff]
        %v1065 = vld [vmem:[#allocation4 + $0x100] sm:$0xff]
        %v1066 = vld [vmem:[#allocation4 + $0x108] sm:$0xff]
        %v1067 = vld [vmem:[#allocation4 + $0x110] sm:$0xff]
        %v1068 = vld [vmem:[#allocation4 + $0x118] sm:$0xff]
        %v1069 = vld [vmem:[#allocation4 + $0x120] sm:$0xff]
        %v1070 = vld [vmem:[#allocation4 + $0x128] sm:$0xff]
        %v1071 = vld [vmem:[#allocation4 + $0x130] sm:$0xff]
        %v1072 = vld [vmem:[#allocation4 + $0x138] sm:$0xff]
        %v1073 = vld [vmem:[#allocation4 + $0x140] sm:$0xff]
        %v1074 = vld [vmem:[#allocation4 + $0x148] sm:$0xff]
        %v1075 = vld [vmem:[#allocation4 + $0x150] sm:$0xff]
        %v1076 = vld [vmem:[#allocation4 + $0x158] sm:$0xff]
        %v1077 = vld [vmem:[#allocation4 + $0x160] sm:$0xff]
        %v1078 = vld [vmem:[#allocation4 + $0x168] sm:$0xff]
        %v1079 = vld [vmem:[#allocation4 + $0x170] sm:$0xff]
        %v1080 = vld [vmem:[#allocation4 + $0x178] sm:$0xff]
        %v1081 = vld [vmem:[#allocation4 + $0x180] sm:$0xff]
        %v1082 = vld [vmem:[#allocation4 + $0x188] sm:$0xff]
        %v1083 = vld [vmem:[#allocation4 + $0x190] sm:$0xff]
        %v1084 = vld [vmem:[#allocation4 + $0x198] sm:$0xff]
        %v1085 = vld [vmem:[#allocation4 + $0x1a0] sm:$0xff]
        %v1086 = vld [vmem:[#allocation4 + $0x1a8] sm:$0xff]
        %v1087 = vld [vmem:[#allocation4 + $0x1b0] sm:$0xff]
        %v1088 = vld [vmem:[#allocation4 + $0x1b8] sm:$0xff]
        %v1089 = vld [vmem:[#allocation4 + $0x1c0] sm:$0xff]
        %v1090 = vld [vmem:[#allocation4 + $0x1c8] sm:$0xff]
        %v1091 = vld [vmem:[#allocation4 + $0x1d0] sm:$0xff]
        %v1092 = vld [vmem:[#allocation4 + $0x1d8] sm:$0xff]
        %v1093 = vld [vmem:[#allocation4 + $0x1e0] sm:$0xff]
        %v1094 = vld [vmem:[#allocation4 + $0x1e8] sm:$0xff]
        %v1095 = vld [vmem:[#allocation4 + $0x1f0] sm:$0xff]
        %v1096 = vld [vmem:[#allocation4 + $0x1f8] sm:$0xff]
        %v1097 = vld [vmem:[#allocation4 + $0x200] sm:$0xff]
        %v1098 = vld [vmem:[#allocation4 + $0x208] sm:$0xff]
        %v1099 = vld [vmem:[#allocation4 + $0x210] sm:$0xff]
        %v1100 = vld [vmem:[#allocation4 + $0x218] sm:$0xff]
        %v1101 = vld [vmem:[#allocation4 + $0x220] sm:$0xff]
        %v1102 = vld [vmem:[#allocation4 + $0x228] sm:$0xff]
        %v1103 = vld [vmem:[#allocation4 + $0x230] sm:$0xff]
        %v1104 = vld [vmem:[#allocation4 + $0x238] sm:$0xff]
        %v1105 = vld [vmem:[#allocation4 + $0x240] sm:$0xff]
        %v1106 = vld [vmem:[#allocation4 + $0x248] sm:$0xff]
        %v1107 = vld [vmem:[#allocation4 + $0x250] sm:$0xff]
        %v1108 = vld [vmem:[#allocation4 + $0x258] sm:$0xff]
        %v1109 = vld [vmem:[#allocation4 + $0x260] sm:$0xff]
        %v1110 = vld [vmem:[#allocation4 + $0x268] sm:$0xff]
        %v1111 = vld [vmem:[#allocation4 + $0x270] sm:$0xff]
        %v1112 = vld [vmem:[#allocation4 + $0x278] sm:$0xff]
        %v1113 = vld [vmem:[#allocation4 + $0x280] sm:$0xff]
        %v1114 = vld [vmem:[#allocation4 + $0x288] sm:$0xff]
        %v1115 = vld [vmem:[#allocation4 + $0x290] sm:$0xff]
        %v1116 = vld [vmem:[#allocation4 + $0x298] sm:$0xff]
        %v1117 = vld [vmem:[#allocation4 + $0x2a0] sm:$0xff]
        %v1118 = vld [vmem:[#allocation4 + $0x2a8] sm:$0xff]
        %v1119 = vld [vmem:[#allocation4 + $0x2b0] sm:$0xff]
        %v1120 = vld [vmem:[#allocation4 + $0x2b8] sm:$0xff]
        %v1121 = vld [vmem:[#allocation4 + $0x2c0] sm:$0xff]
        %v1122 = vld [vmem:[#allocation4 + $0x2c8] sm:$0xff]
        %v1123 = vld [vmem:[#allocation4 + $0x2d0] sm:$0xff]
        %v1124 = vld [vmem:[#allocation4 + $0x2d8] sm:$0xff]
        %v1125 = vld [vmem:[#allocation4 + $0x2e0] sm:$0xff]
        %v1126 = vld [vmem:[#allocation4 + $0x2e8] sm:$0xff]
        %v1127 = vld [vmem:[#allocation4 + $0x2f0] sm:$0xff]
        %v1128 = vld [vmem:[#allocation4 + $0x2f8] sm:$0xff]
        %v1129 = vld [vmem:[#allocation5 + $0x180] sm:$0xff]
        %v1130 = vld [vmem:[#allocation5 + $0x188] sm:$0xff]
        %v1131 = vld [vmem:[#allocation5 + $0x190] sm:$0xff]
        %v1132 = vld [vmem:[#allocation5 + $0x198] sm:$0xff]
        %v1133 = vld [vmem:[#allocation5 + $0x1a0] sm:$0xff]
        %v1134 = vld [vmem:[#allocation5 + $0x1a8] sm:$0xff]
        %v1135 = vld [vmem:[#allocation5 + $0x1b0] sm:$0xff]
        %v1136 = vld [vmem:[#allocation5 + $0x1b8] sm:$0xff]
        %v1137 = vld [vmem:[#allocation5 + $0x1c0] sm:$0xff]
        %v1138 = vld [vmem:[#allocation5 + $0x1c8] sm:$0xff]
        %v1139 = vld [vmem:[#allocation5 + $0x1d0] sm:$0xff]
        %v1140 = vld [vmem:[#allocation5 + $0x1d8] sm:$0xff]
        %v1141 = vld [vmem:[#allocation5 + $0x1e0] sm:$0xff]
        %v1142 = vld [vmem:[#allocation5 + $0x1e8] sm:$0xff]
        %v1143 = vld [vmem:[#allocation5 + $0x1f0] sm:$0xff]
        %v1144 = vld [vmem:[#allocation5 + $0x1f8] sm:$0xff]
        %v1145 = vld [vmem:[#allocation5 + $0x200] sm:$0xff]
        %v1146 = vld [vmem:[#allocation5 + $0x208] sm:$0xff]
        %v1147 = vld [vmem:[#allocation5 + $0x210] sm:$0xff]
        %v1148 = vld [vmem:[#allocation5 + $0x218] sm:$0xff]
        %v1149 = vld [vmem:[#allocation5 + $0x220] sm:$0xff]
        %v1150 = vld [vmem:[#allocation5 + $0x228] sm:$0xff]
        %v1151 = vld [vmem:[#allocation5 + $0x230] sm:$0xff]
        %v1152 = vld [vmem:[#allocation5 + $0x238] sm:$0xff]
        %v1153 = vld [vmem:[#allocation5 + $0x240] sm:$0xff]
        %v1154 = vld [vmem:[#allocation5 + $0x248] sm:$0xff]
        %v1155 = vld [vmem:[#allocation5 + $0x250] sm:$0xff]
        %v1156 = vld [vmem:[#allocation5 + $0x258] sm:$0xff]
        %v1157 = vld [vmem:[#allocation5 + $0x260] sm:$0xff]
        %v1158 = vld [vmem:[#allocation5 + $0x268] sm:$0xff]
        %v1159 = vld [vmem:[#allocation5 + $0x270] sm:$0xff]
        %v1160 = vld [vmem:[#allocation5 + $0x278] sm:$0xff]
        %v1161 = vld [vmem:[#allocation5 + $0x280] sm:$0xff]
        %v1162 = vld [vmem:[#allocation5 + $0x288] sm:$0xff]
        %v1163 = vld [vmem:[#allocation5 + $0x290] sm:$0xff]
        %v1164 = vld [vmem:[#allocation5 + $0x298] sm:$0xff]
        %v1165 = vld [vmem:[#allocation5 + $0x2a0] sm:$0xff]
        %v1166 = vld [vmem:[#allocation5 + $0x2a8] sm:$0xff]
        %v1167 = vld [vmem:[#allocation5 + $0x2b0] sm:$0xff]
        %v1168 = vld [vmem:[#allocation5 + $0x2b8] sm:$0xff]
        %v1169 = vld [vmem:[#allocation5 + $0x2c0] sm:$0xff]
        %v1170 = vld [vmem:[#allocation5 + $0x2c8] sm:$0xff]
        %v1171 = vld [vmem:[#allocation5 + $0x2d0] sm:$0xff]
        %v1172 = vld [vmem:[#allocation5 + $0x2d8] sm:$0xff]
        %v1173 = vld [vmem:[#allocation5 + $0x2e0] sm:$0xff]
        %v1174 = vld [vmem:[#allocation5 + $0x2e8] sm:$0xff]
        %v1175 = vld [vmem:[#allocation5 + $0x2f0] sm:$0xff]
        %v1176 = vld [vmem:[#allocation5 + $0x2f8] sm:$0xff]
        %1177 = vmatpush.msra.mxu0 %v1144
        %1178 = vmatpush.msra.mxu0 %v1143
        %1179 = vmatpush.msra.mxu0 %v1142
        %1180 = vmatpush.msra.mxu0 %v1141
        %1181 = vmatpush.msra.mxu0 %v1140
        %1182 = vmatpush.msra.mxu0 %v1139
        %1183 = vmatpush.msra.mxu0 %v1138
        %1184 = vmatpush.msra.mxu0 %v1137
        %1185 = vmatpush.msra.mxu0 %v1136
        %1186 = vmatpush.msra.mxu0 %v1135
        %1187 = vmatpush.msra.mxu0 %v1134
        %1188 = vmatpush.msra.mxu0 %v1133
        %1189 = vmatpush.msra.mxu0 %v1132
        %1190 = vmatpush.msra.mxu0 %v1131
        %1191 = vmatpush.msra.mxu0 %v1130
        %1192 = vmatpush.msra.mxu0 %v1129
        %1193 = vmatmul.f32.gmra.mxu0 %v1033
        %v1194 = vpop.f32.mrf.mxu0
        %v1195 = vadd.f32 0.0, %v1194
        %1196 = vmatmul.f32.gmra.mxu0 %v1036
        %v1197 = vpop.f32.mrf.mxu0
        %v1198 = vadd.f32 0.0, %v1197
        %1199 = vmatmul.f32.gmra.mxu0 %v1039
        %v1200 = vpop.f32.mrf.mxu0
        %v1201 = vadd.f32 0.0, %v1200
        %1202 = vmatmul.f32.gmra.mxu0 %v1042
        %v1203 = vpop.f32.mrf.mxu0
        %v1204 = vadd.f32 0.0, %v1203
        %1205 = vmatmul.f32.gmra.mxu0 %v1045
        %v1206 = vpop.f32.mrf.mxu0
        %v1207 = vadd.f32 0.0, %v1206
        %1208 = vmatmul.f32.gmra.mxu0 %v1048
        %v1209 = vpop.f32.mrf.mxu0
        %v1210 = vadd.f32 0.0, %v1209
        %1211 = vmatmul.f32.gmra.mxu0 %v1051
        %v1212 = vpop.f32.mrf.mxu0
        %v1213 = vadd.f32 0.0, %v1212
        %1214 = vmatmul.f32.gmra.mxu0 %v1054
        %v1215 = vpop.f32.mrf.mxu0
        %v1216 = vadd.f32 0.0, %v1215
        %1217 = vmatmul.f32.gmra.mxu0 %v1057
        %v1218 = vpop.f32.mrf.mxu0
        %v1219 = vadd.f32 0.0, %v1218
        %1220 = vmatmul.f32.gmra.mxu0 %v1060
        %v1221 = vpop.f32.mrf.mxu0
        %v1222 = vadd.f32 0.0, %v1221
        %1223 = vmatmul.f32.gmra.mxu0 %v1063
        %v1224 = vpop.f32.mrf.mxu0
        %v1225 = vadd.f32 0.0, %v1224
        %1226 = vmatmul.f32.gmra.mxu0 %v1066
        %v1227 = vpop.f32.mrf.mxu0
        %v1228 = vadd.f32 0.0, %v1227
        %1229 = vmatmul.f32.gmra.mxu0 %v1069
        %v1230 = vpop.f32.mrf.mxu0
        %v1231 = vadd.f32 0.0, %v1230
        %1232 = vmatmul.f32.gmra.mxu0 %v1072
        %v1233 = vpop.f32.mrf.mxu0
        %v1234 = vadd.f32 0.0, %v1233
        %1235 = vmatmul.f32.gmra.mxu0 %v1075
        %v1236 = vpop.f32.mrf.mxu0
        %v1237 = vadd.f32 0.0, %v1236
        %1238 = vmatmul.f32.gmra.mxu0 %v1078
        %v1239 = vpop.f32.mrf.mxu0
        %v1240 = vadd.f32 0.0, %v1239
        %1241 = vmatmul.f32.gmra.mxu0 %v1081
        %v1242 = vpop.f32.mrf.mxu0
        %v1243 = vadd.f32 0.0, %v1242
        %1244 = vmatmul.f32.gmra.mxu0 %v1084
        %v1245 = vpop.f32.mrf.mxu0
        %v1246 = vadd.f32 0.0, %v1245
        %1247 = vmatmul.f32.gmra.mxu0 %v1087
        %v1248 = vpop.f32.mrf.mxu0
        %v1249 = vadd.f32 0.0, %v1248
        %1250 = vmatmul.f32.gmra.mxu0 %v1090
        %v1251 = vpop.f32.mrf.mxu0
        %v1252 = vadd.f32 0.0, %v1251
        %1253 = vmatmul.f32.gmra.mxu0 %v1093
        %v1254 = vpop.f32.mrf.mxu0
        %v1255 = vadd.f32 0.0, %v1254
        %1256 = vmatmul.f32.gmra.mxu0 %v1096
        %v1257 = vpop.f32.mrf.mxu0
        %v1258 = vadd.f32 0.0, %v1257
        %1259 = vmatmul.f32.gmra.mxu0 %v1099
        %v1260 = vpop.f32.mrf.mxu0
        %v1261 = vadd.f32 0.0, %v1260
        %1262 = vmatmul.f32.gmra.mxu0 %v1102
        %v1263 = vpop.f32.mrf.mxu0
        %v1264 = vadd.f32 0.0, %v1263
        %1265 = vmatmul.f32.gmra.mxu0 %v1105
        %v1266 = vpop.f32.mrf.mxu0
        %v1267 = vadd.f32 0.0, %v1266
        %1268 = vmatmul.f32.gmra.mxu0 %v1108
        %v1269 = vpop.f32.mrf.mxu0
        %v1270 = vadd.f32 0.0, %v1269
        %1271 = vmatmul.f32.gmra.mxu0 %v1111
        %v1272 = vpop.f32.mrf.mxu0
        %v1273 = vadd.f32 0.0, %v1272
        %1274 = vmatmul.f32.gmra.mxu0 %v1114
        %v1275 = vpop.f32.mrf.mxu0
        %v1276 = vadd.f32 0.0, %v1275
        %1277 = vmatmul.f32.gmra.mxu0 %v1117
        %v1278 = vpop.f32.mrf.mxu0
        %v1279 = vadd.f32 0.0, %v1278
        %1280 = vmatmul.f32.gmra.mxu0 %v1120
        %v1281 = vpop.f32.mrf.mxu0
        %v1282 = vadd.f32 0.0, %v1281
        %1283 = vmatmul.f32.gmra.mxu0 %v1123
        %v1284 = vpop.f32.mrf.mxu0
        %v1285 = vadd.f32 0.0, %v1284
        %1286 = vmatmul.f32.gmra.mxu0 %v1126
        %v1287 = vpop.f32.mrf.mxu0
        %v1288 = vadd.f32 0.0, %v1287
        %1289 = vdwg.mxu0
        %1290 = vmatpush.msra.mxu0 %v1160
        %1291 = vmatpush.msra.mxu0 %v1159
        %1292 = vmatpush.msra.mxu0 %v1158
        %1293 = vmatpush.msra.mxu0 %v1157
        %1294 = vmatpush.msra.mxu0 %v1156
        %1295 = vmatpush.msra.mxu0 %v1155
        %1296 = vmatpush.msra.mxu0 %v1154
        %1297 = vmatpush.msra.mxu0 %v1153
        %1298 = vmatpush.msra.mxu0 %v1152
        %1299 = vmatpush.msra.mxu0 %v1151
        %1300 = vmatpush.msra.mxu0 %v1150
        %1301 = vmatpush.msra.mxu0 %v1149
        %1302 = vmatpush.msra.mxu0 %v1148
        %1303 = vmatpush.msra.mxu0 %v1147
        %1304 = vmatpush.msra.mxu0 %v1146
        %1305 = vmatpush.msra.mxu0 %v1145
        %1306 = vmatmul.f32.gmra.mxu0 %v1034
        %v1307 = vpop.f32.mrf.mxu0
        %v1308 = vadd.f32 %v1195, %v1307
        %1309 = vmatmul.f32.gmra.mxu0 %v1037
        %v1310 = vpop.f32.mrf.mxu0
        %v1311 = vadd.f32 %v1198, %v1310
        %1312 = vmatmul.f32.gmra.mxu0 %v1040
        %v1313 = vpop.f32.mrf.mxu0
        %v1314 = vadd.f32 %v1201, %v1313
        %1315 = vmatmul.f32.gmra.mxu0 %v1043
        %v1316 = vpop.f32.mrf.mxu0
        %v1317 = vadd.f32 %v1204, %v1316
        %1318 = vmatmul.f32.gmra.mxu0 %v1046
        %v1319 = vpop.f32.mrf.mxu0
        %v1320 = vadd.f32 %v1207, %v1319
        %1321 = vmatmul.f32.gmra.mxu0 %v1049
        %v1322 = vpop.f32.mrf.mxu0
        %v1323 = vadd.f32 %v1210, %v1322
        %1324 = vmatmul.f32.gmra.mxu0 %v1052
        %v1325 = vpop.f32.mrf.mxu0
        %v1326 = vadd.f32 %v1213, %v1325
        %1327 = vmatmul.f32.gmra.mxu0 %v1055
        %v1328 = vpop.f32.mrf.mxu0
        %v1329 = vadd.f32 %v1216, %v1328
        %1330 = vmatmul.f32.gmra.mxu0 %v1058
        %v1331 = vpop.f32.mrf.mxu0
        %v1332 = vadd.f32 %v1219, %v1331
        %1333 = vmatmul.f32.gmra.mxu0 %v1061
        %v1334 = vpop.f32.mrf.mxu0
        %v1335 = vadd.f32 %v1222, %v1334
        %1336 = vmatmul.f32.gmra.mxu0 %v1064
        %v1337 = vpop.f32.mrf.mxu0
        %v1338 = vadd.f32 %v1225, %v1337
        %1339 = vmatmul.f32.gmra.mxu0 %v1067
        %v1340 = vpop.f32.mrf.mxu0
        %v1341 = vadd.f32 %v1228, %v1340
        %1342 = vmatmul.f32.gmra.mxu0 %v1070
        %v1343 = vpop.f32.mrf.mxu0
        %v1344 = vadd.f32 %v1231, %v1343
        %1345 = vmatmul.f32.gmra.mxu0 %v1073
        %v1346 = vpop.f32.mrf.mxu0
        %v1347 = vadd.f32 %v1234, %v1346
        %1348 = vmatmul.f32.gmra.mxu0 %v1076
        %v1349 = vpop.f32.mrf.mxu0
        %v1350 = vadd.f32 %v1237, %v1349
        %1351 = vmatmul.f32.gmra.mxu0 %v1079
        %v1352 = vpop.f32.mrf.mxu0
        %v1353 = vadd.f32 %v1240, %v1352
        %1354 = vmatmul.f32.gmra.mxu0 %v1082
        %v1355 = vpop.f32.mrf.mxu0
        %v1356 = vadd.f32 %v1243, %v1355
        %1357 = vmatmul.f32.gmra.mxu0 %v1085
        %v1358 = vpop.f32.mrf.mxu0
        %v1359 = vadd.f32 %v1246, %v1358
        %1360 = vmatmul.f32.gmra.mxu0 %v1088
        %v1361 = vpop.f32.mrf.mxu0
        %v1362 = vadd.f32 %v1249, %v1361
        %1363 = vmatmul.f32.gmra.mxu0 %v1091
        %v1364 = vpop.f32.mrf.mxu0
        %v1365 = vadd.f32 %v1252, %v1364
        %1366 = vmatmul.f32.gmra.mxu0 %v1094
        %v1367 = vpop.f32.mrf.mxu0
        %v1368 = vadd.f32 %v1255, %v1367
        %1369 = vmatmul.f32.gmra.mxu0 %v1097
        %v1370 = vpop.f32.mrf.mxu0
        %v1371 = vadd.f32 %v1258, %v1370
        %1372 = vmatmul.f32.gmra.mxu0 %v1100
        %v1373 = vpop.f32.mrf.mxu0
        %v1374 = vadd.f32 %v1261, %v1373
        %1375 = vmatmul.f32.gmra.mxu0 %v1103
        %v1376 = vpop.f32.mrf.mxu0
        %v1377 = vadd.f32 %v1264, %v1376
        %1378 = vmatmul.f32.gmra.mxu0 %v1106
        %v1379 = vpop.f32.mrf.mxu0
        %v1380 = vadd.f32 %v1267, %v1379
        %1381 = vmatmul.f32.gmra.mxu0 %v1109
        %v1382 = vpop.f32.mrf.mxu0
        %v1383 = vadd.f32 %v1270, %v1382
        %1384 = vmatmul.f32.gmra.mxu0 %v1112
        %v1385 = vpop.f32.mrf.mxu0
        %v1386 = vadd.f32 %v1273, %v1385
        %1387 = vmatmul.f32.gmra.mxu0 %v1115
        %v1388 = vpop.f32.mrf.mxu0
        %v1389 = vadd.f32 %v1276, %v1388
        %1390 = vmatmul.f32.gmra.mxu0 %v1118
        %v1391 = vpop.f32.mrf.mxu0
        %v1392 = vadd.f32 %v1279, %v1391
        %1393 = vmatmul.f32.gmra.mxu0 %v1121
        %v1394 = vpop.f32.mrf.mxu0
        %v1395 = vadd.f32 %v1282, %v1394
        %1396 = vmatmul.f32.gmra.mxu0 %v1124
        %v1397 = vpop.f32.mrf.mxu0
        %v1398 = vadd.f32 %v1285, %v1397
        %1399 = vmatmul.f32.gmra.mxu0 %v1127
        %v1400 = vpop.f32.mrf.mxu0
        %v1401 = vadd.f32 %v1288, %v1400
        %1402 = vdwg.mxu0
        %1403 = vmatpush.msra.mxu0 %v1176
        %1404 = vmatpush.msra.mxu0 %v1175
        %1405 = vmatpush.msra.mxu0 %v1174
        %1406 = vmatpush.msra.mxu0 %v1173
        %1407 = vmatpush.msra.mxu0 %v1172
        %1408 = vmatpush.msra.mxu0 %v1171
        %1409 = vmatpush.msra.mxu0 %v1170
        %1410 = vmatpush.msra.mxu0 %v1169
        %1411 = vmatpush.msra.mxu0 %v1168
        %1412 = vmatpush.msra.mxu0 %v1167
        %1413 = vmatpush.msra.mxu0 %v1166
        %1414 = vmatpush.msra.mxu0 %v1165
        %1415 = vmatpush.msra.mxu0 %v1164
        %1416 = vmatpush.msra.mxu0 %v1163
        %1417 = vmatpush.msra.mxu0 %v1162
        %1418 = vmatpush.msra.mxu0 %v1161
        %1419 = vmatmul.f32.gmra.mxu0 %v1035
        %v1420 = vpop.f32.mrf.mxu0
        %v1421 = vadd.f32 %v1308, %v1420
        %1422 = vmatmul.f32.gmra.mxu0 %v1038
        %v1423 = vpop.f32.mrf.mxu0
        %v1424 = vadd.f32 %v1311, %v1423
        %1425 = vmatmul.f32.gmra.mxu0 %v1041
        %v1426 = vpop.f32.mrf.mxu0
        %v1427 = vadd.f32 %v1314, %v1426
        %1428 = vmatmul.f32.gmra.mxu0 %v1044
        %v1429 = vpop.f32.mrf.mxu0
        %v1430 = vadd.f32 %v1317, %v1429
        %1431 = vmatmul.f32.gmra.mxu0 %v1047
        %v1432 = vpop.f32.mrf.mxu0
        %v1433 = vadd.f32 %v1320, %v1432
        %1434 = vmatmul.f32.gmra.mxu0 %v1050
        %v1435 = vpop.f32.mrf.mxu0
        %v1436 = vadd.f32 %v1323, %v1435
        %1437 = vmatmul.f32.gmra.mxu0 %v1053
        %v1438 = vpop.f32.mrf.mxu0
        %v1439 = vadd.f32 %v1326, %v1438
        %1440 = vmatmul.f32.gmra.mxu0 %v1056
        %v1441 = vpop.f32.mrf.mxu0
        %v1442 = vadd.f32 %v1329, %v1441
        %1443 = vmatmul.f32.gmra.mxu0 %v1059
        %v1444 = vpop.f32.mrf.mxu0
        %v1445 = vadd.f32 %v1332, %v1444
        %1446 = vmatmul.f32.gmra.mxu0 %v1062
        %v1447 = vpop.f32.mrf.mxu0
        %v1448 = vadd.f32 %v1335, %v1447
        %1449 = vmatmul.f32.gmra.mxu0 %v1065
        %v1450 = vpop.f32.mrf.mxu0
        %v1451 = vadd.f32 %v1338, %v1450
        %1452 = vmatmul.f32.gmra.mxu0 %v1068
        %v1453 = vpop.f32.mrf.mxu0
        %v1454 = vadd.f32 %v1341, %v1453
        %1455 = vmatmul.f32.gmra.mxu0 %v1071
        %v1456 = vpop.f32.mrf.mxu0
        %v1457 = vadd.f32 %v1344, %v1456
        %1458 = vmatmul.f32.gmra.mxu0 %v1074
        %v1459 = vpop.f32.mrf.mxu0
        %v1460 = vadd.f32 %v1347, %v1459
        %1461 = vmatmul.f32.gmra.mxu0 %v1077
        %v1462 = vpop.f32.mrf.mxu0
        %v1463 = vadd.f32 %v1350, %v1462
        %1464 = vmatmul.f32.gmra.mxu0 %v1080
        %v1465 = vpop.f32.mrf.mxu0
        %v1466 = vadd.f32 %v1353, %v1465
        %1467 = vmatmul.f32.gmra.mxu0 %v1083
        %v1468 = vpop.f32.mrf.mxu0
        %v1469 = vadd.f32 %v1356, %v1468
        %1470 = vmatmul.f32.gmra.mxu0 %v1086
        %v1471 = vpop.f32.mrf.mxu0
        %v1472 = vadd.f32 %v1359, %v1471
        %1473 = vmatmul.f32.gmra.mxu0 %v1089
        %v1474 = vpop.f32.mrf.mxu0
        %v1475 = vadd.f32 %v1362, %v1474
        %1476 = vmatmul.f32.gmra.mxu0 %v1092
        %v1477 = vpop.f32.mrf.mxu0
        %v1478 = vadd.f32 %v1365, %v1477
        %1479 = vmatmul.f32.gmra.mxu0 %v1095
        %v1480 = vpop.f32.mrf.mxu0
        %v1481 = vadd.f32 %v1368, %v1480
        %1482 = vmatmul.f32.gmra.mxu0 %v1098
        %v1483 = vpop.f32.mrf.mxu0
        %v1484 = vadd.f32 %v1371, %v1483
        %1485 = vmatmul.f32.gmra.mxu0 %v1101
        %v1486 = vpop.f32.mrf.mxu0
        %v1487 = vadd.f32 %v1374, %v1486
        %1488 = vmatmul.f32.gmra.mxu0 %v1104
        %v1489 = vpop.f32.mrf.mxu0
        %v1490 = vadd.f32 %v1377, %v1489
        %1491 = vmatmul.f32.gmra.mxu0 %v1107
        %v1492 = vpop.f32.mrf.mxu0
        %v1493 = vadd.f32 %v1380, %v1492
        %1494 = vmatmul.f32.gmra.mxu0 %v1110
        %v1495 = vpop.f32.mrf.mxu0
        %v1496 = vadd.f32 %v1383, %v1495
        %1497 = vmatmul.f32.gmra.mxu0 %v1113
        %v1498 = vpop.f32.mrf.mxu0
        %v1499 = vadd.f32 %v1386, %v1498
        %1500 = vmatmul.f32.gmra.mxu0 %v1116
        %v1501 = vpop.f32.mrf.mxu0
        %v1502 = vadd.f32 %v1389, %v1501
        %1503 = vmatmul.f32.gmra.mxu0 %v1119
        %v1504 = vpop.f32.mrf.mxu0
        %v1505 = vadd.f32 %v1392, %v1504
        %1506 = vmatmul.f32.gmra.mxu0 %v1122
        %v1507 = vpop.f32.mrf.mxu0
        %v1508 = vadd.f32 %v1395, %v1507
        %1509 = vmatmul.f32.gmra.mxu0 %v1125
        %v1510 = vpop.f32.mrf.mxu0
        %v1511 = vadd.f32 %v1398, %v1510
        %1512 = vmatmul.f32.gmra.mxu0 %v1128
        %v1513 = vpop.f32.mrf.mxu0
        %v1514 = vadd.f32 %v1401, %v1513
        %1515 = vdwg.mxu0
        %1516 = vmatpush.msra.mxu0 %v808
        %1517 = vmatpush.msra.mxu0 %v807
        %1518 = vmatpush.msra.mxu0 %v806
        %1519 = vmatpush.msra.mxu0 %v805
        %1520 = vmatpush.msra.mxu0 %v804
        %1521 = vmatpush.msra.mxu0 %v803
        %1522 = vmatpush.msra.mxu0 %v802
        %1523 = vmatpush.msra.mxu0 %v801
        %1524 = vmatpush.msra.mxu0 %v800
        %1525 = vmatpush.msra.mxu0 %v799
        %1526 = vmatpush.msra.mxu0 %v798
        %1527 = vmatpush.msra.mxu0 %v797
        %1528 = vmatpush.msra.mxu0 %v796
        %1529 = vmatpush.msra.mxu0 %v795
        %1530 = vmatpush.msra.mxu0 %v794
        %1531 = vmatpush.msra.mxu0 %v793
        %1532 = vmatmul.f32.gmra.mxu0 %v697
        %v1533 = vpop.f32.mrf.mxu0
        %v1534 = vadd.f32 %v1421, %v1533
        %1535 = vmatmul.f32.gmra.mxu0 %v700
        %v1536 = vpop.f32.mrf.mxu0
        %v1537 = vadd.f32 %v1424, %v1536
        %1538 = vmatmul.f32.gmra.mxu0 %v703
        %v1539 = vpop.f32.mrf.mxu0
        %v1540 = vadd.f32 %v1427, %v1539
        %1541 = vmatmul.f32.gmra.mxu0 %v706
        %v1542 = vpop.f32.mrf.mxu0
        %v1543 = vadd.f32 %v1430, %v1542
        %1544 = vmatmul.f32.gmra.mxu0 %v709
        %v1545 = vpop.f32.mrf.mxu0
        %v1546 = vadd.f32 %v1433, %v1545
        %1547 = vmatmul.f32.gmra.mxu0 %v712
        %v1548 = vpop.f32.mrf.mxu0
        %v1549 = vadd.f32 %v1436, %v1548
        %1550 = vmatmul.f32.gmra.mxu0 %v715
        %v1551 = vpop.f32.mrf.mxu0
        %v1552 = vadd.f32 %v1439, %v1551
        %1553 = vmatmul.f32.gmra.mxu0 %v718
        %v1554 = vpop.f32.mrf.mxu0
        %v1555 = vadd.f32 %v1442, %v1554
        %1556 = vmatmul.f32.gmra.mxu0 %v721
        %v1557 = vpop.f32.mrf.mxu0
        %v1558 = vadd.f32 %v1445, %v1557
        %1559 = vmatmul.f32.gmra.mxu0 %v724
        %v1560 = vpop.f32.mrf.mxu0
        %v1561 = vadd.f32 %v1448, %v1560
        %1562 = vmatmul.f32.gmra.mxu0 %v727
        %v1563 = vpop.f32.mrf.mxu0
        %v1564 = vadd.f32 %v1451, %v1563
        %1565 = vmatmul.f32.gmra.mxu0 %v730
        %v1566 = vpop.f32.mrf.mxu0
        %v1567 = vadd.f32 %v1454, %v1566
        %1568 = vmatmul.f32.gmra.mxu0 %v733
        %v1569 = vpop.f32.mrf.mxu0
        %v1570 = vadd.f32 %v1457, %v1569
        %1571 = vmatmul.f32.gmra.mxu0 %v736
        %v1572 = vpop.f32.mrf.mxu0
        %v1573 = vadd.f32 %v1460, %v1572
        %1574 = vmatmul.f32.gmra.mxu0 %v739
        %v1575 = vpop.f32.mrf.mxu0
        %v1576 = vadd.f32 %v1463, %v1575
        %1577 = vmatmul.f32.gmra.mxu0 %v742
        %v1578 = vpop.f32.mrf.mxu0
        %v1579 = vadd.f32 %v1466, %v1578
        %1580 = vmatmul.f32.gmra.mxu0 %v745
        %v1581 = vpop.f32.mrf.mxu0
        %v1582 = vadd.f32 %v1469, %v1581
        %1583 = vmatmul.f32.gmra.mxu0 %v748
        %v1584 = vpop.f32.mrf.mxu0
        %v1585 = vadd.f32 %v1472, %v1584
        %1586 = vmatmul.f32.gmra.mxu0 %v751
        %v1587 = vpop.f32.mrf.mxu0
        %v1588 = vadd.f32 %v1475, %v1587
        %1589 = vmatmul.f32.gmra.mxu0 %v754
        %v1590 = vpop.f32.mrf.mxu0
        %v1591 = vadd.f32 %v1478, %v1590
        %1592 = vmatmul.f32.gmra.mxu0 %v757
        %v1593 = vpop.f32.mrf.mxu0
        %v1594 = vadd.f32 %v1481, %v1593
        %1595 = vmatmul.f32.gmra.mxu0 %v760
        %v1596 = vpop.f32.mrf.mxu0
        %v1597 = vadd.f32 %v1484, %v1596
        %1598 = vmatmul.f32.gmra.mxu0 %v763
        %v1599 = vpop.f32.mrf.mxu0
        %v1600 = vadd.f32 %v1487, %v1599
        %1601 = vmatmul.f32.gmra.mxu0 %v766
        %v1602 = vpop.f32.mrf.mxu0
        %v1603 = vadd.f32 %v1490, %v1602
        %1604 = vmatmul.f32.gmra.mxu0 %v769
        %v1605 = vpop.f32.mrf.mxu0
        %v1606 = vadd.f32 %v1493, %v1605
        %1607 = vmatmul.f32.gmra.mxu0 %v772
        %v1608 = vpop.f32.mrf.mxu0
        %v1609 = vadd.f32 %v1496, %v1608
        %1610 = vmatmul.f32.gmra.mxu0 %v775
        %v1611 = vpop.f32.mrf.mxu0
        %v1612 = vadd.f32 %v1499, %v1611
        %1613 = vmatmul.f32.gmra.mxu0 %v778
        %v1614 = vpop.f32.mrf.mxu0
        %v1615 = vadd.f32 %v1502, %v1614
        %1616 = vmatmul.f32.gmra.mxu0 %v781
        %v1617 = vpop.f32.mrf.mxu0
        %v1618 = vadd.f32 %v1505, %v1617
        %1619 = vmatmul.f32.gmra.mxu0 %v784
        %v1620 = vpop.f32.mrf.mxu0
        %v1621 = vadd.f32 %v1508, %v1620
        %1622 = vmatmul.f32.gmra.mxu0 %v787
        %v1623 = vpop.f32.mrf.mxu0
        %v1624 = vadd.f32 %v1511, %v1623
        %1625 = vmatmul.f32.gmra.mxu0 %v790
        %v1626 = vpop.f32.mrf.mxu0
        %v1627 = vadd.f32 %v1514, %v1626
        %1628 = vdwg.mxu0
        %1629 = vmatpush.msra.mxu0 %v824
        %1630 = vmatpush.msra.mxu0 %v823
        %1631 = vmatpush.msra.mxu0 %v822
        %1632 = vmatpush.msra.mxu0 %v821
        %1633 = vmatpush.msra.mxu0 %v820
        %1634 = vmatpush.msra.mxu0 %v819
        %1635 = vmatpush.msra.mxu0 %v818
        %1636 = vmatpush.msra.mxu0 %v817
        %1637 = vmatpush.msra.mxu0 %v816
        %1638 = vmatpush.msra.mxu0 %v815
        %1639 = vmatpush.msra.mxu0 %v814
        %1640 = vmatpush.msra.mxu0 %v813
        %1641 = vmatpush.msra.mxu0 %v812
        %1642 = vmatpush.msra.mxu0 %v811
        %1643 = vmatpush.msra.mxu0 %v810
        %1644 = vmatpush.msra.mxu0 %v809
        %1645 = vmatmul.f32.gmra.mxu0 %v698
        %v1646 = vpop.f32.mrf.mxu0
        %v1647 = vadd.f32 %v1534, %v1646
        %1648 = vmatmul.f32.gmra.mxu0 %v701
        %v1649 = vpop.f32.mrf.mxu0
        %v1650 = vadd.f32 %v1537, %v1649
        %1651 = vmatmul.f32.gmra.mxu0 %v704
        %v1652 = vpop.f32.mrf.mxu0
        %v1653 = vadd.f32 %v1540, %v1652
        %1654 = vmatmul.f32.gmra.mxu0 %v707
        %v1655 = vpop.f32.mrf.mxu0
        %v1656 = vadd.f32 %v1543, %v1655
        %1657 = vmatmul.f32.gmra.mxu0 %v710
        %v1658 = vpop.f32.mrf.mxu0
        %v1659 = vadd.f32 %v1546, %v1658
        %1660 = vmatmul.f32.gmra.mxu0 %v713
        %v1661 = vpop.f32.mrf.mxu0
        %v1662 = vadd.f32 %v1549, %v1661
        %1663 = vmatmul.f32.gmra.mxu0 %v716
        %v1664 = vpop.f32.mrf.mxu0
        %v1665 = vadd.f32 %v1552, %v1664
        %1666 = vmatmul.f32.gmra.mxu0 %v719
        %v1667 = vpop.f32.mrf.mxu0
        %v1668 = vadd.f32 %v1555, %v1667
        %1669 = vmatmul.f32.gmra.mxu0 %v722
        %v1670 = vpop.f32.mrf.mxu0
        %v1671 = vadd.f32 %v1558, %v1670
        %1672 = vmatmul.f32.gmra.mxu0 %v725
        %v1673 = vpop.f32.mrf.mxu0
        %v1674 = vadd.f32 %v1561, %v1673
        %1675 = vmatmul.f32.gmra.mxu0 %v728
        %v1676 = vpop.f32.mrf.mxu0
        %v1677 = vadd.f32 %v1564, %v1676
        %1678 = vmatmul.f32.gmra.mxu0 %v731
        %v1679 = vpop.f32.mrf.mxu0
        %v1680 = vadd.f32 %v1567, %v1679
        %1681 = vmatmul.f32.gmra.mxu0 %v734
        %v1682 = vpop.f32.mrf.mxu0
        %v1683 = vadd.f32 %v1570, %v1682
        %1684 = vmatmul.f32.gmra.mxu0 %v737
        %v1685 = vpop.f32.mrf.mxu0
        %v1686 = vadd.f32 %v1573, %v1685
        %1687 = vmatmul.f32.gmra.mxu0 %v740
        %v1688 = vpop.f32.mrf.mxu0
        %v1689 = vadd.f32 %v1576, %v1688
        %1690 = vmatmul.f32.gmra.mxu0 %v743
        %v1691 = vpop.f32.mrf.mxu0
        %v1692 = vadd.f32 %v1579, %v1691
        %1693 = vmatmul.f32.gmra.mxu0 %v746
        %v1694 = vpop.f32.mrf.mxu0
        %v1695 = vadd.f32 %v1582, %v1694
        %1696 = vmatmul.f32.gmra.mxu0 %v749
        %v1697 = vpop.f32.mrf.mxu0
        %v1698 = vadd.f32 %v1585, %v1697
        %1699 = vmatmul.f32.gmra.mxu0 %v752
        %v1700 = vpop.f32.mrf.mxu0
        %v1701 = vadd.f32 %v1588, %v1700
        %1702 = vmatmul.f32.gmra.mxu0 %v755
        %v1703 = vpop.f32.mrf.mxu0
        %v1704 = vadd.f32 %v1591, %v1703
        %1705 = vmatmul.f32.gmra.mxu0 %v758
        %v1706 = vpop.f32.mrf.mxu0
        %v1707 = vadd.f32 %v1594, %v1706
        %1708 = vmatmul.f32.gmra.mxu0 %v761
        %v1709 = vpop.f32.mrf.mxu0
        %v1710 = vadd.f32 %v1597, %v1709
        %1711 = vmatmul.f32.gmra.mxu0 %v764
        %v1712 = vpop.f32.mrf.mxu0
        %v1713 = vadd.f32 %v1600, %v1712
        %1714 = vmatmul.f32.gmra.mxu0 %v767
        %v1715 = vpop.f32.mrf.mxu0
        %v1716 = vadd.f32 %v1603, %v1715
        %1717 = vmatmul.f32.gmra.mxu0 %v770
        %v1718 = vpop.f32.mrf.mxu0
        %v1719 = vadd.f32 %v1606, %v1718
        %1720 = vmatmul.f32.gmra.mxu0 %v773
        %v1721 = vpop.f32.mrf.mxu0
        %v1722 = vadd.f32 %v1609, %v1721
        %1723 = vmatmul.f32.gmra.mxu0 %v776
        %v1724 = vpop.f32.mrf.mxu0
        %v1725 = vadd.f32 %v1612, %v1724
        %1726 = vmatmul.f32.gmra.mxu0 %v779
        %v1727 = vpop.f32.mrf.mxu0
        %v1728 = vadd.f32 %v1615, %v1727
        %1729 = vmatmul.f32.gmra.mxu0 %v782
        %v1730 = vpop.f32.mrf.mxu0
        %v1731 = vadd.f32 %v1618, %v1730
        %1732 = vmatmul.f32.gmra.mxu0 %v785
        %v1733 = vpop.f32.mrf.mxu0
        %v1734 = vadd.f32 %v1621, %v1733
        %1735 = vmatmul.f32.gmra.mxu0 %v788
        %v1736 = vpop.f32.mrf.mxu0
        %v1737 = vadd.f32 %v1624, %v1736
        %1738 = vmatmul.f32.gmra.mxu0 %v791
        %v1739 = vpop.f32.mrf.mxu0
        %v1740 = vadd.f32 %v1627, %v1739
        %1741 = vdwg.mxu0
        %1742 = vmatpush.msra.mxu0 %v840
        %1743 = vmatpush.msra.mxu0 %v839
        %1744 = vmatpush.msra.mxu0 %v838
        %1745 = vmatpush.msra.mxu0 %v837
        %1746 = vmatpush.msra.mxu0 %v836
        %1747 = vmatpush.msra.mxu0 %v835
        %1748 = vmatpush.msra.mxu0 %v834
        %1749 = vmatpush.msra.mxu0 %v833
        %1750 = vmatpush.msra.mxu0 %v832
        %1751 = vmatpush.msra.mxu0 %v831
        %1752 = vmatpush.msra.mxu0 %v830
        %1753 = vmatpush.msra.mxu0 %v829
        %1754 = vmatpush.msra.mxu0 %v828
        %1755 = vmatpush.msra.mxu0 %v827
        %1756 = vmatpush.msra.mxu0 %v826
        %1757 = vmatpush.msra.mxu0 %v825
        %1758 = vmatmul.f32.gmra.mxu0 %v699
        %v1759 = vpop.f32.mrf.mxu0
        %v1760 = vadd.f32 %v1647, %v1759
        %1761 = vmatmul.f32.gmra.mxu0 %v702
        %v1762 = vpop.f32.mrf.mxu0
        %v1763 = vadd.f32 %v1650, %v1762
        %1764 = vmatmul.f32.gmra.mxu0 %v705
        %v1765 = vpop.f32.mrf.mxu0
        %v1766 = vadd.f32 %v1653, %v1765
        %1767 = vmatmul.f32.gmra.mxu0 %v708
        %v1768 = vpop.f32.mrf.mxu0
        %v1769 = vadd.f32 %v1656, %v1768
        %1770 = vmatmul.f32.gmra.mxu0 %v711
        %v1771 = vpop.f32.mrf.mxu0
        %v1772 = vadd.f32 %v1659, %v1771
        %1773 = vmatmul.f32.gmra.mxu0 %v714
        %v1774 = vpop.f32.mrf.mxu0
        %v1775 = vadd.f32 %v1662, %v1774
        %1776 = vmatmul.f32.gmra.mxu0 %v717
        %v1777 = vpop.f32.mrf.mxu0
        %v1778 = vadd.f32 %v1665, %v1777
        %1779 = vmatmul.f32.gmra.mxu0 %v720
        %v1780 = vpop.f32.mrf.mxu0
        %v1781 = vadd.f32 %v1668, %v1780
        %1782 = vmatmul.f32.gmra.mxu0 %v723
        %v1783 = vpop.f32.mrf.mxu0
        %v1784 = vadd.f32 %v1671, %v1783
        %1785 = vmatmul.f32.gmra.mxu0 %v726
        %v1786 = vpop.f32.mrf.mxu0
        %v1787 = vadd.f32 %v1674, %v1786
        %1788 = vmatmul.f32.gmra.mxu0 %v729
        %v1789 = vpop.f32.mrf.mxu0
        %v1790 = vadd.f32 %v1677, %v1789
        %1791 = vmatmul.f32.gmra.mxu0 %v732
        %v1792 = vpop.f32.mrf.mxu0
        %v1793 = vadd.f32 %v1680, %v1792
        %1794 = vmatmul.f32.gmra.mxu0 %v735
        %v1795 = vpop.f32.mrf.mxu0
        %v1796 = vadd.f32 %v1683, %v1795
        %1797 = vmatmul.f32.gmra.mxu0 %v738
        %v1798 = vpop.f32.mrf.mxu0
        %v1799 = vadd.f32 %v1686, %v1798
        %1800 = vmatmul.f32.gmra.mxu0 %v741
        %v1801 = vpop.f32.mrf.mxu0
        %v1802 = vadd.f32 %v1689, %v1801
        %1803 = vmatmul.f32.gmra.mxu0 %v744
        %v1804 = vpop.f32.mrf.mxu0
        %v1805 = vadd.f32 %v1692, %v1804
        %1806 = vmatmul.f32.gmra.mxu0 %v747
        %v1807 = vpop.f32.mrf.mxu0
        %v1808 = vadd.f32 %v1695, %v1807
        %1809 = vmatmul.f32.gmra.mxu0 %v750
        %v1810 = vpop.f32.mrf.mxu0
        %v1811 = vadd.f32 %v1698, %v1810
        %1812 = vmatmul.f32.gmra.mxu0 %v753
        %v1813 = vpop.f32.mrf.mxu0
        %v1814 = vadd.f32 %v1701, %v1813
        %1815 = vmatmul.f32.gmra.mxu0 %v756
        %v1816 = vpop.f32.mrf.mxu0
        %v1817 = vadd.f32 %v1704, %v1816
        %1818 = vmatmul.f32.gmra.mxu0 %v759
        %v1819 = vpop.f32.mrf.mxu0
        %v1820 = vadd.f32 %v1707, %v1819
        %1821 = vmatmul.f32.gmra.mxu0 %v762
        %v1822 = vpop.f32.mrf.mxu0
        %v1823 = vadd.f32 %v1710, %v1822
        %1824 = vmatmul.f32.gmra.mxu0 %v765
        %v1825 = vpop.f32.mrf.mxu0
        %v1826 = vadd.f32 %v1713, %v1825
        %1827 = vmatmul.f32.gmra.mxu0 %v768
        %v1828 = vpop.f32.mrf.mxu0
        %v1829 = vadd.f32 %v1716, %v1828
        %1830 = vmatmul.f32.gmra.mxu0 %v771
        %v1831 = vpop.f32.mrf.mxu0
        %v1832 = vadd.f32 %v1719, %v1831
        %1833 = vmatmul.f32.gmra.mxu0 %v774
        %v1834 = vpop.f32.mrf.mxu0
        %v1835 = vadd.f32 %v1722, %v1834
        %1836 = vmatmul.f32.gmra.mxu0 %v777
        %v1837 = vpop.f32.mrf.mxu0
        %v1838 = vadd.f32 %v1725, %v1837
        %1839 = vmatmul.f32.gmra.mxu0 %v780
        %v1840 = vpop.f32.mrf.mxu0
        %v1841 = vadd.f32 %v1728, %v1840
        %1842 = vmatmul.f32.gmra.mxu0 %v783
        %v1843 = vpop.f32.mrf.mxu0
        %v1844 = vadd.f32 %v1731, %v1843
        %1845 = vmatmul.f32.gmra.mxu0 %v786
        %v1846 = vpop.f32.mrf.mxu0
        %v1847 = vadd.f32 %v1734, %v1846
        %1848 = vmatmul.f32.gmra.mxu0 %v789
        %v1849 = vpop.f32.mrf.mxu0
        %v1850 = vadd.f32 %v1737, %v1849
        %1851 = vmatmul.f32.gmra.mxu0 %v792
        %v1852 = vpop.f32.mrf.mxu0
        %v1853 = vadd.f32 %v1740, %v1852
        %1854 = vdwg.mxu0
        %s1855 = scalar_lea.vmem [#allocation2], 64
        %v1856 = vld [vmem:[%s1855 + $0x7] sm:$0xff]
        %v1857 = vld [vmem:[%s1855 + $0xf] sm:$0xff]
        %v1858 = vld [vmem:[%s1855 + $0x27] sm:$0xff]
        %v1859 = vld [vmem:[%s1855 + $0x2f] sm:$0xff]
        %v1860 = vld [vmem:[%s1855 + $0x47] sm:$0xff]
        %v1861 = vld [vmem:[%s1855 + $0x4f] sm:$0xff]
        %v1862 = vld [vmem:[%s1855 + $0x67] sm:$0xff]
        %v1863 = vld [vmem:[%s1855 + $0x6f] sm:$0xff]
        %v1864 = vld [vmem:[%s1855 + $0x87] sm:$0xff]
        %v1865 = vld [vmem:[%s1855 + $0x8f] sm:$0xff]
        %v1866 = vld [vmem:[%s1855 + $0xa7] sm:$0xff]
        %v1867 = vld [vmem:[%s1855 + $0xaf] sm:$0xff]
        %v1868 = vld [vmem:[%s1855 + $0xc7] sm:$0xff]
        %v1869 = vld [vmem:[%s1855 + $0xcf] sm:$0xff]
        %v1870 = vld [vmem:[%s1855 + $0xe7] sm:$0xff]
        %v1871 = vld [vmem:[%s1855 + $0xef] sm:$0xff]
        %v1872 = vld [vmem:[%s1855 + $0x107] sm:$0xff]
        %v1873 = vld [vmem:[%s1855 + $0x10f] sm:$0xff]
        %v1874 = vld [vmem:[%s1855 + $0x127] sm:$0xff]
        %v1875 = vld [vmem:[%s1855 + $0x12f] sm:$0xff]
        %v1876 = vld [vmem:[%s1855 + $0x147] sm:$0xff]
        %v1877 = vld [vmem:[%s1855 + $0x14f] sm:$0xff]
        %v1878 = vld [vmem:[%s1855 + $0x167] sm:$0xff]
        %v1879 = vld [vmem:[%s1855 + $0x16f] sm:$0xff]
        %v1880 = vld [vmem:[%s1855 + $0x187] sm:$0xff]
        %v1881 = vld [vmem:[%s1855 + $0x18f] sm:$0xff]
        %v1882 = vld [vmem:[%s1855 + $0x1a7] sm:$0xff]
        %v1883 = vld [vmem:[%s1855 + $0x1af] sm:$0xff]
        %v1884 = vld [vmem:[%s1855 + $0x1c7] sm:$0xff]
        %v1885 = vld [vmem:[%s1855 + $0x1cf] sm:$0xff]
        %v1886 = vld [vmem:[%s1855 + $0x1e7] sm:$0xff]
        %v1887 = vld [vmem:[%s1855 + $0x1ef] sm:$0xff]
        %1888 = vst [vmem:[#allocation4] sm:$0xff] %v1856
        %1889 = vst [vmem:[#allocation4 + $0x18] sm:$0xff] %v1857
        %1890 = vst [vmem:[#allocation4 + $0x30] sm:$0xff] %v1858
        %1891 = vst [vmem:[#allocation4 + $0x48] sm:$0xff] %v1859
        %1892 = vst [vmem:[#allocation4 + $0x60] sm:$0xff] %v1860
        %1893 = vst [vmem:[#allocation4 + $0x78] sm:$0xff] %v1861
        %1894 = vst [vmem:[#allocation4 + $0x90] sm:$0xff] %v1862
        %1895 = vst [vmem:[#allocation4 + $0xa8] sm:$0xff] %v1863
        %1896 = vst [vmem:[#allocation4 + $0xc0] sm:$0xff] %v1864
        %1897 = vst [vmem:[#allocation4 + $0xd8] sm:$0xff] %v1865
        %1898 = vst [vmem:[#allocation4 + $0xf0] sm:$0xff] %v1866
        %1899 = vst [vmem:[#allocation4 + $0x108] sm:$0xff] %v1867
        %1900 = vst [vmem:[#allocation4 + $0x120] sm:$0xff] %v1868
        %1901 = vst [vmem:[#allocation4 + $0x138] sm:$0xff] %v1869
        %1902 = vst [vmem:[#allocation4 + $0x150] sm:$0xff] %v1870
        %1903 = vst [vmem:[#allocation4 + $0x168] sm:$0xff] %v1871
        %1904 = vst [vmem:[#allocation4 + $0x180] sm:$0xff] %v1872
        %1905 = vst [vmem:[#allocation4 + $0x198] sm:$0xff] %v1873
        %1906 = vst [vmem:[#allocation4 + $0x1b0] sm:$0xff] %v1874
        %1907 = vst [vmem:[#allocation4 + $0x1c8] sm:$0xff] %v1875
        %1908 = vst [vmem:[#allocation4 + $0x1e0] sm:$0xff] %v1876
        %1909 = vst [vmem:[#allocation4 + $0x1f8] sm:$0xff] %v1877
        %1910 = vst [vmem:[#allocation4 + $0x210] sm:$0xff] %v1878
        %1911 = vst [vmem:[#allocation4 + $0x228] sm:$0xff] %v1879
        %1912 = vst [vmem:[#allocation4 + $0x240] sm:$0xff] %v1880
        %1913 = vst [vmem:[#allocation4 + $0x258] sm:$0xff] %v1881
        %1914 = vst [vmem:[#allocation4 + $0x270] sm:$0xff] %v1882
        %1915 = vst [vmem:[#allocation4 + $0x288] sm:$0xff] %v1883
        %1916 = vst [vmem:[#allocation4 + $0x2a0] sm:$0xff] %v1884
        %1917 = vst [vmem:[#allocation4 + $0x2b8] sm:$0xff] %v1885
        %1918 = vst [vmem:[#allocation4 + $0x2d0] sm:$0xff] %v1886
        %1919 = vst [vmem:[#allocation4 + $0x2e8] sm:$0xff] %v1887
        %v1920 = vld [vmem:[%s1855 + $0x8] sm:$0xff]
        %v1921 = vld [vmem:[%s1855 + $0x10] sm:$0xff]
        %v1922 = vld [vmem:[%s1855 + $0x28] sm:$0xff]
        %v1923 = vld [vmem:[%s1855 + $0x30] sm:$0xff]
        %v1924 = vld [vmem:[%s1855 + $0x48] sm:$0xff]
        %v1925 = vld [vmem:[%s1855 + $0x50] sm:$0xff]
        %v1926 = vld [vmem:[%s1855 + $0x68] sm:$0xff]
        %v1927 = vld [vmem:[%s1855 + $0x70] sm:$0xff]
        %v1928 = vld [vmem:[%s1855 + $0x88] sm:$0xff]
        %v1929 = vld [vmem:[%s1855 + $0x90] sm:$0xff]
        %v1930 = vld [vmem:[%s1855 + $0xa8] sm:$0xff]
        %v1931 = vld [vmem:[%s1855 + $0xb0] sm:$0xff]
        %v1932 = vld [vmem:[%s1855 + $0xc8] sm:$0xff]
        %v1933 = vld [vmem:[%s1855 + $0xd0] sm:$0xff]
        %v1934 = vld [vmem:[%s1855 + $0xe8] sm:$0xff]
        %v1935 = vld [vmem:[%s1855 + $0xf0] sm:$0xff]
        %v1936 = vld [vmem:[%s1855 + $0x108] sm:$0xff]
        %v1937 = vld [vmem:[%s1855 + $0x110] sm:$0xff]
        %v1938 = vld [vmem:[%s1855 + $0x128] sm:$0xff]
        %v1939 = vld [vmem:[%s1855 + $0x130] sm:$0xff]
        %v1940 = vld [vmem:[%s1855 + $0x148] sm:$0xff]
        %v1941 = vld [vmem:[%s1855 + $0x150] sm:$0xff]
        %v1942 = vld [vmem:[%s1855 + $0x168] sm:$0xff]
        %v1943 = vld [vmem:[%s1855 + $0x170] sm:$0xff]
        %v1944 = vld [vmem:[%s1855 + $0x188] sm:$0xff]
        %v1945 = vld [vmem:[%s1855 + $0x190] sm:$0xff]
        %v1946 = vld [vmem:[%s1855 + $0x1a8] sm:$0xff]
        %v1947 = vld [vmem:[%s1855 + $0x1b0] sm:$0xff]
        %v1948 = vld [vmem:[%s1855 + $0x1c8] sm:$0xff]
        %v1949 = vld [vmem:[%s1855 + $0x1d0] sm:$0xff]
        %v1950 = vld [vmem:[%s1855 + $0x1e8] sm:$0xff]
        %v1951 = vld [vmem:[%s1855 + $0x1f0] sm:$0xff]
        %1952 = vst [vmem:[#allocation4 + $0x8] sm:$0xff] %v1920
        %1953 = vst [vmem:[#allocation4 + $0x20] sm:$0xff] %v1921
        %1954 = vst [vmem:[#allocation4 + $0x38] sm:$0xff] %v1922
        %1955 = vst [vmem:[#allocation4 + $0x50] sm:$0xff] %v1923
        %1956 = vst [vmem:[#allocation4 + $0x68] sm:$0xff] %v1924
        %1957 = vst [vmem:[#allocation4 + $0x80] sm:$0xff] %v1925
        %1958 = vst [vmem:[#allocation4 + $0x98] sm:$0xff] %v1926
        %1959 = vst [vmem:[#allocation4 + $0xb0] sm:$0xff] %v1927
        %1960 = vst [vmem:[#allocation4 + $0xc8] sm:$0xff] %v1928
        %1961 = vst [vmem:[#allocation4 + $0xe0] sm:$0xff] %v1929
        %1962 = vst [vmem:[#allocation4 + $0xf8] sm:$0xff] %v1930
        %1963 = vst [vmem:[#allocation4 + $0x110] sm:$0xff] %v1931
        %1964 = vst [vmem:[#allocation4 + $0x128] sm:$0xff] %v1932
        %1965 = vst [vmem:[#allocation4 + $0x140] sm:$0xff] %v1933
        %1966 = vst [vmem:[#allocation4 + $0x158] sm:$0xff] %v1934
        %1967 = vst [vmem:[#allocation4 + $0x170] sm:$0xff] %v1935
        %1968 = vst [vmem:[#allocation4 + $0x188] sm:$0xff] %v1936
        %1969 = vst [vmem:[#allocation4 + $0x1a0] sm:$0xff] %v1937
        %1970 = vst [vmem:[#allocation4 + $0x1b8] sm:$0xff] %v1938
        %1971 = vst [vmem:[#allocation4 + $0x1d0] sm:$0xff] %v1939
        %1972 = vst [vmem:[#allocation4 + $0x1e8] sm:$0xff] %v1940
        %1973 = vst [vmem:[#allocation4 + $0x200] sm:$0xff] %v1941
        %1974 = vst [vmem:[#allocation4 + $0x218] sm:$0xff] %v1942
        %1975 = vst [vmem:[#allocation4 + $0x230] sm:$0xff] %v1943
        %1976 = vst [vmem:[#allocation4 + $0x248] sm:$0xff] %v1944
        %1977 = vst [vmem:[#allocation4 + $0x260] sm:$0xff] %v1945
        %1978 = vst [vmem:[#allocation4 + $0x278] sm:$0xff] %v1946
        %1979 = vst [vmem:[#allocation4 + $0x290] sm:$0xff] %v1947
        %1980 = vst [vmem:[#allocation4 + $0x2a8] sm:$0xff] %v1948
        %1981 = vst [vmem:[#allocation4 + $0x2c0] sm:$0xff] %v1949
        %1982 = vst [vmem:[#allocation4 + $0x2d8] sm:$0xff] %v1950
        %1983 = vst [vmem:[#allocation4 + $0x2f0] sm:$0xff] %v1951
        %v1984 = vld [vmem:[%s1855 + $0x9] sm:$0xff]
        %v1985 = vld [vmem:[%s1855 + $0x11] sm:$0xff]
        %v1986 = vld [vmem:[%s1855 + $0x29] sm:$0xff]
        %v1987 = vld [vmem:[%s1855 + $0x31] sm:$0xff]
        %v1988 = vld [vmem:[%s1855 + $0x49] sm:$0xff]
        %v1989 = vld [vmem:[%s1855 + $0x51] sm:$0xff]
        %v1990 = vld [vmem:[%s1855 + $0x69] sm:$0xff]
        %v1991 = vld [vmem:[%s1855 + $0x71] sm:$0xff]
        %v1992 = vld [vmem:[%s1855 + $0x89] sm:$0xff]
        %v1993 = vld [vmem:[%s1855 + $0x91] sm:$0xff]
        %v1994 = vld [vmem:[%s1855 + $0xa9] sm:$0xff]
        %v1995 = vld [vmem:[%s1855 + $0xb1] sm:$0xff]
        %v1996 = vld [vmem:[%s1855 + $0xc9] sm:$0xff]
        %v1997 = vld [vmem:[%s1855 + $0xd1] sm:$0xff]
        %v1998 = vld [vmem:[%s1855 + $0xe9] sm:$0xff]
        %v1999 = vld [vmem:[%s1855 + $0xf1] sm:$0xff]
        %v2000 = vld [vmem:[%s1855 + $0x109] sm:$0xff]
        %v2001 = vld [vmem:[%s1855 + $0x111] sm:$0xff]
        %v2002 = vld [vmem:[%s1855 + $0x129] sm:$0xff]
        %v2003 = vld [vmem:[%s1855 + $0x131] sm:$0xff]
        %v2004 = vld [vmem:[%s1855 + $0x149] sm:$0xff]
        %v2005 = vld [vmem:[%s1855 + $0x151] sm:$0xff]
        %v2006 = vld [vmem:[%s1855 + $0x169] sm:$0xff]
        %v2007 = vld [vmem:[%s1855 + $0x171] sm:$0xff]
        %v2008 = vld [vmem:[%s1855 + $0x189] sm:$0xff]
        %v2009 = vld [vmem:[%s1855 + $0x191] sm:$0xff]
        %v2010 = vld [vmem:[%s1855 + $0x1a9] sm:$0xff]
        %v2011 = vld [vmem:[%s1855 + $0x1b1] sm:$0xff]
        %v2012 = vld [vmem:[%s1855 + $0x1c9] sm:$0xff]
        %v2013 = vld [vmem:[%s1855 + $0x1d1] sm:$0xff]
        %v2014 = vld [vmem:[%s1855 + $0x1e9] sm:$0xff]
        %v2015 = vld [vmem:[%s1855 + $0x1f1] sm:$0xff]
        %2016 = vst [vmem:[#allocation4 + $0x10] sm:$0xff] %v1984
        %2017 = vst [vmem:[#allocation4 + $0x28] sm:$0xff] %v1985
        %2018 = vst [vmem:[#allocation4 + $0x40] sm:$0xff] %v1986
        %2019 = vst [vmem:[#allocation4 + $0x58] sm:$0xff] %v1987
        %2020 = vst [vmem:[#allocation4 + $0x70] sm:$0xff] %v1988
        %2021 = vst [vmem:[#allocation4 + $0x88] sm:$0xff] %v1989
        %2022 = vst [vmem:[#allocation4 + $0xa0] sm:$0xff] %v1990
        %2023 = vst [vmem:[#allocation4 + $0xb8] sm:$0xff] %v1991
        %2024 = vst [vmem:[#allocation4 + $0xd0] sm:$0xff] %v1992
        %2025 = vst [vmem:[#allocation4 + $0xe8] sm:$0xff] %v1993
        %2026 = vst [vmem:[#allocation4 + $0x100] sm:$0xff] %v1994
        %2027 = vst [vmem:[#allocation4 + $0x118] sm:$0xff] %v1995
        %2028 = vst [vmem:[#allocation4 + $0x130] sm:$0xff] %v1996
        %2029 = vst [vmem:[#allocation4 + $0x148] sm:$0xff] %v1997
        %2030 = vst [vmem:[#allocation4 + $0x160] sm:$0xff] %v1998
        %2031 = vst [vmem:[#allocation4 + $0x178] sm:$0xff] %v1999
        %2032 = vst [vmem:[#allocation4 + $0x190] sm:$0xff] %v2000
        %2033 = vst [vmem:[#allocation4 + $0x1a8] sm:$0xff] %v2001
        %2034 = vst [vmem:[#allocation4 + $0x1c0] sm:$0xff] %v2002
        %2035 = vst [vmem:[#allocation4 + $0x1d8] sm:$0xff] %v2003
        %2036 = vst [vmem:[#allocation4 + $0x1f0] sm:$0xff] %v2004
        %2037 = vst [vmem:[#allocation4 + $0x208] sm:$0xff] %v2005
        %2038 = vst [vmem:[#allocation4 + $0x220] sm:$0xff] %v2006
        %2039 = vst [vmem:[#allocation4 + $0x238] sm:$0xff] %v2007
        %2040 = vst [vmem:[#allocation4 + $0x250] sm:$0xff] %v2008
        %2041 = vst [vmem:[#allocation4 + $0x268] sm:$0xff] %v2009
        %2042 = vst [vmem:[#allocation4 + $0x280] sm:$0xff] %v2010
        %2043 = vst [vmem:[#allocation4 + $0x298] sm:$0xff] %v2011
        %2044 = vst [vmem:[#allocation4 + $0x2b0] sm:$0xff] %v2012
        %2045 = vst [vmem:[#allocation4 + $0x2c8] sm:$0xff] %v2013
        %2046 = vst [vmem:[#allocation4 + $0x2e0] sm:$0xff] %v2014
        %2047 = vst [vmem:[#allocation4 + $0x2f8] sm:$0xff] %v2015
        %v2048 = vld [vmem:[#allocation4] sm:$0xff]
        %v2049 = vld [vmem:[#allocation4 + $0x8] sm:$0xff]
        %v2050 = vld [vmem:[#allocation4 + $0x10] sm:$0xff]
        %v2051 = vld [vmem:[#allocation4 + $0x18] sm:$0xff]
        %v2052 = vld [vmem:[#allocation4 + $0x20] sm:$0xff]
        %v2053 = vld [vmem:[#allocation4 + $0x28] sm:$0xff]
        %v2054 = vld [vmem:[#allocation4 + $0x30] sm:$0xff]
        %v2055 = vld [vmem:[#allocation4 + $0x38] sm:$0xff]
        %v2056 = vld [vmem:[#allocation4 + $0x40] sm:$0xff]
        %v2057 = vld [vmem:[#allocation4 + $0x48] sm:$0xff]
        %v2058 = vld [vmem:[#allocation4 + $0x50] sm:$0xff]
        %v2059 = vld [vmem:[#allocation4 + $0x58] sm:$0xff]
        %v2060 = vld [vmem:[#allocation4 + $0x60] sm:$0xff]
        %v2061 = vld [vmem:[#allocation4 + $0x68] sm:$0xff]
        %v2062 = vld [vmem:[#allocation4 + $0x70] sm:$0xff]
        %v2063 = vld [vmem:[#allocation4 + $0x78] sm:$0xff]
        %v2064 = vld [vmem:[#allocation4 + $0x80] sm:$0xff]
        %v2065 = vld [vmem:[#allocation4 + $0x88] sm:$0xff]
        %v2066 = vld [vmem:[#allocation4 + $0x90] sm:$0xff]
        %v2067 = vld [vmem:[#allocation4 + $0x98] sm:$0xff]
        %v2068 = vld [vmem:[#allocation4 + $0xa0] sm:$0xff]
        %v2069 = vld [vmem:[#allocation4 + $0xa8] sm:$0xff]
        %v2070 = vld [vmem:[#allocation4 + $0xb0] sm:$0xff]
        %v2071 = vld [vmem:[#allocation4 + $0xb8] sm:$0xff]
        %v2072 = vld [vmem:[#allocation4 + $0xc0] sm:$0xff]
        %v2073 = vld [vmem:[#allocation4 + $0xc8] sm:$0xff]
        %v2074 = vld [vmem:[#allocation4 + $0xd0] sm:$0xff]
        %v2075 = vld [vmem:[#allocation4 + $0xd8] sm:$0xff]
        %v2076 = vld [vmem:[#allocation4 + $0xe0] sm:$0xff]
        %v2077 = vld [vmem:[#allocation4 + $0xe8] sm:$0xff]
        %v2078 = vld [vmem:[#allocation4 + $0xf0] sm:$0xff]
        %v2079 = vld [vmem:[#allocation4 + $0xf8] sm:$0xff]
        %v2080 = vld [vmem:[#allocation4 + $0x100] sm:$0xff]
        %v2081 = vld [vmem:[#allocation4 + $0x108] sm:$0xff]
        %v2082 = vld [vmem:[#allocation4 + $0x110] sm:$0xff]
        %v2083 = vld [vmem:[#allocation4 + $0x118] sm:$0xff]
        %v2084 = vld [vmem:[#allocation4 + $0x120] sm:$0xff]
        %v2085 = vld [vmem:[#allocation4 + $0x128] sm:$0xff]
        %v2086 = vld [vmem:[#allocation4 + $0x130] sm:$0xff]
        %v2087 = vld [vmem:[#allocation4 + $0x138] sm:$0xff]
        %v2088 = vld [vmem:[#allocation4 + $0x140] sm:$0xff]
        %v2089 = vld [vmem:[#allocation4 + $0x148] sm:$0xff]
        %v2090 = vld [vmem:[#allocation4 + $0x150] sm:$0xff]
        %v2091 = vld [vmem:[#allocation4 + $0x158] sm:$0xff]
        %v2092 = vld [vmem:[#allocation4 + $0x160] sm:$0xff]
        %v2093 = vld [vmem:[#allocation4 + $0x168] sm:$0xff]
        %v2094 = vld [vmem:[#allocation4 + $0x170] sm:$0xff]
        %v2095 = vld [vmem:[#allocation4 + $0x178] sm:$0xff]
        %v2096 = vld [vmem:[#allocation4 + $0x180] sm:$0xff]
        %v2097 = vld [vmem:[#allocation4 + $0x188] sm:$0xff]
        %v2098 = vld [vmem:[#allocation4 + $0x190] sm:$0xff]
        %v2099 = vld [vmem:[#allocation4 + $0x198] sm:$0xff]
        %v2100 = vld [vmem:[#allocation4 + $0x1a0] sm:$0xff]
        %v2101 = vld [vmem:[#allocation4 + $0x1a8] sm:$0xff]
        %v2102 = vld [vmem:[#allocation4 + $0x1b0] sm:$0xff]
        %v2103 = vld [vmem:[#allocation4 + $0x1b8] sm:$0xff]
        %v2104 = vld [vmem:[#allocation4 + $0x1c0] sm:$0xff]
        %v2105 = vld [vmem:[#allocation4 + $0x1c8] sm:$0xff]
        %v2106 = vld [vmem:[#allocation4 + $0x1d0] sm:$0xff]
        %v2107 = vld [vmem:[#allocation4 + $0x1d8] sm:$0xff]
        %v2108 = vld [vmem:[#allocation4 + $0x1e0] sm:$0xff]
        %v2109 = vld [vmem:[#allocation4 + $0x1e8] sm:$0xff]
        %v2110 = vld [vmem:[#allocation4 + $0x1f0] sm:$0xff]
        %v2111 = vld [vmem:[#allocation4 + $0x1f8] sm:$0xff]
        %v2112 = vld [vmem:[#allocation4 + $0x200] sm:$0xff]
        %v2113 = vld [vmem:[#allocation4 + $0x208] sm:$0xff]
        %v2114 = vld [vmem:[#allocation4 + $0x210] sm:$0xff]
        %v2115 = vld [vmem:[#allocation4 + $0x218] sm:$0xff]
        %v2116 = vld [vmem:[#allocation4 + $0x220] sm:$0xff]
        %v2117 = vld [vmem:[#allocation4 + $0x228] sm:$0xff]
        %v2118 = vld [vmem:[#allocation4 + $0x230] sm:$0xff]
        %v2119 = vld [vmem:[#allocation4 + $0x238] sm:$0xff]
        %v2120 = vld [vmem:[#allocation4 + $0x240] sm:$0xff]
        %v2121 = vld [vmem:[#allocation4 + $0x248] sm:$0xff]
        %v2122 = vld [vmem:[#allocation4 + $0x250] sm:$0xff]
        %v2123 = vld [vmem:[#allocation4 + $0x258] sm:$0xff]
        %v2124 = vld [vmem:[#allocation4 + $0x260] sm:$0xff]
        %v2125 = vld [vmem:[#allocation4 + $0x268] sm:$0xff]
        %v2126 = vld [vmem:[#allocation4 + $0x270] sm:$0xff]
        %v2127 = vld [vmem:[#allocation4 + $0x278] sm:$0xff]
        %v2128 = vld [vmem:[#allocation4 + $0x280] sm:$0xff]
        %v2129 = vld [vmem:[#allocation4 + $0x288] sm:$0xff]
        %v2130 = vld [vmem:[#allocation4 + $0x290] sm:$0xff]
        %v2131 = vld [vmem:[#allocation4 + $0x298] sm:$0xff]
        %v2132 = vld [vmem:[#allocation4 + $0x2a0] sm:$0xff]
        %v2133 = vld [vmem:[#allocation4 + $0x2a8] sm:$0xff]
        %v2134 = vld [vmem:[#allocation4 + $0x2b0] sm:$0xff]
        %v2135 = vld [vmem:[#allocation4 + $0x2b8] sm:$0xff]
        %v2136 = vld [vmem:[#allocation4 + $0x2c0] sm:$0xff]
        %v2137 = vld [vmem:[#allocation4 + $0x2c8] sm:$0xff]
        %v2138 = vld [vmem:[#allocation4 + $0x2d0] sm:$0xff]
        %v2139 = vld [vmem:[#allocation4 + $0x2d8] sm:$0xff]
        %v2140 = vld [vmem:[#allocation4 + $0x2e0] sm:$0xff]
        %v2141 = vld [vmem:[#allocation4 + $0x2e8] sm:$0xff]
        %v2142 = vld [vmem:[#allocation4 + $0x2f0] sm:$0xff]
        %v2143 = vld [vmem:[#allocation4 + $0x2f8] sm:$0xff]
        %v2144 = vld [vmem:[#allocation5 + $0x300] sm:$0xff]
        %v2145 = vld [vmem:[#allocation5 + $0x308] sm:$0xff]
        %v2146 = vld [vmem:[#allocation5 + $0x310] sm:$0xff]
        %v2147 = vld [vmem:[#allocation5 + $0x318] sm:$0xff]
        %v2148 = vld [vmem:[#allocation5 + $0x320] sm:$0xff]
        %v2149 = vld [vmem:[#allocation5 + $0x328] sm:$0xff]
        %v2150 = vld [vmem:[#allocation5 + $0x330] sm:$0xff]
        %v2151 = vld [vmem:[#allocation5 + $0x338] sm:$0xff]
        %v2152 = vld [vmem:[#allocation5 + $0x340] sm:$0xff]
        %v2153 = vld [vmem:[#allocation5 + $0x348] sm:$0xff]
        %v2154 = vld [vmem:[#allocation5 + $0x350] sm:$0xff]
        %v2155 = vld [vmem:[#allocation5 + $0x358] sm:$0xff]
        %v2156 = vld [vmem:[#allocation5 + $0x360] sm:$0xff]
        %v2157 = vld [vmem:[#allocation5 + $0x368] sm:$0xff]
        %v2158 = vld [vmem:[#allocation5 + $0x370] sm:$0xff]
        %v2159 = vld [vmem:[#allocation5 + $0x378] sm:$0xff]
        %v2160 = vld [vmem:[#allocation5 + $0x380] sm:$0xff]
        %v2161 = vld [vmem:[#allocation5 + $0x388] sm:$0xff]
        %v2162 = vld [vmem:[#allocation5 + $0x390] sm:$0xff]
        %v2163 = vld [vmem:[#allocation5 + $0x398] sm:$0xff]
        %v2164 = vld [vmem:[#allocation5 + $0x3a0] sm:$0xff]
        %v2165 = vld [vmem:[#allocation5 + $0x3a8] sm:$0xff]
        %v2166 = vld [vmem:[#allocation5 + $0x3b0] sm:$0xff]
        %v2167 = vld [vmem:[#allocation5 + $0x3b8] sm:$0xff]
        %v2168 = vld [vmem:[#allocation5 + $0x3c0] sm:$0xff]
        %v2169 = vld [vmem:[#allocation5 + $0x3c8] sm:$0xff]
        %v2170 = vld [vmem:[#allocation5 + $0x3d0] sm:$0xff]
        %v2171 = vld [vmem:[#allocation5 + $0x3d8] sm:$0xff]
        %v2172 = vld [vmem:[#allocation5 + $0x3e0] sm:$0xff]
        %v2173 = vld [vmem:[#allocation5 + $0x3e8] sm:$0xff]
        %v2174 = vld [vmem:[#allocation5 + $0x3f0] sm:$0xff]
        %v2175 = vld [vmem:[#allocation5 + $0x3f8] sm:$0xff]
        %v2176 = vld [vmem:[#allocation5 + $0x400] sm:$0xff]
        %v2177 = vld [vmem:[#allocation5 + $0x408] sm:$0xff]
        %v2178 = vld [vmem:[#allocation5 + $0x410] sm:$0xff]
        %v2179 = vld [vmem:[#allocation5 + $0x418] sm:$0xff]
        %v2180 = vld [vmem:[#allocation5 + $0x420] sm:$0xff]
        %v2181 = vld [vmem:[#allocation5 + $0x428] sm:$0xff]
        %v2182 = vld [vmem:[#allocation5 + $0x430] sm:$0xff]
        %v2183 = vld [vmem:[#allocation5 + $0x438] sm:$0xff]
        %v2184 = vld [vmem:[#allocation5 + $0x440] sm:$0xff]
        %v2185 = vld [vmem:[#allocation5 + $0x448] sm:$0xff]
        %v2186 = vld [vmem:[#allocation5 + $0x450] sm:$0xff]
        %v2187 = vld [vmem:[#allocation5 + $0x458] sm:$0xff]
        %v2188 = vld [vmem:[#allocation5 + $0x460] sm:$0xff]
        %v2189 = vld [vmem:[#allocation5 + $0x468] sm:$0xff]
        %v2190 = vld [vmem:[#allocation5 + $0x470] sm:$0xff]
        %v2191 = vld [vmem:[#allocation5 + $0x478] sm:$0xff]
        %2192 = vmatpush.msra.mxu0 %v2159
        %2193 = vmatpush.msra.mxu0 %v2158
        %2194 = vmatpush.msra.mxu0 %v2157
        %2195 = vmatpush.msra.mxu0 %v2156
        %2196 = vmatpush.msra.mxu0 %v2155
        %2197 = vmatpush.msra.mxu0 %v2154
        %2198 = vmatpush.msra.mxu0 %v2153
        %2199 = vmatpush.msra.mxu0 %v2152
        %2200 = vmatpush.msra.mxu0 %v2151
        %2201 = vmatpush.msra.mxu0 %v2150
        %2202 = vmatpush.msra.mxu0 %v2149
        %2203 = vmatpush.msra.mxu0 %v2148
        %2204 = vmatpush.msra.mxu0 %v2147
        %2205 = vmatpush.msra.mxu0 %v2146
        %2206 = vmatpush.msra.mxu0 %v2145
        %2207 = vmatpush.msra.mxu0 %v2144
        %2208 = vmatmul.f32.gmra.mxu0 %v2048
        %v2209 = vpop.f32.mrf.mxu0
        %v2210 = vadd.f32 0.0, %v2209
        %2211 = vmatmul.f32.gmra.mxu0 %v2051
        %v2212 = vpop.f32.mrf.mxu0
        %v2213 = vadd.f32 0.0, %v2212
        %2214 = vmatmul.f32.gmra.mxu0 %v2054
        %v2215 = vpop.f32.mrf.mxu0
        %v2216 = vadd.f32 0.0, %v2215
        %2217 = vmatmul.f32.gmra.mxu0 %v2057
        %v2218 = vpop.f32.mrf.mxu0
        %v2219 = vadd.f32 0.0, %v2218
        %2220 = vmatmul.f32.gmra.mxu0 %v2060
        %v2221 = vpop.f32.mrf.mxu0
        %v2222 = vadd.f32 0.0, %v2221
        %2223 = vmatmul.f32.gmra.mxu0 %v2063
        %v2224 = vpop.f32.mrf.mxu0
        %v2225 = vadd.f32 0.0, %v2224
        %2226 = vmatmul.f32.gmra.mxu0 %v2066
        %v2227 = vpop.f32.mrf.mxu0
        %v2228 = vadd.f32 0.0, %v2227
        %2229 = vmatmul.f32.gmra.mxu0 %v2069
        %v2230 = vpop.f32.mrf.mxu0
        %v2231 = vadd.f32 0.0, %v2230
        %2232 = vmatmul.f32.gmra.mxu0 %v2072
        %v2233 = vpop.f32.mrf.mxu0
        %v2234 = vadd.f32 0.0, %v2233
        %2235 = vmatmul.f32.gmra.mxu0 %v2075
        %v2236 = vpop.f32.mrf.mxu0
        %v2237 = vadd.f32 0.0, %v2236
        %2238 = vmatmul.f32.gmra.mxu0 %v2078
        %v2239 = vpop.f32.mrf.mxu0
        %v2240 = vadd.f32 0.0, %v2239
        %2241 = vmatmul.f32.gmra.mxu0 %v2081
        %v2242 = vpop.f32.mrf.mxu0
        %v2243 = vadd.f32 0.0, %v2242
        %2244 = vmatmul.f32.gmra.mxu0 %v2084
        %v2245 = vpop.f32.mrf.mxu0
        %v2246 = vadd.f32 0.0, %v2245
        %2247 = vmatmul.f32.gmra.mxu0 %v2087
        %v2248 = vpop.f32.mrf.mxu0
        %v2249 = vadd.f32 0.0, %v2248
        %2250 = vmatmul.f32.gmra.mxu0 %v2090
        %v2251 = vpop.f32.mrf.mxu0
        %v2252 = vadd.f32 0.0, %v2251
        %2253 = vmatmul.f32.gmra.mxu0 %v2093
        %v2254 = vpop.f32.mrf.mxu0
        %v2255 = vadd.f32 0.0, %v2254
        %2256 = vmatmul.f32.gmra.mxu0 %v2096
        %v2257 = vpop.f32.mrf.mxu0
        %v2258 = vadd.f32 0.0, %v2257
        %2259 = vmatmul.f32.gmra.mxu0 %v2099
        %v2260 = vpop.f32.mrf.mxu0
        %v2261 = vadd.f32 0.0, %v2260
        %2262 = vmatmul.f32.gmra.mxu0 %v2102
        %v2263 = vpop.f32.mrf.mxu0
        %v2264 = vadd.f32 0.0, %v2263
        %2265 = vmatmul.f32.gmra.mxu0 %v2105
        %v2266 = vpop.f32.mrf.mxu0
        %v2267 = vadd.f32 0.0, %v2266
        %2268 = vmatmul.f32.gmra.mxu0 %v2108
        %v2269 = vpop.f32.mrf.mxu0
        %v2270 = vadd.f32 0.0, %v2269
        %2271 = vmatmul.f32.gmra.mxu0 %v2111
        %v2272 = vpop.f32.mrf.mxu0
        %v2273 = vadd.f32 0.0, %v2272
        %2274 = vmatmul.f32.gmra.mxu0 %v2114
        %v2275 = vpop.f32.mrf.mxu0
        %v2276 = vadd.f32 0.0, %v2275
        %2277 = vmatmul.f32.gmra.mxu0 %v2117
        %v2278 = vpop.f32.mrf.mxu0
        %v2279 = vadd.f32 0.0, %v2278
        %2280 = vmatmul.f32.gmra.mxu0 %v2120
        %v2281 = vpop.f32.mrf.mxu0
        %v2282 = vadd.f32 0.0, %v2281
        %2283 = vmatmul.f32.gmra.mxu0 %v2123
        %v2284 = vpop.f32.mrf.mxu0
        %v2285 = vadd.f32 0.0, %v2284
        %2286 = vmatmul.f32.gmra.mxu0 %v2126
        %v2287 = vpop.f32.mrf.mxu0
        %v2288 = vadd.f32 0.0, %v2287
        %2289 = vmatmul.f32.gmra.mxu0 %v2129
        %v2290 = vpop.f32.mrf.mxu0
        %v2291 = vadd.f32 0.0, %v2290
        %2292 = vmatmul.f32.gmra.mxu0 %v2132
        %v2293 = vpop.f32.mrf.mxu0
        %v2294 = vadd.f32 0.0, %v2293
        %2295 = vmatmul.f32.gmra.mxu0 %v2135
        %v2296 = vpop.f32.mrf.mxu0
        %v2297 = vadd.f32 0.0, %v2296
        %2298 = vmatmul.f32.gmra.mxu0 %v2138
        %v2299 = vpop.f32.mrf.mxu0
        %v2300 = vadd.f32 0.0, %v2299
        %2301 = vmatmul.f32.gmra.mxu0 %v2141
        %v2302 = vpop.f32.mrf.mxu0
        %v2303 = vadd.f32 0.0, %v2302
        %2304 = vdwg.mxu0
        %2305 = vmatpush.msra.mxu0 %v2175
        %2306 = vmatpush.msra.mxu0 %v2174
        %2307 = vmatpush.msra.mxu0 %v2173
        %2308 = vmatpush.msra.mxu0 %v2172
        %2309 = vmatpush.msra.mxu0 %v2171
        %2310 = vmatpush.msra.mxu0 %v2170
        %2311 = vmatpush.msra.mxu0 %v2169
        %2312 = vmatpush.msra.mxu0 %v2168
        %2313 = vmatpush.msra.mxu0 %v2167
        %2314 = vmatpush.msra.mxu0 %v2166
        %2315 = vmatpush.msra.mxu0 %v2165
        %2316 = vmatpush.msra.mxu0 %v2164
        %2317 = vmatpush.msra.mxu0 %v2163
        %2318 = vmatpush.msra.mxu0 %v2162
        %2319 = vmatpush.msra.mxu0 %v2161
        %2320 = vmatpush.msra.mxu0 %v2160
        %2321 = vmatmul.f32.gmra.mxu0 %v2049
        %v2322 = vpop.f32.mrf.mxu0
        %v2323 = vadd.f32 %v2210, %v2322
        %2324 = vmatmul.f32.gmra.mxu0 %v2052
        %v2325 = vpop.f32.mrf.mxu0
        %v2326 = vadd.f32 %v2213, %v2325
        %2327 = vmatmul.f32.gmra.mxu0 %v2055
        %v2328 = vpop.f32.mrf.mxu0
        %v2329 = vadd.f32 %v2216, %v2328
        %2330 = vmatmul.f32.gmra.mxu0 %v2058
        %v2331 = vpop.f32.mrf.mxu0
        %v2332 = vadd.f32 %v2219, %v2331
        %2333 = vmatmul.f32.gmra.mxu0 %v2061
        %v2334 = vpop.f32.mrf.mxu0
        %v2335 = vadd.f32 %v2222, %v2334
        %2336 = vmatmul.f32.gmra.mxu0 %v2064
        %v2337 = vpop.f32.mrf.mxu0
        %v2338 = vadd.f32 %v2225, %v2337
        %2339 = vmatmul.f32.gmra.mxu0 %v2067
        %v2340 = vpop.f32.mrf.mxu0
        %v2341 = vadd.f32 %v2228, %v2340
        %2342 = vmatmul.f32.gmra.mxu0 %v2070
        %v2343 = vpop.f32.mrf.mxu0
        %v2344 = vadd.f32 %v2231, %v2343
        %2345 = vmatmul.f32.gmra.mxu0 %v2073
        %v2346 = vpop.f32.mrf.mxu0
        %v2347 = vadd.f32 %v2234, %v2346
        %2348 = vmatmul.f32.gmra.mxu0 %v2076
        %v2349 = vpop.f32.mrf.mxu0
        %v2350 = vadd.f32 %v2237, %v2349
        %2351 = vmatmul.f32.gmra.mxu0 %v2079
        %v2352 = vpop.f32.mrf.mxu0
        %v2353 = vadd.f32 %v2240, %v2352
        %2354 = vmatmul.f32.gmra.mxu0 %v2082
        %v2355 = vpop.f32.mrf.mxu0
        %v2356 = vadd.f32 %v2243, %v2355
        %2357 = vmatmul.f32.gmra.mxu0 %v2085
        %v2358 = vpop.f32.mrf.mxu0
        %v2359 = vadd.f32 %v2246, %v2358
        %2360 = vmatmul.f32.gmra.mxu0 %v2088
        %v2361 = vpop.f32.mrf.mxu0
        %v2362 = vadd.f32 %v2249, %v2361
        %2363 = vmatmul.f32.gmra.mxu0 %v2091
        %v2364 = vpop.f32.mrf.mxu0
        %v2365 = vadd.f32 %v2252, %v2364
        %2366 = vmatmul.f32.gmra.mxu0 %v2094
        %v2367 = vpop.f32.mrf.mxu0
        %v2368 = vadd.f32 %v2255, %v2367
        %2369 = vmatmul.f32.gmra.mxu0 %v2097
        %v2370 = vpop.f32.mrf.mxu0
        %v2371 = vadd.f32 %v2258, %v2370
        %2372 = vmatmul.f32.gmra.mxu0 %v2100
        %v2373 = vpop.f32.mrf.mxu0
        %v2374 = vadd.f32 %v2261, %v2373
        %2375 = vmatmul.f32.gmra.mxu0 %v2103
        %v2376 = vpop.f32.mrf.mxu0
        %v2377 = vadd.f32 %v2264, %v2376
        %2378 = vmatmul.f32.gmra.mxu0 %v2106
        %v2379 = vpop.f32.mrf.mxu0
        %v2380 = vadd.f32 %v2267, %v2379
        %2381 = vmatmul.f32.gmra.mxu0 %v2109
        %v2382 = vpop.f32.mrf.mxu0
        %v2383 = vadd.f32 %v2270, %v2382
        %2384 = vmatmul.f32.gmra.mxu0 %v2112
        %v2385 = vpop.f32.mrf.mxu0
        %v2386 = vadd.f32 %v2273, %v2385
        %2387 = vmatmul.f32.gmra.mxu0 %v2115
        %v2388 = vpop.f32.mrf.mxu0
        %v2389 = vadd.f32 %v2276, %v2388
        %2390 = vmatmul.f32.gmra.mxu0 %v2118
        %v2391 = vpop.f32.mrf.mxu0
        %v2392 = vadd.f32 %v2279, %v2391
        %2393 = vmatmul.f32.gmra.mxu0 %v2121
        %v2394 = vpop.f32.mrf.mxu0
        %v2395 = vadd.f32 %v2282, %v2394
        %2396 = vmatmul.f32.gmra.mxu0 %v2124
        %v2397 = vpop.f32.mrf.mxu0
        %v2398 = vadd.f32 %v2285, %v2397
        %2399 = vmatmul.f32.gmra.mxu0 %v2127
        %v2400 = vpop.f32.mrf.mxu0
        %v2401 = vadd.f32 %v2288, %v2400
        %2402 = vmatmul.f32.gmra.mxu0 %v2130
        %v2403 = vpop.f32.mrf.mxu0
        %v2404 = vadd.f32 %v2291, %v2403
        %2405 = vmatmul.f32.gmra.mxu0 %v2133
        %v2406 = vpop.f32.mrf.mxu0
        %v2407 = vadd.f32 %v2294, %v2406
        %2408 = vmatmul.f32.gmra.mxu0 %v2136
        %v2409 = vpop.f32.mrf.mxu0
        %v2410 = vadd.f32 %v2297, %v2409
        %2411 = vmatmul.f32.gmra.mxu0 %v2139
        %v2412 = vpop.f32.mrf.mxu0
        %v2413 = vadd.f32 %v2300, %v2412
        %2414 = vmatmul.f32.gmra.mxu0 %v2142
        %v2415 = vpop.f32.mrf.mxu0
        %v2416 = vadd.f32 %v2303, %v2415
        %2417 = vdwg.mxu0
        %2418 = vmatpush.msra.mxu0 %v2191
        %2419 = vmatpush.msra.mxu0 %v2190
        %2420 = vmatpush.msra.mxu0 %v2189
        %2421 = vmatpush.msra.mxu0 %v2188
        %2422 = vmatpush.msra.mxu0 %v2187
        %2423 = vmatpush.msra.mxu0 %v2186
        %2424 = vmatpush.msra.mxu0 %v2185
        %2425 = vmatpush.msra.mxu0 %v2184
        %2426 = vmatpush.msra.mxu0 %v2183
        %2427 = vmatpush.msra.mxu0 %v2182
        %2428 = vmatpush.msra.mxu0 %v2181
        %2429 = vmatpush.msra.mxu0 %v2180
        %2430 = vmatpush.msra.mxu0 %v2179
        %2431 = vmatpush.msra.mxu0 %v2178
        %2432 = vmatpush.msra.mxu0 %v2177
        %2433 = vmatpush.msra.mxu0 %v2176
        %2434 = vmatmul.f32.gmra.mxu0 %v2050
        %v2435 = vpop.f32.mrf.mxu0
        %v2436 = vadd.f32 %v2323, %v2435
        %2437 = vmatmul.f32.gmra.mxu0 %v2053
        %v2438 = vpop.f32.mrf.mxu0
        %v2439 = vadd.f32 %v2326, %v2438
        %2440 = vmatmul.f32.gmra.mxu0 %v2056
        %v2441 = vpop.f32.mrf.mxu0
        %v2442 = vadd.f32 %v2329, %v2441
        %2443 = vmatmul.f32.gmra.mxu0 %v2059
        %v2444 = vpop.f32.mrf.mxu0
        %v2445 = vadd.f32 %v2332, %v2444
        %2446 = vmatmul.f32.gmra.mxu0 %v2062
        %v2447 = vpop.f32.mrf.mxu0
        %v2448 = vadd.f32 %v2335, %v2447
        %2449 = vmatmul.f32.gmra.mxu0 %v2065
        %v2450 = vpop.f32.mrf.mxu0
        %v2451 = vadd.f32 %v2338, %v2450
        %2452 = vmatmul.f32.gmra.mxu0 %v2068
        %v2453 = vpop.f32.mrf.mxu0
        %v2454 = vadd.f32 %v2341, %v2453
        %2455 = vmatmul.f32.gmra.mxu0 %v2071
        %v2456 = vpop.f32.mrf.mxu0
        %v2457 = vadd.f32 %v2344, %v2456
        %2458 = vmatmul.f32.gmra.mxu0 %v2074
        %v2459 = vpop.f32.mrf.mxu0
        %v2460 = vadd.f32 %v2347, %v2459
        %2461 = vmatmul.f32.gmra.mxu0 %v2077
        %v2462 = vpop.f32.mrf.mxu0
        %v2463 = vadd.f32 %v2350, %v2462
        %2464 = vmatmul.f32.gmra.mxu0 %v2080
        %v2465 = vpop.f32.mrf.mxu0
        %v2466 = vadd.f32 %v2353, %v2465
        %2467 = vmatmul.f32.gmra.mxu0 %v2083
        %v2468 = vpop.f32.mrf.mxu0
        %v2469 = vadd.f32 %v2356, %v2468
        %2470 = vmatmul.f32.gmra.mxu0 %v2086
        %v2471 = vpop.f32.mrf.mxu0
        %v2472 = vadd.f32 %v2359, %v2471
        %2473 = vmatmul.f32.gmra.mxu0 %v2089
        %v2474 = vpop.f32.mrf.mxu0
        %v2475 = vadd.f32 %v2362, %v2474
        %2476 = vmatmul.f32.gmra.mxu0 %v2092
        %v2477 = vpop.f32.mrf.mxu0
        %v2478 = vadd.f32 %v2365, %v2477
        %2479 = vmatmul.f32.gmra.mxu0 %v2095
        %v2480 = vpop.f32.mrf.mxu0
        %v2481 = vadd.f32 %v2368, %v2480
        %2482 = vmatmul.f32.gmra.mxu0 %v2098
        %v2483 = vpop.f32.mrf.mxu0
        %v2484 = vadd.f32 %v2371, %v2483
        %2485 = vmatmul.f32.gmra.mxu0 %v2101
        %v2486 = vpop.f32.mrf.mxu0
        %v2487 = vadd.f32 %v2374, %v2486
        %2488 = vmatmul.f32.gmra.mxu0 %v2104
        %v2489 = vpop.f32.mrf.mxu0
        %v2490 = vadd.f32 %v2377, %v2489
        %2491 = vmatmul.f32.gmra.mxu0 %v2107
        %v2492 = vpop.f32.mrf.mxu0
        %v2493 = vadd.f32 %v2380, %v2492
        %2494 = vmatmul.f32.gmra.mxu0 %v2110
        %v2495 = vpop.f32.mrf.mxu0
        %v2496 = vadd.f32 %v2383, %v2495
        %2497 = vmatmul.f32.gmra.mxu0 %v2113
        %v2498 = vpop.f32.mrf.mxu0
        %v2499 = vadd.f32 %v2386, %v2498
        %2500 = vmatmul.f32.gmra.mxu0 %v2116
        %v2501 = vpop.f32.mrf.mxu0
        %v2502 = vadd.f32 %v2389, %v2501
        %2503 = vmatmul.f32.gmra.mxu0 %v2119
        %v2504 = vpop.f32.mrf.mxu0
        %v2505 = vadd.f32 %v2392, %v2504
        %2506 = vmatmul.f32.gmra.mxu0 %v2122
        %v2507 = vpop.f32.mrf.mxu0
        %v2508 = vadd.f32 %v2395, %v2507
        %2509 = vmatmul.f32.gmra.mxu0 %v2125
        %v2510 = vpop.f32.mrf.mxu0
        %v2511 = vadd.f32 %v2398, %v2510
        %2512 = vmatmul.f32.gmra.mxu0 %v2128
        %v2513 = vpop.f32.mrf.mxu0
        %v2514 = vadd.f32 %v2401, %v2513
        %2515 = vmatmul.f32.gmra.mxu0 %v2131
        %v2516 = vpop.f32.mrf.mxu0
        %v2517 = vadd.f32 %v2404, %v2516
        %2518 = vmatmul.f32.gmra.mxu0 %v2134
        %v2519 = vpop.f32.mrf.mxu0
        %v2520 = vadd.f32 %v2407, %v2519
        %2521 = vmatmul.f32.gmra.mxu0 %v2137
        %v2522 = vpop.f32.mrf.mxu0
        %v2523 = vadd.f32 %v2410, %v2522
        %2524 = vmatmul.f32.gmra.mxu0 %v2140
        %v2525 = vpop.f32.mrf.mxu0
        %v2526 = vadd.f32 %v2413, %v2525
        %2527 = vmatmul.f32.gmra.mxu0 %v2143
        %v2528 = vpop.f32.mrf.mxu0
        %v2529 = vadd.f32 %v2416, %v2528
        %2530 = vdwg.mxu0
        %v2531 = vadd.f32 %v1760, %v2436
        %v2532 = vadd.f32 %v1763, %v2439
        %v2533 = vadd.f32 %v1766, %v2442
        %v2534 = vadd.f32 %v1769, %v2445
        %v2535 = vadd.f32 %v1772, %v2448
        %v2536 = vadd.f32 %v1775, %v2451
        %v2537 = vadd.f32 %v1778, %v2454
        %v2538 = vadd.f32 %v1781, %v2457
        %v2539 = vadd.f32 %v1784, %v2460
        %v2540 = vadd.f32 %v1787, %v2463
        %v2541 = vadd.f32 %v1790, %v2466
        %v2542 = vadd.f32 %v1793, %v2469
        %v2543 = vadd.f32 %v1796, %v2472
        %v2544 = vadd.f32 %v1799, %v2475
        %v2545 = vadd.f32 %v1802, %v2478
        %v2546 = vadd.f32 %v1805, %v2481
        %v2547 = vadd.f32 %v1808, %v2484
        %v2548 = vadd.f32 %v1811, %v2487
        %v2549 = vadd.f32 %v1814, %v2490
        %v2550 = vadd.f32 %v1817, %v2493
        %v2551 = vadd.f32 %v1820, %v2496
        %v2552 = vadd.f32 %v1823, %v2499
        %v2553 = vadd.f32 %v1826, %v2502
        %v2554 = vadd.f32 %v1829, %v2505
        %v2555 = vadd.f32 %v1832, %v2508
        %v2556 = vadd.f32 %v1835, %v2511
        %v2557 = vadd.f32 %v1838, %v2514
        %v2558 = vadd.f32 %v1841, %v2517
        %v2559 = vadd.f32 %v1844, %v2520
        %v2560 = vadd.f32 %v1847, %v2523
        %v2561 = vadd.f32 %v1850, %v2526
        %v2562 = vadd.f32 %v1853, %v2529
        %v2563 = vld [vmem:[%s2] sm:$0x1]
        %v2565 = vperm.slane %v2563, 0
        %v2567 = vadd.f32 %v2531, %v2565
        %v2568 = vadd.f32 %v2532, %v2565
        %v2569 = vadd.f32 %v2533, %v2565
        %v2570 = vadd.f32 %v2534, %v2565
        %v2571 = vadd.f32 %v2535, %v2565
        %v2572 = vadd.f32 %v2536, %v2565
        %v2573 = vadd.f32 %v2537, %v2565
        %v2574 = vadd.f32 %v2538, %v2565
        %v2575 = vadd.f32 %v2539, %v2565
        %v2576 = vadd.f32 %v2540, %v2565
        %v2577 = vadd.f32 %v2541, %v2565
        %v2578 = vadd.f32 %v2542, %v2565
        %v2579 = vadd.f32 %v2543, %v2565
        %v2580 = vadd.f32 %v2544, %v2565
        %v2581 = vadd.f32 %v2545, %v2565
        %v2582 = vadd.f32 %v2546, %v2565
        %v2583 = vadd.f32 %v2547, %v2565
        %v2584 = vadd.f32 %v2548, %v2565
        %v2585 = vadd.f32 %v2549, %v2565
        %v2586 = vadd.f32 %v2550, %v2565
        %v2587 = vadd.f32 %v2551, %v2565
        %v2588 = vadd.f32 %v2552, %v2565
        %v2589 = vadd.f32 %v2553, %v2565
        %v2590 = vadd.f32 %v2554, %v2565
        %v2591 = vadd.f32 %v2555, %v2565
        %v2592 = vadd.f32 %v2556, %v2565
        %v2593 = vadd.f32 %v2557, %v2565
        %v2594 = vadd.f32 %v2558, %v2565
        %v2595 = vadd.f32 %v2559, %v2565
        %v2596 = vadd.f32 %v2560, %v2565
        %v2597 = vadd.f32 %v2561, %v2565
        %v2598 = vadd.f32 %v2562, %v2565
        %v2599 = vmax.f32 %v2567, 0.0
        %v2600 = vmax.f32 %v2568, 0.0
        %v2601 = vmax.f32 %v2569, 0.0
        %v2602 = vmax.f32 %v2570, 0.0
        %v2603 = vmax.f32 %v2571, 0.0
        %v2604 = vmax.f32 %v2572, 0.0
        %v2605 = vmax.f32 %v2573, 0.0
        %v2606 = vmax.f32 %v2574, 0.0
        %v2607 = vmax.f32 %v2575, 0.0
        %v2608 = vmax.f32 %v2576, 0.0
        %v2609 = vmax.f32 %v2577, 0.0
        %v2610 = vmax.f32 %v2578, 0.0
        %v2611 = vmax.f32 %v2579, 0.0
        %v2612 = vmax.f32 %v2580, 0.0
        %v2613 = vmax.f32 %v2581, 0.0
        %v2614 = vmax.f32 %v2582, 0.0
        %v2615 = vmax.f32 %v2583, 0.0
        %v2616 = vmax.f32 %v2584, 0.0
        %v2617 = vmax.f32 %v2585, 0.0
        %v2618 = vmax.f32 %v2586, 0.0
        %v2619 = vmax.f32 %v2587, 0.0
        %v2620 = vmax.f32 %v2588, 0.0
        %v2621 = vmax.f32 %v2589, 0.0
        %v2622 = vmax.f32 %v2590, 0.0
        %v2623 = vmax.f32 %v2591, 0.0
        %v2624 = vmax.f32 %v2592, 0.0
        %v2625 = vmax.f32 %v2593, 0.0
        %v2626 = vmax.f32 %v2594, 0.0
        %v2627 = vmax.f32 %v2595, 0.0
        %v2628 = vmax.f32 %v2596, 0.0
        %v2629 = vmax.f32 %v2597, 0.0
        %v2630 = vmax.f32 %v2598, 0.0
        %s2631 = scalar_lea.vmem [#allocation3], 32
        %2632 = vst [vmem:[%s2631 + $0x8] sm:$0xff] %v2599
        %2633 = vst [vmem:[%s2631 + $0x10] sm:$0xff] %v2600
        %2634 = vst [vmem:[%s2631 + $0x28] sm:$0xff] %v2601
        %2635 = vst [vmem:[%s2631 + $0x30] sm:$0xff] %v2602
        %2636 = vst [vmem:[%s2631 + $0x48] sm:$0xff] %v2603
        %2637 = vst [vmem:[%s2631 + $0x50] sm:$0xff] %v2604
        %2638 = vst [vmem:[%s2631 + $0x68] sm:$0xff] %v2605
        %2639 = vst [vmem:[%s2631 + $0x70] sm:$0xff] %v2606
        %2640 = vst [vmem:[%s2631 + $0x88] sm:$0xff] %v2607
        %2641 = vst [vmem:[%s2631 + $0x90] sm:$0xff] %v2608
        %2642 = vst [vmem:[%s2631 + $0xa8] sm:$0xff] %v2609
        %2643 = vst [vmem:[%s2631 + $0xb0] sm:$0xff] %v2610
        %2644 = vst [vmem:[%s2631 + $0xc8] sm:$0xff] %v2611
        %2645 = vst [vmem:[%s2631 + $0xd0] sm:$0xff] %v2612
        %2646 = vst [vmem:[%s2631 + $0xe8] sm:$0xff] %v2613
        %2647 = vst [vmem:[%s2631 + $0xf0] sm:$0xff] %v2614
        %2648 = vst [vmem:[%s2631 + $0x108] sm:$0xff] %v2615
        %2649 = vst [vmem:[%s2631 + $0x110] sm:$0xff] %v2616
        %2650 = vst [vmem:[%s2631 + $0x128] sm:$0xff] %v2617
        %2651 = vst [vmem:[%s2631 + $0x130] sm:$0xff] %v2618
        %2652 = vst [vmem:[%s2631 + $0x148] sm:$0xff] %v2619
        %2653 = vst [vmem:[%s2631 + $0x150] sm:$0xff] %v2620
        %2654 = vst [vmem:[%s2631 + $0x168] sm:$0xff] %v2621
        %2655 = vst [vmem:[%s2631 + $0x170] sm:$0xff] %v2622
        %2656 = vst [vmem:[%s2631 + $0x188] sm:$0xff] %v2623
        %2657 = vst [vmem:[%s2631 + $0x190] sm:$0xff] %v2624
        %2658 = vst [vmem:[%s2631 + $0x1a8] sm:$0xff] %v2625
        %2659 = vst [vmem:[%s2631 + $0x1b0] sm:$0xff] %v2626
        %2660 = vst [vmem:[%s2631 + $0x1c8] sm:$0xff] %v2627
        %2661 = vst [vmem:[%s2631 + $0x1d0] sm:$0xff] %v2628
        %2662 = vst [vmem:[%s2631 + $0x1e8] sm:$0xff] %v2629
        %2663 = vst [vmem:[%s2631 + $0x1f0] sm:$0xff] %v2630
        %v2664 = vld [vmem:[#allocation3 + $0x7] sm:$0xff]
        %v2665 = vld [vmem:[#allocation3 + $0xf] sm:$0xff]
        %v2666 = vld [vmem:[#allocation3 + $0x27] sm:$0xff]
        %v2667 = vld [vmem:[#allocation3 + $0x2f] sm:$0xff]
        %v2668 = vld [vmem:[#allocation3 + $0x47] sm:$0xff]
        %v2669 = vld [vmem:[#allocation3 + $0x4f] sm:$0xff]
        %v2670 = vld [vmem:[#allocation3 + $0x67] sm:$0xff]
        %v2671 = vld [vmem:[#allocation3 + $0x6f] sm:$0xff]
        %v2672 = vld [vmem:[#allocation3 + $0x87] sm:$0xff]
        %v2673 = vld [vmem:[#allocation3 + $0x8f] sm:$0xff]
        %v2674 = vld [vmem:[#allocation3 + $0xa7] sm:$0xff]
        %v2675 = vld [vmem:[#allocation3 + $0xaf] sm:$0xff]
        %v2676 = vld [vmem:[#allocation3 + $0xc7] sm:$0xff]
        %v2677 = vld [vmem:[#allocation3 + $0xcf] sm:$0xff]
        %v2678 = vld [vmem:[#allocation3 + $0xe7] sm:$0xff]
        %v2679 = vld [vmem:[#allocation3 + $0xef] sm:$0xff]
        %v2680 = vld [vmem:[#allocation3 + $0x107] sm:$0xff]
        %v2681 = vld [vmem:[#allocation3 + $0x10f] sm:$0xff]
        %v2682 = vld [vmem:[#allocation3 + $0x127] sm:$0xff]
        %v2683 = vld [vmem:[#allocation3 + $0x12f] sm:$0xff]
        %v2684 = vld [vmem:[#allocation3 + $0x147] sm:$0xff]
        %v2685 = vld [vmem:[#allocation3 + $0x14f] sm:$0xff]
        %v2686 = vld [vmem:[#allocation3 + $0x167] sm:$0xff]
        %v2687 = vld [vmem:[#allocation3 + $0x16f] sm:$0xff]
        %v2688 = vld [vmem:[#allocation3 + $0x187] sm:$0xff]
        %v2689 = vld [vmem:[#allocation3 + $0x18f] sm:$0xff]
        %v2690 = vld [vmem:[#allocation3 + $0x1a7] sm:$0xff]
        %v2691 = vld [vmem:[#allocation3 + $0x1af] sm:$0xff]
        %v2692 = vld [vmem:[#allocation3 + $0x1c7] sm:$0xff]
        %v2693 = vld [vmem:[#allocation3 + $0x1cf] sm:$0xff]
        %v2694 = vld [vmem:[#allocation3 + $0x1e7] sm:$0xff]
        %v2695 = vld [vmem:[#allocation3 + $0x1ef] sm:$0xff]
        %2696 = vst [vmem:[#allocation4] sm:$0xff] %v2664
        %2697 = vst [vmem:[#allocation4 + $0x18] sm:$0xff] %v2665
        %2698 = vst [vmem:[#allocation4 + $0x30] sm:$0xff] %v2666
        %2699 = vst [vmem:[#allocation4 + $0x48] sm:$0xff] %v2667
        %2700 = vst [vmem:[#allocation4 + $0x60] sm:$0xff] %v2668
        %2701 = vst [vmem:[#allocation4 + $0x78] sm:$0xff] %v2669
        %2702 = vst [vmem:[#allocation4 + $0x90] sm:$0xff] %v2670
        %2703 = vst [vmem:[#allocation4 + $0xa8] sm:$0xff] %v2671
        %2704 = vst [vmem:[#allocation4 + $0xc0] sm:$0xff] %v2672
        %2705 = vst [vmem:[#allocation4 + $0xd8] sm:$0xff] %v2673
        %2706 = vst [vmem:[#allocation4 + $0xf0] sm:$0xff] %v2674
        %2707 = vst [vmem:[#allocation4 + $0x108] sm:$0xff] %v2675
        %2708 = vst [vmem:[#allocation4 + $0x120] sm:$0xff] %v2676
        %2709 = vst [vmem:[#allocation4 + $0x138] sm:$0xff] %v2677
        %2710 = vst [vmem:[#allocation4 + $0x150] sm:$0xff] %v2678
        %2711 = vst [vmem:[#allocation4 + $0x168] sm:$0xff] %v2679
        %2712 = vst [vmem:[#allocation4 + $0x180] sm:$0xff] %v2680
        %2713 = vst [vmem:[#allocation4 + $0x198] sm:$0xff] %v2681
        %2714 = vst [vmem:[#allocation4 + $0x1b0] sm:$0xff] %v2682
        %2715 = vst [vmem:[#allocation4 + $0x1c8] sm:$0xff] %v2683
        %2716 = vst [vmem:[#allocation4 + $0x1e0] sm:$0xff] %v2684
        %2717 = vst [vmem:[#allocation4 + $0x1f8] sm:$0xff] %v2685
        %2718 = vst [vmem:[#allocation4 + $0x210] sm:$0xff] %v2686
        %2719 = vst [vmem:[#allocation4 + $0x228] sm:$0xff] %v2687
        %2720 = vst [vmem:[#allocation4 + $0x240] sm:$0xff] %v2688
        %2721 = vst [vmem:[#allocation4 + $0x258] sm:$0xff] %v2689
        %2722 = vst [vmem:[#allocation4 + $0x270] sm:$0xff] %v2690
        %2723 = vst [vmem:[#allocation4 + $0x288] sm:$0xff] %v2691
        %2724 = vst [vmem:[#allocation4 + $0x2a0] sm:$0xff] %v2692
        %2725 = vst [vmem:[#allocation4 + $0x2b8] sm:$0xff] %v2693
        %2726 = vst [vmem:[#allocation4 + $0x2d0] sm:$0xff] %v2694
        %2727 = vst [vmem:[#allocation4 + $0x2e8] sm:$0xff] %v2695
        %v2728 = vld [vmem:[#allocation3 + $0x8] sm:$0xff]
        %v2729 = vld [vmem:[#allocation3 + $0x10] sm:$0xff]
        %v2730 = vld [vmem:[#allocation3 + $0x28] sm:$0xff]
        %v2731 = vld [vmem:[#allocation3 + $0x30] sm:$0xff]
        %v2732 = vld [vmem:[#allocation3 + $0x48] sm:$0xff]
        %v2733 = vld [vmem:[#allocation3 + $0x50] sm:$0xff]
        %v2734 = vld [vmem:[#allocation3 + $0x68] sm:$0xff]
        %v2735 = vld [vmem:[#allocation3 + $0x70] sm:$0xff]
        %v2736 = vld [vmem:[#allocation3 + $0x88] sm:$0xff]
        %v2737 = vld [vmem:[#allocation3 + $0x90] sm:$0xff]
        %v2738 = vld [vmem:[#allocation3 + $0xa8] sm:$0xff]
        %v2739 = vld [vmem:[#allocation3 + $0xb0] sm:$0xff]
        %v2740 = vld [vmem:[#allocation3 + $0xc8] sm:$0xff]
        %v2741 = vld [vmem:[#allocation3 + $0xd0] sm:$0xff]
        %v2742 = vld [vmem:[#allocation3 + $0xe8] sm:$0xff]
        %v2743 = vld [vmem:[#allocation3 + $0xf0] sm:$0xff]
        %v2744 = vld [vmem:[#allocation3 + $0x108] sm:$0xff]
        %v2745 = vld [vmem:[#allocation3 + $0x110] sm:$0xff]
        %v2746 = vld [vmem:[#allocation3 + $0x128] sm:$0xff]
        %v2747 = vld [vmem:[#allocation3 + $0x130] sm:$0xff]
        %v2748 = vld [vmem:[#allocation3 + $0x148] sm:$0xff]
        %v2749 = vld [vmem:[#allocation3 + $0x150] sm:$0xff]
        %v2750 = vld [vmem:[#allocation3 + $0x168] sm:$0xff]
        %v2751 = vld [vmem:[#allocation3 + $0x170] sm:$0xff]
        %v2752 = vld [vmem:[#allocation3 + $0x188] sm:$0xff]
        %v2753 = vld [vmem:[#allocation3 + $0x190] sm:$0xff]
        %v2754 = vld [vmem:[#allocation3 + $0x1a8] sm:$0xff]
        %v2755 = vld [vmem:[#allocation3 + $0x1b0] sm:$0xff]
        %v2756 = vld [vmem:[#allocation3 + $0x1c8] sm:$0xff]
        %v2757 = vld [vmem:[#allocation3 + $0x1d0] sm:$0xff]
        %v2758 = vld [vmem:[#allocation3 + $0x1e8] sm:$0xff]
        %v2759 = vld [vmem:[#allocation3 + $0x1f0] sm:$0xff]
        %2760 = vst [vmem:[#allocation4 + $0x8] sm:$0xff] %v2728
        %2761 = vst [vmem:[#allocation4 + $0x20] sm:$0xff] %v2729
        %2762 = vst [vmem:[#allocation4 + $0x38] sm:$0xff] %v2730
        %2763 = vst [vmem:[#allocation4 + $0x50] sm:$0xff] %v2731
        %2764 = vst [vmem:[#allocation4 + $0x68] sm:$0xff] %v2732
        %2765 = vst [vmem:[#allocation4 + $0x80] sm:$0xff] %v2733
        %2766 = vst [vmem:[#allocation4 + $0x98] sm:$0xff] %v2734
        %2767 = vst [vmem:[#allocation4 + $0xb0] sm:$0xff] %v2735
        %2768 = vst [vmem:[#allocation4 + $0xc8] sm:$0xff] %v2736
        %2769 = vst [vmem:[#allocation4 + $0xe0] sm:$0xff] %v2737
        %2770 = vst [vmem:[#allocation4 + $0xf8] sm:$0xff] %v2738
        %2771 = vst [vmem:[#allocation4 + $0x110] sm:$0xff] %v2739
        %2772 = vst [vmem:[#allocation4 + $0x128] sm:$0xff] %v2740
        %2773 = vst [vmem:[#allocation4 + $0x140] sm:$0xff] %v2741
        %2774 = vst [vmem:[#allocation4 + $0x158] sm:$0xff] %v2742
        %2775 = vst [vmem:[#allocation4 + $0x170] sm:$0xff] %v2743
        %2776 = vst [vmem:[#allocation4 + $0x188] sm:$0xff] %v2744
        %2777 = vst [vmem:[#allocation4 + $0x1a0] sm:$0xff] %v2745
        %2778 = vst [vmem:[#allocation4 + $0x1b8] sm:$0xff] %v2746
        %2779 = vst [vmem:[#allocation4 + $0x1d0] sm:$0xff] %v2747
        %2780 = vst [vmem:[#allocation4 + $0x1e8] sm:$0xff] %v2748
        %2781 = vst [vmem:[#allocation4 + $0x200] sm:$0xff] %v2749
        %2782 = vst [vmem:[#allocation4 + $0x218] sm:$0xff] %v2750
        %2783 = vst [vmem:[#allocation4 + $0x230] sm:$0xff] %v2751
        %2784 = vst [vmem:[#allocation4 + $0x248] sm:$0xff] %v2752
        %2785 = vst [vmem:[#allocation4 + $0x260] sm:$0xff] %v2753
        %2786 = vst [vmem:[#allocation4 + $0x278] sm:$0xff] %v2754
        %2787 = vst [vmem:[#allocation4 + $0x290] sm:$0xff] %v2755
        %2788 = vst [vmem:[#allocation4 + $0x2a8] sm:$0xff] %v2756
        %2789 = vst [vmem:[#allocation4 + $0x2c0] sm:$0xff] %v2757
        %2790 = vst [vmem:[#allocation4 + $0x2d8] sm:$0xff] %v2758
        %2791 = vst [vmem:[#allocation4 + $0x2f0] sm:$0xff] %v2759
        %v2792 = vld [vmem:[#allocation3 + $0x9] sm:$0xff]
        %v2793 = vld [vmem:[#allocation3 + $0x11] sm:$0xff]
        %v2794 = vld [vmem:[#allocation3 + $0x29] sm:$0xff]
        %v2795 = vld [vmem:[#allocation3 + $0x31] sm:$0xff]
        %v2796 = vld [vmem:[#allocation3 + $0x49] sm:$0xff]
        %v2797 = vld [vmem:[#allocation3 + $0x51] sm:$0xff]
        %v2798 = vld [vmem:[#allocation3 + $0x69] sm:$0xff]
        %v2799 = vld [vmem:[#allocation3 + $0x71] sm:$0xff]
        %v2800 = vld [vmem:[#allocation3 + $0x89] sm:$0xff]
        %v2801 = vld [vmem:[#allocation3 + $0x91] sm:$0xff]
        %v2802 = vld [vmem:[#allocation3 + $0xa9] sm:$0xff]
        %v2803 = vld [vmem:[#allocation3 + $0xb1] sm:$0xff]
        %v2804 = vld [vmem:[#allocation3 + $0xc9] sm:$0xff]
        %v2805 = vld [vmem:[#allocation3 + $0xd1] sm:$0xff]
        %v2806 = vld [vmem:[#allocation3 + $0xe9] sm:$0xff]
        %v2807 = vld [vmem:[#allocation3 + $0xf1] sm:$0xff]
        %v2808 = vld [vmem:[#allocation3 + $0x109] sm:$0xff]
        %v2809 = vld [vmem:[#allocation3 + $0x111] sm:$0xff]
        %v2810 = vld [vmem:[#allocation3 + $0x129] sm:$0xff]
        %v2811 = vld [vmem:[#allocation3 + $0x131] sm:$0xff]
        %v2812 = vld [vmem:[#allocation3 + $0x149] sm:$0xff]
        %v2813 = vld [vmem:[#allocation3 + $0x151] sm:$0xff]
        %v2814 = vld [vmem:[#allocation3 + $0x169] sm:$0xff]
        %v2815 = vld [vmem:[#allocation3 + $0x171] sm:$0xff]
        %v2816 = vld [vmem:[#allocation3 + $0x189] sm:$0xff]
        %v2817 = vld [vmem:[#allocation3 + $0x191] sm:$0xff]
        %v2818 = vld [vmem:[#allocation3 + $0x1a9] sm:$0xff]
        %v2819 = vld [vmem:[#allocation3 + $0x1b1] sm:$0xff]
        %v2820 = vld [vmem:[#allocation3 + $0x1c9] sm:$0xff]
        %v2821 = vld [vmem:[#allocation3 + $0x1d1] sm:$0xff]
        %v2822 = vld [vmem:[#allocation3 + $0x1e9] sm:$0xff]
        %v2823 = vld [vmem:[#allocation3 + $0x1f1] sm:$0xff]
        %2824 = vst [vmem:[#allocation4 + $0x10] sm:$0xff] %v2792
        %2825 = vst [vmem:[#allocation4 + $0x28] sm:$0xff] %v2793
        %2826 = vst [vmem:[#allocation4 + $0x40] sm:$0xff] %v2794
        %2827 = vst [vmem:[#allocation4 + $0x58] sm:$0xff] %v2795
        %2828 = vst [vmem:[#allocation4 + $0x70] sm:$0xff] %v2796
        %2829 = vst [vmem:[#allocation4 + $0x88] sm:$0xff] %v2797
        %2830 = vst [vmem:[#allocation4 + $0xa0] sm:$0xff] %v2798
        %2831 = vst [vmem:[#allocation4 + $0xb8] sm:$0xff] %v2799
        %2832 = vst [vmem:[#allocation4 + $0xd0] sm:$0xff] %v2800
        %2833 = vst [vmem:[#allocation4 + $0xe8] sm:$0xff] %v2801
        %2834 = vst [vmem:[#allocation4 + $0x100] sm:$0xff] %v2802
        %2835 = vst [vmem:[#allocation4 + $0x118] sm:$0xff] %v2803
        %2836 = vst [vmem:[#allocation4 + $0x130] sm:$0xff] %v2804
        %2837 = vst [vmem:[#allocation4 + $0x148] sm:$0xff] %v2805
        %2838 = vst [vmem:[#allocation4 + $0x160] sm:$0xff] %v2806
        %2839 = vst [vmem:[#allocation4 + $0x178] sm:$0xff] %v2807
        %2840 = vst [vmem:[#allocation4 + $0x190] sm:$0xff] %v2808
        %2841 = vst [vmem:[#allocation4 + $0x1a8] sm:$0xff] %v2809
        %2842 = vst [vmem:[#allocation4 + $0x1c0] sm:$0xff] %v2810
        %2843 = vst [vmem:[#allocation4 + $0x1d8] sm:$0xff] %v2811
        %2844 = vst [vmem:[#allocation4 + $0x1f0] sm:$0xff] %v2812
        %2845 = vst [vmem:[#allocation4 + $0x208] sm:$0xff] %v2813
        %2846 = vst [vmem:[#allocation4 + $0x220] sm:$0xff] %v2814
        %2847 = vst [vmem:[#allocation4 + $0x238] sm:$0xff] %v2815
        %2848 = vst [vmem:[#allocation4 + $0x250] sm:$0xff] %v2816
        %2849 = vst [vmem:[#allocation4 + $0x268] sm:$0xff] %v2817
        %2850 = vst [vmem:[#allocation4 + $0x280] sm:$0xff] %v2818
        %2851 = vst [vmem:[#allocation4 + $0x298] sm:$0xff] %v2819
        %2852 = vst [vmem:[#allocation4 + $0x2b0] sm:$0xff] %v2820
        %2853 = vst [vmem:[#allocation4 + $0x2c8] sm:$0xff] %v2821
        %2854 = vst [vmem:[#allocation4 + $0x2e0] sm:$0xff] %v2822
        %2855 = vst [vmem:[#allocation4 + $0x2f8] sm:$0xff] %v2823
        %v2856 = vld [vmem:[#allocation4] sm:$0xff]
        %v2857 = vld [vmem:[#allocation4 + $0x8] sm:$0xff]
        %v2858 = vld [vmem:[#allocation4 + $0x10] sm:$0xff]
        %v2859 = vld [vmem:[#allocation4 + $0x18] sm:$0xff]
        %v2860 = vld [vmem:[#allocation4 + $0x20] sm:$0xff]
        %v2861 = vld [vmem:[#allocation4 + $0x28] sm:$0xff]
        %v2862 = vld [vmem:[#allocation4 + $0x30] sm:$0xff]
        %v2863 = vld [vmem:[#allocation4 + $0x38] sm:$0xff]
        %v2864 = vld [vmem:[#allocation4 + $0x40] sm:$0xff]
        %v2865 = vld [vmem:[#allocation4 + $0x48] sm:$0xff]
        %v2866 = vld [vmem:[#allocation4 + $0x50] sm:$0xff]
        %v2867 = vld [vmem:[#allocation4 + $0x58] sm:$0xff]
        %v2868 = vld [vmem:[#allocation4 + $0x60] sm:$0xff]
        %v2869 = vld [vmem:[#allocation4 + $0x68] sm:$0xff]
        %v2870 = vld [vmem:[#allocation4 + $0x70] sm:$0xff]
        %v2871 = vld [vmem:[#allocation4 + $0x78] sm:$0xff]
        %v2872 = vld [vmem:[#allocation4 + $0x80] sm:$0xff]
        %v2873 = vld [vmem:[#allocation4 + $0x88] sm:$0xff]
        %v2874 = vld [vmem:[#allocation4 + $0x90] sm:$0xff]
        %v2875 = vld [vmem:[#allocation4 + $0x98] sm:$0xff]
        %v2876 = vld [vmem:[#allocation4 + $0xa0] sm:$0xff]
        %v2877 = vld [vmem:[#allocation4 + $0xa8] sm:$0xff]
        %v2878 = vld [vmem:[#allocation4 + $0xb0] sm:$0xff]
        %v2879 = vld [vmem:[#allocation4 + $0xb8] sm:$0xff]
        %v2880 = vld [vmem:[#allocation4 + $0xc0] sm:$0xff]
        %v2881 = vld [vmem:[#allocation4 + $0xc8] sm:$0xff]
        %v2882 = vld [vmem:[#allocation4 + $0xd0] sm:$0xff]
        %v2883 = vld [vmem:[#allocation4 + $0xd8] sm:$0xff]
        %v2884 = vld [vmem:[#allocation4 + $0xe0] sm:$0xff]
        %v2885 = vld [vmem:[#allocation4 + $0xe8] sm:$0xff]
        %v2886 = vld [vmem:[#allocation4 + $0xf0] sm:$0xff]
        %v2887 = vld [vmem:[#allocation4 + $0xf8] sm:$0xff]
        %v2888 = vld [vmem:[#allocation4 + $0x100] sm:$0xff]
        %v2889 = vld [vmem:[#allocation4 + $0x108] sm:$0xff]
        %v2890 = vld [vmem:[#allocation4 + $0x110] sm:$0xff]
        %v2891 = vld [vmem:[#allocation4 + $0x118] sm:$0xff]
        %v2892 = vld [vmem:[#allocation4 + $0x120] sm:$0xff]
        %v2893 = vld [vmem:[#allocation4 + $0x128] sm:$0xff]
        %v2894 = vld [vmem:[#allocation4 + $0x130] sm:$0xff]
        %v2895 = vld [vmem:[#allocation4 + $0x138] sm:$0xff]
        %v2896 = vld [vmem:[#allocation4 + $0x140] sm:$0xff]
        %v2897 = vld [vmem:[#allocation4 + $0x148] sm:$0xff]
        %v2898 = vld [vmem:[#allocation4 + $0x150] sm:$0xff]
        %v2899 = vld [vmem:[#allocation4 + $0x158] sm:$0xff]
        %v2900 = vld [vmem:[#allocation4 + $0x160] sm:$0xff]
        %v2901 = vld [vmem:[#allocation4 + $0x168] sm:$0xff]
        %v2902 = vld [vmem:[#allocation4 + $0x170] sm:$0xff]
        %v2903 = vld [vmem:[#allocation4 + $0x178] sm:$0xff]
        %v2904 = vld [vmem:[#allocation4 + $0x180] sm:$0xff]
        %v2905 = vld [vmem:[#allocation4 + $0x188] sm:$0xff]
        %v2906 = vld [vmem:[#allocation4 + $0x190] sm:$0xff]
        %v2907 = vld [vmem:[#allocation4 + $0x198] sm:$0xff]
        %v2908 = vld [vmem:[#allocation4 + $0x1a0] sm:$0xff]
        %v2909 = vld [vmem:[#allocation4 + $0x1a8] sm:$0xff]
        %v2910 = vld [vmem:[#allocation4 + $0x1b0] sm:$0xff]
        %v2911 = vld [vmem:[#allocation4 + $0x1b8] sm:$0xff]
        %v2912 = vld [vmem:[#allocation4 + $0x1c0] sm:$0xff]
        %v2913 = vld [vmem:[#allocation4 + $0x1c8] sm:$0xff]
        %v2914 = vld [vmem:[#allocation4 + $0x1d0] sm:$0xff]
        %v2915 = vld [vmem:[#allocation4 + $0x1d8] sm:$0xff]
        %v2916 = vld [vmem:[#allocation4 + $0x1e0] sm:$0xff]
        %v2917 = vld [vmem:[#allocation4 + $0x1e8] sm:$0xff]
        %v2918 = vld [vmem:[#allocation4 + $0x1f0] sm:$0xff]
        %v2919 = vld [vmem:[#allocation4 + $0x1f8] sm:$0xff]
        %v2920 = vld [vmem:[#allocation4 + $0x200] sm:$0xff]
        %v2921 = vld [vmem:[#allocation4 + $0x208] sm:$0xff]
        %v2922 = vld [vmem:[#allocation4 + $0x210] sm:$0xff]
        %v2923 = vld [vmem:[#allocation4 + $0x218] sm:$0xff]
        %v2924 = vld [vmem:[#allocation4 + $0x220] sm:$0xff]
        %v2925 = vld [vmem:[#allocation4 + $0x228] sm:$0xff]
        %v2926 = vld [vmem:[#allocation4 + $0x230] sm:$0xff]
        %v2927 = vld [vmem:[#allocation4 + $0x238] sm:$0xff]
        %v2928 = vld [vmem:[#allocation4 + $0x240] sm:$0xff]
        %v2929 = vld [vmem:[#allocation4 + $0x248] sm:$0xff]
        %v2930 = vld [vmem:[#allocation4 + $0x250] sm:$0xff]
        %v2931 = vld [vmem:[#allocation4 + $0x258] sm:$0xff]
        %v2932 = vld [vmem:[#allocation4 + $0x260] sm:$0xff]
        %v2933 = vld [vmem:[#allocation4 + $0x268] sm:$0xff]
        %v2934 = vld [vmem:[#allocation4 + $0x270] sm:$0xff]
        %v2935 = vld [vmem:[#allocation4 + $0x278] sm:$0xff]
        %v2936 = vld [vmem:[#allocation4 + $0x280] sm:$0xff]
        %v2937 = vld [vmem:[#allocation4 + $0x288] sm:$0xff]
        %v2938 = vld [vmem:[#allocation4 + $0x290] sm:$0xff]
        %v2939 = vld [vmem:[#allocation4 + $0x298] sm:$0xff]
        %v2940 = vld [vmem:[#allocation4 + $0x2a0] sm:$0xff]
        %v2941 = vld [vmem:[#allocation4 + $0x2a8] sm:$0xff]
        %v2942 = vld [vmem:[#allocation4 + $0x2b0] sm:$0xff]
        %v2943 = vld [vmem:[#allocation4 + $0x2b8] sm:$0xff]
        %v2944 = vld [vmem:[#allocation4 + $0x2c0] sm:$0xff]
        %v2945 = vld [vmem:[#allocation4 + $0x2c8] sm:$0xff]
        %v2946 = vld [vmem:[#allocation4 + $0x2d0] sm:$0xff]
        %v2947 = vld [vmem:[#allocation4 + $0x2d8] sm:$0xff]
        %v2948 = vld [vmem:[#allocation4 + $0x2e0] sm:$0xff]
        %v2949 = vld [vmem:[#allocation4 + $0x2e8] sm:$0xff]
        %v2950 = vld [vmem:[#allocation4 + $0x2f0] sm:$0xff]
        %v2951 = vld [vmem:[#allocation4 + $0x2f8] sm:$0xff]
        %v2952 = vld [vmem:[#allocation8] sm:$0xff]
        %v2953 = vld [vmem:[#allocation8 + $0x8] sm:$0xff]
        %v2954 = vld [vmem:[#allocation8 + $0x10] sm:$0xff]
        %v2955 = vld [vmem:[#allocation8 + $0x18] sm:$0xff]
        %v2956 = vld [vmem:[#allocation8 + $0x20] sm:$0xff]
        %v2957 = vld [vmem:[#allocation8 + $0x28] sm:$0xff]
        %v2958 = vld [vmem:[#allocation8 + $0x30] sm:$0xff]
        %v2959 = vld [vmem:[#allocation8 + $0x38] sm:$0xff]
        %v2960 = vld [vmem:[#allocation8 + $0x40] sm:$0xff]
        %v2961 = vld [vmem:[#allocation8 + $0x48] sm:$0xff]
        %v2962 = vld [vmem:[#allocation8 + $0x50] sm:$0xff]
        %v2963 = vld [vmem:[#allocation8 + $0x58] sm:$0xff]
        %v2964 = vld [vmem:[#allocation8 + $0x60] sm:$0xff]
        %v2965 = vld [vmem:[#allocation8 + $0x68] sm:$0xff]
        %v2966 = vld [vmem:[#allocation8 + $0x70] sm:$0xff]
        %v2967 = vld [vmem:[#allocation8 + $0x78] sm:$0xff]
        %v2968 = vld [vmem:[#allocation8 + $0x80] sm:$0xff]
        %v2969 = vld [vmem:[#allocation8 + $0x88] sm:$0xff]
        %v2970 = vld [vmem:[#allocation8 + $0x90] sm:$0xff]
        %v2971 = vld [vmem:[#allocation8 + $0x98] sm:$0xff]
        %v2972 = vld [vmem:[#allocation8 + $0xa0] sm:$0xff]
        %v2973 = vld [vmem:[#allocation8 + $0xa8] sm:$0xff]
        %v2974 = vld [vmem:[#allocation8 + $0xb0] sm:$0xff]
        %v2975 = vld [vmem:[#allocation8 + $0xb8] sm:$0xff]
        %v2976 = vld [vmem:[#allocation8 + $0xc0] sm:$0xff]
        %v2977 = vld [vmem:[#allocation8 + $0xc8] sm:$0xff]
        %v2978 = vld [vmem:[#allocation8 + $0xd0] sm:$0xff]
        %v2979 = vld [vmem:[#allocation8 + $0xd8] sm:$0xff]
        %v2980 = vld [vmem:[#allocation8 + $0xe0] sm:$0xff]
        %v2981 = vld [vmem:[#allocation8 + $0xe8] sm:$0xff]
        %v2982 = vld [vmem:[#allocation8 + $0xf0] sm:$0xff]
        %v2983 = vld [vmem:[#allocation8 + $0xf8] sm:$0xff]
        %v2984 = vld [vmem:[#allocation8 + $0x100] sm:$0xff]
        %v2985 = vld [vmem:[#allocation8 + $0x108] sm:$0xff]
        %v2986 = vld [vmem:[#allocation8 + $0x110] sm:$0xff]
        %v2987 = vld [vmem:[#allocation8 + $0x118] sm:$0xff]
        %v2988 = vld [vmem:[#allocation8 + $0x120] sm:$0xff]
        %v2989 = vld [vmem:[#allocation8 + $0x128] sm:$0xff]
        %v2990 = vld [vmem:[#allocation8 + $0x130] sm:$0xff]
        %v2991 = vld [vmem:[#allocation8 + $0x138] sm:$0xff]
        %v2992 = vld [vmem:[#allocation8 + $0x140] sm:$0xff]
        %v2993 = vld [vmem:[#allocation8 + $0x148] sm:$0xff]
        %v2994 = vld [vmem:[#allocation8 + $0x150] sm:$0xff]
        %v2995 = vld [vmem:[#allocation8 + $0x158] sm:$0xff]
        %v2996 = vld [vmem:[#allocation8 + $0x160] sm:$0xff]
        %v2997 = vld [vmem:[#allocation8 + $0x168] sm:$0xff]
        %v2998 = vld [vmem:[#allocation8 + $0x170] sm:$0xff]
        %v2999 = vld [vmem:[#allocation8 + $0x178] sm:$0xff]
        %v3000 = vld [vmem:[%s2631 + $0x7] sm:$0xff]
        %v3001 = vld [vmem:[%s2631 + $0xf] sm:$0xff]
        %v3002 = vld [vmem:[%s2631 + $0x27] sm:$0xff]
        %v3003 = vld [vmem:[%s2631 + $0x2f] sm:$0xff]
        %v3004 = vld [vmem:[%s2631 + $0x47] sm:$0xff]
        %v3005 = vld [vmem:[%s2631 + $0x4f] sm:$0xff]
        %v3006 = vld [vmem:[%s2631 + $0x67] sm:$0xff]
        %v3007 = vld [vmem:[%s2631 + $0x6f] sm:$0xff]
        %v3008 = vld [vmem:[%s2631 + $0x87] sm:$0xff]
        %v3009 = vld [vmem:[%s2631 + $0x8f] sm:$0xff]
        %v3010 = vld [vmem:[%s2631 + $0xa7] sm:$0xff]
        %v3011 = vld [vmem:[%s2631 + $0xaf] sm:$0xff]
        %v3012 = vld [vmem:[%s2631 + $0xc7] sm:$0xff]
        %v3013 = vld [vmem:[%s2631 + $0xcf] sm:$0xff]
        %v3014 = vld [vmem:[%s2631 + $0xe7] sm:$0xff]
        %v3015 = vld [vmem:[%s2631 + $0xef] sm:$0xff]
        %v3016 = vld [vmem:[%s2631 + $0x107] sm:$0xff]
        %v3017 = vld [vmem:[%s2631 + $0x10f] sm:$0xff]
        %v3018 = vld [vmem:[%s2631 + $0x127] sm:$0xff]
        %v3019 = vld [vmem:[%s2631 + $0x12f] sm:$0xff]
        %v3020 = vld [vmem:[%s2631 + $0x147] sm:$0xff]
        %v3021 = vld [vmem:[%s2631 + $0x14f] sm:$0xff]
        %v3022 = vld [vmem:[%s2631 + $0x167] sm:$0xff]
        %v3023 = vld [vmem:[%s2631 + $0x16f] sm:$0xff]
        %v3024 = vld [vmem:[%s2631 + $0x187] sm:$0xff]
        %v3025 = vld [vmem:[%s2631 + $0x18f] sm:$0xff]
        %v3026 = vld [vmem:[%s2631 + $0x1a7] sm:$0xff]
        %v3027 = vld [vmem:[%s2631 + $0x1af] sm:$0xff]
        %v3028 = vld [vmem:[%s2631 + $0x1c7] sm:$0xff]
        %v3029 = vld [vmem:[%s2631 + $0x1cf] sm:$0xff]
        %v3030 = vld [vmem:[%s2631 + $0x1e7] sm:$0xff]
        %v3031 = vld [vmem:[%s2631 + $0x1ef] sm:$0xff]
        %3032 = vst [vmem:[#allocation4] sm:$0xff] %v3000
        %3033 = vst [vmem:[#allocation4 + $0x18] sm:$0xff] %v3001
        %3034 = vst [vmem:[#allocation4 + $0x30] sm:$0xff] %v3002
        %3035 = vst [vmem:[#allocation4 + $0x48] sm:$0xff] %v3003
        %3036 = vst [vmem:[#allocation4 + $0x60] sm:$0xff] %v3004
        %3037 = vst [vmem:[#allocation4 + $0x78] sm:$0xff] %v3005
        %3038 = vst [vmem:[#allocation4 + $0x90] sm:$0xff] %v3006
        %3039 = vst [vmem:[#allocation4 + $0xa8] sm:$0xff] %v3007
        %3040 = vst [vmem:[#allocation4 + $0xc0] sm:$0xff] %v3008
        %3041 = vst [vmem:[#allocation4 + $0xd8] sm:$0xff] %v3009
        %3042 = vst [vmem:[#allocation4 + $0xf0] sm:$0xff] %v3010
        %3043 = vst [vmem:[#allocation4 + $0x108] sm:$0xff] %v3011
        %3044 = vst [vmem:[#allocation4 + $0x120] sm:$0xff] %v3012
        %3045 = vst [vmem:[#allocation4 + $0x138] sm:$0xff] %v3013
        %3046 = vst [vmem:[#allocation4 + $0x150] sm:$0xff] %v3014
        %3047 = vst [vmem:[#allocation4 + $0x168] sm:$0xff] %v3015
        %3048 = vst [vmem:[#allocation4 + $0x180] sm:$0xff] %v3016
        %3049 = vst [vmem:[#allocation4 + $0x198] sm:$0xff] %v3017
        %3050 = vst [vmem:[#allocation4 + $0x1b0] sm:$0xff] %v3018
        %3051 = vst [vmem:[#allocation4 + $0x1c8] sm:$0xff] %v3019
        %3052 = vst [vmem:[#allocation4 + $0x1e0] sm:$0xff] %v3020
        %3053 = vst [vmem:[#allocation4 + $0x1f8] sm:$0xff] %v3021
        %3054 = vst [vmem:[#allocation4 + $0x210] sm:$0xff] %v3022
        %3055 = vst [vmem:[#allocation4 + $0x228] sm:$0xff] %v3023
        %3056 = vst [vmem:[#allocation4 + $0x240] sm:$0xff] %v3024
        %3057 = vst [vmem:[#allocation4 + $0x258] sm:$0xff] %v3025
        %3058 = vst [vmem:[#allocation4 + $0x270] sm:$0xff] %v3026
        %3059 = vst [vmem:[#allocation4 + $0x288] sm:$0xff] %v3027
        %3060 = vst [vmem:[#allocation4 + $0x2a0] sm:$0xff] %v3028
        %3061 = vst [vmem:[#allocation4 + $0x2b8] sm:$0xff] %v3029
        %3062 = vst [vmem:[#allocation4 + $0x2d0] sm:$0xff] %v3030
        %3063 = vst [vmem:[#allocation4 + $0x2e8] sm:$0xff] %v3031
        %v3064 = vld [vmem:[%s2631 + $0x8] sm:$0xff]
        %v3065 = vld [vmem:[%s2631 + $0x10] sm:$0xff]
        %v3066 = vld [vmem:[%s2631 + $0x28] sm:$0xff]
        %v3067 = vld [vmem:[%s2631 + $0x30] sm:$0xff]
        %v3068 = vld [vmem:[%s2631 + $0x48] sm:$0xff]
        %v3069 = vld [vmem:[%s2631 + $0x50] sm:$0xff]
        %v3070 = vld [vmem:[%s2631 + $0x68] sm:$0xff]
        %v3071 = vld [vmem:[%s2631 + $0x70] sm:$0xff]
        %v3072 = vld [vmem:[%s2631 + $0x88] sm:$0xff]
        %v3073 = vld [vmem:[%s2631 + $0x90] sm:$0xff]
        %v3074 = vld [vmem:[%s2631 + $0xa8] sm:$0xff]
        %v3075 = vld [vmem:[%s2631 + $0xb0] sm:$0xff]
        %v3076 = vld [vmem:[%s2631 + $0xc8] sm:$0xff]
        %v3077 = vld [vmem:[%s2631 + $0xd0] sm:$0xff]
        %v3078 = vld [vmem:[%s2631 + $0xe8] sm:$0xff]
        %v3079 = vld [vmem:[%s2631 + $0xf0] sm:$0xff]
        %v3080 = vld [vmem:[%s2631 + $0x108] sm:$0xff]
        %v3081 = vld [vmem:[%s2631 + $0x110] sm:$0xff]
        %v3082 = vld [vmem:[%s2631 + $0x128] sm:$0xff]
        %v3083 = vld [vmem:[%s2631 + $0x130] sm:$0xff]
        %v3084 = vld [vmem:[%s2631 + $0x148] sm:$0xff]
        %v3085 = vld [vmem:[%s2631 + $0x150] sm:$0xff]
        %v3086 = vld [vmem:[%s2631 + $0x168] sm:$0xff]
        %v3087 = vld [vmem:[%s2631 + $0x170] sm:$0xff]
        %v3088 = vld [vmem:[%s2631 + $0x188] sm:$0xff]
        %v3089 = vld [vmem:[%s2631 + $0x190] sm:$0xff]
        %v3090 = vld [vmem:[%s2631 + $0x1a8] sm:$0xff]
        %v3091 = vld [vmem:[%s2631 + $0x1b0] sm:$0xff]
        %v3092 = vld [vmem:[%s2631 + $0x1c8] sm:$0xff]
        %v3093 = vld [vmem:[%s2631 + $0x1d0] sm:$0xff]
        %v3094 = vld [vmem:[%s2631 + $0x1e8] sm:$0xff]
        %v3095 = vld [vmem:[%s2631 + $0x1f0] sm:$0xff]
        %3096 = vst [vmem:[#allocation4 + $0x8] sm:$0xff] %v3064
        %3097 = vst [vmem:[#allocation4 + $0x20] sm:$0xff] %v3065
        %3098 = vst [vmem:[#allocation4 + $0x38] sm:$0xff] %v3066
        %3099 = vst [vmem:[#allocation4 + $0x50] sm:$0xff] %v3067
        %3100 = vst [vmem:[#allocation4 + $0x68] sm:$0xff] %v3068
        %3101 = vst [vmem:[#allocation4 + $0x80] sm:$0xff] %v3069
        %3102 = vst [vmem:[#allocation4 + $0x98] sm:$0xff] %v3070
        %3103 = vst [vmem:[#allocation4 + $0xb0] sm:$0xff] %v3071
        %3104 = vst [vmem:[#allocation4 + $0xc8] sm:$0xff] %v3072
        %3105 = vst [vmem:[#allocation4 + $0xe0] sm:$0xff] %v3073
        %3106 = vst [vmem:[#allocation4 + $0xf8] sm:$0xff] %v3074
        %3107 = vst [vmem:[#allocation4 + $0x110] sm:$0xff] %v3075
        %3108 = vst [vmem:[#allocation4 + $0x128] sm:$0xff] %v3076
        %3109 = vst [vmem:[#allocation4 + $0x140] sm:$0xff] %v3077
        %3110 = vst [vmem:[#allocation4 + $0x158] sm:$0xff] %v3078
        %3111 = vst [vmem:[#allocation4 + $0x170] sm:$0xff] %v3079
        %3112 = vst [vmem:[#allocation4 + $0x188] sm:$0xff] %v3080
        %3113 = vst [vmem:[#allocation4 + $0x1a0] sm:$0xff] %v3081
        %3114 = vst [vmem:[#allocation4 + $0x1b8] sm:$0xff] %v3082
        %3115 = vst [vmem:[#allocation4 + $0x1d0] sm:$0xff] %v3083
        %3116 = vst [vmem:[#allocation4 + $0x1e8] sm:$0xff] %v3084
        %3117 = vst [vmem:[#allocation4 + $0x200] sm:$0xff] %v3085
        %3118 = vst [vmem:[#allocation4 + $0x218] sm:$0xff] %v3086
        %3119 = vst [vmem:[#allocation4 + $0x230] sm:$0xff] %v3087
        %3120 = vst [vmem:[#allocation4 + $0x248] sm:$0xff] %v3088
        %3121 = vst [vmem:[#allocation4 + $0x260] sm:$0xff] %v3089
        %3122 = vst [vmem:[#allocation4 + $0x278] sm:$0xff] %v3090
        %3123 = vst [vmem:[#allocation4 + $0x290] sm:$0xff] %v3091
        %3124 = vst [vmem:[#allocation4 + $0x2a8] sm:$0xff] %v3092
        %3125 = vst [vmem:[#allocation4 + $0x2c0] sm:$0xff] %v3093
        %3126 = vst [vmem:[#allocation4 + $0x2d8] sm:$0xff] %v3094
        %3127 = vst [vmem:[#allocation4 + $0x2f0] sm:$0xff] %v3095
        %v3128 = vld [vmem:[%s2631 + $0x9] sm:$0xff]
        %v3129 = vld [vmem:[%s2631 + $0x11] sm:$0xff]
        %v3130 = vld [vmem:[%s2631 + $0x29] sm:$0xff]
        %v3131 = vld [vmem:[%s2631 + $0x31] sm:$0xff]
        %v3132 = vld [vmem:[%s2631 + $0x49] sm:$0xff]
        %v3133 = vld [vmem:[%s2631 + $0x51] sm:$0xff]
        %v3134 = vld [vmem:[%s2631 + $0x69] sm:$0xff]
        %v3135 = vld [vmem:[%s2631 + $0x71] sm:$0xff]
        %v3136 = vld [vmem:[%s2631 + $0x89] sm:$0xff]
        %v3137 = vld [vmem:[%s2631 + $0x91] sm:$0xff]
        %v3138 = vld [vmem:[%s2631 + $0xa9] sm:$0xff]
        %v3139 = vld [vmem:[%s2631 + $0xb1] sm:$0xff]
        %v3140 = vld [vmem:[%s2631 + $0xc9] sm:$0xff]
        %v3141 = vld [vmem:[%s2631 + $0xd1] sm:$0xff]
        %v3142 = vld [vmem:[%s2631 + $0xe9] sm:$0xff]
        %v3143 = vld [vmem:[%s2631 + $0xf1] sm:$0xff]
        %v3144 = vld [vmem:[%s2631 + $0x109] sm:$0xff]
        %v3145 = vld [vmem:[%s2631 + $0x111] sm:$0xff]
        %v3146 = vld [vmem:[%s2631 + $0x129] sm:$0xff]
        %v3147 = vld [vmem:[%s2631 + $0x131] sm:$0xff]
        %v3148 = vld [vmem:[%s2631 + $0x149] sm:$0xff]
        %v3149 = vld [vmem:[%s2631 + $0x151] sm:$0xff]
        %v3150 = vld [vmem:[%s2631 + $0x169] sm:$0xff]
        %v3151 = vld [vmem:[%s2631 + $0x171] sm:$0xff]
        %v3152 = vld [vmem:[%s2631 + $0x189] sm:$0xff]
        %v3153 = vld [vmem:[%s2631 + $0x191] sm:$0xff]
        %v3154 = vld [vmem:[%s2631 + $0x1a9] sm:$0xff]
        %v3155 = vld [vmem:[%s2631 + $0x1b1] sm:$0xff]
        %v3156 = vld [vmem:[%s2631 + $0x1c9] sm:$0xff]
        %v3157 = vld [vmem:[%s2631 + $0x1d1] sm:$0xff]
        %v3158 = vld [vmem:[%s2631 + $0x1e9] sm:$0xff]
        %v3159 = vld [vmem:[%s2631 + $0x1f1] sm:$0xff]
        %3160 = vst [vmem:[#allocation4 + $0x10] sm:$0xff] %v3128
        %3161 = vst [vmem:[#allocation4 + $0x28] sm:$0xff] %v3129
        %3162 = vst [vmem:[#allocation4 + $0x40] sm:$0xff] %v3130
        %3163 = vst [vmem:[#allocation4 + $0x58] sm:$0xff] %v3131
        %3164 = vst [vmem:[#allocation4 + $0x70] sm:$0xff] %v3132
        %3165 = vst [vmem:[#allocation4 + $0x88] sm:$0xff] %v3133
        %3166 = vst [vmem:[#allocation4 + $0xa0] sm:$0xff] %v3134
        %3167 = vst [vmem:[#allocation4 + $0xb8] sm:$0xff] %v3135
        %3168 = vst [vmem:[#allocation4 + $0xd0] sm:$0xff] %v3136
        %3169 = vst [vmem:[#allocation4 + $0xe8] sm:$0xff] %v3137
        %3170 = vst [vmem:[#allocation4 + $0x100] sm:$0xff] %v3138
        %3171 = vst [vmem:[#allocation4 + $0x118] sm:$0xff] %v3139
        %3172 = vst [vmem:[#allocation4 + $0x130] sm:$0xff] %v3140
        %3173 = vst [vmem:[#allocation4 + $0x148] sm:$0xff] %v3141
        %3174 = vst [vmem:[#allocation4 + $0x160] sm:$0xff] %v3142
        %3175 = vst [vmem:[#allocation4 + $0x178] sm:$0xff] %v3143
        %3176 = vst [vmem:[#allocation4 + $0x190] sm:$0xff] %v3144
        %3177 = vst [vmem:[#allocation4 + $0x1a8] sm:$0xff] %v3145
        %3178 = vst [vmem:[#allocation4 + $0x1c0] sm:$0xff] %v3146
        %3179 = vst [vmem:[#allocation4 + $0x1d8] sm:$0xff] %v3147
        %3180 = vst [vmem:[#allocation4 + $0x1f0] sm:$0xff] %v3148
        %3181 = vst [vmem:[#allocation4 + $0x208] sm:$0xff] %v3149
        %3182 = vst [vmem:[#allocation4 + $0x220] sm:$0xff] %v3150
        %3183 = vst [vmem:[#allocation4 + $0x238] sm:$0xff] %v3151
        %3184 = vst [vmem:[#allocation4 + $0x250] sm:$0xff] %v3152
        %3185 = vst [vmem:[#allocation4 + $0x268] sm:$0xff] %v3153
        %3186 = vst [vmem:[#allocation4 + $0x280] sm:$0xff] %v3154
        %3187 = vst [vmem:[#allocation4 + $0x298] sm:$0xff] %v3155
        %3188 = vst [vmem:[#allocation4 + $0x2b0] sm:$0xff] %v3156
        %3189 = vst [vmem:[#allocation4 + $0x2c8] sm:$0xff] %v3157
        %3190 = vst [vmem:[#allocation4 + $0x2e0] sm:$0xff] %v3158
        %3191 = vst [vmem:[#allocation4 + $0x2f8] sm:$0xff] %v3159
        %v3192 = vld [vmem:[#allocation4] sm:$0xff]
        %v3193 = vld [vmem:[#allocation4 + $0x8] sm:$0xff]
        %v3194 = vld [vmem:[#allocation4 + $0x10] sm:$0xff]
        %v3195 = vld [vmem:[#allocation4 + $0x18] sm:$0xff]
        %v3196 = vld [vmem:[#allocation4 + $0x20] sm:$0xff]
        %v3197 = vld [vmem:[#allocation4 + $0x28] sm:$0xff]
        %v3198 = vld [vmem:[#allocation4 + $0x30] sm:$0xff]
        %v3199 = vld [vmem:[#allocation4 + $0x38] sm:$0xff]
        %v3200 = vld [vmem:[#allocation4 + $0x40] sm:$0xff]
        %v3201 = vld [vmem:[#allocation4 + $0x48] sm:$0xff]
        %v3202 = vld [vmem:[#allocation4 + $0x50] sm:$0xff]
        %v3203 = vld [vmem:[#allocation4 + $0x58] sm:$0xff]
        %v3204 = vld [vmem:[#allocation4 + $0x60] sm:$0xff]
        %v3205 = vld [vmem:[#allocation4 + $0x68] sm:$0xff]
        %v3206 = vld [vmem:[#allocation4 + $0x70] sm:$0xff]
        %v3207 = vld [vmem:[#allocation4 + $0x78] sm:$0xff]
        %v3208 = vld [vmem:[#allocation4 + $0x80] sm:$0xff]
        %v3209 = vld [vmem:[#allocation4 + $0x88] sm:$0xff]
        %v3210 = vld [vmem:[#allocation4 + $0x90] sm:$0xff]
        %v3211 = vld [vmem:[#allocation4 + $0x98] sm:$0xff]
        %v3212 = vld [vmem:[#allocation4 + $0xa0] sm:$0xff]
        %v3213 = vld [vmem:[#allocation4 + $0xa8] sm:$0xff]
        %v3214 = vld [vmem:[#allocation4 + $0xb0] sm:$0xff]
        %v3215 = vld [vmem:[#allocation4 + $0xb8] sm:$0xff]
        %v3216 = vld [vmem:[#allocation4 + $0xc0] sm:$0xff]
        %v3217 = vld [vmem:[#allocation4 + $0xc8] sm:$0xff]
        %v3218 = vld [vmem:[#allocation4 + $0xd0] sm:$0xff]
        %v3219 = vld [vmem:[#allocation4 + $0xd8] sm:$0xff]
        %v3220 = vld [vmem:[#allocation4 + $0xe0] sm:$0xff]
        %v3221 = vld [vmem:[#allocation4 + $0xe8] sm:$0xff]
        %v3222 = vld [vmem:[#allocation4 + $0xf0] sm:$0xff]
        %v3223 = vld [vmem:[#allocation4 + $0xf8] sm:$0xff]
        %v3224 = vld [vmem:[#allocation4 + $0x100] sm:$0xff]
        %v3225 = vld [vmem:[#allocation4 + $0x108] sm:$0xff]
        %v3226 = vld [vmem:[#allocation4 + $0x110] sm:$0xff]
        %v3227 = vld [vmem:[#allocation4 + $0x118] sm:$0xff]
        %v3228 = vld [vmem:[#allocation4 + $0x120] sm:$0xff]
        %v3229 = vld [vmem:[#allocation4 + $0x128] sm:$0xff]
        %v3230 = vld [vmem:[#allocation4 + $0x130] sm:$0xff]
        %v3231 = vld [vmem:[#allocation4 + $0x138] sm:$0xff]
        %v3232 = vld [vmem:[#allocation4 + $0x140] sm:$0xff]
        %v3233 = vld [vmem:[#allocation4 + $0x148] sm:$0xff]
        %v3234 = vld [vmem:[#allocation4 + $0x150] sm:$0xff]
        %v3235 = vld [vmem:[#allocation4 + $0x158] sm:$0xff]
        %v3236 = vld [vmem:[#allocation4 + $0x160] sm:$0xff]
        %v3237 = vld [vmem:[#allocation4 + $0x168] sm:$0xff]
        %v3238 = vld [vmem:[#allocation4 + $0x170] sm:$0xff]
        %v3239 = vld [vmem:[#allocation4 + $0x178] sm:$0xff]
        %v3240 = vld [vmem:[#allocation4 + $0x180] sm:$0xff]
        %v3241 = vld [vmem:[#allocation4 + $0x188] sm:$0xff]
        %v3242 = vld [vmem:[#allocation4 + $0x190] sm:$0xff]
        %v3243 = vld [vmem:[#allocation4 + $0x198] sm:$0xff]
        %v3244 = vld [vmem:[#allocation4 + $0x1a0] sm:$0xff]
        %v3245 = vld [vmem:[#allocation4 + $0x1a8] sm:$0xff]
        %v3246 = vld [vmem:[#allocation4 + $0x1b0] sm:$0xff]
        %v3247 = vld [vmem:[#allocation4 + $0x1b8] sm:$0xff]
        %v3248 = vld [vmem:[#allocation4 + $0x1c0] sm:$0xff]
        %v3249 = vld [vmem:[#allocation4 + $0x1c8] sm:$0xff]
        %v3250 = vld [vmem:[#allocation4 + $0x1d0] sm:$0xff]
        %v3251 = vld [vmem:[#allocation4 + $0x1d8] sm:$0xff]
        %v3252 = vld [vmem:[#allocation4 + $0x1e0] sm:$0xff]
        %v3253 = vld [vmem:[#allocation4 + $0x1e8] sm:$0xff]
        %v3254 = vld [vmem:[#allocation4 + $0x1f0] sm:$0xff]
        %v3255 = vld [vmem:[#allocation4 + $0x1f8] sm:$0xff]
        %v3256 = vld [vmem:[#allocation4 + $0x200] sm:$0xff]
        %v3257 = vld [vmem:[#allocation4 + $0x208] sm:$0xff]
        %v3258 = vld [vmem:[#allocation4 + $0x210] sm:$0xff]
        %v3259 = vld [vmem:[#allocation4 + $0x218] sm:$0xff]
        %v3260 = vld [vmem:[#allocation4 + $0x220] sm:$0xff]
        %v3261 = vld [vmem:[#allocation4 + $0x228] sm:$0xff]
        %v3262 = vld [vmem:[#allocation4 + $0x230] sm:$0xff]
        %v3263 = vld [vmem:[#allocation4 + $0x238] sm:$0xff]
        %v3264 = vld [vmem:[#allocation4 + $0x240] sm:$0xff]
        %v3265 = vld [vmem:[#allocation4 + $0x248] sm:$0xff]
        %v3266 = vld [vmem:[#allocation4 + $0x250] sm:$0xff]
        %v3267 = vld [vmem:[#allocation4 + $0x258] sm:$0xff]
        %v3268 = vld [vmem:[#allocation4 + $0x260] sm:$0xff]
        %v3269 = vld [vmem:[#allocation4 + $0x268] sm:$0xff]
        %v3270 = vld [vmem:[#allocation4 + $0x270] sm:$0xff]
        %v3271 = vld [vmem:[#allocation4 + $0x278] sm:$0xff]
        %v3272 = vld [vmem:[#allocation4 + $0x280] sm:$0xff]
        %v3273 = vld [vmem:[#allocation4 + $0x288] sm:$0xff]
        %v3274 = vld [vmem:[#allocation4 + $0x290] sm:$0xff]
        %v3275 = vld [vmem:[#allocation4 + $0x298] sm:$0xff]
        %v3276 = vld [vmem:[#allocation4 + $0x2a0] sm:$0xff]
        %v3277 = vld [vmem:[#allocation4 + $0x2a8] sm:$0xff]
        %v3278 = vld [vmem:[#allocation4 + $0x2b0] sm:$0xff]
        %v3279 = vld [vmem:[#allocation4 + $0x2b8] sm:$0xff]
        %v3280 = vld [vmem:[#allocation4 + $0x2c0] sm:$0xff]
        %v3281 = vld [vmem:[#allocation4 + $0x2c8] sm:$0xff]
        %v3282 = vld [vmem:[#allocation4 + $0x2d0] sm:$0xff]
        %v3283 = vld [vmem:[#allocation4 + $0x2d8] sm:$0xff]
        %v3284 = vld [vmem:[#allocation4 + $0x2e0] sm:$0xff]
        %v3285 = vld [vmem:[#allocation4 + $0x2e8] sm:$0xff]
        %v3286 = vld [vmem:[#allocation4 + $0x2f0] sm:$0xff]
        %v3287 = vld [vmem:[#allocation4 + $0x2f8] sm:$0xff]
        %v3288 = vld [vmem:[#allocation8 + $0x180] sm:$0xff]
        %v3289 = vld [vmem:[#allocation8 + $0x188] sm:$0xff]
        %v3290 = vld [vmem:[#allocation8 + $0x190] sm:$0xff]
        %v3291 = vld [vmem:[#allocation8 + $0x198] sm:$0xff]
        %v3292 = vld [vmem:[#allocation8 + $0x1a0] sm:$0xff]
        %v3293 = vld [vmem:[#allocation8 + $0x1a8] sm:$0xff]
        %v3294 = vld [vmem:[#allocation8 + $0x1b0] sm:$0xff]
        %v3295 = vld [vmem:[#allocation8 + $0x1b8] sm:$0xff]
        %v3296 = vld [vmem:[#allocation8 + $0x1c0] sm:$0xff]
        %v3297 = vld [vmem:[#allocation8 + $0x1c8] sm:$0xff]
        %v3298 = vld [vmem:[#allocation8 + $0x1d0] sm:$0xff]
        %v3299 = vld [vmem:[#allocation8 + $0x1d8] sm:$0xff]
        %v3300 = vld [vmem:[#allocation8 + $0x1e0] sm:$0xff]
        %v3301 = vld [vmem:[#allocation8 + $0x1e8] sm:$0xff]
        %v3302 = vld [vmem:[#allocation8 + $0x1f0] sm:$0xff]
        %v3303 = vld [vmem:[#allocation8 + $0x1f8] sm:$0xff]
        %v3304 = vld [vmem:[#allocation8 + $0x200] sm:$0xff]
        %v3305 = vld [vmem:[#allocation8 + $0x208] sm:$0xff]
        %v3306 = vld [vmem:[#allocation8 + $0x210] sm:$0xff]
        %v3307 = vld [vmem:[#allocation8 + $0x218] sm:$0xff]
        %v3308 = vld [vmem:[#allocation8 + $0x220] sm:$0xff]
        %v3309 = vld [vmem:[#allocation8 + $0x228] sm:$0xff]
        %v3310 = vld [vmem:[#allocation8 + $0x230] sm:$0xff]
        %v3311 = vld [vmem:[#allocation8 + $0x238] sm:$0xff]
        %v3312 = vld [vmem:[#allocation8 + $0x240] sm:$0xff]
        %v3313 = vld [vmem:[#allocation8 + $0x248] sm:$0xff]
        %v3314 = vld [vmem:[#allocation8 + $0x250] sm:$0xff]
        %v3315 = vld [vmem:[#allocation8 + $0x258] sm:$0xff]
        %v3316 = vld [vmem:[#allocation8 + $0x260] sm:$0xff]
        %v3317 = vld [vmem:[#allocation8 + $0x268] sm:$0xff]
        %v3318 = vld [vmem:[#allocation8 + $0x270] sm:$0xff]
        %v3319 = vld [vmem:[#allocation8 + $0x278] sm:$0xff]
        %v3320 = vld [vmem:[#allocation8 + $0x280] sm:$0xff]
        %v3321 = vld [vmem:[#allocation8 + $0x288] sm:$0xff]
        %v3322 = vld [vmem:[#allocation8 + $0x290] sm:$0xff]
        %v3323 = vld [vmem:[#allocation8 + $0x298] sm:$0xff]
        %v3324 = vld [vmem:[#allocation8 + $0x2a0] sm:$0xff]
        %v3325 = vld [vmem:[#allocation8 + $0x2a8] sm:$0xff]
        %v3326 = vld [vmem:[#allocation8 + $0x2b0] sm:$0xff]
        %v3327 = vld [vmem:[#allocation8 + $0x2b8] sm:$0xff]
        %v3328 = vld [vmem:[#allocation8 + $0x2c0] sm:$0xff]
        %v3329 = vld [vmem:[#allocation8 + $0x2c8] sm:$0xff]
        %v3330 = vld [vmem:[#allocation8 + $0x2d0] sm:$0xff]
        %v3331 = vld [vmem:[#allocation8 + $0x2d8] sm:$0xff]
        %v3332 = vld [vmem:[#allocation8 + $0x2e0] sm:$0xff]
        %v3333 = vld [vmem:[#allocation8 + $0x2e8] sm:$0xff]
        %v3334 = vld [vmem:[#allocation8 + $0x2f0] sm:$0xff]
        %v3335 = vld [vmem:[#allocation8 + $0x2f8] sm:$0xff]
        %3336 = vmatpush.msra.mxu0 %v3303
        %3337 = vmatpush.msra.mxu0 %v3302
        %3338 = vmatpush.msra.mxu0 %v3301
        %3339 = vmatpush.msra.mxu0 %v3300
        %3340 = vmatpush.msra.mxu0 %v3299
        %3341 = vmatpush.msra.mxu0 %v3298
        %3342 = vmatpush.msra.mxu0 %v3297
        %3343 = vmatpush.msra.mxu0 %v3296
        %3344 = vmatpush.msra.mxu0 %v3295
        %3345 = vmatpush.msra.mxu0 %v3294
        %3346 = vmatpush.msra.mxu0 %v3293
        %3347 = vmatpush.msra.mxu0 %v3292
        %3348 = vmatpush.msra.mxu0 %v3291
        %3349 = vmatpush.msra.mxu0 %v3290
        %3350 = vmatpush.msra.mxu0 %v3289
        %3351 = vmatpush.msra.mxu0 %v3288
        %3352 = vmatmul.f32.gmra.mxu0 %v3192
        %v3353 = vpop.f32.mrf.mxu0
        %v3354 = vadd.f32 0.0, %v3353
        %3355 = vmatmul.f32.gmra.mxu0 %v3195
        %v3356 = vpop.f32.mrf.mxu0
        %v3357 = vadd.f32 0.0, %v3356
        %3358 = vmatmul.f32.gmra.mxu0 %v3198
        %v3359 = vpop.f32.mrf.mxu0
        %v3360 = vadd.f32 0.0, %v3359
        %3361 = vmatmul.f32.gmra.mxu0 %v3201
        %v3362 = vpop.f32.mrf.mxu0
        %v3363 = vadd.f32 0.0, %v3362
        %3364 = vmatmul.f32.gmra.mxu0 %v3204
        %v3365 = vpop.f32.mrf.mxu0
        %v3366 = vadd.f32 0.0, %v3365
        %3367 = vmatmul.f32.gmra.mxu0 %v3207
        %v3368 = vpop.f32.mrf.mxu0
        %v3369 = vadd.f32 0.0, %v3368
        %3370 = vmatmul.f32.gmra.mxu0 %v3210
        %v3371 = vpop.f32.mrf.mxu0
        %v3372 = vadd.f32 0.0, %v3371
        %3373 = vmatmul.f32.gmra.mxu0 %v3213
        %v3374 = vpop.f32.mrf.mxu0
        %v3375 = vadd.f32 0.0, %v3374
        %3376 = vmatmul.f32.gmra.mxu0 %v3216
        %v3377 = vpop.f32.mrf.mxu0
        %v3378 = vadd.f32 0.0, %v3377
        %3379 = vmatmul.f32.gmra.mxu0 %v3219
        %v3380 = vpop.f32.mrf.mxu0
        %v3381 = vadd.f32 0.0, %v3380
        %3382 = vmatmul.f32.gmra.mxu0 %v3222
        %v3383 = vpop.f32.mrf.mxu0
        %v3384 = vadd.f32 0.0, %v3383
        %3385 = vmatmul.f32.gmra.mxu0 %v3225
        %v3386 = vpop.f32.mrf.mxu0
        %v3387 = vadd.f32 0.0, %v3386
        %3388 = vmatmul.f32.gmra.mxu0 %v3228
        %v3389 = vpop.f32.mrf.mxu0
        %v3390 = vadd.f32 0.0, %v3389
        %3391 = vmatmul.f32.gmra.mxu0 %v3231
        %v3392 = vpop.f32.mrf.mxu0
        %v3393 = vadd.f32 0.0, %v3392
        %3394 = vmatmul.f32.gmra.mxu0 %v3234
        %v3395 = vpop.f32.mrf.mxu0
        %v3396 = vadd.f32 0.0, %v3395
        %3397 = vmatmul.f32.gmra.mxu0 %v3237
        %v3398 = vpop.f32.mrf.mxu0
        %v3399 = vadd.f32 0.0, %v3398
        %3400 = vmatmul.f32.gmra.mxu0 %v3240
        %v3401 = vpop.f32.mrf.mxu0
        %v3402 = vadd.f32 0.0, %v3401
        %3403 = vmatmul.f32.gmra.mxu0 %v3243
        %v3404 = vpop.f32.mrf.mxu0
        %v3405 = vadd.f32 0.0, %v3404
        %3406 = vmatmul.f32.gmra.mxu0 %v3246
        %v3407 = vpop.f32.mrf.mxu0
        %v3408 = vadd.f32 0.0, %v3407
        %3409 = vmatmul.f32.gmra.mxu0 %v3249
        %v3410 = vpop.f32.mrf.mxu0
        %v3411 = vadd.f32 0.0, %v3410
        %3412 = vmatmul.f32.gmra.mxu0 %v3252
        %v3413 = vpop.f32.mrf.mxu0
        %v3414 = vadd.f32 0.0, %v3413
        %3415 = vmatmul.f32.gmra.mxu0 %v3255
        %v3416 = vpop.f32.mrf.mxu0
        %v3417 = vadd.f32 0.0, %v3416
        %3418 = vmatmul.f32.gmra.mxu0 %v3258
        %v3419 = vpop.f32.mrf.mxu0
        %v3420 = vadd.f32 0.0, %v3419
        %3421 = vmatmul.f32.gmra.mxu0 %v3261
        %v3422 = vpop.f32.mrf.mxu0
        %v3423 = vadd.f32 0.0, %v3422
        %3424 = vmatmul.f32.gmra.mxu0 %v3264
        %v3425 = vpop.f32.mrf.mxu0
        %v3426 = vadd.f32 0.0, %v3425
        %3427 = vmatmul.f32.gmra.mxu0 %v3267
        %v3428 = vpop.f32.mrf.mxu0
        %v3429 = vadd.f32 0.0, %v3428
        %3430 = vmatmul.f32.gmra.mxu0 %v3270
        %v3431 = vpop.f32.mrf.mxu0
        %v3432 = vadd.f32 0.0, %v3431
        %3433 = vmatmul.f32.gmra.mxu0 %v3273
        %v3434 = vpop.f32.mrf.mxu0
        %v3435 = vadd.f32 0.0, %v3434
        %3436 = vmatmul.f32.gmra.mxu0 %v3276
        %v3437 = vpop.f32.mrf.mxu0
        %v3438 = vadd.f32 0.0, %v3437
        %3439 = vmatmul.f32.gmra.mxu0 %v3279
        %v3440 = vpop.f32.mrf.mxu0
        %v3441 = vadd.f32 0.0, %v3440
        %3442 = vmatmul.f32.gmra.mxu0 %v3282
        %v3443 = vpop.f32.mrf.mxu0
        %v3444 = vadd.f32 0.0, %v3443
        %3445 = vmatmul.f32.gmra.mxu0 %v3285
        %v3446 = vpop.f32.mrf.mxu0
        %v3447 = vadd.f32 0.0, %v3446
        %3448 = vdwg.mxu0
        %3449 = vmatpush.msra.mxu0 %v3319
        %3450 = vmatpush.msra.mxu0 %v3318
        %3451 = vmatpush.msra.mxu0 %v3317
        %3452 = vmatpush.msra.mxu0 %v3316
        %3453 = vmatpush.msra.mxu0 %v3315
        %3454 = vmatpush.msra.mxu0 %v3314
        %3455 = vmatpush.msra.mxu0 %v3313
        %3456 = vmatpush.msra.mxu0 %v3312
        %3457 = vmatpush.msra.mxu0 %v3311
        %3458 = vmatpush.msra.mxu0 %v3310
        %3459 = vmatpush.msra.mxu0 %v3309
        %3460 = vmatpush.msra.mxu0 %v3308
        %3461 = vmatpush.msra.mxu0 %v3307
        %3462 = vmatpush.msra.mxu0 %v3306
        %3463 = vmatpush.msra.mxu0 %v3305
        %3464 = vmatpush.msra.mxu0 %v3304
        %3465 = vmatmul.f32.gmra.mxu0 %v3193
        %v3466 = vpop.f32.mrf.mxu0
        %v3467 = vadd.f32 %v3354, %v3466
        %3468 = vmatmul.f32.gmra.mxu0 %v3196
        %v3469 = vpop.f32.mrf.mxu0
        %v3470 = vadd.f32 %v3357, %v3469
        %3471 = vmatmul.f32.gmra.mxu0 %v3199
        %v3472 = vpop.f32.mrf.mxu0
        %v3473 = vadd.f32 %v3360, %v3472
        %3474 = vmatmul.f32.gmra.mxu0 %v3202
        %v3475 = vpop.f32.mrf.mxu0
        %v3476 = vadd.f32 %v3363, %v3475
        %3477 = vmatmul.f32.gmra.mxu0 %v3205
        %v3478 = vpop.f32.mrf.mxu0
        %v3479 = vadd.f32 %v3366, %v3478
        %3480 = vmatmul.f32.gmra.mxu0 %v3208
        %v3481 = vpop.f32.mrf.mxu0
        %v3482 = vadd.f32 %v3369, %v3481
        %3483 = vmatmul.f32.gmra.mxu0 %v3211
        %v3484 = vpop.f32.mrf.mxu0
        %v3485 = vadd.f32 %v3372, %v3484
        %3486 = vmatmul.f32.gmra.mxu0 %v3214
        %v3487 = vpop.f32.mrf.mxu0
        %v3488 = vadd.f32 %v3375, %v3487
        %3489 = vmatmul.f32.gmra.mxu0 %v3217
        %v3490 = vpop.f32.mrf.mxu0
        %v3491 = vadd.f32 %v3378, %v3490
        %3492 = vmatmul.f32.gmra.mxu0 %v3220
        %v3493 = vpop.f32.mrf.mxu0
        %v3494 = vadd.f32 %v3381, %v3493
        %3495 = vmatmul.f32.gmra.mxu0 %v3223
        %v3496 = vpop.f32.mrf.mxu0
        %v3497 = vadd.f32 %v3384, %v3496
        %3498 = vmatmul.f32.gmra.mxu0 %v3226
        %v3499 = vpop.f32.mrf.mxu0
        %v3500 = vadd.f32 %v3387, %v3499
        %3501 = vmatmul.f32.gmra.mxu0 %v3229
        %v3502 = vpop.f32.mrf.mxu0
        %v3503 = vadd.f32 %v3390, %v3502
        %3504 = vmatmul.f32.gmra.mxu0 %v3232
        %v3505 = vpop.f32.mrf.mxu0
        %v3506 = vadd.f32 %v3393, %v3505
        %3507 = vmatmul.f32.gmra.mxu0 %v3235
        %v3508 = vpop.f32.mrf.mxu0
        %v3509 = vadd.f32 %v3396, %v3508
        %3510 = vmatmul.f32.gmra.mxu0 %v3238
        %v3511 = vpop.f32.mrf.mxu0
        %v3512 = vadd.f32 %v3399, %v3511
        %3513 = vmatmul.f32.gmra.mxu0 %v3241
        %v3514 = vpop.f32.mrf.mxu0
        %v3515 = vadd.f32 %v3402, %v3514
        %3516 = vmatmul.f32.gmra.mxu0 %v3244
        %v3517 = vpop.f32.mrf.mxu0
        %v3518 = vadd.f32 %v3405, %v3517
        %3519 = vmatmul.f32.gmra.mxu0 %v3247
        %v3520 = vpop.f32.mrf.mxu0
        %v3521 = vadd.f32 %v3408, %v3520
        %3522 = vmatmul.f32.gmra.mxu0 %v3250
        %v3523 = vpop.f32.mrf.mxu0
        %v3524 = vadd.f32 %v3411, %v3523
        %3525 = vmatmul.f32.gmra.mxu0 %v3253
        %v3526 = vpop.f32.mrf.mxu0
        %v3527 = vadd.f32 %v3414, %v3526
        %3528 = vmatmul.f32.gmra.mxu0 %v3256
        %v3529 = vpop.f32.mrf.mxu0
        %v3530 = vadd.f32 %v3417, %v3529
        %3531 = vmatmul.f32.gmra.mxu0 %v3259
        %v3532 = vpop.f32.mrf.mxu0
        %v3533 = vadd.f32 %v3420, %v3532
        %3534 = vmatmul.f32.gmra.mxu0 %v3262
        %v3535 = vpop.f32.mrf.mxu0
        %v3536 = vadd.f32 %v3423, %v3535
        %3537 = vmatmul.f32.gmra.mxu0 %v3265
        %v3538 = vpop.f32.mrf.mxu0
        %v3539 = vadd.f32 %v3426, %v3538
        %3540 = vmatmul.f32.gmra.mxu0 %v3268
        %v3541 = vpop.f32.mrf.mxu0
        %v3542 = vadd.f32 %v3429, %v3541
        %3543 = vmatmul.f32.gmra.mxu0 %v3271
        %v3544 = vpop.f32.mrf.mxu0
        %v3545 = vadd.f32 %v3432, %v3544
        %3546 = vmatmul.f32.gmra.mxu0 %v3274
        %v3547 = vpop.f32.mrf.mxu0
        %v3548 = vadd.f32 %v3435, %v3547
        %3549 = vmatmul.f32.gmra.mxu0 %v3277
        %v3550 = vpop.f32.mrf.mxu0
        %v3551 = vadd.f32 %v3438, %v3550
        %3552 = vmatmul.f32.gmra.mxu0 %v3280
        %v3553 = vpop.f32.mrf.mxu0
        %v3554 = vadd.f32 %v3441, %v3553
        %3555 = vmatmul.f32.gmra.mxu0 %v3283
        %v3556 = vpop.f32.mrf.mxu0
        %v3557 = vadd.f32 %v3444, %v3556
        %3558 = vmatmul.f32.gmra.mxu0 %v3286
        %v3559 = vpop.f32.mrf.mxu0
        %v3560 = vadd.f32 %v3447, %v3559
        %3561 = vdwg.mxu0
        %3562 = vmatpush.msra.mxu0 %v3335
        %3563 = vmatpush.msra.mxu0 %v3334
        %3564 = vmatpush.msra.mxu0 %v3333
        %3565 = vmatpush.msra.mxu0 %v3332
        %3566 = vmatpush.msra.mxu0 %v3331
        %3567 = vmatpush.msra.mxu0 %v3330
        %3568 = vmatpush.msra.mxu0 %v3329
        %3569 = vmatpush.msra.mxu0 %v3328
        %3570 = vmatpush.msra.mxu0 %v3327
        %3571 = vmatpush.msra.mxu0 %v3326
        %3572 = vmatpush.msra.mxu0 %v3325
        %3573 = vmatpush.msra.mxu0 %v3324
        %3574 = vmatpush.msra.mxu0 %v3323
        %3575 = vmatpush.msra.mxu0 %v3322
        %3576 = vmatpush.msra.mxu0 %v3321
        %3577 = vmatpush.msra.mxu0 %v3320
        %3578 = vmatmul.f32.gmra.mxu0 %v3194
        %v3579 = vpop.f32.mrf.mxu0
        %v3580 = vadd.f32 %v3467, %v3579
        %3581 = vmatmul.f32.gmra.mxu0 %v3197
        %v3582 = vpop.f32.mrf.mxu0
        %v3583 = vadd.f32 %v3470, %v3582
        %3584 = vmatmul.f32.gmra.mxu0 %v3200
        %v3585 = vpop.f32.mrf.mxu0
        %v3586 = vadd.f32 %v3473, %v3585
        %3587 = vmatmul.f32.gmra.mxu0 %v3203
        %v3588 = vpop.f32.mrf.mxu0
        %v3589 = vadd.f32 %v3476, %v3588
        %3590 = vmatmul.f32.gmra.mxu0 %v3206
        %v3591 = vpop.f32.mrf.mxu0
        %v3592 = vadd.f32 %v3479, %v3591
        %3593 = vmatmul.f32.gmra.mxu0 %v3209
        %v3594 = vpop.f32.mrf.mxu0
        %v3595 = vadd.f32 %v3482, %v3594
        %3596 = vmatmul.f32.gmra.mxu0 %v3212
        %v3597 = vpop.f32.mrf.mxu0
        %v3598 = vadd.f32 %v3485, %v3597
        %3599 = vmatmul.f32.gmra.mxu0 %v3215
        %v3600 = vpop.f32.mrf.mxu0
        %v3601 = vadd.f32 %v3488, %v3600
        %3602 = vmatmul.f32.gmra.mxu0 %v3218
        %v3603 = vpop.f32.mrf.mxu0
        %v3604 = vadd.f32 %v3491, %v3603
        %3605 = vmatmul.f32.gmra.mxu0 %v3221
        %v3606 = vpop.f32.mrf.mxu0
        %v3607 = vadd.f32 %v3494, %v3606
        %3608 = vmatmul.f32.gmra.mxu0 %v3224
        %v3609 = vpop.f32.mrf.mxu0
        %v3610 = vadd.f32 %v3497, %v3609
        %3611 = vmatmul.f32.gmra.mxu0 %v3227
        %v3612 = vpop.f32.mrf.mxu0
        %v3613 = vadd.f32 %v3500, %v3612
        %3614 = vmatmul.f32.gmra.mxu0 %v3230
        %v3615 = vpop.f32.mrf.mxu0
        %v3616 = vadd.f32 %v3503, %v3615
        %3617 = vmatmul.f32.gmra.mxu0 %v3233
        %v3618 = vpop.f32.mrf.mxu0
        %v3619 = vadd.f32 %v3506, %v3618
        %3620 = vmatmul.f32.gmra.mxu0 %v3236
        %v3621 = vpop.f32.mrf.mxu0
        %v3622 = vadd.f32 %v3509, %v3621
        %3623 = vmatmul.f32.gmra.mxu0 %v3239
        %v3624 = vpop.f32.mrf.mxu0
        %v3625 = vadd.f32 %v3512, %v3624
        %3626 = vmatmul.f32.gmra.mxu0 %v3242
        %v3627 = vpop.f32.mrf.mxu0
        %v3628 = vadd.f32 %v3515, %v3627
        %3629 = vmatmul.f32.gmra.mxu0 %v3245
        %v3630 = vpop.f32.mrf.mxu0
        %v3631 = vadd.f32 %v3518, %v3630
        %3632 = vmatmul.f32.gmra.mxu0 %v3248
        %v3633 = vpop.f32.mrf.mxu0
        %v3634 = vadd.f32 %v3521, %v3633
        %3635 = vmatmul.f32.gmra.mxu0 %v3251
        %v3636 = vpop.f32.mrf.mxu0
        %v3637 = vadd.f32 %v3524, %v3636
        %3638 = vmatmul.f32.gmra.mxu0 %v3254
        %v3639 = vpop.f32.mrf.mxu0
        %v3640 = vadd.f32 %v3527, %v3639
        %3641 = vmatmul.f32.gmra.mxu0 %v3257
        %v3642 = vpop.f32.mrf.mxu0
        %v3643 = vadd.f32 %v3530, %v3642
        %3644 = vmatmul.f32.gmra.mxu0 %v3260
        %v3645 = vpop.f32.mrf.mxu0
        %v3646 = vadd.f32 %v3533, %v3645
        %3647 = vmatmul.f32.gmra.mxu0 %v3263
        %v3648 = vpop.f32.mrf.mxu0
        %v3649 = vadd.f32 %v3536, %v3648
        %3650 = vmatmul.f32.gmra.mxu0 %v3266
        %v3651 = vpop.f32.mrf.mxu0
        %v3652 = vadd.f32 %v3539, %v3651
        %3653 = vmatmul.f32.gmra.mxu0 %v3269
        %v3654 = vpop.f32.mrf.mxu0
        %v3655 = vadd.f32 %v3542, %v3654
        %3656 = vmatmul.f32.gmra.mxu0 %v3272
        %v3657 = vpop.f32.mrf.mxu0
        %v3658 = vadd.f32 %v3545, %v3657
        %3659 = vmatmul.f32.gmra.mxu0 %v3275
        %v3660 = vpop.f32.mrf.mxu0
        %v3661 = vadd.f32 %v3548, %v3660
        %3662 = vmatmul.f32.gmra.mxu0 %v3278
        %v3663 = vpop.f32.mrf.mxu0
        %v3664 = vadd.f32 %v3551, %v3663
        %3665 = vmatmul.f32.gmra.mxu0 %v3281
        %v3666 = vpop.f32.mrf.mxu0
        %v3667 = vadd.f32 %v3554, %v3666
        %3668 = vmatmul.f32.gmra.mxu0 %v3284
        %v3669 = vpop.f32.mrf.mxu0
        %v3670 = vadd.f32 %v3557, %v3669
        %3671 = vmatmul.f32.gmra.mxu0 %v3287
        %v3672 = vpop.f32.mrf.mxu0
        %v3673 = vadd.f32 %v3560, %v3672
        %3674 = vdwg.mxu0
        %3675 = vmatpush.msra.mxu0 %v2967
        %3676 = vmatpush.msra.mxu0 %v2966
        %3677 = vmatpush.msra.mxu0 %v2965
        %3678 = vmatpush.msra.mxu0 %v2964
        %3679 = vmatpush.msra.mxu0 %v2963
        %3680 = vmatpush.msra.mxu0 %v2962
        %3681 = vmatpush.msra.mxu0 %v2961
        %3682 = vmatpush.msra.mxu0 %v2960
        %3683 = vmatpush.msra.mxu0 %v2959
        %3684 = vmatpush.msra.mxu0 %v2958
        %3685 = vmatpush.msra.mxu0 %v2957
        %3686 = vmatpush.msra.mxu0 %v2956
        %3687 = vmatpush.msra.mxu0 %v2955
        %3688 = vmatpush.msra.mxu0 %v2954
        %3689 = vmatpush.msra.mxu0 %v2953
        %3690 = vmatpush.msra.mxu0 %v2952
        %3691 = vmatmul.f32.gmra.mxu0 %v2856
        %v3692 = vpop.f32.mrf.mxu0
        %v3693 = vadd.f32 %v3580, %v3692
        %3694 = vmatmul.f32.gmra.mxu0 %v2859
        %v3695 = vpop.f32.mrf.mxu0
        %v3696 = vadd.f32 %v3583, %v3695
        %3697 = vmatmul.f32.gmra.mxu0 %v2862
        %v3698 = vpop.f32.mrf.mxu0
        %v3699 = vadd.f32 %v3586, %v3698
        %3700 = vmatmul.f32.gmra.mxu0 %v2865
        %v3701 = vpop.f32.mrf.mxu0
        %v3702 = vadd.f32 %v3589, %v3701
        %3703 = vmatmul.f32.gmra.mxu0 %v2868
        %v3704 = vpop.f32.mrf.mxu0
        %v3705 = vadd.f32 %v3592, %v3704
        %3706 = vmatmul.f32.gmra.mxu0 %v2871
        %v3707 = vpop.f32.mrf.mxu0
        %v3708 = vadd.f32 %v3595, %v3707
        %3709 = vmatmul.f32.gmra.mxu0 %v2874
        %v3710 = vpop.f32.mrf.mxu0
        %v3711 = vadd.f32 %v3598, %v3710
        %3712 = vmatmul.f32.gmra.mxu0 %v2877
        %v3713 = vpop.f32.mrf.mxu0
        %v3714 = vadd.f32 %v3601, %v3713
        %3715 = vmatmul.f32.gmra.mxu0 %v2880
        %v3716 = vpop.f32.mrf.mxu0
        %v3717 = vadd.f32 %v3604, %v3716
        %3718 = vmatmul.f32.gmra.mxu0 %v2883
        %v3719 = vpop.f32.mrf.mxu0
        %v3720 = vadd.f32 %v3607, %v3719
        %3721 = vmatmul.f32.gmra.mxu0 %v2886
        %v3722 = vpop.f32.mrf.mxu0
        %v3723 = vadd.f32 %v3610, %v3722
        %3724 = vmatmul.f32.gmra.mxu0 %v2889
        %v3725 = vpop.f32.mrf.mxu0
        %v3726 = vadd.f32 %v3613, %v3725
        %3727 = vmatmul.f32.gmra.mxu0 %v2892
        %v3728 = vpop.f32.mrf.mxu0
        %v3729 = vadd.f32 %v3616, %v3728
        %3730 = vmatmul.f32.gmra.mxu0 %v2895
        %v3731 = vpop.f32.mrf.mxu0
        %v3732 = vadd.f32 %v3619, %v3731
        %3733 = vmatmul.f32.gmra.mxu0 %v2898
        %v3734 = vpop.f32.mrf.mxu0
        %v3735 = vadd.f32 %v3622, %v3734
        %3736 = vmatmul.f32.gmra.mxu0 %v2901
        %v3737 = vpop.f32.mrf.mxu0
        %v3738 = vadd.f32 %v3625, %v3737
        %3739 = vmatmul.f32.gmra.mxu0 %v2904
        %v3740 = vpop.f32.mrf.mxu0
        %v3741 = vadd.f32 %v3628, %v3740
        %3742 = vmatmul.f32.gmra.mxu0 %v2907
        %v3743 = vpop.f32.mrf.mxu0
        %v3744 = vadd.f32 %v3631, %v3743
        %3745 = vmatmul.f32.gmra.mxu0 %v2910
        %v3746 = vpop.f32.mrf.mxu0
        %v3747 = vadd.f32 %v3634, %v3746
        %3748 = vmatmul.f32.gmra.mxu0 %v2913
        %v3749 = vpop.f32.mrf.mxu0
        %v3750 = vadd.f32 %v3637, %v3749
        %3751 = vmatmul.f32.gmra.mxu0 %v2916
        %v3752 = vpop.f32.mrf.mxu0
        %v3753 = vadd.f32 %v3640, %v3752
        %3754 = vmatmul.f32.gmra.mxu0 %v2919
        %v3755 = vpop.f32.mrf.mxu0
        %v3756 = vadd.f32 %v3643, %v3755
        %3757 = vmatmul.f32.gmra.mxu0 %v2922
        %v3758 = vpop.f32.mrf.mxu0
        %v3759 = vadd.f32 %v3646, %v3758
        %3760 = vmatmul.f32.gmra.mxu0 %v2925
        %v3761 = vpop.f32.mrf.mxu0
        %v3762 = vadd.f32 %v3649, %v3761
        %3763 = vmatmul.f32.gmra.mxu0 %v2928
        %v3764 = vpop.f32.mrf.mxu0
        %v3765 = vadd.f32 %v3652, %v3764
        %3766 = vmatmul.f32.gmra.mxu0 %v2931
        %v3767 = vpop.f32.mrf.mxu0
        %v3768 = vadd.f32 %v3655, %v3767
        %3769 = vmatmul.f32.gmra.mxu0 %v2934
        %v3770 = vpop.f32.mrf.mxu0
        %v3771 = vadd.f32 %v3658, %v3770
        %3772 = vmatmul.f32.gmra.mxu0 %v2937
        %v3773 = vpop.f32.mrf.mxu0
        %v3774 = vadd.f32 %v3661, %v3773
        %3775 = vmatmul.f32.gmra.mxu0 %v2940
        %v3776 = vpop.f32.mrf.mxu0
        %v3777 = vadd.f32 %v3664, %v3776
        %3778 = vmatmul.f32.gmra.mxu0 %v2943
        %v3779 = vpop.f32.mrf.mxu0
        %v3780 = vadd.f32 %v3667, %v3779
        %3781 = vmatmul.f32.gmra.mxu0 %v2946
        %v3782 = vpop.f32.mrf.mxu0
        %v3783 = vadd.f32 %v3670, %v3782
        %3784 = vmatmul.f32.gmra.mxu0 %v2949
        %v3785 = vpop.f32.mrf.mxu0
        %v3786 = vadd.f32 %v3673, %v3785
        %3787 = vdwg.mxu0
        %3788 = vmatpush.msra.mxu0 %v2983
        %3789 = vmatpush.msra.mxu0 %v2982
        %3790 = vmatpush.msra.mxu0 %v2981
        %3791 = vmatpush.msra.mxu0 %v2980
        %3792 = vmatpush.msra.mxu0 %v2979
        %3793 = vmatpush.msra.mxu0 %v2978
        %3794 = vmatpush.msra.mxu0 %v2977
        %3795 = vmatpush.msra.mxu0 %v2976
        %3796 = vmatpush.msra.mxu0 %v2975
        %3797 = vmatpush.msra.mxu0 %v2974
        %3798 = vmatpush.msra.mxu0 %v2973
        %3799 = vmatpush.msra.mxu0 %v2972
        %3800 = vmatpush.msra.mxu0 %v2971
        %3801 = vmatpush.msra.mxu0 %v2970
        %3802 = vmatpush.msra.mxu0 %v2969
        %3803 = vmatpush.msra.mxu0 %v2968
        %3804 = vmatmul.f32.gmra.mxu0 %v2857
        %v3805 = vpop.f32.mrf.mxu0
        %v3806 = vadd.f32 %v3693, %v3805
        %3807 = vmatmul.f32.gmra.mxu0 %v2860
        %v3808 = vpop.f32.mrf.mxu0
        %v3809 = vadd.f32 %v3696, %v3808
        %3810 = vmatmul.f32.gmra.mxu0 %v2863
        %v3811 = vpop.f32.mrf.mxu0
        %v3812 = vadd.f32 %v3699, %v3811
        %3813 = vmatmul.f32.gmra.mxu0 %v2866
        %v3814 = vpop.f32.mrf.mxu0
        %v3815 = vadd.f32 %v3702, %v3814
        %3816 = vmatmul.f32.gmra.mxu0 %v2869
        %v3817 = vpop.f32.mrf.mxu0
        %v3818 = vadd.f32 %v3705, %v3817
        %3819 = vmatmul.f32.gmra.mxu0 %v2872
        %v3820 = vpop.f32.mrf.mxu0
        %v3821 = vadd.f32 %v3708, %v3820
        %3822 = vmatmul.f32.gmra.mxu0 %v2875
        %v3823 = vpop.f32.mrf.mxu0
        %v3824 = vadd.f32 %v3711, %v3823
        %3825 = vmatmul.f32.gmra.mxu0 %v2878
        %v3826 = vpop.f32.mrf.mxu0
        %v3827 = vadd.f32 %v3714, %v3826
        %3828 = vmatmul.f32.gmra.mxu0 %v2881
        %v3829 = vpop.f32.mrf.mxu0
        %v3830 = vadd.f32 %v3717, %v3829
        %3831 = vmatmul.f32.gmra.mxu0 %v2884
        %v3832 = vpop.f32.mrf.mxu0
        %v3833 = vadd.f32 %v3720, %v3832
        %3834 = vmatmul.f32.gmra.mxu0 %v2887
        %v3835 = vpop.f32.mrf.mxu0
        %v3836 = vadd.f32 %v3723, %v3835
        %3837 = vmatmul.f32.gmra.mxu0 %v2890
        %v3838 = vpop.f32.mrf.mxu0
        %v3839 = vadd.f32 %v3726, %v3838
        %3840 = vmatmul.f32.gmra.mxu0 %v2893
        %v3841 = vpop.f32.mrf.mxu0
        %v3842 = vadd.f32 %v3729, %v3841
        %3843 = vmatmul.f32.gmra.mxu0 %v2896
        %v3844 = vpop.f32.mrf.mxu0
        %v3845 = vadd.f32 %v3732, %v3844
        %3846 = vmatmul.f32.gmra.mxu0 %v2899
        %v3847 = vpop.f32.mrf.mxu0
        %v3848 = vadd.f32 %v3735, %v3847
        %3849 = vmatmul.f32.gmra.mxu0 %v2902
        %v3850 = vpop.f32.mrf.mxu0
        %v3851 = vadd.f32 %v3738, %v3850
        %3852 = vmatmul.f32.gmra.mxu0 %v2905
        %v3853 = vpop.f32.mrf.mxu0
        %v3854 = vadd.f32 %v3741, %v3853
        %3855 = vmatmul.f32.gmra.mxu0 %v2908
        %v3856 = vpop.f32.mrf.mxu0
        %v3857 = vadd.f32 %v3744, %v3856
        %3858 = vmatmul.f32.gmra.mxu0 %v2911
        %v3859 = vpop.f32.mrf.mxu0
        %v3860 = vadd.f32 %v3747, %v3859
        %3861 = vmatmul.f32.gmra.mxu0 %v2914
        %v3862 = vpop.f32.mrf.mxu0
        %v3863 = vadd.f32 %v3750, %v3862
        %3864 = vmatmul.f32.gmra.mxu0 %v2917
        %v3865 = vpop.f32.mrf.mxu0
        %v3866 = vadd.f32 %v3753, %v3865
        %3867 = vmatmul.f32.gmra.mxu0 %v2920
        %v3868 = vpop.f32.mrf.mxu0
        %v3869 = vadd.f32 %v3756, %v3868
        %3870 = vmatmul.f32.gmra.mxu0 %v2923
        %v3871 = vpop.f32.mrf.mxu0
        %v3872 = vadd.f32 %v3759, %v3871
        %3873 = vmatmul.f32.gmra.mxu0 %v2926
        %v3874 = vpop.f32.mrf.mxu0
        %v3875 = vadd.f32 %v3762, %v3874
        %3876 = vmatmul.f32.gmra.mxu0 %v2929
        %v3877 = vpop.f32.mrf.mxu0
        %v3878 = vadd.f32 %v3765, %v3877
        %3879 = vmatmul.f32.gmra.mxu0 %v2932
        %v3880 = vpop.f32.mrf.mxu0
        %v3881 = vadd.f32 %v3768, %v3880
        %3882 = vmatmul.f32.gmra.mxu0 %v2935
        %v3883 = vpop.f32.mrf.mxu0
        %v3884 = vadd.f32 %v3771, %v3883
        %3885 = vmatmul.f32.gmra.mxu0 %v2938
        %v3886 = vpop.f32.mrf.mxu0
        %v3887 = vadd.f32 %v3774, %v3886
        %3888 = vmatmul.f32.gmra.mxu0 %v2941
        %v3889 = vpop.f32.mrf.mxu0
        %v3890 = vadd.f32 %v3777, %v3889
        %3891 = vmatmul.f32.gmra.mxu0 %v2944
        %v3892 = vpop.f32.mrf.mxu0
        %v3893 = vadd.f32 %v3780, %v3892
        %3894 = vmatmul.f32.gmra.mxu0 %v2947
        %v3895 = vpop.f32.mrf.mxu0
        %v3896 = vadd.f32 %v3783, %v3895
        %3897 = vmatmul.f32.gmra.mxu0 %v2950
        %v3898 = vpop.f32.mrf.mxu0
        %v3899 = vadd.f32 %v3786, %v3898
        %3900 = vdwg.mxu0
        %3901 = vmatpush.msra.mxu0 %v2999
        %3902 = vmatpush.msra.mxu0 %v2998
        %3903 = vmatpush.msra.mxu0 %v2997
        %3904 = vmatpush.msra.mxu0 %v2996
        %3905 = vmatpush.msra.mxu0 %v2995
        %3906 = vmatpush.msra.mxu0 %v2994
        %3907 = vmatpush.msra.mxu0 %v2993
        %3908 = vmatpush.msra.mxu0 %v2992
        %3909 = vmatpush.msra.mxu0 %v2991
        %3910 = vmatpush.msra.mxu0 %v2990
        %3911 = vmatpush.msra.mxu0 %v2989
        %3912 = vmatpush.msra.mxu0 %v2988
        %3913 = vmatpush.msra.mxu0 %v2987
        %3914 = vmatpush.msra.mxu0 %v2986
        %3915 = vmatpush.msra.mxu0 %v2985
        %3916 = vmatpush.msra.mxu0 %v2984
        %3917 = vmatmul.f32.gmra.mxu0 %v2858
        %v3918 = vpop.f32.mrf.mxu0
        %v3919 = vadd.f32 %v3806, %v3918
        %3920 = vmatmul.f32.gmra.mxu0 %v2861
        %v3921 = vpop.f32.mrf.mxu0
        %v3922 = vadd.f32 %v3809, %v3921
        %3923 = vmatmul.f32.gmra.mxu0 %v2864
        %v3924 = vpop.f32.mrf.mxu0
        %v3925 = vadd.f32 %v3812, %v3924
        %3926 = vmatmul.f32.gmra.mxu0 %v2867
        %v3927 = vpop.f32.mrf.mxu0
        %v3928 = vadd.f32 %v3815, %v3927
        %3929 = vmatmul.f32.gmra.mxu0 %v2870
        %v3930 = vpop.f32.mrf.mxu0
        %v3931 = vadd.f32 %v3818, %v3930
        %3932 = vmatmul.f32.gmra.mxu0 %v2873
        %v3933 = vpop.f32.mrf.mxu0
        %v3934 = vadd.f32 %v3821, %v3933
        %3935 = vmatmul.f32.gmra.mxu0 %v2876
        %v3936 = vpop.f32.mrf.mxu0
        %v3937 = vadd.f32 %v3824, %v3936
        %3938 = vmatmul.f32.gmra.mxu0 %v2879
        %v3939 = vpop.f32.mrf.mxu0
        %v3940 = vadd.f32 %v3827, %v3939
        %3941 = vmatmul.f32.gmra.mxu0 %v2882
        %v3942 = vpop.f32.mrf.mxu0
        %v3943 = vadd.f32 %v3830, %v3942
        %3944 = vmatmul.f32.gmra.mxu0 %v2885
        %v3945 = vpop.f32.mrf.mxu0
        %v3946 = vadd.f32 %v3833, %v3945
        %3947 = vmatmul.f32.gmra.mxu0 %v2888
        %v3948 = vpop.f32.mrf.mxu0
        %v3949 = vadd.f32 %v3836, %v3948
        %3950 = vmatmul.f32.gmra.mxu0 %v2891
        %v3951 = vpop.f32.mrf.mxu0
        %v3952 = vadd.f32 %v3839, %v3951
        %3953 = vmatmul.f32.gmra.mxu0 %v2894
        %v3954 = vpop.f32.mrf.mxu0
        %v3955 = vadd.f32 %v3842, %v3954
        %3956 = vmatmul.f32.gmra.mxu0 %v2897
        %v3957 = vpop.f32.mrf.mxu0
        %v3958 = vadd.f32 %v3845, %v3957
        %3959 = vmatmul.f32.gmra.mxu0 %v2900
        %v3960 = vpop.f32.mrf.mxu0
        %v3961 = vadd.f32 %v3848, %v3960
        %3962 = vmatmul.f32.gmra.mxu0 %v2903
        %v3963 = vpop.f32.mrf.mxu0
        %v3964 = vadd.f32 %v3851, %v3963
        %3965 = vmatmul.f32.gmra.mxu0 %v2906
        %v3966 = vpop.f32.mrf.mxu0
        %v3967 = vadd.f32 %v3854, %v3966
        %3968 = vmatmul.f32.gmra.mxu0 %v2909
        %v3969 = vpop.f32.mrf.mxu0
        %v3970 = vadd.f32 %v3857, %v3969
        %3971 = vmatmul.f32.gmra.mxu0 %v2912
        %v3972 = vpop.f32.mrf.mxu0
        %v3973 = vadd.f32 %v3860, %v3972
        %3974 = vmatmul.f32.gmra.mxu0 %v2915
        %v3975 = vpop.f32.mrf.mxu0
        %v3976 = vadd.f32 %v3863, %v3975
        %3977 = vmatmul.f32.gmra.mxu0 %v2918
        %v3978 = vpop.f32.mrf.mxu0
        %v3979 = vadd.f32 %v3866, %v3978
        %3980 = vmatmul.f32.gmra.mxu0 %v2921
        %v3981 = vpop.f32.mrf.mxu0
        %v3982 = vadd.f32 %v3869, %v3981
        %3983 = vmatmul.f32.gmra.mxu0 %v2924
        %v3984 = vpop.f32.mrf.mxu0
        %v3985 = vadd.f32 %v3872, %v3984
        %3986 = vmatmul.f32.gmra.mxu0 %v2927
        %v3987 = vpop.f32.mrf.mxu0
        %v3988 = vadd.f32 %v3875, %v3987
        %3989 = vmatmul.f32.gmra.mxu0 %v2930
        %v3990 = vpop.f32.mrf.mxu0
        %v3991 = vadd.f32 %v3878, %v3990
        %3992 = vmatmul.f32.gmra.mxu0 %v2933
        %v3993 = vpop.f32.mrf.mxu0
        %v3994 = vadd.f32 %v3881, %v3993
        %3995 = vmatmul.f32.gmra.mxu0 %v2936
        %v3996 = vpop.f32.mrf.mxu0
        %v3997 = vadd.f32 %v3884, %v3996
        %3998 = vmatmul.f32.gmra.mxu0 %v2939
        %v3999 = vpop.f32.mrf.mxu0
        %v4000 = vadd.f32 %v3887, %v3999
        %4001 = vmatmul.f32.gmra.mxu0 %v2942
        %v4002 = vpop.f32.mrf.mxu0
        %v4003 = vadd.f32 %v3890, %v4002
        %4004 = vmatmul.f32.gmra.mxu0 %v2945
        %v4005 = vpop.f32.mrf.mxu0
        %v4006 = vadd.f32 %v3893, %v4005
        %4007 = vmatmul.f32.gmra.mxu0 %v2948
        %v4008 = vpop.f32.mrf.mxu0
        %v4009 = vadd.f32 %v3896, %v4008
        %4010 = vmatmul.f32.gmra.mxu0 %v2951
        %v4011 = vpop.f32.mrf.mxu0
        %v4012 = vadd.f32 %v3899, %v4011
        %4013 = vdwg.mxu0
        %s4014 = scalar_lea.vmem [#allocation3], 64
        %v4015 = vld [vmem:[%s4014 + $0x7] sm:$0xff]
        %v4016 = vld [vmem:[%s4014 + $0xf] sm:$0xff]
        %v4017 = vld [vmem:[%s4014 + $0x27] sm:$0xff]
        %v4018 = vld [vmem:[%s4014 + $0x2f] sm:$0xff]
        %v4019 = vld [vmem:[%s4014 + $0x47] sm:$0xff]
        %v4020 = vld [vmem:[%s4014 + $0x4f] sm:$0xff]
        %v4021 = vld [vmem:[%s4014 + $0x67] sm:$0xff]
        %v4022 = vld [vmem:[%s4014 + $0x6f] sm:$0xff]
        %v4023 = vld [vmem:[%s4014 + $0x87] sm:$0xff]
        %v4024 = vld [vmem:[%s4014 + $0x8f] sm:$0xff]
        %v4025 = vld [vmem:[%s4014 + $0xa7] sm:$0xff]
        %v4026 = vld [vmem:[%s4014 + $0xaf] sm:$0xff]
        %v4027 = vld [vmem:[%s4014 + $0xc7] sm:$0xff]
        %v4028 = vld [vmem:[%s4014 + $0xcf] sm:$0xff]
        %v4029 = vld [vmem:[%s4014 + $0xe7] sm:$0xff]
        %v4030 = vld [vmem:[%s4014 + $0xef] sm:$0xff]
        %v4031 = vld [vmem:[%s4014 + $0x107] sm:$0xff]
        %v4032 = vld [vmem:[%s4014 + $0x10f] sm:$0xff]
        %v4033 = vld [vmem:[%s4014 + $0x127] sm:$0xff]
        %v4034 = vld [vmem:[%s4014 + $0x12f] sm:$0xff]
        %v4035 = vld [vmem:[%s4014 + $0x147] sm:$0xff]
        %v4036 = vld [vmem:[%s4014 + $0x14f] sm:$0xff]
        %v4037 = vld [vmem:[%s4014 + $0x167] sm:$0xff]
        %v4038 = vld [vmem:[%s4014 + $0x16f] sm:$0xff]
        %v4039 = vld [vmem:[%s4014 + $0x187] sm:$0xff]
        %v4040 = vld [vmem:[%s4014 + $0x18f] sm:$0xff]
        %v4041 = vld [vmem:[%s4014 + $0x1a7] sm:$0xff]
        %v4042 = vld [vmem:[%s4014 + $0x1af] sm:$0xff]
        %v4043 = vld [vmem:[%s4014 + $0x1c7] sm:$0xff]
        %v4044 = vld [vmem:[%s4014 + $0x1cf] sm:$0xff]
        %v4045 = vld [vmem:[%s4014 + $0x1e7] sm:$0xff]
        %v4046 = vld [vmem:[%s4014 + $0x1ef] sm:$0xff]
        %4047 = vst [vmem:[#allocation4] sm:$0xff] %v4015
        %4048 = vst [vmem:[#allocation4 + $0x18] sm:$0xff] %v4016
        %4049 = vst [vmem:[#allocation4 + $0x30] sm:$0xff] %v4017
        %4050 = vst [vmem:[#allocation4 + $0x48] sm:$0xff] %v4018
        %4051 = vst [vmem:[#allocation4 + $0x60] sm:$0xff] %v4019
        %4052 = vst [vmem:[#allocation4 + $0x78] sm:$0xff] %v4020
        %4053 = vst [vmem:[#allocation4 + $0x90] sm:$0xff] %v4021
        %4054 = vst [vmem:[#allocation4 + $0xa8] sm:$0xff] %v4022
        %4055 = vst [vmem:[#allocation4 + $0xc0] sm:$0xff] %v4023
        %4056 = vst [vmem:[#allocation4 + $0xd8] sm:$0xff] %v4024
        %4057 = vst [vmem:[#allocation4 + $0xf0] sm:$0xff] %v4025
        %4058 = vst [vmem:[#allocation4 + $0x108] sm:$0xff] %v4026
        %4059 = vst [vmem:[#allocation4 + $0x120] sm:$0xff] %v4027
        %4060 = vst [vmem:[#allocation4 + $0x138] sm:$0xff] %v4028
        %4061 = vst [vmem:[#allocation4 + $0x150] sm:$0xff] %v4029
        %4062 = vst [vmem:[#allocation4 + $0x168] sm:$0xff] %v4030
        %4063 = vst [vmem:[#allocation4 + $0x180] sm:$0xff] %v4031
        %4064 = vst [vmem:[#allocation4 + $0x198] sm:$0xff] %v4032
        %4065 = vst [vmem:[#allocation4 + $0x1b0] sm:$0xff] %v4033
        %4066 = vst [vmem:[#allocation4 + $0x1c8] sm:$0xff] %v4034
        %4067 = vst [vmem:[#allocation4 + $0x1e0] sm:$0xff] %v4035
        %4068 = vst [vmem:[#allocation4 + $0x1f8] sm:$0xff] %v4036
        %4069 = vst [vmem:[#allocation4 + $0x210] sm:$0xff] %v4037
        %4070 = vst [vmem:[#allocation4 + $0x228] sm:$0xff] %v4038
        %4071 = vst [vmem:[#allocation4 + $0x240] sm:$0xff] %v4039
        %4072 = vst [vmem:[#allocation4 + $0x258] sm:$0xff] %v4040
        %4073 = vst [vmem:[#allocation4 + $0x270] sm:$0xff] %v4041
        %4074 = vst [vmem:[#allocation4 + $0x288] sm:$0xff] %v4042
        %4075 = vst [vmem:[#allocation4 + $0x2a0] sm:$0xff] %v4043
        %4076 = vst [vmem:[#allocation4 + $0x2b8] sm:$0xff] %v4044
        %4077 = vst [vmem:[#allocation4 + $0x2d0] sm:$0xff] %v4045
        %4078 = vst [vmem:[#allocation4 + $0x2e8] sm:$0xff] %v4046
        %v4079 = vld [vmem:[%s4014 + $0x8] sm:$0xff]
        %v4080 = vld [vmem:[%s4014 + $0x10] sm:$0xff]
        %v4081 = vld [vmem:[%s4014 + $0x28] sm:$0xff]
        %v4082 = vld [vmem:[%s4014 + $0x30] sm:$0xff]
        %v4083 = vld [vmem:[%s4014 + $0x48] sm:$0xff]
        %v4084 = vld [vmem:[%s4014 + $0x50] sm:$0xff]
        %v4085 = vld [vmem:[%s4014 + $0x68] sm:$0xff]
        %v4086 = vld [vmem:[%s4014 + $0x70] sm:$0xff]
        %v4087 = vld [vmem:[%s4014 + $0x88] sm:$0xff]
        %v4088 = vld [vmem:[%s4014 + $0x90] sm:$0xff]
        %v4089 = vld [vmem:[%s4014 + $0xa8] sm:$0xff]
        %v4090 = vld [vmem:[%s4014 + $0xb0] sm:$0xff]
        %v4091 = vld [vmem:[%s4014 + $0xc8] sm:$0xff]
        %v4092 = vld [vmem:[%s4014 + $0xd0] sm:$0xff]
        %v4093 = vld [vmem:[%s4014 + $0xe8] sm:$0xff]
        %v4094 = vld [vmem:[%s4014 + $0xf0] sm:$0xff]
        %v4095 = vld [vmem:[%s4014 + $0x108] sm:$0xff]
        %v4096 = vld [vmem:[%s4014 + $0x110] sm:$0xff]
        %v4097 = vld [vmem:[%s4014 + $0x128] sm:$0xff]
        %v4098 = vld [vmem:[%s4014 + $0x130] sm:$0xff]
        %v4099 = vld [vmem:[%s4014 + $0x148] sm:$0xff]
        %v4100 = vld [vmem:[%s4014 + $0x150] sm:$0xff]
        %v4101 = vld [vmem:[%s4014 + $0x168] sm:$0xff]
        %v4102 = vld [vmem:[%s4014 + $0x170] sm:$0xff]
        %v4103 = vld [vmem:[%s4014 + $0x188] sm:$0xff]
        %v4104 = vld [vmem:[%s4014 + $0x190] sm:$0xff]
        %v4105 = vld [vmem:[%s4014 + $0x1a8] sm:$0xff]
        %v4106 = vld [vmem:[%s4014 + $0x1b0] sm:$0xff]
        %v4107 = vld [vmem:[%s4014 + $0x1c8] sm:$0xff]
        %v4108 = vld [vmem:[%s4014 + $0x1d0] sm:$0xff]
        %v4109 = vld [vmem:[%s4014 + $0x1e8] sm:$0xff]
        %v4110 = vld [vmem:[%s4014 + $0x1f0] sm:$0xff]
        %4111 = vst [vmem:[#allocation4 + $0x8] sm:$0xff] %v4079
        %4112 = vst [vmem:[#allocation4 + $0x20] sm:$0xff] %v4080
        %4113 = vst [vmem:[#allocation4 + $0x38] sm:$0xff] %v4081
        %4114 = vst [vmem:[#allocation4 + $0x50] sm:$0xff] %v4082
        %4115 = vst [vmem:[#allocation4 + $0x68] sm:$0xff] %v4083
        %4116 = vst [vmem:[#allocation4 + $0x80] sm:$0xff] %v4084
        %4117 = vst [vmem:[#allocation4 + $0x98] sm:$0xff] %v4085
        %4118 = vst [vmem:[#allocation4 + $0xb0] sm:$0xff] %v4086
        %4119 = vst [vmem:[#allocation4 + $0xc8] sm:$0xff] %v4087
        %4120 = vst [vmem:[#allocation4 + $0xe0] sm:$0xff] %v4088
        %4121 = vst [vmem:[#allocation4 + $0xf8] sm:$0xff] %v4089
        %4122 = vst [vmem:[#allocation4 + $0x110] sm:$0xff] %v4090
        %4123 = vst [vmem:[#allocation4 + $0x128] sm:$0xff] %v4091
        %4124 = vst [vmem:[#allocation4 + $0x140] sm:$0xff] %v4092
        %4125 = vst [vmem:[#allocation4 + $0x158] sm:$0xff] %v4093
        %4126 = vst [vmem:[#allocation4 + $0x170] sm:$0xff] %v4094
        %4127 = vst [vmem:[#allocation4 + $0x188] sm:$0xff] %v4095
        %4128 = vst [vmem:[#allocation4 + $0x1a0] sm:$0xff] %v4096
        %4129 = vst [vmem:[#allocation4 + $0x1b8] sm:$0xff] %v4097
        %4130 = vst [vmem:[#allocation4 + $0x1d0] sm:$0xff] %v4098
        %4131 = vst [vmem:[#allocation4 + $0x1e8] sm:$0xff] %v4099
        %4132 = vst [vmem:[#allocation4 + $0x200] sm:$0xff] %v4100
        %4133 = vst [vmem:[#allocation4 + $0x218] sm:$0xff] %v4101
        %4134 = vst [vmem:[#allocation4 + $0x230] sm:$0xff] %v4102
        %4135 = vst [vmem:[#allocation4 + $0x248] sm:$0xff] %v4103
        %4136 = vst [vmem:[#allocation4 + $0x260] sm:$0xff] %v4104
        %4137 = vst [vmem:[#allocation4 + $0x278] sm:$0xff] %v4105
        %4138 = vst [vmem:[#allocation4 + $0x290] sm:$0xff] %v4106
        %4139 = vst [vmem:[#allocation4 + $0x2a8] sm:$0xff] %v4107
        %4140 = vst [vmem:[#allocation4 + $0x2c0] sm:$0xff] %v4108
        %4141 = vst [vmem:[#allocation4 + $0x2d8] sm:$0xff] %v4109
        %4142 = vst [vmem:[#allocation4 + $0x2f0] sm:$0xff] %v4110
        %v4143 = vld [vmem:[%s4014 + $0x9] sm:$0xff]
        %v4144 = vld [vmem:[%s4014 + $0x11] sm:$0xff]
        %v4145 = vld [vmem:[%s4014 + $0x29] sm:$0xff]
        %v4146 = vld [vmem:[%s4014 + $0x31] sm:$0xff]
        %v4147 = vld [vmem:[%s4014 + $0x49] sm:$0xff]
        %v4148 = vld [vmem:[%s4014 + $0x51] sm:$0xff]
        %v4149 = vld [vmem:[%s4014 + $0x69] sm:$0xff]
        %v4150 = vld [vmem:[%s4014 + $0x71] sm:$0xff]
        %v4151 = vld [vmem:[%s4014 + $0x89] sm:$0xff]
        %v4152 = vld [vmem:[%s4014 + $0x91] sm:$0xff]
        %v4153 = vld [vmem:[%s4014 + $0xa9] sm:$0xff]
        %v4154 = vld [vmem:[%s4014 + $0xb1] sm:$0xff]
        %v4155 = vld [vmem:[%s4014 + $0xc9] sm:$0xff]
        %v4156 = vld [vmem:[%s4014 + $0xd1] sm:$0xff]
        %v4157 = vld [vmem:[%s4014 + $0xe9] sm:$0xff]
        %v4158 = vld [vmem:[%s4014 + $0xf1] sm:$0xff]
        %v4159 = vld [vmem:[%s4014 + $0x109] sm:$0xff]
        %v4160 = vld [vmem:[%s4014 + $0x111] sm:$0xff]
        %v4161 = vld [vmem:[%s4014 + $0x129] sm:$0xff]
        %v4162 = vld [vmem:[%s4014 + $0x131] sm:$0xff]
        %v4163 = vld [vmem:[%s4014 + $0x149] sm:$0xff]
        %v4164 = vld [vmem:[%s4014 + $0x151] sm:$0xff]
        %v4165 = vld [vmem:[%s4014 + $0x169] sm:$0xff]
        %v4166 = vld [vmem:[%s4014 + $0x171] sm:$0xff]
        %v4167 = vld [vmem:[%s4014 + $0x189] sm:$0xff]
        %v4168 = vld [vmem:[%s4014 + $0x191] sm:$0xff]
        %v4169 = vld [vmem:[%s4014 + $0x1a9] sm:$0xff]
        %v4170 = vld [vmem:[%s4014 + $0x1b1] sm:$0xff]
        %v4171 = vld [vmem:[%s4014 + $0x1c9] sm:$0xff]
        %v4172 = vld [vmem:[%s4014 + $0x1d1] sm:$0xff]
        %v4173 = vld [vmem:[%s4014 + $0x1e9] sm:$0xff]
        %v4174 = vld [vmem:[%s4014 + $0x1f1] sm:$0xff]
        %4175 = vst [vmem:[#allocation4 + $0x10] sm:$0xff] %v4143
        %4176 = vst [vmem:[#allocation4 + $0x28] sm:$0xff] %v4144
        %4177 = vst [vmem:[#allocation4 + $0x40] sm:$0xff] %v4145
        %4178 = vst [vmem:[#allocation4 + $0x58] sm:$0xff] %v4146
        %4179 = vst [vmem:[#allocation4 + $0x70] sm:$0xff] %v4147
        %4180 = vst [vmem:[#allocation4 + $0x88] sm:$0xff] %v4148
        %4181 = vst [vmem:[#allocation4 + $0xa0] sm:$0xff] %v4149
        %4182 = vst [vmem:[#allocation4 + $0xb8] sm:$0xff] %v4150
        %4183 = vst [vmem:[#allocation4 + $0xd0] sm:$0xff] %v4151
        %4184 = vst [vmem:[#allocation4 + $0xe8] sm:$0xff] %v4152
        %4185 = vst [vmem:[#allocation4 + $0x100] sm:$0xff] %v4153
        %4186 = vst [vmem:[#allocation4 + $0x118] sm:$0xff] %v4154
        %4187 = vst [vmem:[#allocation4 + $0x130] sm:$0xff] %v4155
        %4188 = vst [vmem:[#allocation4 + $0x148] sm:$0xff] %v4156
        %4189 = vst [vmem:[#allocation4 + $0x160] sm:$0xff] %v4157
        %4190 = vst [vmem:[#allocation4 + $0x178] sm:$0xff] %v4158
        %4191 = vst [vmem:[#allocation4 + $0x190] sm:$0xff] %v4159
        %4192 = vst [vmem:[#allocation4 + $0x1a8] sm:$0xff] %v4160
        %4193 = vst [vmem:[#allocation4 + $0x1c0] sm:$0xff] %v4161
        %4194 = vst [vmem:[#allocation4 + $0x1d8] sm:$0xff] %v4162
        %4195 = vst [vmem:[#allocation4 + $0x1f0] sm:$0xff] %v4163
        %4196 = vst [vmem:[#allocation4 + $0x208] sm:$0xff] %v4164
        %4197 = vst [vmem:[#allocation4 + $0x220] sm:$0xff] %v4165
        %4198 = vst [vmem:[#allocation4 + $0x238] sm:$0xff] %v4166
        %4199 = vst [vmem:[#allocation4 + $0x250] sm:$0xff] %v4167
        %4200 = vst [vmem:[#allocation4 + $0x268] sm:$0xff] %v4168
        %4201 = vst [vmem:[#allocation4 + $0x280] sm:$0xff] %v4169
        %4202 = vst [vmem:[#allocation4 + $0x298] sm:$0xff] %v4170
        %4203 = vst [vmem:[#allocation4 + $0x2b0] sm:$0xff] %v4171
        %4204 = vst [vmem:[#allocation4 + $0x2c8] sm:$0xff] %v4172
        %4205 = vst [vmem:[#allocation4 + $0x2e0] sm:$0xff] %v4173
        %4206 = vst [vmem:[#allocation4 + $0x2f8] sm:$0xff] %v4174
        %v4207 = vld [vmem:[#allocation4] sm:$0xff]
        %v4208 = vld [vmem:[#allocation4 + $0x8] sm:$0xff]
        %v4209 = vld [vmem:[#allocation4 + $0x10] sm:$0xff]
        %v4210 = vld [vmem:[#allocation4 + $0x18] sm:$0xff]
        %v4211 = vld [vmem:[#allocation4 + $0x20] sm:$0xff]
        %v4212 = vld [vmem:[#allocation4 + $0x28] sm:$0xff]
        %v4213 = vld [vmem:[#allocation4 + $0x30] sm:$0xff]
        %v4214 = vld [vmem:[#allocation4 + $0x38] sm:$0xff]
        %v4215 = vld [vmem:[#allocation4 + $0x40] sm:$0xff]
        %v4216 = vld [vmem:[#allocation4 + $0x48] sm:$0xff]
        %v4217 = vld [vmem:[#allocation4 + $0x50] sm:$0xff]
        %v4218 = vld [vmem:[#allocation4 + $0x58] sm:$0xff]
        %v4219 = vld [vmem:[#allocation4 + $0x60] sm:$0xff]
        %v4220 = vld [vmem:[#allocation4 + $0x68] sm:$0xff]
        %v4221 = vld [vmem:[#allocation4 + $0x70] sm:$0xff]
        %v4222 = vld [vmem:[#allocation4 + $0x78] sm:$0xff]
        %v4223 = vld [vmem:[#allocation4 + $0x80] sm:$0xff]
        %v4224 = vld [vmem:[#allocation4 + $0x88] sm:$0xff]
        %v4225 = vld [vmem:[#allocation4 + $0x90] sm:$0xff]
        %v4226 = vld [vmem:[#allocation4 + $0x98] sm:$0xff]
        %v4227 = vld [vmem:[#allocation4 + $0xa0] sm:$0xff]
        %v4228 = vld [vmem:[#allocation4 + $0xa8] sm:$0xff]
        %v4229 = vld [vmem:[#allocation4 + $0xb0] sm:$0xff]
        %v4230 = vld [vmem:[#allocation4 + $0xb8] sm:$0xff]
        %v4231 = vld [vmem:[#allocation4 + $0xc0] sm:$0xff]
        %v4232 = vld [vmem:[#allocation4 + $0xc8] sm:$0xff]
        %v4233 = vld [vmem:[#allocation4 + $0xd0] sm:$0xff]
        %v4234 = vld [vmem:[#allocation4 + $0xd8] sm:$0xff]
        %v4235 = vld [vmem:[#allocation4 + $0xe0] sm:$0xff]
        %v4236 = vld [vmem:[#allocation4 + $0xe8] sm:$0xff]
        %v4237 = vld [vmem:[#allocation4 + $0xf0] sm:$0xff]
        %v4238 = vld [vmem:[#allocation4 + $0xf8] sm:$0xff]
        %v4239 = vld [vmem:[#allocation4 + $0x100] sm:$0xff]
        %v4240 = vld [vmem:[#allocation4 + $0x108] sm:$0xff]
        %v4241 = vld [vmem:[#allocation4 + $0x110] sm:$0xff]
        %v4242 = vld [vmem:[#allocation4 + $0x118] sm:$0xff]
        %v4243 = vld [vmem:[#allocation4 + $0x120] sm:$0xff]
        %v4244 = vld [vmem:[#allocation4 + $0x128] sm:$0xff]
        %v4245 = vld [vmem:[#allocation4 + $0x130] sm:$0xff]
        %v4246 = vld [vmem:[#allocation4 + $0x138] sm:$0xff]
        %v4247 = vld [vmem:[#allocation4 + $0x140] sm:$0xff]
        %v4248 = vld [vmem:[#allocation4 + $0x148] sm:$0xff]
        %v4249 = vld [vmem:[#allocation4 + $0x150] sm:$0xff]
        %v4250 = vld [vmem:[#allocation4 + $0x158] sm:$0xff]
        %v4251 = vld [vmem:[#allocation4 + $0x160] sm:$0xff]
        %v4252 = vld [vmem:[#allocation4 + $0x168] sm:$0xff]
        %v4253 = vld [vmem:[#allocation4 + $0x170] sm:$0xff]
        %v4254 = vld [vmem:[#allocation4 + $0x178] sm:$0xff]
        %v4255 = vld [vmem:[#allocation4 + $0x180] sm:$0xff]
        %v4256 = vld [vmem:[#allocation4 + $0x188] sm:$0xff]
        %v4257 = vld [vmem:[#allocation4 + $0x190] sm:$0xff]
        %v4258 = vld [vmem:[#allocation4 + $0x198] sm:$0xff]
        %v4259 = vld [vmem:[#allocation4 + $0x1a0] sm:$0xff]
        %v4260 = vld [vmem:[#allocation4 + $0x1a8] sm:$0xff]
        %v4261 = vld [vmem:[#allocation4 + $0x1b0] sm:$0xff]
        %v4262 = vld [vmem:[#allocation4 + $0x1b8] sm:$0xff]
        %v4263 = vld [vmem:[#allocation4 + $0x1c0] sm:$0xff]
        %v4264 = vld [vmem:[#allocation4 + $0x1c8] sm:$0xff]
        %v4265 = vld [vmem:[#allocation4 + $0x1d0] sm:$0xff]
        %v4266 = vld [vmem:[#allocation4 + $0x1d8] sm:$0xff]
        %v4267 = vld [vmem:[#allocation4 + $0x1e0] sm:$0xff]
        %v4268 = vld [vmem:[#allocation4 + $0x1e8] sm:$0xff]
        %v4269 = vld [vmem:[#allocation4 + $0x1f0] sm:$0xff]
        %v4270 = vld [vmem:[#allocation4 + $0x1f8] sm:$0xff]
        %v4271 = vld [vmem:[#allocation4 + $0x200] sm:$0xff]
        %v4272 = vld [vmem:[#allocation4 + $0x208] sm:$0xff]
        %v4273 = vld [vmem:[#allocation4 + $0x210] sm:$0xff]
        %v4274 = vld [vmem:[#allocation4 + $0x218] sm:$0xff]
        %v4275 = vld [vmem:[#allocation4 + $0x220] sm:$0xff]
        %v4276 = vld [vmem:[#allocation4 + $0x228] sm:$0xff]
        %v4277 = vld [vmem:[#allocation4 + $0x230] sm:$0xff]
        %v4278 = vld [vmem:[#allocation4 + $0x238] sm:$0xff]
        %v4279 = vld [vmem:[#allocation4 + $0x240] sm:$0xff]
        %v4280 = vld [vmem:[#allocation4 + $0x248] sm:$0xff]
        %v4281 = vld [vmem:[#allocation4 + $0x250] sm:$0xff]
        %v4282 = vld [vmem:[#allocation4 + $0x258] sm:$0xff]
        %v4283 = vld [vmem:[#allocation4 + $0x260] sm:$0xff]
        %v4284 = vld [vmem:[#allocation4 + $0x268] sm:$0xff]
        %v4285 = vld [vmem:[#allocation4 + $0x270] sm:$0xff]
        %v4286 = vld [vmem:[#allocation4 + $0x278] sm:$0xff]
        %v4287 = vld [vmem:[#allocation4 + $0x280] sm:$0xff]
        %v4288 = vld [vmem:[#allocation4 + $0x288] sm:$0xff]
        %v4289 = vld [vmem:[#allocation4 + $0x290] sm:$0xff]
        %v4290 = vld [vmem:[#allocation4 + $0x298] sm:$0xff]
        %v4291 = vld [vmem:[#allocation4 + $0x2a0] sm:$0xff]
        %v4292 = vld [vmem:[#allocation4 + $0x2a8] sm:$0xff]
        %v4293 = vld [vmem:[#allocation4 + $0x2b0] sm:$0xff]
        %v4294 = vld [vmem:[#allocation4 + $0x2b8] sm:$0xff]
        %v4295 = vld [vmem:[#allocation4 + $0x2c0] sm:$0xff]
        %v4296 = vld [vmem:[#allocation4 + $0x2c8] sm:$0xff]
        %v4297 = vld [vmem:[#allocation4 + $0x2d0] sm:$0xff]
        %v4298 = vld [vmem:[#allocation4 + $0x2d8] sm:$0xff]
        %v4299 = vld [vmem:[#allocation4 + $0x2e0] sm:$0xff]
        %v4300 = vld [vmem:[#allocation4 + $0x2e8] sm:$0xff]
        %v4301 = vld [vmem:[#allocation4 + $0x2f0] sm:$0xff]
        %v4302 = vld [vmem:[#allocation4 + $0x2f8] sm:$0xff]
        %v4303 = vld [vmem:[#allocation8 + $0x300] sm:$0xff]
        %v4304 = vld [vmem:[#allocation8 + $0x308] sm:$0xff]
        %v4305 = vld [vmem:[#allocation8 + $0x310] sm:$0xff]
        %v4306 = vld [vmem:[#allocation8 + $0x318] sm:$0xff]
        %v4307 = vld [vmem:[#allocation8 + $0x320] sm:$0xff]
        %v4308 = vld [vmem:[#allocation8 + $0x328] sm:$0xff]
        %v4309 = vld [vmem:[#allocation8 + $0x330] sm:$0xff]
        %v4310 = vld [vmem:[#allocation8 + $0x338] sm:$0xff]
        %v4311 = vld [vmem:[#allocation8 + $0x340] sm:$0xff]
        %v4312 = vld [vmem:[#allocation8 + $0x348] sm:$0xff]
        %v4313 = vld [vmem:[#allocation8 + $0x350] sm:$0xff]
        %v4314 = vld [vmem:[#allocation8 + $0x358] sm:$0xff]
        %v4315 = vld [vmem:[#allocation8 + $0x360] sm:$0xff]
        %v4316 = vld [vmem:[#allocation8 + $0x368] sm:$0xff]
        %v4317 = vld [vmem:[#allocation8 + $0x370] sm:$0xff]
        %v4318 = vld [vmem:[#allocation8 + $0x378] sm:$0xff]
        %v4319 = vld [vmem:[#allocation8 + $0x380] sm:$0xff]
        %v4320 = vld [vmem:[#allocation8 + $0x388] sm:$0xff]
        %v4321 = vld [vmem:[#allocation8 + $0x390] sm:$0xff]
        %v4322 = vld [vmem:[#allocation8 + $0x398] sm:$0xff]
        %v4323 = vld [vmem:[#allocation8 + $0x3a0] sm:$0xff]
        %v4324 = vld [vmem:[#allocation8 + $0x3a8] sm:$0xff]
        %v4325 = vld [vmem:[#allocation8 + $0x3b0] sm:$0xff]
        %v4326 = vld [vmem:[#allocation8 + $0x3b8] sm:$0xff]
        %v4327 = vld [vmem:[#allocation8 + $0x3c0] sm:$0xff]
        %v4328 = vld [vmem:[#allocation8 + $0x3c8] sm:$0xff]
        %v4329 = vld [vmem:[#allocation8 + $0x3d0] sm:$0xff]
        %v4330 = vld [vmem:[#allocation8 + $0x3d8] sm:$0xff]
        %v4331 = vld [vmem:[#allocation8 + $0x3e0] sm:$0xff]
        %v4332 = vld [vmem:[#allocation8 + $0x3e8] sm:$0xff]
        %v4333 = vld [vmem:[#allocation8 + $0x3f0] sm:$0xff]
        %v4334 = vld [vmem:[#allocation8 + $0x3f8] sm:$0xff]
        %v4335 = vld [vmem:[#allocation8 + $0x400] sm:$0xff]
        %v4336 = vld [vmem:[#allocation8 + $0x408] sm:$0xff]
        %v4337 = vld [vmem:[#allocation8 + $0x410] sm:$0xff]
        %v4338 = vld [vmem:[#allocation8 + $0x418] sm:$0xff]
        %v4339 = vld [vmem:[#allocation8 + $0x420] sm:$0xff]
        %v4340 = vld [vmem:[#allocation8 + $0x428] sm:$0xff]
        %v4341 = vld [vmem:[#allocation8 + $0x430] sm:$0xff]
        %v4342 = vld [vmem:[#allocation8 + $0x438] sm:$0xff]
        %v4343 = vld [vmem:[#allocation8 + $0x440] sm:$0xff]
        %v4344 = vld [vmem:[#allocation8 + $0x448] sm:$0xff]
        %v4345 = vld [vmem:[#allocation8 + $0x450] sm:$0xff]
        %v4346 = vld [vmem:[#allocation8 + $0x458] sm:$0xff]
        %v4347 = vld [vmem:[#allocation8 + $0x460] sm:$0xff]
        %v4348 = vld [vmem:[#allocation8 + $0x468] sm:$0xff]
        %v4349 = vld [vmem:[#allocation8 + $0x470] sm:$0xff]
        %v4350 = vld [vmem:[#allocation8 + $0x478] sm:$0xff]
        %4351 = vmatpush.msra.mxu0 %v4318
        %4352 = vmatpush.msra.mxu0 %v4317
        %4353 = vmatpush.msra.mxu0 %v4316
        %4354 = vmatpush.msra.mxu0 %v4315
        %4355 = vmatpush.msra.mxu0 %v4314
        %4356 = vmatpush.msra.mxu0 %v4313
        %4357 = vmatpush.msra.mxu0 %v4312
        %4358 = vmatpush.msra.mxu0 %v4311
        %4359 = vmatpush.msra.mxu0 %v4310
        %4360 = vmatpush.msra.mxu0 %v4309
        %4361 = vmatpush.msra.mxu0 %v4308
        %4362 = vmatpush.msra.mxu0 %v4307
        %4363 = vmatpush.msra.mxu0 %v4306
        %4364 = vmatpush.msra.mxu0 %v4305
        %4365 = vmatpush.msra.mxu0 %v4304
        %4366 = vmatpush.msra.mxu0 %v4303
        %4367 = vmatmul.f32.gmra.mxu0 %v4207
        %v4368 = vpop.f32.mrf.mxu0
        %v4369 = vadd.f32 0.0, %v4368
        %4370 = vmatmul.f32.gmra.mxu0 %v4210
        %v4371 = vpop.f32.mrf.mxu0
        %v4372 = vadd.f32 0.0, %v4371
        %4373 = vmatmul.f32.gmra.mxu0 %v4213
        %v4374 = vpop.f32.mrf.mxu0
        %v4375 = vadd.f32 0.0, %v4374
        %4376 = vmatmul.f32.gmra.mxu0 %v4216
        %v4377 = vpop.f32.mrf.mxu0
        %v4378 = vadd.f32 0.0, %v4377
        %4379 = vmatmul.f32.gmra.mxu0 %v4219
        %v4380 = vpop.f32.mrf.mxu0
        %v4381 = vadd.f32 0.0, %v4380
        %4382 = vmatmul.f32.gmra.mxu0 %v4222
        %v4383 = vpop.f32.mrf.mxu0
        %v4384 = vadd.f32 0.0, %v4383
        %4385 = vmatmul.f32.gmra.mxu0 %v4225
        %v4386 = vpop.f32.mrf.mxu0
        %v4387 = vadd.f32 0.0, %v4386
        %4388 = vmatmul.f32.gmra.mxu0 %v4228
        %v4389 = vpop.f32.mrf.mxu0
        %v4390 = vadd.f32 0.0, %v4389
        %4391 = vmatmul.f32.gmra.mxu0 %v4231
        %v4392 = vpop.f32.mrf.mxu0
        %v4393 = vadd.f32 0.0, %v4392
        %4394 = vmatmul.f32.gmra.mxu0 %v4234
        %v4395 = vpop.f32.mrf.mxu0
        %v4396 = vadd.f32 0.0, %v4395
        %4397 = vmatmul.f32.gmra.mxu0 %v4237
        %v4398 = vpop.f32.mrf.mxu0
        %v4399 = vadd.f32 0.0, %v4398
        %4400 = vmatmul.f32.gmra.mxu0 %v4240
        %v4401 = vpop.f32.mrf.mxu0
        %v4402 = vadd.f32 0.0, %v4401
        %4403 = vmatmul.f32.gmra.mxu0 %v4243
        %v4404 = vpop.f32.mrf.mxu0
        %v4405 = vadd.f32 0.0, %v4404
        %4406 = vmatmul.f32.gmra.mxu0 %v4246
        %v4407 = vpop.f32.mrf.mxu0
        %v4408 = vadd.f32 0.0, %v4407
        %4409 = vmatmul.f32.gmra.mxu0 %v4249
        %v4410 = vpop.f32.mrf.mxu0
        %v4411 = vadd.f32 0.0, %v4410
        %4412 = vmatmul.f32.gmra.mxu0 %v4252
        %v4413 = vpop.f32.mrf.mxu0
        %v4414 = vadd.f32 0.0, %v4413
        %4415 = vmatmul.f32.gmra.mxu0 %v4255
        %v4416 = vpop.f32.mrf.mxu0
        %v4417 = vadd.f32 0.0, %v4416
        %4418 = vmatmul.f32.gmra.mxu0 %v4258
        %v4419 = vpop.f32.mrf.mxu0
        %v4420 = vadd.f32 0.0, %v4419
        %4421 = vmatmul.f32.gmra.mxu0 %v4261
        %v4422 = vpop.f32.mrf.mxu0
        %v4423 = vadd.f32 0.0, %v4422
        %4424 = vmatmul.f32.gmra.mxu0 %v4264
        %v4425 = vpop.f32.mrf.mxu0
        %v4426 = vadd.f32 0.0, %v4425
        %4427 = vmatmul.f32.gmra.mxu0 %v4267
        %v4428 = vpop.f32.mrf.mxu0
        %v4429 = vadd.f32 0.0, %v4428
        %4430 = vmatmul.f32.gmra.mxu0 %v4270
        %v4431 = vpop.f32.mrf.mxu0
        %v4432 = vadd.f32 0.0, %v4431
        %4433 = vmatmul.f32.gmra.mxu0 %v4273
        %v4434 = vpop.f32.mrf.mxu0
        %v4435 = vadd.f32 0.0, %v4434
        %4436 = vmatmul.f32.gmra.mxu0 %v4276
        %v4437 = vpop.f32.mrf.mxu0
        %v4438 = vadd.f32 0.0, %v4437
        %4439 = vmatmul.f32.gmra.mxu0 %v4279
        %v4440 = vpop.f32.mrf.mxu0
        %v4441 = vadd.f32 0.0, %v4440
        %4442 = vmatmul.f32.gmra.mxu0 %v4282
        %v4443 = vpop.f32.mrf.mxu0
        %v4444 = vadd.f32 0.0, %v4443
        %4445 = vmatmul.f32.gmra.mxu0 %v4285
        %v4446 = vpop.f32.mrf.mxu0
        %v4447 = vadd.f32 0.0, %v4446
        %4448 = vmatmul.f32.gmra.mxu0 %v4288
        %v4449 = vpop.f32.mrf.mxu0
        %v4450 = vadd.f32 0.0, %v4449
        %4451 = vmatmul.f32.gmra.mxu0 %v4291
        %v4452 = vpop.f32.mrf.mxu0
        %v4453 = vadd.f32 0.0, %v4452
        %4454 = vmatmul.f32.gmra.mxu0 %v4294
        %v4455 = vpop.f32.mrf.mxu0
        %v4456 = vadd.f32 0.0, %v4455
        %4457 = vmatmul.f32.gmra.mxu0 %v4297
        %v4458 = vpop.f32.mrf.mxu0
        %v4459 = vadd.f32 0.0, %v4458
        %4460 = vmatmul.f32.gmra.mxu0 %v4300
        %v4461 = vpop.f32.mrf.mxu0
        %v4462 = vadd.f32 0.0, %v4461
        %4463 = vdwg.mxu0
        %4464 = vmatpush.msra.mxu0 %v4334
        %4465 = vmatpush.msra.mxu0 %v4333
        %4466 = vmatpush.msra.mxu0 %v4332
        %4467 = vmatpush.msra.mxu0 %v4331
        %4468 = vmatpush.msra.mxu0 %v4330
        %4469 = vmatpush.msra.mxu0 %v4329
        %4470 = vmatpush.msra.mxu0 %v4328
        %4471 = vmatpush.msra.mxu0 %v4327
        %4472 = vmatpush.msra.mxu0 %v4326
        %4473 = vmatpush.msra.mxu0 %v4325
        %4474 = vmatpush.msra.mxu0 %v4324
        %4475 = vmatpush.msra.mxu0 %v4323
        %4476 = vmatpush.msra.mxu0 %v4322
        %4477 = vmatpush.msra.mxu0 %v4321
        %4478 = vmatpush.msra.mxu0 %v4320
        %4479 = vmatpush.msra.mxu0 %v4319
        %4480 = vmatmul.f32.gmra.mxu0 %v4208
        %v4481 = vpop.f32.mrf.mxu0
        %v4482 = vadd.f32 %v4369, %v4481
        %4483 = vmatmul.f32.gmra.mxu0 %v4211
        %v4484 = vpop.f32.mrf.mxu0
        %v4485 = vadd.f32 %v4372, %v4484
        %4486 = vmatmul.f32.gmra.mxu0 %v4214
        %v4487 = vpop.f32.mrf.mxu0
        %v4488 = vadd.f32 %v4375, %v4487
        %4489 = vmatmul.f32.gmra.mxu0 %v4217
        %v4490 = vpop.f32.mrf.mxu0
        %v4491 = vadd.f32 %v4378, %v4490
        %4492 = vmatmul.f32.gmra.mxu0 %v4220
        %v4493 = vpop.f32.mrf.mxu0
        %v4494 = vadd.f32 %v4381, %v4493
        %4495 = vmatmul.f32.gmra.mxu0 %v4223
        %v4496 = vpop.f32.mrf.mxu0
        %v4497 = vadd.f32 %v4384, %v4496
        %4498 = vmatmul.f32.gmra.mxu0 %v4226
        %v4499 = vpop.f32.mrf.mxu0
        %v4500 = vadd.f32 %v4387, %v4499
        %4501 = vmatmul.f32.gmra.mxu0 %v4229
        %v4502 = vpop.f32.mrf.mxu0
        %v4503 = vadd.f32 %v4390, %v4502
        %4504 = vmatmul.f32.gmra.mxu0 %v4232
        %v4505 = vpop.f32.mrf.mxu0
        %v4506 = vadd.f32 %v4393, %v4505
        %4507 = vmatmul.f32.gmra.mxu0 %v4235
        %v4508 = vpop.f32.mrf.mxu0
        %v4509 = vadd.f32 %v4396, %v4508
        %4510 = vmatmul.f32.gmra.mxu0 %v4238
        %v4511 = vpop.f32.mrf.mxu0
        %v4512 = vadd.f32 %v4399, %v4511
        %4513 = vmatmul.f32.gmra.mxu0 %v4241
        %v4514 = vpop.f32.mrf.mxu0
        %v4515 = vadd.f32 %v4402, %v4514
        %4516 = vmatmul.f32.gmra.mxu0 %v4244
        %v4517 = vpop.f32.mrf.mxu0
        %v4518 = vadd.f32 %v4405, %v4517
        %4519 = vmatmul.f32.gmra.mxu0 %v4247
        %v4520 = vpop.f32.mrf.mxu0
        %v4521 = vadd.f32 %v4408, %v4520
        %4522 = vmatmul.f32.gmra.mxu0 %v4250
        %v4523 = vpop.f32.mrf.mxu0
        %v4524 = vadd.f32 %v4411, %v4523
        %4525 = vmatmul.f32.gmra.mxu0 %v4253
        %v4526 = vpop.f32.mrf.mxu0
        %v4527 = vadd.f32 %v4414, %v4526
        %4528 = vmatmul.f32.gmra.mxu0 %v4256
        %v4529 = vpop.f32.mrf.mxu0
        %v4530 = vadd.f32 %v4417, %v4529
        %4531 = vmatmul.f32.gmra.mxu0 %v4259
        %v4532 = vpop.f32.mrf.mxu0
        %v4533 = vadd.f32 %v4420, %v4532
        %4534 = vmatmul.f32.gmra.mxu0 %v4262
        %v4535 = vpop.f32.mrf.mxu0
        %v4536 = vadd.f32 %v4423, %v4535
        %4537 = vmatmul.f32.gmra.mxu0 %v4265
        %v4538 = vpop.f32.mrf.mxu0
        %v4539 = vadd.f32 %v4426, %v4538
        %4540 = vmatmul.f32.gmra.mxu0 %v4268
        %v4541 = vpop.f32.mrf.mxu0
        %v4542 = vadd.f32 %v4429, %v4541
        %4543 = vmatmul.f32.gmra.mxu0 %v4271
        %v4544 = vpop.f32.mrf.mxu0
        %v4545 = vadd.f32 %v4432, %v4544
        %4546 = vmatmul.f32.gmra.mxu0 %v4274
        %v4547 = vpop.f32.mrf.mxu0
        %v4548 = vadd.f32 %v4435, %v4547
        %4549 = vmatmul.f32.gmra.mxu0 %v4277
        %v4550 = vpop.f32.mrf.mxu0
        %v4551 = vadd.f32 %v4438, %v4550
        %4552 = vmatmul.f32.gmra.mxu0 %v4280
        %v4553 = vpop.f32.mrf.mxu0
        %v4554 = vadd.f32 %v4441, %v4553
        %4555 = vmatmul.f32.gmra.mxu0 %v4283
        %v4556 = vpop.f32.mrf.mxu0
        %v4557 = vadd.f32 %v4444, %v4556
        %4558 = vmatmul.f32.gmra.mxu0 %v4286
        %v4559 = vpop.f32.mrf.mxu0
        %v4560 = vadd.f32 %v4447, %v4559
        %4561 = vmatmul.f32.gmra.mxu0 %v4289
        %v4562 = vpop.f32.mrf.mxu0
        %v4563 = vadd.f32 %v4450, %v4562
        %4564 = vmatmul.f32.gmra.mxu0 %v4292
        %v4565 = vpop.f32.mrf.mxu0
        %v4566 = vadd.f32 %v4453, %v4565
        %4567 = vmatmul.f32.gmra.mxu0 %v4295
        %v4568 = vpop.f32.mrf.mxu0
        %v4569 = vadd.f32 %v4456, %v4568
        %4570 = vmatmul.f32.gmra.mxu0 %v4298
        %v4571 = vpop.f32.mrf.mxu0
        %v4572 = vadd.f32 %v4459, %v4571
        %4573 = vmatmul.f32.gmra.mxu0 %v4301
        %v4574 = vpop.f32.mrf.mxu0
        %v4575 = vadd.f32 %v4462, %v4574
        %4576 = vdwg.mxu0
        %4577 = vmatpush.msra.mxu0 %v4350
        %4578 = vmatpush.msra.mxu0 %v4349
        %4579 = vmatpush.msra.mxu0 %v4348
        %4580 = vmatpush.msra.mxu0 %v4347
        %4581 = vmatpush.msra.mxu0 %v4346
        %4582 = vmatpush.msra.mxu0 %v4345
        %4583 = vmatpush.msra.mxu0 %v4344
        %4584 = vmatpush.msra.mxu0 %v4343
        %4585 = vmatpush.msra.mxu0 %v4342
        %4586 = vmatpush.msra.mxu0 %v4341
        %4587 = vmatpush.msra.mxu0 %v4340
        %4588 = vmatpush.msra.mxu0 %v4339
        %4589 = vmatpush.msra.mxu0 %v4338
        %4590 = vmatpush.msra.mxu0 %v4337
        %4591 = vmatpush.msra.mxu0 %v4336
        %4592 = vmatpush.msra.mxu0 %v4335
        %4593 = vmatmul.f32.gmra.mxu0 %v4209
        %v4594 = vpop.f32.mrf.mxu0
        %v4595 = vadd.f32 %v4482, %v4594
        %4596 = vmatmul.f32.gmra.mxu0 %v4212
        %v4597 = vpop.f32.mrf.mxu0
        %v4598 = vadd.f32 %v4485, %v4597
        %4599 = vmatmul.f32.gmra.mxu0 %v4215
        %v4600 = vpop.f32.mrf.mxu0
        %v4601 = vadd.f32 %v4488, %v4600
        %4602 = vmatmul.f32.gmra.mxu0 %v4218
        %v4603 = vpop.f32.mrf.mxu0
        %v4604 = vadd.f32 %v4491, %v4603
        %4605 = vmatmul.f32.gmra.mxu0 %v4221
        %v4606 = vpop.f32.mrf.mxu0
        %v4607 = vadd.f32 %v4494, %v4606
        %4608 = vmatmul.f32.gmra.mxu0 %v4224
        %v4609 = vpop.f32.mrf.mxu0
        %v4610 = vadd.f32 %v4497, %v4609
        %4611 = vmatmul.f32.gmra.mxu0 %v4227
        %v4612 = vpop.f32.mrf.mxu0
        %v4613 = vadd.f32 %v4500, %v4612
        %4614 = vmatmul.f32.gmra.mxu0 %v4230
        %v4615 = vpop.f32.mrf.mxu0
        %v4616 = vadd.f32 %v4503, %v4615
        %4617 = vmatmul.f32.gmra.mxu0 %v4233
        %v4618 = vpop.f32.mrf.mxu0
        %v4619 = vadd.f32 %v4506, %v4618
        %4620 = vmatmul.f32.gmra.mxu0 %v4236
        %v4621 = vpop.f32.mrf.mxu0
        %v4622 = vadd.f32 %v4509, %v4621
        %4623 = vmatmul.f32.gmra.mxu0 %v4239
        %v4624 = vpop.f32.mrf.mxu0
        %v4625 = vadd.f32 %v4512, %v4624
        %4626 = vmatmul.f32.gmra.mxu0 %v4242
        %v4627 = vpop.f32.mrf.mxu0
        %v4628 = vadd.f32 %v4515, %v4627
        %4629 = vmatmul.f32.gmra.mxu0 %v4245
        %v4630 = vpop.f32.mrf.mxu0
        %v4631 = vadd.f32 %v4518, %v4630
        %4632 = vmatmul.f32.gmra.mxu0 %v4248
        %v4633 = vpop.f32.mrf.mxu0
        %v4634 = vadd.f32 %v4521, %v4633
        %4635 = vmatmul.f32.gmra.mxu0 %v4251
        %v4636 = vpop.f32.mrf.mxu0
        %v4637 = vadd.f32 %v4524, %v4636
        %4638 = vmatmul.f32.gmra.mxu0 %v4254
        %v4639 = vpop.f32.mrf.mxu0
        %v4640 = vadd.f32 %v4527, %v4639
        %4641 = vmatmul.f32.gmra.mxu0 %v4257
        %v4642 = vpop.f32.mrf.mxu0
        %v4643 = vadd.f32 %v4530, %v4642
        %4644 = vmatmul.f32.gmra.mxu0 %v4260
        %v4645 = vpop.f32.mrf.mxu0
        %v4646 = vadd.f32 %v4533, %v4645
        %4647 = vmatmul.f32.gmra.mxu0 %v4263
        %v4648 = vpop.f32.mrf.mxu0
        %v4649 = vadd.f32 %v4536, %v4648
        %4650 = vmatmul.f32.gmra.mxu0 %v4266
        %v4651 = vpop.f32.mrf.mxu0
        %v4652 = vadd.f32 %v4539, %v4651
        %4653 = vmatmul.f32.gmra.mxu0 %v4269
        %v4654 = vpop.f32.mrf.mxu0
        %v4655 = vadd.f32 %v4542, %v4654
        %4656 = vmatmul.f32.gmra.mxu0 %v4272
        %v4657 = vpop.f32.mrf.mxu0
        %v4658 = vadd.f32 %v4545, %v4657
        %4659 = vmatmul.f32.gmra.mxu0 %v4275
        %v4660 = vpop.f32.mrf.mxu0
        %v4661 = vadd.f32 %v4548, %v4660
        %4662 = vmatmul.f32.gmra.mxu0 %v4278
        %v4663 = vpop.f32.mrf.mxu0
        %v4664 = vadd.f32 %v4551, %v4663
        %4665 = vmatmul.f32.gmra.mxu0 %v4281
        %v4666 = vpop.f32.mrf.mxu0
        %v4667 = vadd.f32 %v4554, %v4666
        %4668 = vmatmul.f32.gmra.mxu0 %v4284
        %v4669 = vpop.f32.mrf.mxu0
        %v4670 = vadd.f32 %v4557, %v4669
        %4671 = vmatmul.f32.gmra.mxu0 %v4287
        %v4672 = vpop.f32.mrf.mxu0
        %v4673 = vadd.f32 %v4560, %v4672
        %4674 = vmatmul.f32.gmra.mxu0 %v4290
        %v4675 = vpop.f32.mrf.mxu0
        %v4676 = vadd.f32 %v4563, %v4675
        %4677 = vmatmul.f32.gmra.mxu0 %v4293
        %v4678 = vpop.f32.mrf.mxu0
        %v4679 = vadd.f32 %v4566, %v4678
        %4680 = vmatmul.f32.gmra.mxu0 %v4296
        %v4681 = vpop.f32.mrf.mxu0
        %v4682 = vadd.f32 %v4569, %v4681
        %4683 = vmatmul.f32.gmra.mxu0 %v4299
        %v4684 = vpop.f32.mrf.mxu0
        %v4685 = vadd.f32 %v4572, %v4684
        %4686 = vmatmul.f32.gmra.mxu0 %v4302
        %v4687 = vpop.f32.mrf.mxu0
        %v4688 = vadd.f32 %v4575, %v4687
        %4689 = vdwg.mxu0
        %v4690 = vadd.f32 %v3919, %v4595
        %v4691 = vadd.f32 %v3922, %v4598
        %v4692 = vadd.f32 %v3925, %v4601
        %v4693 = vadd.f32 %v3928, %v4604
        %v4694 = vadd.f32 %v3931, %v4607
        %v4695 = vadd.f32 %v3934, %v4610
        %v4696 = vadd.f32 %v3937, %v4613
        %v4697 = vadd.f32 %v3940, %v4616
        %v4698 = vadd.f32 %v3943, %v4619
        %v4699 = vadd.f32 %v3946, %v4622
        %v4700 = vadd.f32 %v3949, %v4625
        %v4701 = vadd.f32 %v3952, %v4628
        %v4702 = vadd.f32 %v3955, %v4631
        %v4703 = vadd.f32 %v3958, %v4634
        %v4704 = vadd.f32 %v3961, %v4637
        %v4705 = vadd.f32 %v3964, %v4640
        %v4706 = vadd.f32 %v3967, %v4643
        %v4707 = vadd.f32 %v3970, %v4646
        %v4708 = vadd.f32 %v3973, %v4649
        %v4709 = vadd.f32 %v3976, %v4652
        %v4710 = vadd.f32 %v3979, %v4655
        %v4711 = vadd.f32 %v3982, %v4658
        %v4712 = vadd.f32 %v3985, %v4661
        %v4713 = vadd.f32 %v3988, %v4664
        %v4714 = vadd.f32 %v3991, %v4667
        %v4715 = vadd.f32 %v3994, %v4670
        %v4716 = vadd.f32 %v3997, %v4673
        %v4717 = vadd.f32 %v4000, %v4676
        %v4718 = vadd.f32 %v4003, %v4679
        %v4719 = vadd.f32 %v4006, %v4682
        %v4720 = vadd.f32 %v4009, %v4685
        %v4721 = vadd.f32 %v4012, %v4688
        %v4722 = vld [vmem:[%s4] sm:$0x1]
        %v4724 = vperm.slane %v4722, 0
        %v4726 = vadd.f32 %v4690, %v4724
        %v4727 = vadd.f32 %v4691, %v4724
        %v4728 = vadd.f32 %v4692, %v4724
        %v4729 = vadd.f32 %v4693, %v4724
        %v4730 = vadd.f32 %v4694, %v4724
        %v4731 = vadd.f32 %v4695, %v4724
        %v4732 = vadd.f32 %v4696, %v4724
        %v4733 = vadd.f32 %v4697, %v4724
        %v4734 = vadd.f32 %v4698, %v4724
        %v4735 = vadd.f32 %v4699, %v4724
        %v4736 = vadd.f32 %v4700, %v4724
        %v4737 = vadd.f32 %v4701, %v4724
        %v4738 = vadd.f32 %v4702, %v4724
        %v4739 = vadd.f32 %v4703, %v4724
        %v4740 = vadd.f32 %v4704, %v4724
        %v4741 = vadd.f32 %v4705, %v4724
        %v4742 = vadd.f32 %v4706, %v4724
        %v4743 = vadd.f32 %v4707, %v4724
        %v4744 = vadd.f32 %v4708, %v4724
        %v4745 = vadd.f32 %v4709, %v4724
        %v4746 = vadd.f32 %v4710, %v4724
        %v4747 = vadd.f32 %v4711, %v4724
        %v4748 = vadd.f32 %v4712, %v4724
        %v4749 = vadd.f32 %v4713, %v4724
        %v4750 = vadd.f32 %v4714, %v4724
        %v4751 = vadd.f32 %v4715, %v4724
        %v4752 = vadd.f32 %v4716, %v4724
        %v4753 = vadd.f32 %v4717, %v4724
        %v4754 = vadd.f32 %v4718, %v4724
        %v4755 = vadd.f32 %v4719, %v4724
        %v4756 = vadd.f32 %v4720, %v4724
        %v4757 = vadd.f32 %v4721, %v4724
        %v4758 = vmax.f32 %v4726, 0.0
        %v4759 = vmax.f32 %v4727, 0.0
        %v4760 = vmax.f32 %v4728, 0.0
        %v4761 = vmax.f32 %v4729, 0.0
        %v4762 = vmax.f32 %v4730, 0.0
        %v4763 = vmax.f32 %v4731, 0.0
        %v4764 = vmax.f32 %v4732, 0.0
        %v4765 = vmax.f32 %v4733, 0.0
        %v4766 = vmax.f32 %v4734, 0.0
        %v4767 = vmax.f32 %v4735, 0.0
        %v4768 = vmax.f32 %v4736, 0.0
        %v4769 = vmax.f32 %v4737, 0.0
        %v4770 = vmax.f32 %v4738, 0.0
        %v4771 = vmax.f32 %v4739, 0.0
        %v4772 = vmax.f32 %v4740, 0.0
        %v4773 = vmax.f32 %v4741, 0.0
        %v4774 = vmax.f32 %v4742, 0.0
        %v4775 = vmax.f32 %v4743, 0.0
        %v4776 = vmax.f32 %v4744, 0.0
        %v4777 = vmax.f32 %v4745, 0.0
        %v4778 = vmax.f32 %v4746, 0.0
        %v4779 = vmax.f32 %v4747, 0.0
        %v4780 = vmax.f32 %v4748, 0.0
        %v4781 = vmax.f32 %v4749, 0.0
        %v4782 = vmax.f32 %v4750, 0.0
        %v4783 = vmax.f32 %v4751, 0.0
        %v4784 = vmax.f32 %v4752, 0.0
        %v4785 = vmax.f32 %v4753, 0.0
        %v4786 = vmax.f32 %v4754, 0.0
        %v4787 = vmax.f32 %v4755, 0.0
        %v4788 = vmax.f32 %v4756, 0.0
        %v4789 = vmax.f32 %v4757, 0.0
        %4790 = vst [vmem:[%s282] sm:$0xff] %v4758
        %4791 = vst [vmem:[%s282 + $0x8] sm:$0xff] %v4759
        %4792 = vst [vmem:[%s282 + $0x10] sm:$0xff] %v4760
        %4793 = vst [vmem:[%s282 + $0x18] sm:$0xff] %v4761
        %4794 = vst [vmem:[%s282 + $0x20] sm:$0xff] %v4762
        %4795 = vst [vmem:[%s282 + $0x28] sm:$0xff] %v4763
        %4796 = vst [vmem:[%s282 + $0x30] sm:$0xff] %v4764
        %4797 = vst [vmem:[%s282 + $0x38] sm:$0xff] %v4765
        %4798 = vst [vmem:[%s282 + $0x40] sm:$0xff] %v4766
        %4799 = vst [vmem:[%s282 + $0x48] sm:$0xff] %v4767
        %4800 = vst [vmem:[%s282 + $0x50] sm:$0xff] %v4768
        %4801 = vst [vmem:[%s282 + $0x58] sm:$0xff] %v4769
        %4802 = vst [vmem:[%s282 + $0x60] sm:$0xff] %v4770
        %4803 = vst [vmem:[%s282 + $0x68] sm:$0xff] %v4771
        %4804 = vst [vmem:[%s282 + $0x70] sm:$0xff] %v4772
        %4805 = vst [vmem:[%s282 + $0x78] sm:$0xff] %v4773
        %4806 = vst [vmem:[%s282 + $0x80] sm:$0xff] %v4774
        %4807 = vst [vmem:[%s282 + $0x88] sm:$0xff] %v4775
        %4808 = vst [vmem:[%s282 + $0x90] sm:$0xff] %v4776
        %4809 = vst [vmem:[%s282 + $0x98] sm:$0xff] %v4777
        %4810 = vst [vmem:[%s282 + $0xa0] sm:$0xff] %v4778
        %4811 = vst [vmem:[%s282 + $0xa8] sm:$0xff] %v4779
        %4812 = vst [vmem:[%s282 + $0xb0] sm:$0xff] %v4780
        %4813 = vst [vmem:[%s282 + $0xb8] sm:$0xff] %v4781
        %4814 = vst [vmem:[%s282 + $0xc0] sm:$0xff] %v4782
        %4815 = vst [vmem:[%s282 + $0xc8] sm:$0xff] %v4783
        %4816 = vst [vmem:[%s282 + $0xd0] sm:$0xff] %v4784
        %4817 = vst [vmem:[%s282 + $0xd8] sm:$0xff] %v4785
        %4818 = vst [vmem:[%s282 + $0xe0] sm:$0xff] %v4786
        %4819 = vst [vmem:[%s282 + $0xe8] sm:$0xff] %v4787
        %4820 = vst [vmem:[%s282 + $0xf0] sm:$0xff] %v4788
        %4821 = vst [vmem:[%s282 + $0xf8] sm:$0xff] %v4789
        %v4822 = vlaneseq
        %v4823 = vshrl.u32 %v4822, 7
        %v4824 = vadd.s32 %v4823, 8
        %v4825 = vadd.s32 %v4823, 16
        %v4826 = vadd.s32 %v4823, 24
        %v4827 = vadd.s32 %v4823, 32
        %v4828 = vadd.s32 %v4823, 40
        %v4829 = vadd.s32 %v4823, 48
        %v4830 = vadd.s32 %v4823, 56
        %v4831 = vadd.s32 %v4823, 64
        %v4832 = vadd.s32 %v4823, 72
        %v4833 = vadd.s32 %v4823, 80
        %v4834 = vadd.s32 %v4823, 88
        %v4835 = vadd.s32 %v4823, 96
        %v4836 = vadd.s32 %v4823, 104
        %v4837 = vadd.s32 %v4823, 112
        %v4838 = vadd.s32 %v4823, 120
        %v4839 = vlaneseq
        %v4840 = vand.u32 %v4839, 127
        %v4841 = vadd.s32 %v4840, 128
        %v4842 = vmul.u32 %v4823, 2
        %v4843 = vmul.u32 %v4824, 2
        %v4844 = vmul.u32 %v4825, 2
        %v4845 = vmul.u32 %v4826, 2
        %v4846 = vmul.u32 %v4827, 2
        %v4847 = vmul.u32 %v4828, 2
        %v4848 = vmul.u32 %v4829, 2
        %v4849 = vmul.u32 %v4830, 2
        %v4850 = vmul.u32 %v4831, 2
        %v4851 = vmul.u32 %v4832, 2
        %v4852 = vmul.u32 %v4833, 2
        %v4853 = vmul.u32 %v4834, 2
        %v4854 = vmul.u32 %v4835, 2
        %v4855 = vmul.u32 %v4836, 2
        %v4856 = vmul.u32 %v4837, 2
        %v4857 = vmul.u32 %v4838, 2
        %vm4858 = vcmp.eq.s32.totalorder %v4840, %v4842
        %vm4859 = vcmp.eq.s32.totalorder %v4841, %v4842
        %vm4860 = vcmp.eq.s32.totalorder %v4840, %v4843
        %vm4861 = vcmp.eq.s32.totalorder %v4841, %v4843
        %vm4862 = vcmp.eq.s32.totalorder %v4840, %v4844
        %vm4863 = vcmp.eq.s32.totalorder %v4841, %v4844
        %vm4864 = vcmp.eq.s32.totalorder %v4840, %v4845
        %vm4865 = vcmp.eq.s32.totalorder %v4841, %v4845
        %vm4866 = vcmp.eq.s32.totalorder %v4840, %v4846
        %vm4867 = vcmp.eq.s32.totalorder %v4841, %v4846
        %vm4868 = vcmp.eq.s32.totalorder %v4840, %v4847
        %vm4869 = vcmp.eq.s32.totalorder %v4841, %v4847
        %vm4870 = vcmp.eq.s32.totalorder %v4840, %v4848
        %vm4871 = vcmp.eq.s32.totalorder %v4841, %v4848
        %vm4872 = vcmp.eq.s32.totalorder %v4840, %v4849
        %vm4873 = vcmp.eq.s32.totalorder %v4841, %v4849
        %vm4874 = vcmp.eq.s32.totalorder %v4840, %v4850
        %vm4875 = vcmp.eq.s32.totalorder %v4841, %v4850
        %vm4876 = vcmp.eq.s32.totalorder %v4840, %v4851
        %vm4877 = vcmp.eq.s32.totalorder %v4841, %v4851
        %vm4878 = vcmp.eq.s32.totalorder %v4840, %v4852
        %vm4879 = vcmp.eq.s32.totalorder %v4841, %v4852
        %vm4880 = vcmp.eq.s32.totalorder %v4840, %v4853
        %vm4881 = vcmp.eq.s32.totalorder %v4841, %v4853
        %vm4882 = vcmp.eq.s32.totalorder %v4840, %v4854
        %vm4883 = vcmp.eq.s32.totalorder %v4841, %v4854
        %vm4884 = vcmp.eq.s32.totalorder %v4840, %v4855
        %vm4885 = vcmp.eq.s32.totalorder %v4841, %v4855
        %vm4886 = vcmp.eq.s32.totalorder %v4840, %v4856
        %vm4887 = vcmp.eq.s32.totalorder %v4841, %v4856
        %vm4888 = vcmp.eq.s32.totalorder %v4840, %v4857
        %vm4889 = vcmp.eq.s32.totalorder %v4841, %v4857
        %v4890 = vsel %vm4858, 1.0, 0.0
        %v4891 = vsel %vm4859, 1.0, 0.0
        %v4892 = vsel %vm4860, 1.0, 0.0
        %v4893 = vsel %vm4861, 1.0, 0.0
        %v4894 = vsel %vm4862, 1.0, 0.0
        %v4895 = vsel %vm4863, 1.0, 0.0
        %v4896 = vsel %vm4864, 1.0, 0.0
        %v4897 = vsel %vm4865, 1.0, 0.0
        %v4898 = vsel %vm4866, 1.0, 0.0
        %v4899 = vsel %vm4867, 1.0, 0.0
        %v4900 = vsel %vm4868, 1.0, 0.0
        %v4901 = vsel %vm4869, 1.0, 0.0
        %v4902 = vsel %vm4870, 1.0, 0.0
        %v4903 = vsel %vm4871, 1.0, 0.0
        %v4904 = vsel %vm4872, 1.0, 0.0
        %v4905 = vsel %vm4873, 1.0, 0.0
        %v4906 = vsel %vm4874, 1.0, 0.0
        %v4907 = vsel %vm4875, 1.0, 0.0
        %v4908 = vsel %vm4876, 1.0, 0.0
        %v4909 = vsel %vm4877, 1.0, 0.0
        %v4910 = vsel %vm4878, 1.0, 0.0
        %v4911 = vsel %vm4879, 1.0, 0.0
        %v4912 = vsel %vm4880, 1.0, 0.0
        %v4913 = vsel %vm4881, 1.0, 0.0
        %v4914 = vsel %vm4882, 1.0, 0.0
        %v4915 = vsel %vm4883, 1.0, 0.0
        %v4916 = vsel %vm4884, 1.0, 0.0
        %v4917 = vsel %vm4885, 1.0, 0.0
        %v4918 = vsel %vm4886, 1.0, 0.0
        %v4919 = vsel %vm4887, 1.0, 0.0
        %v4920 = vsel %vm4888, 1.0, 0.0
        %v4921 = vsel %vm4889, 1.0, 0.0
        %v4922 = vadd.s32 %v4842, 1
        %v4923 = vadd.s32 %v4843, 1
        %v4924 = vadd.s32 %v4844, 1
        %v4925 = vadd.s32 %v4845, 1
        %v4926 = vadd.s32 %v4846, 1
        %v4927 = vadd.s32 %v4847, 1
        %v4928 = vadd.s32 %v4848, 1
        %v4929 = vadd.s32 %v4849, 1
        %v4930 = vadd.s32 %v4850, 1
        %v4931 = vadd.s32 %v4851, 1
        %v4932 = vadd.s32 %v4852, 1
        %v4933 = vadd.s32 %v4853, 1
        %v4934 = vadd.s32 %v4854, 1
        %v4935 = vadd.s32 %v4855, 1
        %v4936 = vadd.s32 %v4856, 1
        %v4937 = vadd.s32 %v4857, 1
        %vm4938 = vcmp.eq.s32.totalorder %v4840, %v4922
        %vm4939 = vcmp.eq.s32.totalorder %v4841, %v4922
        %vm4940 = vcmp.eq.s32.totalorder %v4840, %v4923
        %vm4941 = vcmp.eq.s32.totalorder %v4841, %v4923
        %vm4942 = vcmp.eq.s32.totalorder %v4840, %v4924
        %vm4943 = vcmp.eq.s32.totalorder %v4841, %v4924
        %vm4944 = vcmp.eq.s32.totalorder %v4840, %v4925
        %vm4945 = vcmp.eq.s32.totalorder %v4841, %v4925
        %vm4946 = vcmp.eq.s32.totalorder %v4840, %v4926
        %vm4947 = vcmp.eq.s32.totalorder %v4841, %v4926
        %vm4948 = vcmp.eq.s32.totalorder %v4840, %v4927
        %vm4949 = vcmp.eq.s32.totalorder %v4841, %v4927
        %vm4950 = vcmp.eq.s32.totalorder %v4840, %v4928
        %vm4951 = vcmp.eq.s32.totalorder %v4841, %v4928
        %vm4952 = vcmp.eq.s32.totalorder %v4840, %v4929
        %vm4953 = vcmp.eq.s32.totalorder %v4841, %v4929
        %vm4954 = vcmp.eq.s32.totalorder %v4840, %v4930
        %vm4955 = vcmp.eq.s32.totalorder %v4841, %v4930
        %vm4956 = vcmp.eq.s32.totalorder %v4840, %v4931
        %vm4957 = vcmp.eq.s32.totalorder %v4841, %v4931
        %vm4958 = vcmp.eq.s32.totalorder %v4840, %v4932
        %vm4959 = vcmp.eq.s32.totalorder %v4841, %v4932
        %vm4960 = vcmp.eq.s32.totalorder %v4840, %v4933
        %vm4961 = vcmp.eq.s32.totalorder %v4841, %v4933
        %vm4962 = vcmp.eq.s32.totalorder %v4840, %v4934
        %vm4963 = vcmp.eq.s32.totalorder %v4841, %v4934
        %vm4964 = vcmp.eq.s32.totalorder %v4840, %v4935
        %vm4965 = vcmp.eq.s32.totalorder %v4841, %v4935
        %vm4966 = vcmp.eq.s32.totalorder %v4840, %v4936
        %vm4967 = vcmp.eq.s32.totalorder %v4841, %v4936
        %vm4968 = vcmp.eq.s32.totalorder %v4840, %v4937
        %vm4969 = vcmp.eq.s32.totalorder %v4841, %v4937
        %v4970 = vsel %vm4938, 1.0, 0.0
        %v4971 = vsel %vm4939, 1.0, 0.0
        %v4972 = vsel %vm4940, 1.0, 0.0
        %v4973 = vsel %vm4941, 1.0, 0.0
        %v4974 = vsel %vm4942, 1.0, 0.0
        %v4975 = vsel %vm4943, 1.0, 0.0
        %v4976 = vsel %vm4944, 1.0, 0.0
        %v4977 = vsel %vm4945, 1.0, 0.0
        %v4978 = vsel %vm4946, 1.0, 0.0
        %v4979 = vsel %vm4947, 1.0, 0.0
        %v4980 = vsel %vm4948, 1.0, 0.0
        %v4981 = vsel %vm4949, 1.0, 0.0
        %v4982 = vsel %vm4950, 1.0, 0.0
        %v4983 = vsel %vm4951, 1.0, 0.0
        %v4984 = vsel %vm4952, 1.0, 0.0
        %v4985 = vsel %vm4953, 1.0, 0.0
        %v4986 = vsel %vm4954, 1.0, 0.0
        %v4987 = vsel %vm4955, 1.0, 0.0
        %v4988 = vsel %vm4956, 1.0, 0.0
        %v4989 = vsel %vm4957, 1.0, 0.0
        %v4990 = vsel %vm4958, 1.0, 0.0
        %v4991 = vsel %vm4959, 1.0, 0.0
        %v4992 = vsel %vm4960, 1.0, 0.0
        %v4993 = vsel %vm4961, 1.0, 0.0
        %v4994 = vsel %vm4962, 1.0, 0.0
        %v4995 = vsel %vm4963, 1.0, 0.0
        %v4996 = vsel %vm4964, 1.0, 0.0
        %v4997 = vsel %vm4965, 1.0, 0.0
        %v4998 = vsel %vm4966, 1.0, 0.0
        %v4999 = vsel %vm4967, 1.0, 0.0
        %v5000 = vsel %vm4968, 1.0, 0.0
        %v5001 = vsel %vm4969, 1.0, 0.0
        %5002 = vmatpush.msra.mxu0 %v4773
        %5003 = vmatpush.msra.mxu0 %v4772
        %5004 = vmatpush.msra.mxu0 %v4771
        %5005 = vmatpush.msra.mxu0 %v4770
        %5006 = vmatpush.msra.mxu0 %v4769
        %5007 = vmatpush.msra.mxu0 %v4768
        %5008 = vmatpush.msra.mxu0 %v4767
        %5009 = vmatpush.msra.mxu0 %v4766
        %5010 = vmatpush.msra.mxu0 %v4765
        %5011 = vmatpush.msra.mxu0 %v4764
        %5012 = vmatpush.msra.mxu0 %v4763
        %5013 = vmatpush.msra.mxu0 %v4762
        %5014 = vmatpush.msra.mxu0 %v4761
        %5015 = vmatpush.msra.mxu0 %v4760
        %5016 = vmatpush.msra.mxu0 %v4759
        %5017 = vmatpush.msra.mxu0 %v4758
        %5018 = vmatmul.f32.gmra.mxu0 %v4890
        %v5019 = vpop.f32.mrf.mxu0
        %v5020 = vadd.f32 0.0, %v5019
        %5021 = vmatmul.f32.gmra.mxu0 %v4892
        %v5022 = vpop.f32.mrf.mxu0
        %v5023 = vadd.f32 0.0, %v5022
        %5024 = vmatmul.f32.gmra.mxu0 %v4894
        %v5025 = vpop.f32.mrf.mxu0
        %v5026 = vadd.f32 0.0, %v5025
        %5027 = vmatmul.f32.gmra.mxu0 %v4896
        %v5028 = vpop.f32.mrf.mxu0
        %v5029 = vadd.f32 0.0, %v5028
        %5030 = vmatmul.f32.gmra.mxu0 %v4898
        %v5031 = vpop.f32.mrf.mxu0
        %v5032 = vadd.f32 0.0, %v5031
        %5033 = vmatmul.f32.gmra.mxu0 %v4900
        %v5034 = vpop.f32.mrf.mxu0
        %v5035 = vadd.f32 0.0, %v5034
        %5036 = vmatmul.f32.gmra.mxu0 %v4902
        %v5037 = vpop.f32.mrf.mxu0
        %v5038 = vadd.f32 0.0, %v5037
        %5039 = vmatmul.f32.gmra.mxu0 %v4904
        %v5040 = vpop.f32.mrf.mxu0
        %v5041 = vadd.f32 0.0, %v5040
        %5042 = vmatmul.f32.gmra.mxu0 %v4906
        %v5043 = vpop.f32.mrf.mxu0
        %v5044 = vadd.f32 0.0, %v5043
        %5045 = vmatmul.f32.gmra.mxu0 %v4908
        %v5046 = vpop.f32.mrf.mxu0
        %v5047 = vadd.f32 0.0, %v5046
        %5048 = vmatmul.f32.gmra.mxu0 %v4910
        %v5049 = vpop.f32.mrf.mxu0
        %v5050 = vadd.f32 0.0, %v5049
        %5051 = vmatmul.f32.gmra.mxu0 %v4912
        %v5052 = vpop.f32.mrf.mxu0
        %v5053 = vadd.f32 0.0, %v5052
        %5054 = vmatmul.f32.gmra.mxu0 %v4914
        %v5055 = vpop.f32.mrf.mxu0
        %v5056 = vadd.f32 0.0, %v5055
        %5057 = vmatmul.f32.gmra.mxu0 %v4916
        %v5058 = vpop.f32.mrf.mxu0
        %v5059 = vadd.f32 0.0, %v5058
        %5060 = vmatmul.f32.gmra.mxu0 %v4918
        %v5061 = vpop.f32.mrf.mxu0
        %v5062 = vadd.f32 0.0, %v5061
        %5063 = vmatmul.f32.gmra.mxu0 %v4920
        %v5064 = vpop.f32.mrf.mxu0
        %v5065 = vadd.f32 0.0, %v5064
        %5066 = vdwg.mxu0
        %5067 = vmatpush.msra.mxu0 %v4789
        %5068 = vmatpush.msra.mxu0 %v4788
        %5069 = vmatpush.msra.mxu0 %v4787
        %5070 = vmatpush.msra.mxu0 %v4786
        %5071 = vmatpush.msra.mxu0 %v4785
        %5072 = vmatpush.msra.mxu0 %v4784
        %5073 = vmatpush.msra.mxu0 %v4783
        %5074 = vmatpush.msra.mxu0 %v4782
        %5075 = vmatpush.msra.mxu0 %v4781
        %5076 = vmatpush.msra.mxu0 %v4780
        %5077 = vmatpush.msra.mxu0 %v4779
        %5078 = vmatpush.msra.mxu0 %v4778
        %5079 = vmatpush.msra.mxu0 %v4777
        %5080 = vmatpush.msra.mxu0 %v4776
        %5081 = vmatpush.msra.mxu0 %v4775
        %5082 = vmatpush.msra.mxu0 %v4774
        %5083 = vmatmul.f32.gmra.mxu0 %v4891
        %v5084 = vpop.f32.mrf.mxu0
        %v5085 = vadd.f32 %v5020, %v5084
        %5086 = vmatmul.f32.gmra.mxu0 %v4893
        %v5087 = vpop.f32.mrf.mxu0
        %v5088 = vadd.f32 %v5023, %v5087
        %5089 = vmatmul.f32.gmra.mxu0 %v4895
        %v5090 = vpop.f32.mrf.mxu0
        %v5091 = vadd.f32 %v5026, %v5090
        %5092 = vmatmul.f32.gmra.mxu0 %v4897
        %v5093 = vpop.f32.mrf.mxu0
        %v5094 = vadd.f32 %v5029, %v5093
        %5095 = vmatmul.f32.gmra.mxu0 %v4899
        %v5096 = vpop.f32.mrf.mxu0
        %v5097 = vadd.f32 %v5032, %v5096
        %5098 = vmatmul.f32.gmra.mxu0 %v4901
        %v5099 = vpop.f32.mrf.mxu0
        %v5100 = vadd.f32 %v5035, %v5099
        %5101 = vmatmul.f32.gmra.mxu0 %v4903
        %v5102 = vpop.f32.mrf.mxu0
        %v5103 = vadd.f32 %v5038, %v5102
        %5104 = vmatmul.f32.gmra.mxu0 %v4905
        %v5105 = vpop.f32.mrf.mxu0
        %v5106 = vadd.f32 %v5041, %v5105
        %5107 = vmatmul.f32.gmra.mxu0 %v4907
        %v5108 = vpop.f32.mrf.mxu0
        %v5109 = vadd.f32 %v5044, %v5108
        %5110 = vmatmul.f32.gmra.mxu0 %v4909
        %v5111 = vpop.f32.mrf.mxu0
        %v5112 = vadd.f32 %v5047, %v5111
        %5113 = vmatmul.f32.gmra.mxu0 %v4911
        %v5114 = vpop.f32.mrf.mxu0
        %v5115 = vadd.f32 %v5050, %v5114
        %5116 = vmatmul.f32.gmra.mxu0 %v4913
        %v5117 = vpop.f32.mrf.mxu0
        %v5118 = vadd.f32 %v5053, %v5117
        %5119 = vmatmul.f32.gmra.mxu0 %v4915
        %v5120 = vpop.f32.mrf.mxu0
        %v5121 = vadd.f32 %v5056, %v5120
        %5122 = vmatmul.f32.gmra.mxu0 %v4917
        %v5123 = vpop.f32.mrf.mxu0
        %v5124 = vadd.f32 %v5059, %v5123
        %5125 = vmatmul.f32.gmra.mxu0 %v4919
        %v5126 = vpop.f32.mrf.mxu0
        %v5127 = vadd.f32 %v5062, %v5126
        %5128 = vmatmul.f32.gmra.mxu0 %v4921
        %v5129 = vpop.f32.mrf.mxu0
        %v5130 = vadd.f32 %v5065, %v5129
        %5131 = vdwg.mxu0
        %5132 = vmatpush.msra.mxu0 %v4773
        %5133 = vmatpush.msra.mxu0 %v4772
        %5134 = vmatpush.msra.mxu0 %v4771
        %5135 = vmatpush.msra.mxu0 %v4770
        %5136 = vmatpush.msra.mxu0 %v4769
        %5137 = vmatpush.msra.mxu0 %v4768
        %5138 = vmatpush.msra.mxu0 %v4767
        %5139 = vmatpush.msra.mxu0 %v4766
        %5140 = vmatpush.msra.mxu0 %v4765
        %5141 = vmatpush.msra.mxu0 %v4764
        %5142 = vmatpush.msra.mxu0 %v4763
        %5143 = vmatpush.msra.mxu0 %v4762
        %5144 = vmatpush.msra.mxu0 %v4761
        %5145 = vmatpush.msra.mxu0 %v4760
        %5146 = vmatpush.msra.mxu0 %v4759
        %5147 = vmatpush.msra.mxu0 %v4758
        %5148 = vmatmul.f32.gmra.mxu0 %v4970
        %v5149 = vpop.f32.mrf.mxu0
        %v5150 = vadd.f32 0.0, %v5149
        %5151 = vmatmul.f32.gmra.mxu0 %v4972
        %v5152 = vpop.f32.mrf.mxu0
        %v5153 = vadd.f32 0.0, %v5152
        %5154 = vmatmul.f32.gmra.mxu0 %v4974
        %v5155 = vpop.f32.mrf.mxu0
        %v5156 = vadd.f32 0.0, %v5155
        %5157 = vmatmul.f32.gmra.mxu0 %v4976
        %v5158 = vpop.f32.mrf.mxu0
        %v5159 = vadd.f32 0.0, %v5158
        %5160 = vmatmul.f32.gmra.mxu0 %v4978
        %v5161 = vpop.f32.mrf.mxu0
        %v5162 = vadd.f32 0.0, %v5161
        %5163 = vmatmul.f32.gmra.mxu0 %v4980
        %v5164 = vpop.f32.mrf.mxu0
        %v5165 = vadd.f32 0.0, %v5164
        %5166 = vmatmul.f32.gmra.mxu0 %v4982
        %v5167 = vpop.f32.mrf.mxu0
        %v5168 = vadd.f32 0.0, %v5167
        %5169 = vmatmul.f32.gmra.mxu0 %v4984
        %v5170 = vpop.f32.mrf.mxu0
        %v5171 = vadd.f32 0.0, %v5170
        %5172 = vmatmul.f32.gmra.mxu0 %v4986
        %v5173 = vpop.f32.mrf.mxu0
        %v5174 = vadd.f32 0.0, %v5173
        %5175 = vmatmul.f32.gmra.mxu0 %v4988
        %v5176 = vpop.f32.mrf.mxu0
        %v5177 = vadd.f32 0.0, %v5176
        %5178 = vmatmul.f32.gmra.mxu0 %v4990
        %v5179 = vpop.f32.mrf.mxu0
        %v5180 = vadd.f32 0.0, %v5179
        %5181 = vmatmul.f32.gmra.mxu0 %v4992
        %v5182 = vpop.f32.mrf.mxu0
        %v5183 = vadd.f32 0.0, %v5182
        %5184 = vmatmul.f32.gmra.mxu0 %v4994
        %v5185 = vpop.f32.mrf.mxu0
        %v5186 = vadd.f32 0.0, %v5185
        %5187 = vmatmul.f32.gmra.mxu0 %v4996
        %v5188 = vpop.f32.mrf.mxu0
        %v5189 = vadd.f32 0.0, %v5188
        %5190 = vmatmul.f32.gmra.mxu0 %v4998
        %v5191 = vpop.f32.mrf.mxu0
        %v5192 = vadd.f32 0.0, %v5191
        %5193 = vmatmul.f32.gmra.mxu0 %v5000
        %v5194 = vpop.f32.mrf.mxu0
        %v5195 = vadd.f32 0.0, %v5194
        %5196 = vdwg.mxu0
        %5197 = vmatpush.msra.mxu0 %v4789
        %5198 = vmatpush.msra.mxu0 %v4788
        %5199 = vmatpush.msra.mxu0 %v4787
        %5200 = vmatpush.msra.mxu0 %v4786
        %5201 = vmatpush.msra.mxu0 %v4785
        %5202 = vmatpush.msra.mxu0 %v4784
        %5203 = vmatpush.msra.mxu0 %v4783
        %5204 = vmatpush.msra.mxu0 %v4782
        %5205 = vmatpush.msra.mxu0 %v4781
        %5206 = vmatpush.msra.mxu0 %v4780
        %5207 = vmatpush.msra.mxu0 %v4779
        %5208 = vmatpush.msra.mxu0 %v4778
        %5209 = vmatpush.msra.mxu0 %v4777
        %5210 = vmatpush.msra.mxu0 %v4776
        %5211 = vmatpush.msra.mxu0 %v4775
        %5212 = vmatpush.msra.mxu0 %v4774
        %5213 = vmatmul.f32.gmra.mxu0 %v4971
        %v5214 = vpop.f32.mrf.mxu0
        %v5215 = vadd.f32 %v5150, %v5214
        %5216 = vmatmul.f32.gmra.mxu0 %v4973
        %v5217 = vpop.f32.mrf.mxu0
        %v5218 = vadd.f32 %v5153, %v5217
        %5219 = vmatmul.f32.gmra.mxu0 %v4975
        %v5220 = vpop.f32.mrf.mxu0
        %v5221 = vadd.f32 %v5156, %v5220
        %5222 = vmatmul.f32.gmra.mxu0 %v4977
        %v5223 = vpop.f32.mrf.mxu0
        %v5224 = vadd.f32 %v5159, %v5223
        %5225 = vmatmul.f32.gmra.mxu0 %v4979
        %v5226 = vpop.f32.mrf.mxu0
        %v5227 = vadd.f32 %v5162, %v5226
        %5228 = vmatmul.f32.gmra.mxu0 %v4981
        %v5229 = vpop.f32.mrf.mxu0
        %v5230 = vadd.f32 %v5165, %v5229
        %5231 = vmatmul.f32.gmra.mxu0 %v4983
        %v5232 = vpop.f32.mrf.mxu0
        %v5233 = vadd.f32 %v5168, %v5232
        %5234 = vmatmul.f32.gmra.mxu0 %v4985
        %v5235 = vpop.f32.mrf.mxu0
        %v5236 = vadd.f32 %v5171, %v5235
        %5237 = vmatmul.f32.gmra.mxu0 %v4987
        %v5238 = vpop.f32.mrf.mxu0
        %v5239 = vadd.f32 %v5174, %v5238
        %5240 = vmatmul.f32.gmra.mxu0 %v4989
        %v5241 = vpop.f32.mrf.mxu0
        %v5242 = vadd.f32 %v5177, %v5241
        %5243 = vmatmul.f32.gmra.mxu0 %v4991
        %v5244 = vpop.f32.mrf.mxu0
        %v5245 = vadd.f32 %v5180, %v5244
        %5246 = vmatmul.f32.gmra.mxu0 %v4993
        %v5247 = vpop.f32.mrf.mxu0
        %v5248 = vadd.f32 %v5183, %v5247
        %5249 = vmatmul.f32.gmra.mxu0 %v4995
        %v5250 = vpop.f32.mrf.mxu0
        %v5251 = vadd.f32 %v5186, %v5250
        %5252 = vmatmul.f32.gmra.mxu0 %v4997
        %v5253 = vpop.f32.mrf.mxu0
        %v5254 = vadd.f32 %v5189, %v5253
        %5255 = vmatmul.f32.gmra.mxu0 %v4999
        %v5256 = vpop.f32.mrf.mxu0
        %v5257 = vadd.f32 %v5192, %v5256
        %5258 = vmatmul.f32.gmra.mxu0 %v5001
        %v5259 = vpop.f32.mrf.mxu0
        %v5260 = vadd.f32 %v5195, %v5259
        %5261 = vdwg.mxu0
        %v5262 = vmax.f32 %v5085, %v5215
        %v5263 = vmax.f32 %v5088, %v5218
        %v5264 = vmax.f32 %v5091, %v5221
        %v5265 = vmax.f32 %v5094, %v5224
        %v5266 = vmax.f32 %v5097, %v5227
        %v5267 = vmax.f32 %v5100, %v5230
        %v5268 = vmax.f32 %v5103, %v5233
        %v5269 = vmax.f32 %v5106, %v5236
        %v5270 = vmax.f32 %v5109, %v5239
        %v5271 = vmax.f32 %v5112, %v5242
        %v5272 = vmax.f32 %v5115, %v5245
        %v5273 = vmax.f32 %v5118, %v5248
        %v5274 = vmax.f32 %v5121, %v5251
        %v5275 = vmax.f32 %v5124, %v5254
        %v5276 = vmax.f32 %v5127, %v5257
        %v5277 = vmax.f32 %v5130, %v5260
        %v5278 = vmax.f32 %v5262, %v5263
        %v5279 = vmax.f32 %v5264, %v5265
        %v5280 = vmax.f32 %v5266, %v5267
        %v5281 = vmax.f32 %v5268, %v5269
        %v5282 = vmax.f32 %v5270, %v5271
        %v5283 = vmax.f32 %v5272, %v5273
        %v5284 = vmax.f32 %v5274, %v5275
        %v5285 = vmax.f32 %v5276, %v5277
        %5286 = vst [vmem:[%s289] sm:$0xff] %v5278
        %5287 = vst [vmem:[%s289 + $0x8] sm:$0xff] %v5279
        %5288 = vst [vmem:[%s289 + $0x10] sm:$0xff] %v5280
        %5289 = vst [vmem:[%s289 + $0x18] sm:$0xff] %v5281
        %5290 = vst [vmem:[%s289 + $0x20] sm:$0xff] %v5282
        %5291 = vst [vmem:[%s289 + $0x28] sm:$0xff] %v5283
        %5292 = vst [vmem:[%s289 + $0x30] sm:$0xff] %v5284
        %5293 = vst [vmem:[%s289 + $0x38] sm:$0xff] %v5285
        %s5294 = sand.u32 %s144, 1
        %s5295 = scalar_lea.sflag [#allocation7], %s5294
        %s5296 = sand.u32 %s144, 1
        %s5297 = smul.addr %s5296, 256
        %s5298 = scalar_lea.vmem [#allocation10], %s5297
        %s5299 = sand.u32 %s170, 1
        %s5300 = scalar_lea.sflag [#allocation12], %s5299
        %s5301 = sand.u32 %s170, 1
        %s5302 = smul.addr %s5301, 64
        %s5303 = scalar_lea.vmem [#allocation11], %s5302
        // Predicated region
        $region49: #{tpu_custom_call.1} parent=39 // pred_check
          %p5304 = pneg %p154
        $region50: #{tpu_custom_call.1} parent=39 // pred_check_branch
          %5306 = sbr.rel (%p5304) target = $region52
        $region51: #{tpu_custom_call.1} parent=39 // pred_region
          %5308 = vsyncadd %s5295, 0
          %s5309 = smul.addr %s26, 32
          %s5310 = smul.addr %s5309, 8
          %s5311 = scalar_lea.hbm %s5, %s5310
          %s5312 = sshll.u32 %s5298, 4
          %s5313 = int_to_ptr.vmem [resolvable:$true] %s5312
          %s5314 = sshll.u32 %s5311, 4
          %s5315 = int_to_ptr.hbm [resolvable:$true] %s5314
          %5320 = dma.vmem_to_hbm [thread:$0]  %s5313, 4096, %s5315, %s5295, 128, 128, 8
        $region52: #{tpu_custom_call.1} parent=39 // pred_fallthru
          _
        // Predicated region
        $region53: #{tpu_custom_call.1} parent=39 // pred_check
          %p5321 = pneg %p180
        $region54: #{tpu_custom_call.1} parent=39 // pred_check_branch
          %5323 = sbr.rel (%p5321) target = $region56
        $region55: #{tpu_custom_call.1} parent=39 // pred_region
          %5325 = vsyncadd %s5300, 0
          %s5326 = smul.addr %s26, 8
          %s5327 = smul.addr %s5326, 8
          %s5328 = scalar_lea.hbm %s6, %s5327
          %s5329 = sshll.u32 %s5303, 4
          %s5330 = int_to_ptr.vmem [resolvable:$true] %s5329
          %s5331 = sshll.u32 %s5328, 4
          %s5332 = int_to_ptr.hbm [resolvable:$true] %s5331
          %5337 = dma.vmem_to_hbm [thread:$0]  %s5330, 1024, %s5332, %s5300, 128, 128, 8
        $region56: #{tpu_custom_call.1} parent=39 // pred_fallthru
          _
      $region40: #{tpu_custom_call.1} parent=5 // pred_fallthru
        _
      %p5338 = scmp.le.s32.totalorder 2, %s21
      // Predicated region
      $region57: #{tpu_custom_call.1} parent=5 // pred_check
        %p5339 = pneg %p5338
      $region58: #{tpu_custom_call.1} parent=5 // pred_check_branch
        %5341 = sbr.rel (%p5339) target = $region60
      $region59: #{tpu_custom_call.1} parent=5 // pred_region
        %s5342 = ssub.s32 %s21, 2
        // Predicated region
        $region61: #{tpu_custom_call.1} parent=59 // pred_check
          %p5343 = pneg %p160
        $region62: #{tpu_custom_call.1} parent=59 // pred_check_branch
          %5345 = sbr.rel (%p5343) target = $region64
        $region63: #{tpu_custom_call.1} parent=59 // pred_region
          %s5346 = sand.u32 %s145, 1
          %s5347 = scalar_lea.sflag [#allocation7], %s5346
          %s5348 = sand.u32 %s145, 1
          %s5349 = smul.addr %s5348, 256
          %s5350 = scalar_lea.vmem [#allocation10], %s5349
          %5352 = dma.done %s5347, 4096
        $region64: #{tpu_custom_call.1} parent=59 // pred_fallthru
          _
        // Predicated region
        $region65: #{tpu_custom_call.1} parent=59 // pred_check
          %p5353 = pneg %p186
        $region66: #{tpu_custom_call.1} parent=59 // pred_check_branch
          %5355 = sbr.rel (%p5353) target = $region68
        $region67: #{tpu_custom_call.1} parent=59 // pred_region
          %s5356 = sand.u32 %s171, 1
          %s5357 = scalar_lea.sflag [#allocation12], %s5356
          %s5358 = sand.u32 %s171, 1
          %s5359 = smul.addr %s5358, 64
          %s5360 = scalar_lea.vmem [#allocation11], %s5359
          %5362 = dma.done %s5357, 1024
        $region68: #{tpu_custom_call.1} parent=59 // pred_fallthru
          _
      $region60: #{tpu_custom_call.1} parent=5 // pred_fallthru
        _
    $region6: #{tpu_custom_call.1} parent=1 // loop_footer
      %s25 = sadd.s32 1, %s21
    $region7: #{tpu_custom_call.1} parent=1 // loop_footer_branch
      %20 = sbr.rel target = $region3
    $region8: #{tpu_custom_call.1} parent=1 // loop_exit
      _
    %5363 = vsyncpa [#allocation6], 1
    %s5364 = scalar_lea.sflag [#allocation6], 1
    %5365 = vsyncpa %s5364, 1
    %5366 = vsyncpa [#allocation9], 1
    %5367 = vsyncpa [#allocation7], 1
    %s5368 = scalar_lea.sflag [#allocation7], 1
    %5369 = vsyncpa %s5368, 1
    %5370 = vsyncpa [#allocation12], 1
    %s5371 = scalar_lea.sflag [#allocation12], 1
    %5372 = vsyncpa %s5371, 1

</llo_original>
